<compile_context>
chip_gen: v7x
topology: tpu7x:2x2x1
jax: 0.10.0
libtpu: 0.0.40
codegen_flags: <defaults>
</compile_context>

<pallas_src>
import numpy as np

import jax
import jax.numpy as jnp
from jax.experimental import pallas as pl
from jax.experimental.pallas import tpu as pltpu

NEG_SLOPE = 0.01                     # F.leaky_relu default negative slope
_VMEM_LIMIT = 32 * 1024 * 1024       # safe scoped-VMEM request on v5e/v6e/v7x


def _batch_tile(n, cap=32):
    """Images per grid step: largest divisor of n <= cap (preferring multiples
    of 8 for sublane-aligned reshapes), capped so the grid keeps >= 2 steps
    (both v7x TensorCores get work)."""
    cap = max(1, min(cap, n // 2 if n >= 2 else 1))
    divs = [d for d in range(1, cap + 1) if n % d == 0]
    mult8 = [d for d in divs if d % 8 == 0]
    return (mult8 or divs)[-1]


# ------------------------------- Pallas kernel -------------------------------

def _cifar_cnn1_kernel(xe_ref, xo_ref,
                       w1e_ref, w1o_ref, b1_ref,
                       w2e_ref, w2o_ref, b2_ref,
                       w3e_ref, w3o_ref, b3_ref,
                       wfc1_ref, bfc1_ref, wfc2_ref, bfc2_ref,
                       vT_ref, beta_ref,
                       xout_ref, yout_ref):
    """Whole CifarCNN1 forward for one batch tile (everything VMEM-resident).

    xe_ref/xo_ref: (1, 16, tb, 96)  even/odd rows of the 32x32x3 input (bf16),
                   last dim = (width x channel) folded.
    w{L}{e,o}_ref: (kh, K, 256)     banded conv weights producing even/odd
                   pooled output columns; the kw taps, the W-pooling parity and
                   the NEXT layer's W zero-padding are folded into rows/cols.
    b{L}_ref:      (1, 256) f32     bias tiled over output width (0 on pads).
    wfc1_ref:      (3, 256, 128)    fc1 banded over the 3 feature rows (bf16).
    xout/yout:     (1, tb, C) f32   normalized features / logits.
    """

    def conv_block(xe, xo, we_ref, wo_ref, b_ref):
        # xe/xo: (hp2, tb, K) bf16 values = even/odd rows of the padded input.
        hp2, tb, K = xe.shape
        kh = we_ref.shape[0]
        ncols = b_ref.shape[-1]
        ho2 = (2 * hp2 - kh + 1) // 2            # pooled output rows
        # 4 pooling-quadrant accumulators (conv-row parity x conv-col parity);
        # batch is folded into the matmul M dim -> M = ho2 * tb.
        acc = [jnp.zeros((ho2 * tb, ncols), jnp.float32) for _ in range(4)]
        for s in range(kh + 1):                  # input row offset: 2h + s
            src = xe if s % 2 == 0 else xo
            xs = src[s // 2: s // 2 + ho2].reshape(ho2 * tb, K)
            for row_off in (0, 1):
                dh = s - row_off
                if 0 <= dh < kh:
                    acc[2 * row_off + 0] += jnp.dot(
                        xs, we_ref[dh], preferred_element_type=jnp.float32)
                    acc[2 * row_off + 1] += jnp.dot(
                        xs, wo_ref[dh], preferred_element_type=jnp.float32)
        m = jnp.maximum(jnp.maximum(acc[0], acc[1]),
                        jnp.maximum(acc[2], acc[3]))     # 2x2 max-pool
        m = m + b_ref[...]                               # bias const per window
        m = jnp.where(m >= 0, m, NEG_SLOPE * m)          # leaky_relu (monotone)
        return m.reshape(ho2, tb, ncols).astype(jnp.bfloat16)

    def pad_split(p):
        # Zero-pad one row top/bottom and split into even/odd rows, producing
        # the next conv layer's parity-split input as VMEM values (the W-pad is
        # already baked into the columns by the previous layer's banded weights).
        z = jnp.zeros_like(p[0:1])
        rows = [z] + [p[r:r + 1] for r in range(p.shape[0])] + [z]
        return (jnp.concatenate(rows[0::2], axis=0),
                jnp.concatenate(rows[1::2], axis=0))

    # ----- conv stack: 32x32x3 -> 14x14x16 -> 6x6x32 -> 3x3x64 ----------------
    p1 = conv_block(xe_ref[0], xo_ref[0], w1e_ref, w1o_ref, b1_ref)  # (14,tb,256)
    x2e, x2o = pad_split(p1)                                         # (8,tb,256) x2
    p2 = conv_block(x2e, x2o, w2e_ref, w2o_ref, b2_ref)              # (6,tb,256)
    x3e, x3o = pad_split(p2)                                         # (4,tb,256) x2
    p3 = conv_block(x3e, x3o, w3e_ref, w3o_ref, b3_ref)              # (3,tb,256)

    # ----- head: fc1 (banded over the 3 feature rows) + leaky + fc2 + norm + cls
    tb = p3.shape[1]
    nh = wfc1_ref.shape[-1]
    h = jnp.zeros((tb, nh), jnp.float32)
    for r in range(3):
        h += jnp.dot(p3[r], wfc1_ref[r], preferred_element_type=jnp.float32)
    h = h + bfc1_ref[...]
    h = jnp.where(h >= 0, h, NEG_SLOPE * h).astype(jnp.bfloat16)
    z = jnp.dot(h, wfc2_ref[...], preferred_element_type=jnp.float32)
    z = z + bfc2_ref[...]
    ss = jnp.sum(z * z, axis=-1, keepdims=True)
    # F.normalize(p=2, eps=1e-12): x / max(||x||, eps) == x * rsqrt(max(ss, eps^2))
    xn = z * jax.lax.rsqrt(jnp.maximum(ss, 1e-24))
    xout_ref[0] = xn
    yout_ref[0] = jnp.dot(xn.astype(jnp.bfloat16), vT_ref[...],
                          preferred_element_type=jnp.float32) * beta_ref[0]


# ------------------------------ Forward wrapper ------------------------------

@jax.jit
def cifar_cnn1_forward(kp, x_nchw):
    """CifarCNN1.forward. x: NCHW float32 (N, 3, 32, 32). Returns (x, y) f32."""
    N = x_nchw.shape[0]
    C = kp["bfc2"].shape[-1]
    tb = _batch_tile(N)
    nb = N // tb

    # Entry layout glue (one-time): NCHW -> (nb, H, tb, W*Cin) bf16, even/odd rows.
    x = jnp.transpose(x_nchw, (0, 2, 3, 1)).astype(jnp.bfloat16)   # (N, 32, 32, 3)
    x = x.reshape(nb, tb, 32, 96)
    x = jnp.transpose(x, (0, 2, 1, 3))                             # (nb, 32, tb, 96)
    x_even, x_odd = x[:, 0::2], x[:, 1::2]                         # (nb, 16, tb, 96)

    const3 = lambda i: (0, 0, 0)
    const2 = lambda i: (0, 0)

    xn, y = pl.pallas_call(
        _cifar_cnn1_kernel,
        out_shape=(jax.ShapeDtypeStruct((nb, tb, C), jnp.float32),
                   jax.ShapeDtypeStruct((nb, tb, C), jnp.float32)),
        grid=(nb,),
        in_specs=[
            pl.BlockSpec((1, 16, tb, 96), lambda i: (i, 0, 0, 0)),   # x even rows
            pl.BlockSpec((1, 16, tb, 96), lambda i: (i, 0, 0, 0)),   # x odd rows
            pl.BlockSpec((5, 96, 256), const3),                      # conv1 bands
            pl.BlockSpec((5, 96, 256), const3),
            pl.BlockSpec((1, 256), const2),
            pl.BlockSpec((5, 256, 256), const3),                     # conv2 bands
            pl.BlockSpec((5, 256, 256), const3),
            pl.BlockSpec((1, 256), const2),
            pl.BlockSpec((3, 256, 256), const3),                     # conv3 bands
            pl.BlockSpec((3, 256, 256), const3),
            pl.BlockSpec((1, 256), const2),
            pl.BlockSpec((3, 256, 128), const3),                     # fc1 bands
            pl.BlockSpec((1, 128), const2),
            pl.BlockSpec((128, C), const2),                          # fc2
            pl.BlockSpec((1, C), const2),
            pl.BlockSpec((C, C), const2),                            # cls V^T
            pl.BlockSpec(memory_space=pltpu.MemorySpace.SMEM),       # beta
        ],
        out_specs=(pl.BlockSpec((1, tb, C), lambda i: (i, 0, 0)),
                   pl.BlockSpec((1, tb, C), lambda i: (i, 0, 0))),
        compiler_params=pltpu.CompilerParams(
            dimension_semantics=("parallel",),
            vmem_limit_bytes=_VMEM_LIMIT),
    )(x_even, x_odd,
      kp["c1_we"], kp["c1_wo"], kp["c1_b"],
      kp["c2_we"], kp["c2_wo"], kp["c2_b"],
      kp["c3_we"], kp["c3_wo"], kp["c3_b"],
      kp["wfc1"], kp["bfc1"], kp["wfc2"], kp["bfc2"],
      kp["vT"], kp["beta"])
    return xn.reshape(N, C), y.reshape(N, C)


# --------------------------- Parameter preparation ---------------------------

def init_params(key, num_classes=10):
    """Deterministic synthetic parameters (same shapes/init as CifarCNN1)."""
    ks = jax.random.split(key, 10)

    def uni(k, shape, fan_in):
        bound = 1.0 / jnp.sqrt(jnp.float32(fan_in))
        return jax.random.uniform(k, shape, jnp.float32, -bound, bound)

    p = {}
    # Conv weights stored HWIO (kh, kw, Cin, Cout).  Real PyTorch weights
    # (Cout, Cin, kh, kw) import as w.transpose(2, 3, 1, 0).
    p["w1"] = uni(ks[0], (5, 5, 3, 16), 3 * 5 * 5)
    p["b1"] = uni(ks[1], (16,), 3 * 5 * 5)
    p["w2"] = uni(ks[2], (5, 5, 16, 32), 16 * 5 * 5)
    p["b2"] = uni(ks[3], (32,), 16 * 5 * 5)
    p["w3"] = uni(ks[4], (3, 3, 32, 64), 32 * 3 * 3)
    p["b3"] = uni(ks[5], (64,), 32 * 3 * 3)
    # fc1 stored (in=576, out=128), rows in NHWC flatten order (h, w, c).  Real
    # PyTorch fc1.weight (128, 576) in (c, h, w) order imports as
    #   w.reshape(128, 64, 3, 3).transpose(2, 3, 1, 0).reshape(576, 128).
    p["wfc1"] = uni(ks[6], (64 * 3 * 3, 128), 64 * 3 * 3)
    p["bfc1"] = uni(ks[7], (128,), 64 * 3 * 3)
    p["wfc2"] = uni(ks[8], (128, num_classes), 128)
    p["bfc2"] = uni(ks[9], (num_classes,), 128)
    # cls weight V = sqrt(C/(C-1)) * (I - ones/C); y = x @ V^T (V symmetric).
    Cn = num_classes
    V = jnp.sqrt(jnp.float32(Cn) / jnp.float32(Cn - 1)) * (
        jnp.eye(Cn, dtype=jnp.float32) - jnp.ones((Cn, Cn), jnp.float32) / Cn)
    p["vT"] = V.T
    p["beta"] = jnp.ones((1,), jnp.float32)
    return p


def _banded_conv_weights(w_hwio, wp, ncols, col_off, dtype=jnp.bfloat16):
    """Fold kw taps, W-pooling column parity and the next layer's W-padding
    into banded weight matrices.

    Returns (band_even, band_odd), each (kh, wp*cin, ncols), with
      band_p[dh, (2*w2 + p + dw)*cin + ci, col_off + w2*cout + co] = w[dh,dw,ci,co]
    so that  x_rows @ band_p  yields the parity-p conv columns laid out directly
    at the next layer's (W-padded) input column positions.
    """
    kh, kw, cin, cout = w_hwio.shape
    wo2 = (wp - kw + 1) // 2
    w_np = np.asarray(w_hwio, np.float32)
    bands = np.zeros((2, kh, wp * cin, ncols), np.float32)
    for p in range(2):
        for dh in range(kh):
            for w2 in range(wo2):
                for dw in range(kw):
                    r0 = (2 * w2 + p + dw) * cin
                    c0 = col_off + w2 * cout
                    bands[p, dh, r0:r0 + cin, c0:c0 + cout] = w_np[dh, dw]
    return jnp.asarray(bands[0], dtype), jnp.asarray(bands[1], dtype)


# (name, weight key, bias key, padded input width Wp, output column offset)
# col offset = next layer's Cin (bakes that layer's W zero-padding in), or 0.
_CONV_LAYOUT = (
    ("c1", "w1", "b1", 32, 16),    # conv1: 32x32x3 (pad 0) -> pooled 14x14x16
    ("c2", "w2", "b2", 16, 32),    # conv2: 14x14x16 (pad 1 -> 16) -> 6x6x32
    ("c3", "w3", "b3", 8, 0),      # conv3: 6x6x32  (pad 1 -> 8)  -> 3x3x64
)
_NCOLS = 256                       # all conv outputs padded to 256 lanes


def prepare_kernel_params(params):
    """One-time host-side conversion into kernel-ready layout (32x32 input)."""
    kp = {}
    for name, wk, bk, wp, coff in _CONV_LAYOUT:
        kh, kw, cin, cout = params[wk].shape
        wo2 = (wp - kw + 1) // 2
        we, wo = _banded_conv_weights(params[wk], wp, _NCOLS, coff)
        kp[name + "_we"] = we
        kp[name + "_wo"] = wo
        bt = np.zeros((1, _NCOLS), np.float32)
        bv = np.asarray(params[bk], np.float32)
        for w2 in range(wo2):
            bt[0, coff + w2 * cout: coff + (w2 + 1) * cout] = bv
        kp[name + "_b"] = jnp.asarray(bt)
    # fc1: (576, 128) NHWC-flatten rows -> banded (3, 256, 128); rows >= 192 of
    # each band are zero (they see conv3's zero-padded output columns).
    w1 = np.asarray(params["wfc1"], np.float32).reshape(3, 192, 128)
    w1b = np.zeros((3, _NCOLS, 128), np.float32)
    w1b[:, :192, :] = w1
    kp["wfc1"] = jnp.asarray(w1b, jnp.bfloat16)
    kp["bfc1"] = jnp.asarray(np.asarray(params["bfc1"], np.float32)[None, :])
    kp["wfc2"] = params["wfc2"].astype(jnp.bfloat16)
    kp["bfc2"] = params["bfc2"].astype(jnp.float32).reshape(1, -1)
    kp["vT"] = params["vT"].astype(jnp.bfloat16)
    kp["beta"] = params["beta"].astype(jnp.float32).reshape(1)
    return kp


if __name__ == "__main__":
    key = jax.random.PRNGKey(0)
    k_param, k_input = jax.random.split(key)

    params = init_params(k_param, num_classes=10)
    kparams = prepare_kernel_params(params)

    # CIFAR-style input: batch=2, 3 channels, 32x32 (required by fc1 = 64*3*3).
    x = jax.random.normal(k_input, (2, 3, 32, 32), jnp.float32)

    x_feat, y_logits = cifar_cnn1_forward(kparams, x)
    jax.block_until_ready((x_feat, y_logits))

    assert x_feat.shape == (2, 10) and y_logits.shape == (2, 10)
    assert bool(jnp.all(jnp.isfinite(x_feat))) and bool(jnp.all(jnp.isfinite(y_logits)))
    print("KERNEL_OK")
</pallas_src>

<mosaic_0001>
module attributes {stable_mosaic.version = 11 : i64} {
  func.func @_cifar_cnn1_kernel(%arg0: i32, %arg1: memref<1x16x1x96xbf16, #tpu.memory_space<vmem>>, %arg2: memref<1x16x1x96xbf16, #tpu.memory_space<vmem>>, %arg3: memref<5x96x256xbf16, #tpu.memory_space<vmem>>, %arg4: memref<5x96x256xbf16, #tpu.memory_space<vmem>>, %arg5: memref<1x256xf32, #tpu.memory_space<vmem>>, %arg6: memref<5x256x256xbf16, #tpu.memory_space<vmem>>, %arg7: memref<5x256x256xbf16, #tpu.memory_space<vmem>>, %arg8: memref<1x256xf32, #tpu.memory_space<vmem>>, %arg9: memref<3x256x256xbf16, #tpu.memory_space<vmem>>, %arg10: memref<3x256x256xbf16, #tpu.memory_space<vmem>>, %arg11: memref<1x256xf32, #tpu.memory_space<vmem>>, %arg12: memref<3x256x128xbf16, #tpu.memory_space<vmem>>, %arg13: memref<1x128xf32, #tpu.memory_space<vmem>>, %arg14: memref<128x10xbf16, #tpu.memory_space<vmem>>, %arg15: memref<1x10xf32, #tpu.memory_space<vmem>>, %arg16: memref<10x10xbf16, #tpu.memory_space<vmem>>, %arg17: memref<1xf32, #tpu.memory_space<smem>>, %arg18: memref<1x1x10xf32, #tpu.memory_space<vmem>>, %arg19: memref<1x1x10xf32, #tpu.memory_space<vmem>>) attributes {dimension_semantics = [#tpu.dimension_semantics<parallel>], iteration_bounds = array<i64: 2>, scalar_prefetch = 0 : i64, scratch_operands = 0 : i64, tpu.core_type = #tpu.core_type<tc>, window_params = [{transform_indices = @transform_0, window_bounds = array<i64: 1, 16, 1, 96>}, {transform_indices = @transform_1, window_bounds = array<i64: 1, 16, 1, 96>}, {pipeline_mode = #tpu.pipeline_mode<synchronous>, transform_indices = @transform_2, window_bounds = array<i64: 5, 96, 256>}, {pipeline_mode = #tpu.pipeline_mode<synchronous>, transform_indices = @transform_3, window_bounds = array<i64: 5, 96, 256>}, {pipeline_mode = #tpu.pipeline_mode<synchronous>, transform_indices = @transform_4, window_bounds = array<i64: 1, 256>}, {pipeline_mode = #tpu.pipeline_mode<synchronous>, transform_indices = @transform_5, window_bounds = array<i64: 5, 256, 256>}, {pipeline_mode = #tpu.pipeline_mode<synchronous>, transform_indices = @transform_6, window_bounds = array<i64: 5, 256, 256>}, {pipeline_mode = #tpu.pipeline_mode<synchronous>, transform_indices = @transform_7, window_bounds = array<i64: 1, 256>}, {pipeline_mode = #tpu.pipeline_mode<synchronous>, transform_indices = @transform_8, window_bounds = array<i64: 3, 256, 256>}, {pipeline_mode = #tpu.pipeline_mode<synchronous>, transform_indices = @transform_9, window_bounds = array<i64: 3, 256, 256>}, {pipeline_mode = #tpu.pipeline_mode<synchronous>, transform_indices = @transform_10, window_bounds = array<i64: 1, 256>}, {pipeline_mode = #tpu.pipeline_mode<synchronous>, transform_indices = @transform_11, window_bounds = array<i64: 3, 256, 128>}, {pipeline_mode = #tpu.pipeline_mode<synchronous>, transform_indices = @transform_12, window_bounds = array<i64: 1, 128>}, {pipeline_mode = #tpu.pipeline_mode<synchronous>, transform_indices = @transform_13, window_bounds = array<i64: 128, 10>}, {pipeline_mode = #tpu.pipeline_mode<synchronous>, transform_indices = @transform_14, window_bounds = array<i64: 1, 10>}, {pipeline_mode = #tpu.pipeline_mode<synchronous>, transform_indices = @transform_15, window_bounds = array<i64: 10, 10>}, {transform_indices = @transform_16, window_bounds = array<i64: 1>}, {transform_indices = @transform_17, window_bounds = array<i64: 1, 1, 10>}, {transform_indices = @transform_18, window_bounds = array<i64: 1, 1, 10>}]} {
    %c0 = arith.constant 0 : index
    %c0_0 = arith.constant 0 : index
    %c0_1 = arith.constant 0 : index
    %c0_2 = arith.constant 0 : index
    %0 = vector.load %arg1[%c0, %c0_0, %c0_1, %c0_2] : memref<1x16x1x96xbf16, #tpu.memory_space<vmem>>, vector<1x16x1x96xbf16>
    %1 = vector.shape_cast %0 : vector<1x16x1x96xbf16> to vector<16x1x96xbf16>
    %c0_3 = arith.constant 0 : index
    %c0_4 = arith.constant 0 : index
    %c0_5 = arith.constant 0 : index
    %c0_6 = arith.constant 0 : index
    %2 = vector.load %arg2[%c0_3, %c0_4, %c0_5, %c0_6] : memref<1x16x1x96xbf16, #tpu.memory_space<vmem>>, vector<1x16x1x96xbf16>
    %3 = vector.shape_cast %2 : vector<1x16x1x96xbf16> to vector<16x1x96xbf16>
    %cst = arith.constant 0.000000e+00 : f32
    %4 = vector.broadcast %cst : f32 to vector<14x256xf32>
    %cst_7 = arith.constant 0.000000e+00 : f32
    %5 = vector.broadcast %cst_7 : f32 to vector<14x256xf32>
    %cst_8 = arith.constant 0.000000e+00 : f32
    %6 = vector.broadcast %cst_8 : f32 to vector<14x256xf32>
    %cst_9 = arith.constant 0.000000e+00 : f32
    %7 = vector.broadcast %cst_9 : f32 to vector<14x256xf32>
    %8 = vector.extract_strided_slice %1 {offsets = [0, 0, 0], sizes = [14, 1, 96], strides = [1, 1, 1]} : vector<16x1x96xbf16> to vector<14x1x96xbf16>
    %9 = vector.shape_cast %8 : vector<14x1x96xbf16> to vector<14x96xbf16>
    %c0_10 = arith.constant 0 : index
    %c0_11 = arith.constant 0 : index
    %c0_12 = arith.constant 0 : index
    %10 = vector.load %arg3[%c0_10, %c0_11, %c0_12] : memref<5x96x256xbf16, #tpu.memory_space<vmem>>, vector<1x96x256xbf16>
    %11 = vector.shape_cast %10 : vector<1x96x256xbf16> to vector<96x256xbf16>
    %cst_13 = arith.constant dense<0.000000e+00> : vector<14x256xf32>
    %12 = tpu.matmul %9, %11, %cst_13 {dimension_numbers = #tpu.dot_dimension_numbers<[1], [0], [0], [1], [0, 0, 1, 1], [], []>} : vector<14x96xbf16>, vector<96x256xbf16>, vector<14x256xf32> -> vector<14x256xf32>
    %13 = arith.addf %4, %12 : vector<14x256xf32>
    %c0_14 = arith.constant 0 : index
    %c0_15 = arith.constant 0 : index
    %c0_16 = arith.constant 0 : index
    %14 = vector.load %arg4[%c0_14, %c0_15, %c0_16] : memref<5x96x256xbf16, #tpu.memory_space<vmem>>, vector<1x96x256xbf16>
    %15 = vector.shape_cast %14 : vector<1x96x256xbf16> to vector<96x256xbf16>
    %cst_17 = arith.constant dense<0.000000e+00> : vector<14x256xf32>
    %16 = tpu.matmul %9, %15, %cst_17 {dimension_numbers = #tpu.dot_dimension_numbers<[1], [0], [0], [1], [0, 0, 1, 1], [], []>} : vector<14x96xbf16>, vector<96x256xbf16>, vector<14x256xf32> -> vector<14x256xf32>
    %17 = arith.addf %5, %16 : vector<14x256xf32>
    %18 = vector.extract_strided_slice %3 {offsets = [0, 0, 0], sizes = [14, 1, 96], strides = [1, 1, 1]} : vector<16x1x96xbf16> to vector<14x1x96xbf16>
    %19 = vector.shape_cast %18 : vector<14x1x96xbf16> to vector<14x96xbf16>
    %c1 = arith.constant 1 : index
    %c0_18 = arith.constant 0 : index
    %c0_19 = arith.constant 0 : index
    %20 = vector.load %arg3[%c1, %c0_18, %c0_19] : memref<5x96x256xbf16, #tpu.memory_space<vmem>>, vector<1x96x256xbf16>
    %21 = vector.shape_cast %20 : vector<1x96x256xbf16> to vector<96x256xbf16>
    %cst_20 = arith.constant dense<0.000000e+00> : vector<14x256xf32>
    %22 = tpu.matmul %19, %21, %cst_20 {dimension_numbers = #tpu.dot_dimension_numbers<[1], [0], [0], [1], [0, 0, 1, 1], [], []>} : vector<14x96xbf16>, vector<96x256xbf16>, vector<14x256xf32> -> vector<14x256xf32>
    %23 = arith.addf %13, %22 : vector<14x256xf32>
    %c1_21 = arith.constant 1 : index
    %c0_22 = arith.constant 0 : index
    %c0_23 = arith.constant 0 : index
    %24 = vector.load %arg4[%c1_21, %c0_22, %c0_23] : memref<5x96x256xbf16, #tpu.memory_space<vmem>>, vector<1x96x256xbf16>
    %25 = vector.shape_cast %24 : vector<1x96x256xbf16> to vector<96x256xbf16>
    %cst_24 = arith.constant dense<0.000000e+00> : vector<14x256xf32>
    %26 = tpu.matmul %19, %25, %cst_24 {dimension_numbers = #tpu.dot_dimension_numbers<[1], [0], [0], [1], [0, 0, 1, 1], [], []>} : vector<14x96xbf16>, vector<96x256xbf16>, vector<14x256xf32> -> vector<14x256xf32>
    %27 = arith.addf %17, %26 : vector<14x256xf32>
    %c0_25 = arith.constant 0 : index
    %c0_26 = arith.constant 0 : index
    %c0_27 = arith.constant 0 : index
    %28 = vector.load %arg3[%c0_25, %c0_26, %c0_27] : memref<5x96x256xbf16, #tpu.memory_space<vmem>>, vector<1x96x256xbf16>
    %29 = vector.shape_cast %28 : vector<1x96x256xbf16> to vector<96x256xbf16>
    %cst_28 = arith.constant dense<0.000000e+00> : vector<14x256xf32>
    %30 = tpu.matmul %19, %29, %cst_28 {dimension_numbers = #tpu.dot_dimension_numbers<[1], [0], [0], [1], [0, 0, 1, 1], [], []>} : vector<14x96xbf16>, vector<96x256xbf16>, vector<14x256xf32> -> vector<14x256xf32>
    %31 = arith.addf %6, %30 : vector<14x256xf32>
    %c0_29 = arith.constant 0 : index
    %c0_30 = arith.constant 0 : index
    %c0_31 = arith.constant 0 : index
    %32 = vector.load %arg4[%c0_29, %c0_30, %c0_31] : memref<5x96x256xbf16, #tpu.memory_space<vmem>>, vector<1x96x256xbf16>
    %33 = vector.shape_cast %32 : vector<1x96x256xbf16> to vector<96x256xbf16>
    %cst_32 = arith.constant dense<0.000000e+00> : vector<14x256xf32>
    %34 = tpu.matmul %19, %33, %cst_32 {dimension_numbers = #tpu.dot_dimension_numbers<[1], [0], [0], [1], [0, 0, 1, 1], [], []>} : vector<14x96xbf16>, vector<96x256xbf16>, vector<14x256xf32> -> vector<14x256xf32>
    %35 = arith.addf %7, %34 : vector<14x256xf32>
    %36 = vector.extract_strided_slice %1 {offsets = [1, 0, 0], sizes = [14, 1, 96], strides = [1, 1, 1]} : vector<16x1x96xbf16> to vector<14x1x96xbf16>
    %37 = vector.shape_cast %36 : vector<14x1x96xbf16> to vector<14x96xbf16>
    %c2 = arith.constant 2 : index
    %c0_33 = arith.constant 0 : index
    %c0_34 = arith.constant 0 : index
    %38 = vector.load %arg3[%c2, %c0_33, %c0_34] : memref<5x96x256xbf16, #tpu.memory_space<vmem>>, vector<1x96x256xbf16>
    %39 = vector.shape_cast %38 : vector<1x96x256xbf16> to vector<96x256xbf16>
    %cst_35 = arith.constant dense<0.000000e+00> : vector<14x256xf32>
    %40 = tpu.matmul %37, %39, %cst_35 {dimension_numbers = #tpu.dot_dimension_numbers<[1], [0], [0], [1], [0, 0, 1, 1], [], []>} : vector<14x96xbf16>, vector<96x256xbf16>, vector<14x256xf32> -> vector<14x256xf32>
    %41 = arith.addf %23, %40 : vector<14x256xf32>
    %c2_36 = arith.constant 2 : index
    %c0_37 = arith.constant 0 : index
    %c0_38 = arith.constant 0 : index
    %42 = vector.load %arg4[%c2_36, %c0_37, %c0_38] : memref<5x96x256xbf16, #tpu.memory_space<vmem>>, vector<1x96x256xbf16>
    %43 = vector.shape_cast %42 : vector<1x96x256xbf16> to vector<96x256xbf16>
    %cst_39 = arith.constant dense<0.000000e+00> : vector<14x256xf32>
    %44 = tpu.matmul %37, %43, %cst_39 {dimension_numbers = #tpu.dot_dimension_numbers<[1], [0], [0], [1], [0, 0, 1, 1], [], []>} : vector<14x96xbf16>, vector<96x256xbf16>, vector<14x256xf32> -> vector<14x256xf32>
    %45 = arith.addf %27, %44 : vector<14x256xf32>
    %c1_40 = arith.constant 1 : index
    %c0_41 = arith.constant 0 : index
    %c0_42 = arith.constant 0 : index
    %46 = vector.load %arg3[%c1_40, %c0_41, %c0_42] : memref<5x96x256xbf16, #tpu.memory_space<vmem>>, vector<1x96x256xbf16>
    %47 = vector.shape_cast %46 : vector<1x96x256xbf16> to vector<96x256xbf16>
    %cst_43 = arith.constant dense<0.000000e+00> : vector<14x256xf32>
    %48 = tpu.matmul %37, %47, %cst_43 {dimension_numbers = #tpu.dot_dimension_numbers<[1], [0], [0], [1], [0, 0, 1, 1], [], []>} : vector<14x96xbf16>, vector<96x256xbf16>, vector<14x256xf32> -> vector<14x256xf32>
    %49 = arith.addf %31, %48 : vector<14x256xf32>
    %c1_44 = arith.constant 1 : index
    %c0_45 = arith.constant 0 : index
    %c0_46 = arith.constant 0 : index
    %50 = vector.load %arg4[%c1_44, %c0_45, %c0_46] : memref<5x96x256xbf16, #tpu.memory_space<vmem>>, vector<1x96x256xbf16>
    %51 = vector.shape_cast %50 : vector<1x96x256xbf16> to vector<96x256xbf16>
    %cst_47 = arith.constant dense<0.000000e+00> : vector<14x256xf32>
    %52 = tpu.matmul %37, %51, %cst_47 {dimension_numbers = #tpu.dot_dimension_numbers<[1], [0], [0], [1], [0, 0, 1, 1], [], []>} : vector<14x96xbf16>, vector<96x256xbf16>, vector<14x256xf32> -> vector<14x256xf32>
    %53 = arith.addf %35, %52 : vector<14x256xf32>
    %54 = vector.extract_strided_slice %3 {offsets = [1, 0, 0], sizes = [14, 1, 96], strides = [1, 1, 1]} : vector<16x1x96xbf16> to vector<14x1x96xbf16>
    %55 = vector.shape_cast %54 : vector<14x1x96xbf16> to vector<14x96xbf16>
    %c3 = arith.constant 3 : index
    %c0_48 = arith.constant 0 : index
    %c0_49 = arith.constant 0 : index
    %56 = vector.load %arg3[%c3, %c0_48, %c0_49] : memref<5x96x256xbf16, #tpu.memory_space<vmem>>, vector<1x96x256xbf16>
    %57 = vector.shape_cast %56 : vector<1x96x256xbf16> to vector<96x256xbf16>
    %cst_50 = arith.constant dense<0.000000e+00> : vector<14x256xf32>
    %58 = tpu.matmul %55, %57, %cst_50 {dimension_numbers = #tpu.dot_dimension_numbers<[1], [0], [0], [1], [0, 0, 1, 1], [], []>} : vector<14x96xbf16>, vector<96x256xbf16>, vector<14x256xf32> -> vector<14x256xf32>
    %59 = arith.addf %41, %58 : vector<14x256xf32>
    %c3_51 = arith.constant 3 : index
    %c0_52 = arith.constant 0 : index
    %c0_53 = arith.constant 0 : index
    %60 = vector.load %arg4[%c3_51, %c0_52, %c0_53] : memref<5x96x256xbf16, #tpu.memory_space<vmem>>, vector<1x96x256xbf16>
    %61 = vector.shape_cast %60 : vector<1x96x256xbf16> to vector<96x256xbf16>
    %cst_54 = arith.constant dense<0.000000e+00> : vector<14x256xf32>
    %62 = tpu.matmul %55, %61, %cst_54 {dimension_numbers = #tpu.dot_dimension_numbers<[1], [0], [0], [1], [0, 0, 1, 1], [], []>} : vector<14x96xbf16>, vector<96x256xbf16>, vector<14x256xf32> -> vector<14x256xf32>
    %63 = arith.addf %45, %62 : vector<14x256xf32>
    %c2_55 = arith.constant 2 : index
    %c0_56 = arith.constant 0 : index
    %c0_57 = arith.constant 0 : index
    %64 = vector.load %arg3[%c2_55, %c0_56, %c0_57] : memref<5x96x256xbf16, #tpu.memory_space<vmem>>, vector<1x96x256xbf16>
    %65 = vector.shape_cast %64 : vector<1x96x256xbf16> to vector<96x256xbf16>
    %cst_58 = arith.constant dense<0.000000e+00> : vector<14x256xf32>
    %66 = tpu.matmul %55, %65, %cst_58 {dimension_numbers = #tpu.dot_dimension_numbers<[1], [0], [0], [1], [0, 0, 1, 1], [], []>} : vector<14x96xbf16>, vector<96x256xbf16>, vector<14x256xf32> -> vector<14x256xf32>
    %67 = arith.addf %49, %66 : vector<14x256xf32>
    %c2_59 = arith.constant 2 : index
    %c0_60 = arith.constant 0 : index
    %c0_61 = arith.constant 0 : index
    %68 = vector.load %arg4[%c2_59, %c0_60, %c0_61] : memref<5x96x256xbf16, #tpu.memory_space<vmem>>, vector<1x96x256xbf16>
    %69 = vector.shape_cast %68 : vector<1x96x256xbf16> to vector<96x256xbf16>
    %cst_62 = arith.constant dense<0.000000e+00> : vector<14x256xf32>
    %70 = tpu.matmul %55, %69, %cst_62 {dimension_numbers = #tpu.dot_dimension_numbers<[1], [0], [0], [1], [0, 0, 1, 1], [], []>} : vector<14x96xbf16>, vector<96x256xbf16>, vector<14x256xf32> -> vector<14x256xf32>
    %71 = arith.addf %53, %70 : vector<14x256xf32>
    %72 = vector.extract_strided_slice %1 {offsets = [2, 0, 0], sizes = [14, 1, 96], strides = [1, 1, 1]} : vector<16x1x96xbf16> to vector<14x1x96xbf16>
    %73 = vector.shape_cast %72 : vector<14x1x96xbf16> to vector<14x96xbf16>
    %c4 = arith.constant 4 : index
    %c0_63 = arith.constant 0 : index
    %c0_64 = arith.constant 0 : index
    %74 = vector.load %arg3[%c4, %c0_63, %c0_64] : memref<5x96x256xbf16, #tpu.memory_space<vmem>>, vector<1x96x256xbf16>
    %75 = vector.shape_cast %74 : vector<1x96x256xbf16> to vector<96x256xbf16>
    %cst_65 = arith.constant dense<0.000000e+00> : vector<14x256xf32>
    %76 = tpu.matmul %73, %75, %cst_65 {dimension_numbers = #tpu.dot_dimension_numbers<[1], [0], [0], [1], [0, 0, 1, 1], [], []>} : vector<14x96xbf16>, vector<96x256xbf16>, vector<14x256xf32> -> vector<14x256xf32>
    %77 = arith.addf %59, %76 : vector<14x256xf32>
    %c4_66 = arith.constant 4 : index
    %c0_67 = arith.constant 0 : index
    %c0_68 = arith.constant 0 : index
    %78 = vector.load %arg4[%c4_66, %c0_67, %c0_68] : memref<5x96x256xbf16, #tpu.memory_space<vmem>>, vector<1x96x256xbf16>
    %79 = vector.shape_cast %78 : vector<1x96x256xbf16> to vector<96x256xbf16>
    %cst_69 = arith.constant dense<0.000000e+00> : vector<14x256xf32>
    %80 = tpu.matmul %73, %79, %cst_69 {dimension_numbers = #tpu.dot_dimension_numbers<[1], [0], [0], [1], [0, 0, 1, 1], [], []>} : vector<14x96xbf16>, vector<96x256xbf16>, vector<14x256xf32> -> vector<14x256xf32>
    %81 = arith.addf %63, %80 : vector<14x256xf32>
    %c3_70 = arith.constant 3 : index
    %c0_71 = arith.constant 0 : index
    %c0_72 = arith.constant 0 : index
    %82 = vector.load %arg3[%c3_70, %c0_71, %c0_72] : memref<5x96x256xbf16, #tpu.memory_space<vmem>>, vector<1x96x256xbf16>
    %83 = vector.shape_cast %82 : vector<1x96x256xbf16> to vector<96x256xbf16>
    %cst_73 = arith.constant dense<0.000000e+00> : vector<14x256xf32>
    %84 = tpu.matmul %73, %83, %cst_73 {dimension_numbers = #tpu.dot_dimension_numbers<[1], [0], [0], [1], [0, 0, 1, 1], [], []>} : vector<14x96xbf16>, vector<96x256xbf16>, vector<14x256xf32> -> vector<14x256xf32>
    %85 = arith.addf %67, %84 : vector<14x256xf32>
    %c3_74 = arith.constant 3 : index
    %c0_75 = arith.constant 0 : index
    %c0_76 = arith.constant 0 : index
    %86 = vector.load %arg4[%c3_74, %c0_75, %c0_76] : memref<5x96x256xbf16, #tpu.memory_space<vmem>>, vector<1x96x256xbf16>
    %87 = vector.shape_cast %86 : vector<1x96x256xbf16> to vector<96x256xbf16>
    %cst_77 = arith.constant dense<0.000000e+00> : vector<14x256xf32>
    %88 = tpu.matmul %73, %87, %cst_77 {dimension_numbers = #tpu.dot_dimension_numbers<[1], [0], [0], [1], [0, 0, 1, 1], [], []>} : vector<14x96xbf16>, vector<96x256xbf16>, vector<14x256xf32> -> vector<14x256xf32>
    %89 = arith.addf %71, %88 : vector<14x256xf32>
    %90 = vector.extract_strided_slice %3 {offsets = [2, 0, 0], sizes = [14, 1, 96], strides = [1, 1, 1]} : vector<16x1x96xbf16> to vector<14x1x96xbf16>
    %91 = vector.shape_cast %90 : vector<14x1x96xbf16> to vector<14x96xbf16>
    %c4_78 = arith.constant 4 : index
    %c0_79 = arith.constant 0 : index
    %c0_80 = arith.constant 0 : index
    %92 = vector.load %arg3[%c4_78, %c0_79, %c0_80] : memref<5x96x256xbf16, #tpu.memory_space<vmem>>, vector<1x96x256xbf16>
    %93 = vector.shape_cast %92 : vector<1x96x256xbf16> to vector<96x256xbf16>
    %cst_81 = arith.constant dense<0.000000e+00> : vector<14x256xf32>
    %94 = tpu.matmul %91, %93, %cst_81 {dimension_numbers = #tpu.dot_dimension_numbers<[1], [0], [0], [1], [0, 0, 1, 1], [], []>} : vector<14x96xbf16>, vector<96x256xbf16>, vector<14x256xf32> -> vector<14x256xf32>
    %95 = arith.addf %85, %94 : vector<14x256xf32>
    %c4_82 = arith.constant 4 : index
    %c0_83 = arith.constant 0 : index
    %c0_84 = arith.constant 0 : index
    %96 = vector.load %arg4[%c4_82, %c0_83, %c0_84] : memref<5x96x256xbf16, #tpu.memory_space<vmem>>, vector<1x96x256xbf16>
    %97 = vector.shape_cast %96 : vector<1x96x256xbf16> to vector<96x256xbf16>
    %cst_85 = arith.constant dense<0.000000e+00> : vector<14x256xf32>
    %98 = tpu.matmul %91, %97, %cst_85 {dimension_numbers = #tpu.dot_dimension_numbers<[1], [0], [0], [1], [0, 0, 1, 1], [], []>} : vector<14x96xbf16>, vector<96x256xbf16>, vector<14x256xf32> -> vector<14x256xf32>
    %99 = arith.addf %89, %98 : vector<14x256xf32>
    %100 = arith.maximumf %77, %81 : vector<14x256xf32>
    %101 = arith.maximumf %95, %99 : vector<14x256xf32>
    %102 = arith.maximumf %100, %101 : vector<14x256xf32>
    %c0_86 = arith.constant 0 : index
    %c0_87 = arith.constant 0 : index
    %103 = vector.load %arg5[%c0_86, %c0_87] : memref<1x256xf32, #tpu.memory_space<vmem>>, vector<1x256xf32>
    %104 = vector.broadcast %103 : vector<1x256xf32> to vector<14x256xf32>
    %105 = arith.addf %102, %104 : vector<14x256xf32>
    %cst_88 = arith.constant 0.000000e+00 : f32
    %106 = vector.broadcast %cst_88 : f32 to vector<14x256xf32>
    %107 = arith.cmpf oge, %105, %106 : vector<14x256xf32>
    %cst_89 = arith.constant 0.00999999977 : f32
    %108 = vector.broadcast %cst_89 : f32 to vector<14x256xf32>
    %109 = arith.mulf %108, %105 : vector<14x256xf32>
    %110 = arith.select %107, %105, %109 : vector<14x256xi1>, vector<14x256xf32>
    %111 = vector.shape_cast %110 : vector<14x256xf32> to vector<14x1x256xf32>
    %112 = arith.truncf %111 : vector<14x1x256xf32> to vector<14x1x256xbf16>
    %cst_90 = arith.constant 0.000000e+00 : bf16
    %113 = vector.broadcast %cst_90 : bf16 to vector<1x1x256xbf16>
    %114 = vector.extract_strided_slice %112 {offsets = [0, 0, 0], sizes = [1, 1, 256], strides = [1, 1, 1]} : vector<14x1x256xbf16> to vector<1x1x256xbf16>
    %115 = vector.extract_strided_slice %112 {offsets = [1, 0, 0], sizes = [1, 1, 256], strides = [1, 1, 1]} : vector<14x1x256xbf16> to vector<1x1x256xbf16>
    %116 = vector.extract_strided_slice %112 {offsets = [2, 0, 0], sizes = [1, 1, 256], strides = [1, 1, 1]} : vector<14x1x256xbf16> to vector<1x1x256xbf16>
    %117 = vector.extract_strided_slice %112 {offsets = [3, 0, 0], sizes = [1, 1, 256], strides = [1, 1, 1]} : vector<14x1x256xbf16> to vector<1x1x256xbf16>
    %118 = vector.extract_strided_slice %112 {offsets = [4, 0, 0], sizes = [1, 1, 256], strides = [1, 1, 1]} : vector<14x1x256xbf16> to vector<1x1x256xbf16>
    %119 = vector.extract_strided_slice %112 {offsets = [5, 0, 0], sizes = [1, 1, 256], strides = [1, 1, 1]} : vector<14x1x256xbf16> to vector<1x1x256xbf16>
    %120 = vector.extract_strided_slice %112 {offsets = [6, 0, 0], sizes = [1, 1, 256], strides = [1, 1, 1]} : vector<14x1x256xbf16> to vector<1x1x256xbf16>
    %121 = vector.extract_strided_slice %112 {offsets = [7, 0, 0], sizes = [1, 1, 256], strides = [1, 1, 1]} : vector<14x1x256xbf16> to vector<1x1x256xbf16>
    %122 = vector.extract_strided_slice %112 {offsets = [8, 0, 0], sizes = [1, 1, 256], strides = [1, 1, 1]} : vector<14x1x256xbf16> to vector<1x1x256xbf16>
    %123 = vector.extract_strided_slice %112 {offsets = [9, 0, 0], sizes = [1, 1, 256], strides = [1, 1, 1]} : vector<14x1x256xbf16> to vector<1x1x256xbf16>
    %124 = vector.extract_strided_slice %112 {offsets = [10, 0, 0], sizes = [1, 1, 256], strides = [1, 1, 1]} : vector<14x1x256xbf16> to vector<1x1x256xbf16>
    %125 = vector.extract_strided_slice %112 {offsets = [11, 0, 0], sizes = [1, 1, 256], strides = [1, 1, 1]} : vector<14x1x256xbf16> to vector<1x1x256xbf16>
    %126 = vector.extract_strided_slice %112 {offsets = [12, 0, 0], sizes = [1, 1, 256], strides = [1, 1, 1]} : vector<14x1x256xbf16> to vector<1x1x256xbf16>
    %127 = vector.extract_strided_slice %112 {offsets = [13, 0, 0], sizes = [1, 1, 256], strides = [1, 1, 1]} : vector<14x1x256xbf16> to vector<1x1x256xbf16>
    %128 = tpu.concatenate %113, %115, %117, %119, %121, %123, %125, %127 in 0 : vector<1x1x256xbf16>, vector<1x1x256xbf16>, vector<1x1x256xbf16>, vector<1x1x256xbf16>, vector<1x1x256xbf16>, vector<1x1x256xbf16>, vector<1x1x256xbf16>, vector<1x1x256xbf16> -> vector<8x1x256xbf16>
    %129 = tpu.concatenate %114, %116, %118, %120, %122, %124, %126, %113 in 0 : vector<1x1x256xbf16>, vector<1x1x256xbf16>, vector<1x1x256xbf16>, vector<1x1x256xbf16>, vector<1x1x256xbf16>, vector<1x1x256xbf16>, vector<1x1x256xbf16>, vector<1x1x256xbf16> -> vector<8x1x256xbf16>
    %cst_91 = arith.constant 0.000000e+00 : f32
    %130 = vector.broadcast %cst_91 : f32 to vector<6x256xf32>
    %cst_92 = arith.constant 0.000000e+00 : f32
    %131 = vector.broadcast %cst_92 : f32 to vector<6x256xf32>
    %cst_93 = arith.constant 0.000000e+00 : f32
    %132 = vector.broadcast %cst_93 : f32 to vector<6x256xf32>
    %cst_94 = arith.constant 0.000000e+00 : f32
    %133 = vector.broadcast %cst_94 : f32 to vector<6x256xf32>
    %134 = vector.extract_strided_slice %128 {offsets = [0, 0, 0], sizes = [6, 1, 256], strides = [1, 1, 1]} : vector<8x1x256xbf16> to vector<6x1x256xbf16>
    %135 = vector.shape_cast %134 : vector<6x1x256xbf16> to vector<6x256xbf16>
    %c0_95 = arith.constant 0 : index
    %c0_96 = arith.constant 0 : index
    %c0_97 = arith.constant 0 : index
    %136 = vector.load %arg6[%c0_95, %c0_96, %c0_97] : memref<5x256x256xbf16, #tpu.memory_space<vmem>>, vector<1x256x256xbf16>
    %137 = vector.shape_cast %136 : vector<1x256x256xbf16> to vector<256x256xbf16>
    %cst_98 = arith.constant dense<0.000000e+00> : vector<6x256xf32>
    %138 = tpu.matmul %135, %137, %cst_98 {dimension_numbers = #tpu.dot_dimension_numbers<[1], [0], [0], [1], [0, 0, 1, 1], [], []>} : vector<6x256xbf16>, vector<256x256xbf16>, vector<6x256xf32> -> vector<6x256xf32>
    %139 = arith.addf %130, %138 : vector<6x256xf32>
    %c0_99 = arith.constant 0 : index
    %c0_100 = arith.constant 0 : index
    %c0_101 = arith.constant 0 : index
    %140 = vector.load %arg7[%c0_99, %c0_100, %c0_101] : memref<5x256x256xbf16, #tpu.memory_space<vmem>>, vector<1x256x256xbf16>
    %141 = vector.shape_cast %140 : vector<1x256x256xbf16> to vector<256x256xbf16>
    %cst_102 = arith.constant dense<0.000000e+00> : vector<6x256xf32>
    %142 = tpu.matmul %135, %141, %cst_102 {dimension_numbers = #tpu.dot_dimension_numbers<[1], [0], [0], [1], [0, 0, 1, 1], [], []>} : vector<6x256xbf16>, vector<256x256xbf16>, vector<6x256xf32> -> vector<6x256xf32>
    %143 = arith.addf %131, %142 : vector<6x256xf32>
    %144 = vector.extract_strided_slice %129 {offsets = [0, 0, 0], sizes = [6, 1, 256], strides = [1, 1, 1]} : vector<8x1x256xbf16> to vector<6x1x256xbf16>
    %145 = vector.shape_cast %144 : vector<6x1x256xbf16> to vector<6x256xbf16>
    %c1_103 = arith.constant 1 : index
    %c0_104 = arith.constant 0 : index
    %c0_105 = arith.constant 0 : index
    %146 = vector.load %arg6[%c1_103, %c0_104, %c0_105] : memref<5x256x256xbf16, #tpu.memory_space<vmem>>, vector<1x256x256xbf16>
    %147 = vector.shape_cast %146 : vector<1x256x256xbf16> to vector<256x256xbf16>
    %cst_106 = arith.constant dense<0.000000e+00> : vector<6x256xf32>
    %148 = tpu.matmul %145, %147, %cst_106 {dimension_numbers = #tpu.dot_dimension_numbers<[1], [0], [0], [1], [0, 0, 1, 1], [], []>} : vector<6x256xbf16>, vector<256x256xbf16>, vector<6x256xf32> -> vector<6x256xf32>
    %149 = arith.addf %139, %148 : vector<6x256xf32>
    %c1_107 = arith.constant 1 : index
    %c0_108 = arith.constant 0 : index
    %c0_109 = arith.constant 0 : index
    %150 = vector.load %arg7[%c1_107, %c0_108, %c0_109] : memref<5x256x256xbf16, #tpu.memory_space<vmem>>, vector<1x256x256xbf16>
    %151 = vector.shape_cast %150 : vector<1x256x256xbf16> to vector<256x256xbf16>
    %cst_110 = arith.constant dense<0.000000e+00> : vector<6x256xf32>
    %152 = tpu.matmul %145, %151, %cst_110 {dimension_numbers = #tpu.dot_dimension_numbers<[1], [0], [0], [1], [0, 0, 1, 1], [], []>} : vector<6x256xbf16>, vector<256x256xbf16>, vector<6x256xf32> -> vector<6x256xf32>
    %153 = arith.addf %143, %152 : vector<6x256xf32>
    %c0_111 = arith.constant 0 : index
    %c0_112 = arith.constant 0 : index
    %c0_113 = arith.constant 0 : index
    %154 = vector.load %arg6[%c0_111, %c0_112, %c0_113] : memref<5x256x256xbf16, #tpu.memory_space<vmem>>, vector<1x256x256xbf16>
    %155 = vector.shape_cast %154 : vector<1x256x256xbf16> to vector<256x256xbf16>
    %cst_114 = arith.constant dense<0.000000e+00> : vector<6x256xf32>
    %156 = tpu.matmul %145, %155, %cst_114 {dimension_numbers = #tpu.dot_dimension_numbers<[1], [0], [0], [1], [0, 0, 1, 1], [], []>} : vector<6x256xbf16>, vector<256x256xbf16>, vector<6x256xf32> -> vector<6x256xf32>
    %157 = arith.addf %132, %156 : vector<6x256xf32>
    %c0_115 = arith.constant 0 : index
    %c0_116 = arith.constant 0 : index
    %c0_117 = arith.constant 0 : index
    %158 = vector.load %arg7[%c0_115, %c0_116, %c0_117] : memref<5x256x256xbf16, #tpu.memory_space<vmem>>, vector<1x256x256xbf16>
    %159 = vector.shape_cast %158 : vector<1x256x256xbf16> to vector<256x256xbf16>
    %cst_118 = arith.constant dense<0.000000e+00> : vector<6x256xf32>
    %160 = tpu.matmul %145, %159, %cst_118 {dimension_numbers = #tpu.dot_dimension_numbers<[1], [0], [0], [1], [0, 0, 1, 1], [], []>} : vector<6x256xbf16>, vector<256x256xbf16>, vector<6x256xf32> -> vector<6x256xf32>
    %161 = arith.addf %133, %160 : vector<6x256xf32>
    %162 = vector.extract_strided_slice %128 {offsets = [1, 0, 0], sizes = [6, 1, 256], strides = [1, 1, 1]} : vector<8x1x256xbf16> to vector<6x1x256xbf16>
    %163 = vector.shape_cast %162 : vector<6x1x256xbf16> to vector<6x256xbf16>
    %c2_119 = arith.constant 2 : index
    %c0_120 = arith.constant 0 : index
    %c0_121 = arith.constant 0 : index
    %164 = vector.load %arg6[%c2_119, %c0_120, %c0_121] : memref<5x256x256xbf16, #tpu.memory_space<vmem>>, vector<1x256x256xbf16>
    %165 = vector.shape_cast %164 : vector<1x256x256xbf16> to vector<256x256xbf16>
    %cst_122 = arith.constant dense<0.000000e+00> : vector<6x256xf32>
    %166 = tpu.matmul %163, %165, %cst_122 {dimension_numbers = #tpu.dot_dimension_numbers<[1], [0], [0], [1], [0, 0, 1, 1], [], []>} : vector<6x256xbf16>, vector<256x256xbf16>, vector<6x256xf32> -> vector<6x256xf32>
    %167 = arith.addf %149, %166 : vector<6x256xf32>
    %c2_123 = arith.constant 2 : index
    %c0_124 = arith.constant 0 : index
    %c0_125 = arith.constant 0 : index
    %168 = vector.load %arg7[%c2_123, %c0_124, %c0_125] : memref<5x256x256xbf16, #tpu.memory_space<vmem>>, vector<1x256x256xbf16>
    %169 = vector.shape_cast %168 : vector<1x256x256xbf16> to vector<256x256xbf16>
    %cst_126 = arith.constant dense<0.000000e+00> : vector<6x256xf32>
    %170 = tpu.matmul %163, %169, %cst_126 {dimension_numbers = #tpu.dot_dimension_numbers<[1], [0], [0], [1], [0, 0, 1, 1], [], []>} : vector<6x256xbf16>, vector<256x256xbf16>, vector<6x256xf32> -> vector<6x256xf32>
    %171 = arith.addf %153, %170 : vector<6x256xf32>
    %c1_127 = arith.constant 1 : index
    %c0_128 = arith.constant 0 : index
    %c0_129 = arith.constant 0 : index
    %172 = vector.load %arg6[%c1_127, %c0_128, %c0_129] : memref<5x256x256xbf16, #tpu.memory_space<vmem>>, vector<1x256x256xbf16>
    %173 = vector.shape_cast %172 : vector<1x256x256xbf16> to vector<256x256xbf16>
    %cst_130 = arith.constant dense<0.000000e+00> : vector<6x256xf32>
    %174 = tpu.matmul %163, %173, %cst_130 {dimension_numbers = #tpu.dot_dimension_numbers<[1], [0], [0], [1], [0, 0, 1, 1], [], []>} : vector<6x256xbf16>, vector<256x256xbf16>, vector<6x256xf32> -> vector<6x256xf32>
    %175 = arith.addf %157, %174 : vector<6x256xf32>
    %c1_131 = arith.constant 1 : index
    %c0_132 = arith.constant 0 : index
    %c0_133 = arith.constant 0 : index
    %176 = vector.load %arg7[%c1_131, %c0_132, %c0_133] : memref<5x256x256xbf16, #tpu.memory_space<vmem>>, vector<1x256x256xbf16>
    %177 = vector.shape_cast %176 : vector<1x256x256xbf16> to vector<256x256xbf16>
    %cst_134 = arith.constant dense<0.000000e+00> : vector<6x256xf32>
    %178 = tpu.matmul %163, %177, %cst_134 {dimension_numbers = #tpu.dot_dimension_numbers<[1], [0], [0], [1], [0, 0, 1, 1], [], []>} : vector<6x256xbf16>, vector<256x256xbf16>, vector<6x256xf32> -> vector<6x256xf32>
    %179 = arith.addf %161, %178 : vector<6x256xf32>
    %180 = vector.extract_strided_slice %129 {offsets = [1, 0, 0], sizes = [6, 1, 256], strides = [1, 1, 1]} : vector<8x1x256xbf16> to vector<6x1x256xbf16>
    %181 = vector.shape_cast %180 : vector<6x1x256xbf16> to vector<6x256xbf16>
    %c3_135 = arith.constant 3 : index
    %c0_136 = arith.constant 0 : index
    %c0_137 = arith.constant 0 : index
    %182 = vector.load %arg6[%c3_135, %c0_136, %c0_137] : memref<5x256x256xbf16, #tpu.memory_space<vmem>>, vector<1x256x256xbf16>
    %183 = vector.shape_cast %182 : vector<1x256x256xbf16> to vector<256x256xbf16>
    %cst_138 = arith.constant dense<0.000000e+00> : vector<6x256xf32>
    %184 = tpu.matmul %181, %183, %cst_138 {dimension_numbers = #tpu.dot_dimension_numbers<[1], [0], [0], [1], [0, 0, 1, 1], [], []>} : vector<6x256xbf16>, vector<256x256xbf16>, vector<6x256xf32> -> vector<6x256xf32>
    %185 = arith.addf %167, %184 : vector<6x256xf32>
    %c3_139 = arith.constant 3 : index
    %c0_140 = arith.constant 0 : index
    %c0_141 = arith.constant 0 : index
    %186 = vector.load %arg7[%c3_139, %c0_140, %c0_141] : memref<5x256x256xbf16, #tpu.memory_space<vmem>>, vector<1x256x256xbf16>
    %187 = vector.shape_cast %186 : vector<1x256x256xbf16> to vector<256x256xbf16>
    %cst_142 = arith.constant dense<0.000000e+00> : vector<6x256xf32>
    %188 = tpu.matmul %181, %187, %cst_142 {dimension_numbers = #tpu.dot_dimension_numbers<[1], [0], [0], [1], [0, 0, 1, 1], [], []>} : vector<6x256xbf16>, vector<256x256xbf16>, vector<6x256xf32> -> vector<6x256xf32>
    %189 = arith.addf %171, %188 : vector<6x256xf32>
    %c2_143 = arith.constant 2 : index
    %c0_144 = arith.constant 0 : index
    %c0_145 = arith.constant 0 : index
    %190 = vector.load %arg6[%c2_143, %c0_144, %c0_145] : memref<5x256x256xbf16, #tpu.memory_space<vmem>>, vector<1x256x256xbf16>
    %191 = vector.shape_cast %190 : vector<1x256x256xbf16> to vector<256x256xbf16>
    %cst_146 = arith.constant dense<0.000000e+00> : vector<6x256xf32>
    %192 = tpu.matmul %181, %191, %cst_146 {dimension_numbers = #tpu.dot_dimension_numbers<[1], [0], [0], [1], [0, 0, 1, 1], [], []>} : vector<6x256xbf16>, vector<256x256xbf16>, vector<6x256xf32> -> vector<6x256xf32>
    %193 = arith.addf %175, %192 : vector<6x256xf32>
    %c2_147 = arith.constant 2 : index
    %c0_148 = arith.constant 0 : index
    %c0_149 = arith.constant 0 : index
    %194 = vector.load %arg7[%c2_147, %c0_148, %c0_149] : memref<5x256x256xbf16, #tpu.memory_space<vmem>>, vector<1x256x256xbf16>
    %195 = vector.shape_cast %194 : vector<1x256x256xbf16> to vector<256x256xbf16>
    %cst_150 = arith.constant dense<0.000000e+00> : vector<6x256xf32>
    %196 = tpu.matmul %181, %195, %cst_150 {dimension_numbers = #tpu.dot_dimension_numbers<[1], [0], [0], [1], [0, 0, 1, 1], [], []>} : vector<6x256xbf16>, vector<256x256xbf16>, vector<6x256xf32> -> vector<6x256xf32>
    %197 = arith.addf %179, %196 : vector<6x256xf32>
    %198 = vector.extract_strided_slice %128 {offsets = [2, 0, 0], sizes = [6, 1, 256], strides = [1, 1, 1]} : vector<8x1x256xbf16> to vector<6x1x256xbf16>
    %199 = vector.shape_cast %198 : vector<6x1x256xbf16> to vector<6x256xbf16>
    %c4_151 = arith.constant 4 : index
    %c0_152 = arith.constant 0 : index
    %c0_153 = arith.constant 0 : index
    %200 = vector.load %arg6[%c4_151, %c0_152, %c0_153] : memref<5x256x256xbf16, #tpu.memory_space<vmem>>, vector<1x256x256xbf16>
    %201 = vector.shape_cast %200 : vector<1x256x256xbf16> to vector<256x256xbf16>
    %cst_154 = arith.constant dense<0.000000e+00> : vector<6x256xf32>
    %202 = tpu.matmul %199, %201, %cst_154 {dimension_numbers = #tpu.dot_dimension_numbers<[1], [0], [0], [1], [0, 0, 1, 1], [], []>} : vector<6x256xbf16>, vector<256x256xbf16>, vector<6x256xf32> -> vector<6x256xf32>
    %203 = arith.addf %185, %202 : vector<6x256xf32>
    %c4_155 = arith.constant 4 : index
    %c0_156 = arith.constant 0 : index
    %c0_157 = arith.constant 0 : index
    %204 = vector.load %arg7[%c4_155, %c0_156, %c0_157] : memref<5x256x256xbf16, #tpu.memory_space<vmem>>, vector<1x256x256xbf16>
    %205 = vector.shape_cast %204 : vector<1x256x256xbf16> to vector<256x256xbf16>
    %cst_158 = arith.constant dense<0.000000e+00> : vector<6x256xf32>
    %206 = tpu.matmul %199, %205, %cst_158 {dimension_numbers = #tpu.dot_dimension_numbers<[1], [0], [0], [1], [0, 0, 1, 1], [], []>} : vector<6x256xbf16>, vector<256x256xbf16>, vector<6x256xf32> -> vector<6x256xf32>
    %207 = arith.addf %189, %206 : vector<6x256xf32>
    %c3_159 = arith.constant 3 : index
    %c0_160 = arith.constant 0 : index
    %c0_161 = arith.constant 0 : index
    %208 = vector.load %arg6[%c3_159, %c0_160, %c0_161] : memref<5x256x256xbf16, #tpu.memory_space<vmem>>, vector<1x256x256xbf16>
    %209 = vector.shape_cast %208 : vector<1x256x256xbf16> to vector<256x256xbf16>
    %cst_162 = arith.constant dense<0.000000e+00> : vector<6x256xf32>
    %210 = tpu.matmul %199, %209, %cst_162 {dimension_numbers = #tpu.dot_dimension_numbers<[1], [0], [0], [1], [0, 0, 1, 1], [], []>} : vector<6x256xbf16>, vector<256x256xbf16>, vector<6x256xf32> -> vector<6x256xf32>
    %211 = arith.addf %193, %210 : vector<6x256xf32>
    %c3_163 = arith.constant 3 : index
    %c0_164 = arith.constant 0 : index
    %c0_165 = arith.constant 0 : index
    %212 = vector.load %arg7[%c3_163, %c0_164, %c0_165] : memref<5x256x256xbf16, #tpu.memory_space<vmem>>, vector<1x256x256xbf16>
    %213 = vector.shape_cast %212 : vector<1x256x256xbf16> to vector<256x256xbf16>
    %cst_166 = arith.constant dense<0.000000e+00> : vector<6x256xf32>
    %214 = tpu.matmul %199, %213, %cst_166 {dimension_numbers = #tpu.dot_dimension_numbers<[1], [0], [0], [1], [0, 0, 1, 1], [], []>} : vector<6x256xbf16>, vector<256x256xbf16>, vector<6x256xf32> -> vector<6x256xf32>
    %215 = arith.addf %197, %214 : vector<6x256xf32>
    %216 = vector.extract_strided_slice %129 {offsets = [2, 0, 0], sizes = [6, 1, 256], strides = [1, 1, 1]} : vector<8x1x256xbf16> to vector<6x1x256xbf16>
    %217 = vector.shape_cast %216 : vector<6x1x256xbf16> to vector<6x256xbf16>
    %c4_167 = arith.constant 4 : index
    %c0_168 = arith.constant 0 : index
    %c0_169 = arith.constant 0 : index
    %218 = vector.load %arg6[%c4_167, %c0_168, %c0_169] : memref<5x256x256xbf16, #tpu.memory_space<vmem>>, vector<1x256x256xbf16>
    %219 = vector.shape_cast %218 : vector<1x256x256xbf16> to vector<256x256xbf16>
    %cst_170 = arith.constant dense<0.000000e+00> : vector<6x256xf32>
    %220 = tpu.matmul %217, %219, %cst_170 {dimension_numbers = #tpu.dot_dimension_numbers<[1], [0], [0], [1], [0, 0, 1, 1], [], []>} : vector<6x256xbf16>, vector<256x256xbf16>, vector<6x256xf32> -> vector<6x256xf32>
    %221 = arith.addf %211, %220 : vector<6x256xf32>
    %c4_171 = arith.constant 4 : index
    %c0_172 = arith.constant 0 : index
    %c0_173 = arith.constant 0 : index
    %222 = vector.load %arg7[%c4_171, %c0_172, %c0_173] : memref<5x256x256xbf16, #tpu.memory_space<vmem>>, vector<1x256x256xbf16>
    %223 = vector.shape_cast %222 : vector<1x256x256xbf16> to vector<256x256xbf16>
    %cst_174 = arith.constant dense<0.000000e+00> : vector<6x256xf32>
    %224 = tpu.matmul %217, %223, %cst_174 {dimension_numbers = #tpu.dot_dimension_numbers<[1], [0], [0], [1], [0, 0, 1, 1], [], []>} : vector<6x256xbf16>, vector<256x256xbf16>, vector<6x256xf32> -> vector<6x256xf32>
    %225 = arith.addf %215, %224 : vector<6x256xf32>
    %226 = arith.maximumf %203, %207 : vector<6x256xf32>
    %227 = arith.maximumf %221, %225 : vector<6x256xf32>
    %228 = arith.maximumf %226, %227 : vector<6x256xf32>
    %c0_175 = arith.constant 0 : index
    %c0_176 = arith.constant 0 : index
    %229 = vector.load %arg8[%c0_175, %c0_176] : memref<1x256xf32, #tpu.memory_space<vmem>>, vector<1x256xf32>
    %230 = vector.broadcast %229 : vector<1x256xf32> to vector<6x256xf32>
    %231 = arith.addf %228, %230 : vector<6x256xf32>
    %cst_177 = arith.constant 0.000000e+00 : f32
    %232 = vector.broadcast %cst_177 : f32 to vector<6x256xf32>
    %233 = arith.cmpf oge, %231, %232 : vector<6x256xf32>
    %cst_178 = arith.constant 0.00999999977 : f32
    %234 = vector.broadcast %cst_178 : f32 to vector<6x256xf32>
    %235 = arith.mulf %234, %231 : vector<6x256xf32>
    %236 = arith.select %233, %231, %235 : vector<6x256xi1>, vector<6x256xf32>
    %237 = vector.shape_cast %236 : vector<6x256xf32> to vector<6x1x256xf32>
    %238 = arith.truncf %237 : vector<6x1x256xf32> to vector<6x1x256xbf16>
    %cst_179 = arith.constant 0.000000e+00 : bf16
    %239 = vector.broadcast %cst_179 : bf16 to vector<1x1x256xbf16>
    %240 = vector.extract_strided_slice %238 {offsets = [0, 0, 0], sizes = [1, 1, 256], strides = [1, 1, 1]} : vector<6x1x256xbf16> to vector<1x1x256xbf16>
    %241 = vector.extract_strided_slice %238 {offsets = [1, 0, 0], sizes = [1, 1, 256], strides = [1, 1, 1]} : vector<6x1x256xbf16> to vector<1x1x256xbf16>
    %242 = vector.extract_strided_slice %238 {offsets = [2, 0, 0], sizes = [1, 1, 256], strides = [1, 1, 1]} : vector<6x1x256xbf16> to vector<1x1x256xbf16>
    %243 = vector.extract_strided_slice %238 {offsets = [3, 0, 0], sizes = [1, 1, 256], strides = [1, 1, 1]} : vector<6x1x256xbf16> to vector<1x1x256xbf16>
    %244 = vector.extract_strided_slice %238 {offsets = [4, 0, 0], sizes = [1, 1, 256], strides = [1, 1, 1]} : vector<6x1x256xbf16> to vector<1x1x256xbf16>
    %245 = vector.extract_strided_slice %238 {offsets = [5, 0, 0], sizes = [1, 1, 256], strides = [1, 1, 1]} : vector<6x1x256xbf16> to vector<1x1x256xbf16>
    %246 = tpu.concatenate %239, %241, %243, %245 in 0 : vector<1x1x256xbf16>, vector<1x1x256xbf16>, vector<1x1x256xbf16>, vector<1x1x256xbf16> -> vector<4x1x256xbf16>
    %247 = tpu.concatenate %240, %242, %244, %239 in 0 : vector<1x1x256xbf16>, vector<1x1x256xbf16>, vector<1x1x256xbf16>, vector<1x1x256xbf16> -> vector<4x1x256xbf16>
    %cst_180 = arith.constant 0.000000e+00 : f32
    %248 = vector.broadcast %cst_180 : f32 to vector<3x256xf32>
    %cst_181 = arith.constant 0.000000e+00 : f32
    %249 = vector.broadcast %cst_181 : f32 to vector<3x256xf32>
    %cst_182 = arith.constant 0.000000e+00 : f32
    %250 = vector.broadcast %cst_182 : f32 to vector<3x256xf32>
    %cst_183 = arith.constant 0.000000e+00 : f32
    %251 = vector.broadcast %cst_183 : f32 to vector<3x256xf32>
    %252 = vector.extract_strided_slice %246 {offsets = [0, 0, 0], sizes = [3, 1, 256], strides = [1, 1, 1]} : vector<4x1x256xbf16> to vector<3x1x256xbf16>
    %253 = vector.shape_cast %252 : vector<3x1x256xbf16> to vector<3x256xbf16>
    %c0_184 = arith.constant 0 : index
    %c0_185 = arith.constant 0 : index
    %c0_186 = arith.constant 0 : index
    %254 = vector.load %arg9[%c0_184, %c0_185, %c0_186] : memref<3x256x256xbf16, #tpu.memory_space<vmem>>, vector<1x256x256xbf16>
    %255 = vector.shape_cast %254 : vector<1x256x256xbf16> to vector<256x256xbf16>
    %cst_187 = arith.constant dense<0.000000e+00> : vector<3x256xf32>
    %256 = tpu.matmul %253, %255, %cst_187 {dimension_numbers = #tpu.dot_dimension_numbers<[1], [0], [0], [1], [0, 0, 1, 1], [], []>} : vector<3x256xbf16>, vector<256x256xbf16>, vector<3x256xf32> -> vector<3x256xf32>
    %257 = arith.addf %248, %256 : vector<3x256xf32>
    %c0_188 = arith.constant 0 : index
    %c0_189 = arith.constant 0 : index
    %c0_190 = arith.constant 0 : index
    %258 = vector.load %arg10[%c0_188, %c0_189, %c0_190] : memref<3x256x256xbf16, #tpu.memory_space<vmem>>, vector<1x256x256xbf16>
    %259 = vector.shape_cast %258 : vector<1x256x256xbf16> to vector<256x256xbf16>
    %cst_191 = arith.constant dense<0.000000e+00> : vector<3x256xf32>
    %260 = tpu.matmul %253, %259, %cst_191 {dimension_numbers = #tpu.dot_dimension_numbers<[1], [0], [0], [1], [0, 0, 1, 1], [], []>} : vector<3x256xbf16>, vector<256x256xbf16>, vector<3x256xf32> -> vector<3x256xf32>
    %261 = arith.addf %249, %260 : vector<3x256xf32>
    %262 = vector.extract_strided_slice %247 {offsets = [0, 0, 0], sizes = [3, 1, 256], strides = [1, 1, 1]} : vector<4x1x256xbf16> to vector<3x1x256xbf16>
    %263 = vector.shape_cast %262 : vector<3x1x256xbf16> to vector<3x256xbf16>
    %c1_192 = arith.constant 1 : index
    %c0_193 = arith.constant 0 : index
    %c0_194 = arith.constant 0 : index
    %264 = vector.load %arg9[%c1_192, %c0_193, %c0_194] : memref<3x256x256xbf16, #tpu.memory_space<vmem>>, vector<1x256x256xbf16>
    %265 = vector.shape_cast %264 : vector<1x256x256xbf16> to vector<256x256xbf16>
    %cst_195 = arith.constant dense<0.000000e+00> : vector<3x256xf32>
    %266 = tpu.matmul %263, %265, %cst_195 {dimension_numbers = #tpu.dot_dimension_numbers<[1], [0], [0], [1], [0, 0, 1, 1], [], []>} : vector<3x256xbf16>, vector<256x256xbf16>, vector<3x256xf32> -> vector<3x256xf32>
    %267 = arith.addf %257, %266 : vector<3x256xf32>
    %c1_196 = arith.constant 1 : index
    %c0_197 = arith.constant 0 : index
    %c0_198 = arith.constant 0 : index
    %268 = vector.load %arg10[%c1_196, %c0_197, %c0_198] : memref<3x256x256xbf16, #tpu.memory_space<vmem>>, vector<1x256x256xbf16>
    %269 = vector.shape_cast %268 : vector<1x256x256xbf16> to vector<256x256xbf16>
    %cst_199 = arith.constant dense<0.000000e+00> : vector<3x256xf32>
    %270 = tpu.matmul %263, %269, %cst_199 {dimension_numbers = #tpu.dot_dimension_numbers<[1], [0], [0], [1], [0, 0, 1, 1], [], []>} : vector<3x256xbf16>, vector<256x256xbf16>, vector<3x256xf32> -> vector<3x256xf32>
    %271 = arith.addf %261, %270 : vector<3x256xf32>
    %c0_200 = arith.constant 0 : index
    %c0_201 = arith.constant 0 : index
    %c0_202 = arith.constant 0 : index
    %272 = vector.load %arg9[%c0_200, %c0_201, %c0_202] : memref<3x256x256xbf16, #tpu.memory_space<vmem>>, vector<1x256x256xbf16>
    %273 = vector.shape_cast %272 : vector<1x256x256xbf16> to vector<256x256xbf16>
    %cst_203 = arith.constant dense<0.000000e+00> : vector<3x256xf32>
    %274 = tpu.matmul %263, %273, %cst_203 {dimension_numbers = #tpu.dot_dimension_numbers<[1], [0], [0], [1], [0, 0, 1, 1], [], []>} : vector<3x256xbf16>, vector<256x256xbf16>, vector<3x256xf32> -> vector<3x256xf32>
    %275 = arith.addf %250, %274 : vector<3x256xf32>
    %c0_204 = arith.constant 0 : index
    %c0_205 = arith.constant 0 : index
    %c0_206 = arith.constant 0 : index
    %276 = vector.load %arg10[%c0_204, %c0_205, %c0_206] : memref<3x256x256xbf16, #tpu.memory_space<vmem>>, vector<1x256x256xbf16>
    %277 = vector.shape_cast %276 : vector<1x256x256xbf16> to vector<256x256xbf16>
    %cst_207 = arith.constant dense<0.000000e+00> : vector<3x256xf32>
    %278 = tpu.matmul %263, %277, %cst_207 {dimension_numbers = #tpu.dot_dimension_numbers<[1], [0], [0], [1], [0, 0, 1, 1], [], []>} : vector<3x256xbf16>, vector<256x256xbf16>, vector<3x256xf32> -> vector<3x256xf32>
    %279 = arith.addf %251, %278 : vector<3x256xf32>
    %280 = vector.extract_strided_slice %246 {offsets = [1, 0, 0], sizes = [3, 1, 256], strides = [1, 1, 1]} : vector<4x1x256xbf16> to vector<3x1x256xbf16>
    %281 = vector.shape_cast %280 : vector<3x1x256xbf16> to vector<3x256xbf16>
    %c2_208 = arith.constant 2 : index
    %c0_209 = arith.constant 0 : index
    %c0_210 = arith.constant 0 : index
    %282 = vector.load %arg9[%c2_208, %c0_209, %c0_210] : memref<3x256x256xbf16, #tpu.memory_space<vmem>>, vector<1x256x256xbf16>
    %283 = vector.shape_cast %282 : vector<1x256x256xbf16> to vector<256x256xbf16>
    %cst_211 = arith.constant dense<0.000000e+00> : vector<3x256xf32>
    %284 = tpu.matmul %281, %283, %cst_211 {dimension_numbers = #tpu.dot_dimension_numbers<[1], [0], [0], [1], [0, 0, 1, 1], [], []>} : vector<3x256xbf16>, vector<256x256xbf16>, vector<3x256xf32> -> vector<3x256xf32>
    %285 = arith.addf %267, %284 : vector<3x256xf32>
    %c2_212 = arith.constant 2 : index
    %c0_213 = arith.constant 0 : index
    %c0_214 = arith.constant 0 : index
    %286 = vector.load %arg10[%c2_212, %c0_213, %c0_214] : memref<3x256x256xbf16, #tpu.memory_space<vmem>>, vector<1x256x256xbf16>
    %287 = vector.shape_cast %286 : vector<1x256x256xbf16> to vector<256x256xbf16>
    %cst_215 = arith.constant dense<0.000000e+00> : vector<3x256xf32>
    %288 = tpu.matmul %281, %287, %cst_215 {dimension_numbers = #tpu.dot_dimension_numbers<[1], [0], [0], [1], [0, 0, 1, 1], [], []>} : vector<3x256xbf16>, vector<256x256xbf16>, vector<3x256xf32> -> vector<3x256xf32>
    %289 = arith.addf %271, %288 : vector<3x256xf32>
    %c1_216 = arith.constant 1 : index
    %c0_217 = arith.constant 0 : index
    %c0_218 = arith.constant 0 : index
    %290 = vector.load %arg9[%c1_216, %c0_217, %c0_218] : memref<3x256x256xbf16, #tpu.memory_space<vmem>>, vector<1x256x256xbf16>
    %291 = vector.shape_cast %290 : vector<1x256x256xbf16> to vector<256x256xbf16>
    %cst_219 = arith.constant dense<0.000000e+00> : vector<3x256xf32>
    %292 = tpu.matmul %281, %291, %cst_219 {dimension_numbers = #tpu.dot_dimension_numbers<[1], [0], [0], [1], [0, 0, 1, 1], [], []>} : vector<3x256xbf16>, vector<256x256xbf16>, vector<3x256xf32> -> vector<3x256xf32>
    %293 = arith.addf %275, %292 : vector<3x256xf32>
    %c1_220 = arith.constant 1 : index
    %c0_221 = arith.constant 0 : index
    %c0_222 = arith.constant 0 : index
    %294 = vector.load %arg10[%c1_220, %c0_221, %c0_222] : memref<3x256x256xbf16, #tpu.memory_space<vmem>>, vector<1x256x256xbf16>
    %295 = vector.shape_cast %294 : vector<1x256x256xbf16> to vector<256x256xbf16>
    %cst_223 = arith.constant dense<0.000000e+00> : vector<3x256xf32>
    %296 = tpu.matmul %281, %295, %cst_223 {dimension_numbers = #tpu.dot_dimension_numbers<[1], [0], [0], [1], [0, 0, 1, 1], [], []>} : vector<3x256xbf16>, vector<256x256xbf16>, vector<3x256xf32> -> vector<3x256xf32>
    %297 = arith.addf %279, %296 : vector<3x256xf32>
    %298 = vector.extract_strided_slice %247 {offsets = [1, 0, 0], sizes = [3, 1, 256], strides = [1, 1, 1]} : vector<4x1x256xbf16> to vector<3x1x256xbf16>
    %299 = vector.shape_cast %298 : vector<3x1x256xbf16> to vector<3x256xbf16>
    %c2_224 = arith.constant 2 : index
    %c0_225 = arith.constant 0 : index
    %c0_226 = arith.constant 0 : index
    %300 = vector.load %arg9[%c2_224, %c0_225, %c0_226] : memref<3x256x256xbf16, #tpu.memory_space<vmem>>, vector<1x256x256xbf16>
    %301 = vector.shape_cast %300 : vector<1x256x256xbf16> to vector<256x256xbf16>
    %cst_227 = arith.constant dense<0.000000e+00> : vector<3x256xf32>
    %302 = tpu.matmul %299, %301, %cst_227 {dimension_numbers = #tpu.dot_dimension_numbers<[1], [0], [0], [1], [0, 0, 1, 1], [], []>} : vector<3x256xbf16>, vector<256x256xbf16>, vector<3x256xf32> -> vector<3x256xf32>
    %303 = arith.addf %293, %302 : vector<3x256xf32>
    %c2_228 = arith.constant 2 : index
    %c0_229 = arith.constant 0 : index
    %c0_230 = arith.constant 0 : index
    %304 = vector.load %arg10[%c2_228, %c0_229, %c0_230] : memref<3x256x256xbf16, #tpu.memory_space<vmem>>, vector<1x256x256xbf16>
    %305 = vector.shape_cast %304 : vector<1x256x256xbf16> to vector<256x256xbf16>
    %cst_231 = arith.constant dense<0.000000e+00> : vector<3x256xf32>
    %306 = tpu.matmul %299, %305, %cst_231 {dimension_numbers = #tpu.dot_dimension_numbers<[1], [0], [0], [1], [0, 0, 1, 1], [], []>} : vector<3x256xbf16>, vector<256x256xbf16>, vector<3x256xf32> -> vector<3x256xf32>
    %307 = arith.addf %297, %306 : vector<3x256xf32>
    %308 = arith.maximumf %285, %289 : vector<3x256xf32>
    %309 = arith.maximumf %303, %307 : vector<3x256xf32>
    %310 = arith.maximumf %308, %309 : vector<3x256xf32>
    %c0_232 = arith.constant 0 : index
    %c0_233 = arith.constant 0 : index
    %311 = vector.load %arg11[%c0_232, %c0_233] : memref<1x256xf32, #tpu.memory_space<vmem>>, vector<1x256xf32>
    %312 = vector.broadcast %311 : vector<1x256xf32> to vector<3x256xf32>
    %313 = arith.addf %310, %312 : vector<3x256xf32>
    %cst_234 = arith.constant 0.000000e+00 : f32
    %314 = vector.broadcast %cst_234 : f32 to vector<3x256xf32>
    %315 = arith.cmpf oge, %313, %314 : vector<3x256xf32>
    %cst_235 = arith.constant 0.00999999977 : f32
    %316 = vector.broadcast %cst_235 : f32 to vector<3x256xf32>
    %317 = arith.mulf %316, %313 : vector<3x256xf32>
    %318 = arith.select %315, %313, %317 : vector<3x256xi1>, vector<3x256xf32>
    %319 = vector.shape_cast %318 : vector<3x256xf32> to vector<3x1x256xf32>
    %320 = arith.truncf %319 : vector<3x1x256xf32> to vector<3x1x256xbf16>
    %cst_236 = arith.constant 0.000000e+00 : f32
    %321 = vector.broadcast %cst_236 : f32 to vector<1x128xf32>
    %322 = vector.extract_strided_slice %320 {offsets = [0, 0, 0], sizes = [1, 1, 256], strides = [1, 1, 1]} : vector<3x1x256xbf16> to vector<1x1x256xbf16>
    %323 = vector.shape_cast %322 : vector<1x1x256xbf16> to vector<1x256xbf16>
    %c0_237 = arith.constant 0 : index
    %c0_238 = arith.constant 0 : index
    %c0_239 = arith.constant 0 : index
    %324 = vector.load %arg12[%c0_237, %c0_238, %c0_239] : memref<3x256x128xbf16, #tpu.memory_space<vmem>>, vector<1x256x128xbf16>
    %325 = vector.shape_cast %324 : vector<1x256x128xbf16> to vector<256x128xbf16>
    %cst_240 = arith.constant dense<0.000000e+00> : vector<1x128xf32>
    %326 = tpu.matmul %323, %325, %cst_240 {dimension_numbers = #tpu.dot_dimension_numbers<[1], [0], [0], [1], [0, 0, 1, 1], [], []>} : vector<1x256xbf16>, vector<256x128xbf16>, vector<1x128xf32> -> vector<1x128xf32>
    %327 = arith.addf %321, %326 : vector<1x128xf32>
    %328 = vector.extract_strided_slice %320 {offsets = [1, 0, 0], sizes = [1, 1, 256], strides = [1, 1, 1]} : vector<3x1x256xbf16> to vector<1x1x256xbf16>
    %329 = vector.shape_cast %328 : vector<1x1x256xbf16> to vector<1x256xbf16>
    %c1_241 = arith.constant 1 : index
    %c0_242 = arith.constant 0 : index
    %c0_243 = arith.constant 0 : index
    %330 = vector.load %arg12[%c1_241, %c0_242, %c0_243] : memref<3x256x128xbf16, #tpu.memory_space<vmem>>, vector<1x256x128xbf16>
    %331 = vector.shape_cast %330 : vector<1x256x128xbf16> to vector<256x128xbf16>
    %cst_244 = arith.constant dense<0.000000e+00> : vector<1x128xf32>
    %332 = tpu.matmul %329, %331, %cst_244 {dimension_numbers = #tpu.dot_dimension_numbers<[1], [0], [0], [1], [0, 0, 1, 1], [], []>} : vector<1x256xbf16>, vector<256x128xbf16>, vector<1x128xf32> -> vector<1x128xf32>
    %333 = arith.addf %327, %332 : vector<1x128xf32>
    %334 = vector.extract_strided_slice %320 {offsets = [2, 0, 0], sizes = [1, 1, 256], strides = [1, 1, 1]} : vector<3x1x256xbf16> to vector<1x1x256xbf16>
    %335 = vector.shape_cast %334 : vector<1x1x256xbf16> to vector<1x256xbf16>
    %c2_245 = arith.constant 2 : index
    %c0_246 = arith.constant 0 : index
    %c0_247 = arith.constant 0 : index
    %336 = vector.load %arg12[%c2_245, %c0_246, %c0_247] : memref<3x256x128xbf16, #tpu.memory_space<vmem>>, vector<1x256x128xbf16>
    %337 = vector.shape_cast %336 : vector<1x256x128xbf16> to vector<256x128xbf16>
    %cst_248 = arith.constant dense<0.000000e+00> : vector<1x128xf32>
    %338 = tpu.matmul %335, %337, %cst_248 {dimension_numbers = #tpu.dot_dimension_numbers<[1], [0], [0], [1], [0, 0, 1, 1], [], []>} : vector<1x256xbf16>, vector<256x128xbf16>, vector<1x128xf32> -> vector<1x128xf32>
    %339 = arith.addf %333, %338 : vector<1x128xf32>
    %c0_249 = arith.constant 0 : index
    %c0_250 = arith.constant 0 : index
    %340 = vector.load %arg13[%c0_249, %c0_250] : memref<1x128xf32, #tpu.memory_space<vmem>>, vector<1x128xf32>
    %341 = arith.addf %339, %340 : vector<1x128xf32>
    %cst_251 = arith.constant 0.000000e+00 : f32
    %342 = vector.broadcast %cst_251 : f32 to vector<1x128xf32>
    %343 = arith.cmpf oge, %341, %342 : vector<1x128xf32>
    %cst_252 = arith.constant 0.00999999977 : f32
    %344 = vector.broadcast %cst_252 : f32 to vector<1x128xf32>
    %345 = arith.mulf %344, %341 : vector<1x128xf32>
    %346 = arith.select %343, %341, %345 : vector<1x128xi1>, vector<1x128xf32>
    %347 = arith.truncf %346 : vector<1x128xf32> to vector<1x128xbf16>
    %c0_253 = arith.constant 0 : index
    %c0_254 = arith.constant 0 : index
    %348 = vector.load %arg14[%c0_253, %c0_254] : memref<128x10xbf16, #tpu.memory_space<vmem>>, vector<128x10xbf16>
    %cst_255 = arith.constant dense<0.000000e+00> : vector<1x10xf32>
    %349 = tpu.matmul %347, %348, %cst_255 {dimension_numbers = #tpu.dot_dimension_numbers<[1], [0], [0], [1], [0, 0, 1, 1], [], []>} : vector<1x128xbf16>, vector<128x10xbf16>, vector<1x10xf32> -> vector<1x10xf32>
    %c0_256 = arith.constant 0 : index
    %c0_257 = arith.constant 0 : index
    %350 = vector.load %arg15[%c0_256, %c0_257] : memref<1x10xf32, #tpu.memory_space<vmem>>, vector<1x10xf32>
    %351 = arith.addf %349, %350 : vector<1x10xf32>
    %352 = arith.mulf %351, %351 : vector<1x10xf32>
    %cst_258 = arith.constant dense<0.000000e+00> : vector<1xf32>
    %353 = vector.multi_reduction <add>, %352, %cst_258 [1] : vector<1x10xf32> to vector<1xf32>
    %354 = vector.shape_cast %353 : vector<1xf32> to vector<1x1xf32>
    %cst_259 = arith.constant 1.000000e-24 : f32
    %355 = vector.broadcast %cst_259 : f32 to vector<1x1xf32>
    %356 = arith.maximumf %354, %355 : vector<1x1xf32>
    %357 = math.rsqrt %356 : vector<1x1xf32>
    %358 = vector.broadcast %357 : vector<1x1xf32> to vector<1x10xf32>
    %359 = arith.mulf %351, %358 : vector<1x10xf32>
    %c0_260 = arith.constant 0 : index
    %c0_261 = arith.constant 0 : index
    %c0_262 = arith.constant 0 : index
    %360 = vector.load %arg18[%c0_260, %c0_261, %c0_262] : memref<1x1x10xf32, #tpu.memory_space<vmem>>, vector<1x1x10xf32>
    %361 = vector.shape_cast %360 : vector<1x1x10xf32> to vector<1x10xf32>
    %362 = vector.shape_cast %359 : vector<1x10xf32> to vector<1x1x10xf32>
    tpu.vector_store %arg18[%c0_260, %c0_261, %c0_262], %362 {strides = array<i32>} : memref<1x1x10xf32, #tpu.memory_space<vmem>>, vector<1x1x10xf32>,
    %363 = arith.truncf %359 : vector<1x10xf32> to vector<1x10xbf16>
    %c0_263 = arith.constant 0 : index
    %c0_264 = arith.constant 0 : index
    %364 = vector.load %arg16[%c0_263, %c0_264] : memref<10x10xbf16, #tpu.memory_space<vmem>>, vector<10x10xbf16>
    %cst_265 = arith.constant dense<0.000000e+00> : vector<1x10xf32>
    %365 = tpu.matmul %363, %364, %cst_265 {dimension_numbers = #tpu.dot_dimension_numbers<[1], [0], [0], [1], [0, 0, 1, 1], [], []>} : vector<1x10xbf16>, vector<10x10xbf16>, vector<1x10xf32> -> vector<1x10xf32>
    %c0_266 = arith.constant 0 : index
    %366 = memref.load %arg17[%c0_266] : memref<1xf32, #tpu.memory_space<smem>>
    %367 = vector.broadcast %366 : f32 to vector<1x10xf32>
    %368 = arith.mulf %365, %367 : vector<1x10xf32>
    %c0_267 = arith.constant 0 : index
    %c0_268 = arith.constant 0 : index
    %c0_269 = arith.constant 0 : index
    %369 = vector.load %arg19[%c0_267, %c0_268, %c0_269] : memref<1x1x10xf32, #tpu.memory_space<vmem>>, vector<1x1x10xf32>
    %370 = vector.shape_cast %369 : vector<1x1x10xf32> to vector<1x10xf32>
    %371 = vector.shape_cast %368 : vector<1x10xf32> to vector<1x1x10xf32>
    tpu.vector_store %arg19[%c0_267, %c0_268, %c0_269], %371 {strides = array<i32>} : memref<1x1x10xf32, #tpu.memory_space<vmem>>, vector<1x1x10xf32>,
    return
  }
  func.func @transform_0(%arg0: i32) -> (i32, i32, i32, i32) {
    %c0_i32 = arith.constant 0 : i32
    %c0_i32_0 = arith.constant 0 : i32
    %c0_i32_1 = arith.constant 0 : i32
    %c0_i32_2 = arith.constant 0 : i32
    return %arg0, %c0_i32, %c0_i32_0, %c0_i32_1 : i32, i32, i32, i32
  }
  func.func @transform_1(%arg0: i32) -> (i32, i32, i32, i32) {
    %c0_i32 = arith.constant 0 : i32
    %c0_i32_0 = arith.constant 0 : i32
    %c0_i32_1 = arith.constant 0 : i32
    %c0_i32_2 = arith.constant 0 : i32
    return %arg0, %c0_i32, %c0_i32_0, %c0_i32_1 : i32, i32, i32, i32
  }
  func.func @transform_2(%arg0: i32) -> (i32, i32, i32) {
    %c0_i32 = arith.constant 0 : i32
    %c0_i32_0 = arith.constant 0 : i32
    %c0_i32_1 = arith.constant 0 : i32
    %c0_i32_2 = arith.constant 0 : i32
    return %c0_i32, %c0_i32_0, %c0_i32_1 : i32, i32, i32
  }
  func.func @transform_3(%arg0: i32) -> (i32, i32, i32) {
    %c0_i32 = arith.constant 0 : i32
    %c0_i32_0 = arith.constant 0 : i32
    %c0_i32_1 = arith.constant 0 : i32
    %c0_i32_2 = arith.constant 0 : i32
    return %c0_i32, %c0_i32_0, %c0_i32_1 : i32, i32, i32
  }
  func.func @transform_4(%arg0: i32) -> (i32, i32) {
    %c0_i32 = arith.constant 0 : i32
    %c0_i32_0 = arith.constant 0 : i32
    %c0_i32_1 = arith.constant 0 : i32
    return %c0_i32, %c0_i32_0 : i32, i32
  }
  func.func @transform_5(%arg0: i32) -> (i32, i32, i32) {
    %c0_i32 = arith.constant 0 : i32
    %c0_i32_0 = arith.constant 0 : i32
    %c0_i32_1 = arith.constant 0 : i32
    %c0_i32_2 = arith.constant 0 : i32
    return %c0_i32, %c0_i32_0, %c0_i32_1 : i32, i32, i32
  }
  func.func @transform_6(%arg0: i32) -> (i32, i32, i32) {
    %c0_i32 = arith.constant 0 : i32
    %c0_i32_0 = arith.constant 0 : i32
    %c0_i32_1 = arith.constant 0 : i32
    %c0_i32_2 = arith.constant 0 : i32
    return %c0_i32, %c0_i32_0, %c0_i32_1 : i32, i32, i32
  }
  func.func @transform_7(%arg0: i32) -> (i32, i32) {
    %c0_i32 = arith.constant 0 : i32
    %c0_i32_0 = arith.constant 0 : i32
    %c0_i32_1 = arith.constant 0 : i32
    return %c0_i32, %c0_i32_0 : i32, i32
  }
  func.func @transform_8(%arg0: i32) -> (i32, i32, i32) {
    %c0_i32 = arith.constant 0 : i32
    %c0_i32_0 = arith.constant 0 : i32
    %c0_i32_1 = arith.constant 0 : i32
    %c0_i32_2 = arith.constant 0 : i32
    return %c0_i32, %c0_i32_0, %c0_i32_1 : i32, i32, i32
  }
  func.func @transform_9(%arg0: i32) -> (i32, i32, i32) {
    %c0_i32 = arith.constant 0 : i32
    %c0_i32_0 = arith.constant 0 : i32
    %c0_i32_1 = arith.constant 0 : i32
    %c0_i32_2 = arith.constant 0 : i32
    return %c0_i32, %c0_i32_0, %c0_i32_1 : i32, i32, i32
  }
  func.func @transform_10(%arg0: i32) -> (i32, i32) {
    %c0_i32 = arith.constant 0 : i32
    %c0_i32_0 = arith.constant 0 : i32
    %c0_i32_1 = arith.constant 0 : i32
    return %c0_i32, %c0_i32_0 : i32, i32
  }
  func.func @transform_11(%arg0: i32) -> (i32, i32, i32) {
    %c0_i32 = arith.constant 0 : i32
    %c0_i32_0 = arith.constant 0 : i32
    %c0_i32_1 = arith.constant 0 : i32
    %c0_i32_2 = arith.constant 0 : i32
    return %c0_i32, %c0_i32_0, %c0_i32_1 : i32, i32, i32
  }
  func.func @transform_12(%arg0: i32) -> (i32, i32) {
    %c0_i32 = arith.constant 0 : i32
    %c0_i32_0 = arith.constant 0 : i32
    %c0_i32_1 = arith.constant 0 : i32
    return %c0_i32, %c0_i32_0 : i32, i32
  }
  func.func @transform_13(%arg0: i32) -> (i32, i32) {
    %c0_i32 = arith.constant 0 : i32
    %c0_i32_0 = arith.constant 0 : i32
    %c0_i32_1 = arith.constant 0 : i32
    return %c0_i32, %c0_i32_0 : i32, i32
  }
  func.func @transform_14(%arg0: i32) -> (i32, i32) {
    %c0_i32 = arith.constant 0 : i32
    %c0_i32_0 = arith.constant 0 : i32
    %c0_i32_1 = arith.constant 0 : i32
    return %c0_i32, %c0_i32_0 : i32, i32
  }
  func.func @transform_15(%arg0: i32) -> (i32, i32) {
    %c0_i32 = arith.constant 0 : i32
    %c0_i32_0 = arith.constant 0 : i32
    %c0_i32_1 = arith.constant 0 : i32
    return %c0_i32, %c0_i32_0 : i32, i32
  }
  func.func @transform_16(%arg0: i32) -> i32 {
    %c0_i32 = arith.constant 0 : i32
    %c0_i32_0 = arith.constant 0 : i32
    return %c0_i32 : i32
  }
  func.func @transform_17(%arg0: i32) -> (i32, i32, i32) {
    %c0_i32 = arith.constant 0 : i32
    %c0_i32_0 = arith.constant 0 : i32
    %c0_i32_1 = arith.constant 0 : i32
    return %arg0, %c0_i32, %c0_i32_0 : i32, i32, i32
  }
  func.func @transform_18(%arg0: i32) -> (i32, i32, i32) {
    %c0_i32 = arith.constant 0 : i32
    %c0_i32_0 = arith.constant 0 : i32
    %c0_i32_1 = arith.constant 0 : i32
    return %arg0, %c0_i32, %c0_i32_0 : i32, i32, i32
  }
}

</mosaic_0001>

<llo_original>
// kernel: cifar_cnn1_forward.1
$region0: #{cifar_cnn1_forward.1}
  #allocation0 [shape = 'u32[]', space=smem, size = 0x4, offset = 0x4, fixed_abs, tag = 'smem constant byte address 0x4 - core index']
  #allocation1 [shape = 'u32[144,128]{1,0:T(1,128)}', space=vmem, size = 0x12000, scoped, tag = 'internal scratch']
  #allocation2 [shape = 'f32[1]{0:T(128)S(6)}', space=smem, size = 0x200, scoped, tag = 'scoped memory for cifar_cnn1_forward.1']
  %s0 = inlined_call_operand.vmem [shape: bf16[2,16,1,96], index: 0, kind: input, shape index: {}]
  %s1 = inlined_call_operand.vmem [shape: bf16[2,16,1,96], index: 1, kind: input, shape index: {}]
  %s2 = inlined_call_operand.hbm [shape: bf16[5,96,256], index: 2, kind: input, shape index: {}]
  %s3 = inlined_call_operand.hbm [shape: bf16[5,96,256], index: 3, kind: input, shape index: {}]
  %s4 = inlined_call_operand.vmem [shape: f32[1,256], index: 4, kind: input, shape index: {}]
  %s5 = inlined_call_operand.hbm [shape: bf16[5,256,256], index: 5, kind: input, shape index: {}]
  %s6 = inlined_call_operand.hbm [shape: bf16[5,256,256], index: 6, kind: input, shape index: {}]
  %s7 = inlined_call_operand.vmem [shape: f32[1,256], index: 7, kind: input, shape index: {}]
  %s8 = inlined_call_operand.vmem [shape: bf16[3,256,256], index: 8, kind: input, shape index: {}]
  %s9 = inlined_call_operand.hbm [shape: bf16[3,256,256], index: 9, kind: input, shape index: {}]
  %s10 = inlined_call_operand.vmem [shape: f32[1,256], index: 10, kind: input, shape index: {}]
  %s11 = inlined_call_operand.vmem [shape: bf16[3,256,128], index: 11, kind: input, shape index: {}]
  %s12 = inlined_call_operand.vmem [shape: f32[1,128], index: 12, kind: input, shape index: {}]
  %s13 = inlined_call_operand.vmem [shape: bf16[128,10], index: 13, kind: input, shape index: {}]
  %s14 = inlined_call_operand.vmem [shape: f32[1,10], index: 14, kind: input, shape index: {}]
  %s15 = inlined_call_operand.vmem [shape: bf16[10,10], index: 15, kind: input, shape index: {}]
  %s16 = inlined_call_operand.<no memory space> [shape: f32[1], index: 16, kind: input, shape index: {}]
  %s17 = inlined_call_operand.hbm [shape: f32[2,1,10], index: 17, kind: output, shape index: {0}]
  %s18 = inlined_call_operand.hbm [shape: f32[2,1,10], index: 18, kind: output, shape index: {1}]
  %19 = xla_tuple %s17, %s18
  %s20 = sld [smem:[#allocation0]]
  $region129: #{cifar_cnn1_forward.1} parent=0
    _
  %s22 = ssub.s32 1, %s20
  %s23 = scalar_select 0, %s22, %s20
  %24 = sst [smem:[#allocation2]] %s16
  $region1: #{cifar_cnn1_forward.1} parent=0
    #allocation3 [shape = 'u8[245760]{0}', space=vmem, size = 0x3c000, scoped, tag = 'input window, operand 2, single buffered']
    #allocation4 [shape = 's32[2]{0}', space=sflag, size = 0x8, scoped, tag = 'scoped memory for cifar_cnn1_forward.1']
    #allocation5 [shape = 's32[2]{0}', space=sflag, size = 0x8, scoped, tag = 'scoped memory for cifar_cnn1_forward.1']
    #allocation6 [shape = 'u8[245760]{0}', space=vmem, size = 0x3c000, scoped, tag = 'input window, operand 3, single buffered']
    #allocation7 [shape = 's32[1]{0}', space=sflag, size = 0x4, scoped, tag = 'scoped memory for cifar_cnn1_forward.1']
    #allocation8 [shape = 'u8[655360]{0}', space=vmem, size = 0xa0000, scoped, tag = 'input window, operand 5, single buffered']
    #allocation9 [shape = 'u8[655360]{0}', space=vmem, size = 0xa0000, scoped, tag = 'input window, operand 6, single buffered']
    #allocation10 [shape = 's32[1]{0}', space=sflag, size = 0x4, scoped, tag = 'scoped memory for cifar_cnn1_forward.1']
    #allocation11 [shape = 'u8[393216]{0}', space=vmem, size = 0x60000, scoped, tag = 'input window, operand 9, single buffered']
    #allocation12 [shape = 'u8[1024]{0}', space=vmem, size = 0x400, scoped, tag = 'output window, operand 0']
    #allocation13 [shape = 'u8[1024]{0}', space=vmem, size = 0x400, scoped, tag = 'output window, operand 1']
    #allocation14 [shape = 's32[2]{0}', space=sflag, size = 0x8, scoped, tag = 'scoped memory for cifar_cnn1_forward.1']
    %25 = vsyncpa [#allocation4], 0
    %26 = vsyncpa [#allocation7], 0
    %27 = vsyncpa [#allocation10], 0
    %28 = vsyncpa [#allocation5], 0
    %s29 = scalar_lea.sflag [#allocation5], 1
    %30 = vsyncpa %s29, 0
    %31 = vsyncpa [#allocation14], 0
    %s32 = scalar_lea.sflag [#allocation14], 1
    %33 = vsyncpa %s32, 0
    loop: start=0, step=1, limit=4
    $region2: #{cifar_cnn1_forward.1} parent=1 // loop_pre_header
      _
    $region3: #{cifar_cnn1_forward.1} parent=1 // loop_header
      %s35 = sphi 0, %s39
      %p36 = scmp.ge.s32.totalorder %s35, 4
      %s45 = sphi 0, %s47
      %s48 = sphi 0, %s45
      %s49 = sphi 0, %s48
      %s65 = sphi 0, %s49
      %s71 = sphi 0, %s73
      %s74 = sphi 0, %s71
      %s75 = sphi 0, %s74
      %s91 = sphi 0, %s75
      %s95 = sphi 0, %s95
      %s97 = sphi 0, %s95
      %s98 = sphi 0, %s97
      %s112 = sphi 0, %s98
      %s116 = sphi 0, %s116
      %s118 = sphi 0, %s116
      %s119 = sphi 0, %s118
      %s133 = sphi 0, %s119
      %s137 = sphi 0, %s137
      %s139 = sphi 0, %s137
      %s140 = sphi 0, %s139
      %s154 = sphi 0, %s140
      %s158 = sphi 0, %s158
      %s160 = sphi 0, %s158
      %s161 = sphi 0, %s160
      %s175 = sphi 0, %s161
      %s179 = sphi 0, %s179
      %s181 = sphi 0, %s179
      %s182 = sphi 0, %s181
      %s196 = sphi 0, %s182
      %s200 = sphi 0, %s200
      %s202 = sphi 0, %s200
      %s203 = sphi 0, %s202
      %s217 = sphi 0, %s203
      %s221 = sphi 0, %s221
      %s223 = sphi 0, %s221
      %s224 = sphi 0, %s223
      %s238 = sphi 0, %s224
      %s242 = sphi 0, %s242
      %s244 = sphi 0, %s242
      %s245 = sphi 0, %s244
      %s259 = sphi 0, %s245
      %s263 = sphi 0, %s263
      %s265 = sphi 0, %s263
      %s266 = sphi 0, %s265
      %s280 = sphi 0, %s266
      %s284 = sphi 0, %s284
      %s286 = sphi 0, %s284
      %s287 = sphi 0, %s286
      %s301 = sphi 0, %s287
      %s305 = sphi 0, %s305
      %s307 = sphi 0, %s305
      %s308 = sphi 0, %s307
      %s322 = sphi 0, %s308
      %s326 = sphi 0, %s326
      %s328 = sphi 0, %s326
      %s329 = sphi 0, %s328
      %s343 = sphi 0, %s329
      %s347 = sphi 0, %s347
      %s349 = sphi 0, %s347
      %s350 = sphi 0, %s349
      %s364 = sphi 0, %s350
      %s368 = sphi 0, %s368
      %s370 = sphi 0, %s368
      %s371 = sphi 0, %s370
      %s385 = sphi 0, %s371
      %s389 = sphi 0, %s389
      %s391 = sphi 0, %s389
      %s392 = sphi 0, %s391
      %s406 = sphi 0, %s392
      %s412 = sphi 0, %s414
      %s415 = sphi 0, %s412
      %s416 = sphi 0, %s415
      %s432 = sphi 0, %s416
      %s438 = sphi 0, %s440
      %s441 = sphi 0, %s438
      %s442 = sphi 0, %s441
      %s458 = sphi 0, %s442
    $region4: #{cifar_cnn1_forward.1} parent=1 // loop_header_branch
      %38 = sbr.rel (%p36) target = $region8
    $region5: #{cifar_cnn1_forward.1} parent=1 // loop_body
      %s40 = ssub.s32 %s35, 1
      %s41 = ssub.s32 %s35, 2
      %s42 = sadd.s32 %s35, 1
      %s43 = ssub.s32 %s35, %s42
      %p44 = scmp.eq.s32.totalorder %s43, 0
      %s46 = sadd.s32 %s45, 1
      %s47 = scalar_select %p44, %s45, %s46
      %p50 = pneg %p44
      %p51 = scmp.eq.s32.totalorder %s35, 1
      %p52 = por %p50, %p51
      %p53 = scmp.ne.s32.totalorder %s45, %s48
      %p54 = scmp.eq.s32.totalorder %s35, 0
      %p55 = por %p53, %p54
      %p56 = scmp.ne.s32.totalorder %s45, %s48
      %p57 = scmp.eq.s32.totalorder %s40, 1
      %p58 = por %p56, %p57
      %p59 = scmp.ne.s32.totalorder %s48, %s49
      %p60 = scmp.eq.s32.totalorder %s40, 0
      %p61 = por %p59, %p60
      %p62 = scmp.ne.s32.totalorder %s48, %s49
      %p63 = scmp.eq.s32.totalorder %s41, 1
      %p64 = por %p62, %p63
      %p66 = scmp.ne.s32.totalorder %s49, %s65
      %p67 = scmp.eq.s32.totalorder %s41, 0
      %p68 = por %p66, %p67
      %s69 = ssub.s32 %s35, %s42
      %p70 = scmp.eq.s32.totalorder %s69, 0
      %s72 = sadd.s32 %s71, 1
      %s73 = scalar_select %p70, %s71, %s72
      %p76 = pneg %p70
      %p77 = scmp.eq.s32.totalorder %s35, 1
      %p78 = por %p76, %p77
      %p79 = scmp.ne.s32.totalorder %s71, %s74
      %p80 = scmp.eq.s32.totalorder %s35, 0
      %p81 = por %p79, %p80
      %p82 = scmp.ne.s32.totalorder %s71, %s74
      %p83 = scmp.eq.s32.totalorder %s40, 1
      %p84 = por %p82, %p83
      %p85 = scmp.ne.s32.totalorder %s74, %s75
      %p86 = scmp.eq.s32.totalorder %s40, 0
      %p87 = por %p85, %p86
      %p88 = scmp.ne.s32.totalorder %s74, %s75
      %p89 = scmp.eq.s32.totalorder %s41, 1
      %p90 = por %p88, %p89
      %p92 = scmp.ne.s32.totalorder %s75, %s91
      %p93 = scmp.eq.s32.totalorder %s41, 0
      %p94 = por %p92, %p93
      %s96 = sadd.s32 %s95, 1
      %p99 = scmp.eq.s32.totalorder %s35, 1
      %p100 = scmp.ne.s32.totalorder %s95, %s97
      %p101 = scmp.eq.s32.totalorder %s35, 0
      %p102 = por %p100, %p101
      %p103 = scmp.ne.s32.totalorder %s95, %s97
      %p104 = scmp.eq.s32.totalorder %s40, 1
      %p105 = por %p103, %p104
      %p106 = scmp.ne.s32.totalorder %s97, %s98
      %p107 = scmp.eq.s32.totalorder %s40, 0
      %p108 = por %p106, %p107
      %p109 = scmp.ne.s32.totalorder %s97, %s98
      %p110 = scmp.eq.s32.totalorder %s41, 1
      %p111 = por %p109, %p110
      %p113 = scmp.ne.s32.totalorder %s98, %s112
      %p114 = scmp.eq.s32.totalorder %s41, 0
      %p115 = por %p113, %p114
      %s117 = sadd.s32 %s116, 1
      %p120 = scmp.eq.s32.totalorder %s35, 1
      %p121 = scmp.ne.s32.totalorder %s116, %s118
      %p122 = scmp.eq.s32.totalorder %s35, 0
      %p123 = por %p121, %p122
      %p124 = scmp.ne.s32.totalorder %s116, %s118
      %p125 = scmp.eq.s32.totalorder %s40, 1
      %p126 = por %p124, %p125
      %p127 = scmp.ne.s32.totalorder %s118, %s119
      %p128 = scmp.eq.s32.totalorder %s40, 0
      %p129 = por %p127, %p128
      %p130 = scmp.ne.s32.totalorder %s118, %s119
      %p131 = scmp.eq.s32.totalorder %s41, 1
      %p132 = por %p130, %p131
      %p134 = scmp.ne.s32.totalorder %s119, %s133
      %p135 = scmp.eq.s32.totalorder %s41, 0
      %p136 = por %p134, %p135
      %s138 = sadd.s32 %s137, 1
      %p141 = scmp.eq.s32.totalorder %s35, 1
      %p142 = scmp.ne.s32.totalorder %s137, %s139
      %p143 = scmp.eq.s32.totalorder %s35, 0
      %p144 = por %p142, %p143
      %p145 = scmp.ne.s32.totalorder %s137, %s139
      %p146 = scmp.eq.s32.totalorder %s40, 1
      %p147 = por %p145, %p146
      %p148 = scmp.ne.s32.totalorder %s139, %s140
      %p149 = scmp.eq.s32.totalorder %s40, 0
      %p150 = por %p148, %p149
      %p151 = scmp.ne.s32.totalorder %s139, %s140
      %p152 = scmp.eq.s32.totalorder %s41, 1
      %p153 = por %p151, %p152
      %p155 = scmp.ne.s32.totalorder %s140, %s154
      %p156 = scmp.eq.s32.totalorder %s41, 0
      %p157 = por %p155, %p156
      %s159 = sadd.s32 %s158, 1
      %p162 = scmp.eq.s32.totalorder %s35, 1
      %p163 = scmp.ne.s32.totalorder %s158, %s160
      %p164 = scmp.eq.s32.totalorder %s35, 0
      %p165 = por %p163, %p164
      %p166 = scmp.ne.s32.totalorder %s158, %s160
      %p167 = scmp.eq.s32.totalorder %s40, 1
      %p168 = por %p166, %p167
      %p169 = scmp.ne.s32.totalorder %s160, %s161
      %p170 = scmp.eq.s32.totalorder %s40, 0
      %p171 = por %p169, %p170
      %p172 = scmp.ne.s32.totalorder %s160, %s161
      %p173 = scmp.eq.s32.totalorder %s41, 1
      %p174 = por %p172, %p173
      %p176 = scmp.ne.s32.totalorder %s161, %s175
      %p177 = scmp.eq.s32.totalorder %s41, 0
      %p178 = por %p176, %p177
      %s180 = sadd.s32 %s179, 1
      %p183 = scmp.eq.s32.totalorder %s35, 1
      %p184 = scmp.ne.s32.totalorder %s179, %s181
      %p185 = scmp.eq.s32.totalorder %s35, 0
      %p186 = por %p184, %p185
      %p187 = scmp.ne.s32.totalorder %s179, %s181
      %p188 = scmp.eq.s32.totalorder %s40, 1
      %p189 = por %p187, %p188
      %p190 = scmp.ne.s32.totalorder %s181, %s182
      %p191 = scmp.eq.s32.totalorder %s40, 0
      %p192 = por %p190, %p191
      %p193 = scmp.ne.s32.totalorder %s181, %s182
      %p194 = scmp.eq.s32.totalorder %s41, 1
      %p195 = por %p193, %p194
      %p197 = scmp.ne.s32.totalorder %s182, %s196
      %p198 = scmp.eq.s32.totalorder %s41, 0
      %p199 = por %p197, %p198
      %s201 = sadd.s32 %s200, 1
      %p204 = scmp.eq.s32.totalorder %s35, 1
      %p205 = scmp.ne.s32.totalorder %s200, %s202
      %p206 = scmp.eq.s32.totalorder %s35, 0
      %p207 = por %p205, %p206
      %p208 = scmp.ne.s32.totalorder %s200, %s202
      %p209 = scmp.eq.s32.totalorder %s40, 1
      %p210 = por %p208, %p209
      %p211 = scmp.ne.s32.totalorder %s202, %s203
      %p212 = scmp.eq.s32.totalorder %s40, 0
      %p213 = por %p211, %p212
      %p214 = scmp.ne.s32.totalorder %s202, %s203
      %p215 = scmp.eq.s32.totalorder %s41, 1
      %p216 = por %p214, %p215
      %p218 = scmp.ne.s32.totalorder %s203, %s217
      %p219 = scmp.eq.s32.totalorder %s41, 0
      %p220 = por %p218, %p219
      %s222 = sadd.s32 %s221, 1
      %p225 = scmp.eq.s32.totalorder %s35, 1
      %p226 = scmp.ne.s32.totalorder %s221, %s223
      %p227 = scmp.eq.s32.totalorder %s35, 0
      %p228 = por %p226, %p227
      %p229 = scmp.ne.s32.totalorder %s221, %s223
      %p230 = scmp.eq.s32.totalorder %s40, 1
      %p231 = por %p229, %p230
      %p232 = scmp.ne.s32.totalorder %s223, %s224
      %p233 = scmp.eq.s32.totalorder %s40, 0
      %p234 = por %p232, %p233
      %p235 = scmp.ne.s32.totalorder %s223, %s224
      %p236 = scmp.eq.s32.totalorder %s41, 1
      %p237 = por %p235, %p236
      %p239 = scmp.ne.s32.totalorder %s224, %s238
      %p240 = scmp.eq.s32.totalorder %s41, 0
      %p241 = por %p239, %p240
      %s243 = sadd.s32 %s242, 1
      %p246 = scmp.eq.s32.totalorder %s35, 1
      %p247 = scmp.ne.s32.totalorder %s242, %s244
      %p248 = scmp.eq.s32.totalorder %s35, 0
      %p249 = por %p247, %p248
      %p250 = scmp.ne.s32.totalorder %s242, %s244
      %p251 = scmp.eq.s32.totalorder %s40, 1
      %p252 = por %p250, %p251
      %p253 = scmp.ne.s32.totalorder %s244, %s245
      %p254 = scmp.eq.s32.totalorder %s40, 0
      %p255 = por %p253, %p254
      %p256 = scmp.ne.s32.totalorder %s244, %s245
      %p257 = scmp.eq.s32.totalorder %s41, 1
      %p258 = por %p256, %p257
      %p260 = scmp.ne.s32.totalorder %s245, %s259
      %p261 = scmp.eq.s32.totalorder %s41, 0
      %p262 = por %p260, %p261
      %s264 = sadd.s32 %s263, 1
      %p267 = scmp.eq.s32.totalorder %s35, 1
      %p268 = scmp.ne.s32.totalorder %s263, %s265
      %p269 = scmp.eq.s32.totalorder %s35, 0
      %p270 = por %p268, %p269
      %p271 = scmp.ne.s32.totalorder %s263, %s265
      %p272 = scmp.eq.s32.totalorder %s40, 1
      %p273 = por %p271, %p272
      %p274 = scmp.ne.s32.totalorder %s265, %s266
      %p275 = scmp.eq.s32.totalorder %s40, 0
      %p276 = por %p274, %p275
      %p277 = scmp.ne.s32.totalorder %s265, %s266
      %p278 = scmp.eq.s32.totalorder %s41, 1
      %p279 = por %p277, %p278
      %p281 = scmp.ne.s32.totalorder %s266, %s280
      %p282 = scmp.eq.s32.totalorder %s41, 0
      %p283 = por %p281, %p282
      %s285 = sadd.s32 %s284, 1
      %p288 = scmp.eq.s32.totalorder %s35, 1
      %p289 = scmp.ne.s32.totalorder %s284, %s286
      %p290 = scmp.eq.s32.totalorder %s35, 0
      %p291 = por %p289, %p290
      %p292 = scmp.ne.s32.totalorder %s284, %s286
      %p293 = scmp.eq.s32.totalorder %s40, 1
      %p294 = por %p292, %p293
      %p295 = scmp.ne.s32.totalorder %s286, %s287
      %p296 = scmp.eq.s32.totalorder %s40, 0
      %p297 = por %p295, %p296
      %p298 = scmp.ne.s32.totalorder %s286, %s287
      %p299 = scmp.eq.s32.totalorder %s41, 1
      %p300 = por %p298, %p299
      %p302 = scmp.ne.s32.totalorder %s287, %s301
      %p303 = scmp.eq.s32.totalorder %s41, 0
      %p304 = por %p302, %p303
      %s306 = sadd.s32 %s305, 1
      %p309 = scmp.eq.s32.totalorder %s35, 1
      %p310 = scmp.ne.s32.totalorder %s305, %s307
      %p311 = scmp.eq.s32.totalorder %s35, 0
      %p312 = por %p310, %p311
      %p313 = scmp.ne.s32.totalorder %s305, %s307
      %p314 = scmp.eq.s32.totalorder %s40, 1
      %p315 = por %p313, %p314
      %p316 = scmp.ne.s32.totalorder %s307, %s308
      %p317 = scmp.eq.s32.totalorder %s40, 0
      %p318 = por %p316, %p317
      %p319 = scmp.ne.s32.totalorder %s307, %s308
      %p320 = scmp.eq.s32.totalorder %s41, 1
      %p321 = por %p319, %p320
      %p323 = scmp.ne.s32.totalorder %s308, %s322
      %p324 = scmp.eq.s32.totalorder %s41, 0
      %p325 = por %p323, %p324
      %s327 = sadd.s32 %s326, 1
      %p330 = scmp.eq.s32.totalorder %s35, 1
      %p331 = scmp.ne.s32.totalorder %s326, %s328
      %p332 = scmp.eq.s32.totalorder %s35, 0
      %p333 = por %p331, %p332
      %p334 = scmp.ne.s32.totalorder %s326, %s328
      %p335 = scmp.eq.s32.totalorder %s40, 1
      %p336 = por %p334, %p335
      %p337 = scmp.ne.s32.totalorder %s328, %s329
      %p338 = scmp.eq.s32.totalorder %s40, 0
      %p339 = por %p337, %p338
      %p340 = scmp.ne.s32.totalorder %s328, %s329
      %p341 = scmp.eq.s32.totalorder %s41, 1
      %p342 = por %p340, %p341
      %p344 = scmp.ne.s32.totalorder %s329, %s343
      %p345 = scmp.eq.s32.totalorder %s41, 0
      %p346 = por %p344, %p345
      %s348 = sadd.s32 %s347, 1
      %p351 = scmp.eq.s32.totalorder %s35, 1
      %p352 = scmp.ne.s32.totalorder %s347, %s349
      %p353 = scmp.eq.s32.totalorder %s35, 0
      %p354 = por %p352, %p353
      %p355 = scmp.ne.s32.totalorder %s347, %s349
      %p356 = scmp.eq.s32.totalorder %s40, 1
      %p357 = por %p355, %p356
      %p358 = scmp.ne.s32.totalorder %s349, %s350
      %p359 = scmp.eq.s32.totalorder %s40, 0
      %p360 = por %p358, %p359
      %p361 = scmp.ne.s32.totalorder %s349, %s350
      %p362 = scmp.eq.s32.totalorder %s41, 1
      %p363 = por %p361, %p362
      %p365 = scmp.ne.s32.totalorder %s350, %s364
      %p366 = scmp.eq.s32.totalorder %s41, 0
      %p367 = por %p365, %p366
      %s369 = sadd.s32 %s368, 1
      %p372 = scmp.eq.s32.totalorder %s35, 1
      %p373 = scmp.ne.s32.totalorder %s368, %s370
      %p374 = scmp.eq.s32.totalorder %s35, 0
      %p375 = por %p373, %p374
      %p376 = scmp.ne.s32.totalorder %s368, %s370
      %p377 = scmp.eq.s32.totalorder %s40, 1
      %p378 = por %p376, %p377
      %p379 = scmp.ne.s32.totalorder %s370, %s371
      %p380 = scmp.eq.s32.totalorder %s40, 0
      %p381 = por %p379, %p380
      %p382 = scmp.ne.s32.totalorder %s370, %s371
      %p383 = scmp.eq.s32.totalorder %s41, 1
      %p384 = por %p382, %p383
      %p386 = scmp.ne.s32.totalorder %s371, %s385
      %p387 = scmp.eq.s32.totalorder %s41, 0
      %p388 = por %p386, %p387
      %s390 = sadd.s32 %s389, 1
      %p393 = scmp.eq.s32.totalorder %s35, 1
      %p394 = scmp.ne.s32.totalorder %s389, %s391
      %p395 = scmp.eq.s32.totalorder %s35, 0
      %p396 = por %p394, %p395
      %p397 = scmp.ne.s32.totalorder %s389, %s391
      %p398 = scmp.eq.s32.totalorder %s40, 1
      %p399 = por %p397, %p398
      %p400 = scmp.ne.s32.totalorder %s391, %s392
      %p401 = scmp.eq.s32.totalorder %s40, 0
      %p402 = por %p400, %p401
      %p403 = scmp.ne.s32.totalorder %s391, %s392
      %p404 = scmp.eq.s32.totalorder %s41, 1
      %p405 = por %p403, %p404
      %p407 = scmp.ne.s32.totalorder %s392, %s406
      %p408 = scmp.eq.s32.totalorder %s41, 0
      %p409 = por %p407, %p408
      %s410 = ssub.s32 %s35, %s42
      %p411 = scmp.eq.s32.totalorder %s410, 0
      %s413 = sadd.s32 %s412, 1
      %s414 = scalar_select %p411, %s412, %s413
      %p417 = pneg %p411
      %p418 = scmp.eq.s32.totalorder %s35, 1
      %p419 = por %p417, %p418
      %p420 = scmp.ne.s32.totalorder %s412, %s415
      %p421 = scmp.eq.s32.totalorder %s35, 0
      %p422 = por %p420, %p421
      %p423 = scmp.ne.s32.totalorder %s412, %s415
      %p424 = scmp.eq.s32.totalorder %s40, 1
      %p425 = por %p423, %p424
      %p426 = scmp.ne.s32.totalorder %s415, %s416
      %p427 = scmp.eq.s32.totalorder %s40, 0
      %p428 = por %p426, %p427
      %p429 = scmp.ne.s32.totalorder %s415, %s416
      %p430 = scmp.eq.s32.totalorder %s41, 1
      %p431 = por %p429, %p430
      %p433 = scmp.ne.s32.totalorder %s416, %s432
      %p434 = scmp.eq.s32.totalorder %s41, 0
      %p435 = por %p433, %p434
      %s436 = ssub.s32 %s35, %s42
      %p437 = scmp.eq.s32.totalorder %s436, 0
      %s439 = sadd.s32 %s438, 1
      %s440 = scalar_select %p437, %s438, %s439
      %p443 = pneg %p437
      %p444 = scmp.eq.s32.totalorder %s35, 1
      %p445 = por %p443, %p444
      %p446 = scmp.ne.s32.totalorder %s438, %s441
      %p447 = scmp.eq.s32.totalorder %s35, 0
      %p448 = por %p446, %p447
      %p449 = scmp.ne.s32.totalorder %s438, %s441
      %p450 = scmp.eq.s32.totalorder %s40, 1
      %p451 = por %p449, %p450
      %p452 = scmp.ne.s32.totalorder %s441, %s442
      %p453 = scmp.eq.s32.totalorder %s40, 0
      %p454 = por %p452, %p453
      %p455 = scmp.ne.s32.totalorder %s441, %s442
      %p456 = scmp.eq.s32.totalorder %s41, 1
      %p457 = por %p455, %p456
      %p459 = scmp.ne.s32.totalorder %s442, %s458
      %p460 = scmp.eq.s32.totalorder %s41, 0
      %p461 = por %p459, %p460
      %p462 = scmp.le.s32.totalorder 1, %s35
      %p463 = scmp.lt.s32.totalorder %s35, 3
      %p464 = pnand %p462, %p463
      %p465 = pneg %p464
      // Predicated region
      $region9: #{cifar_cnn1_forward.1} parent=5 // pred_check
        _
      $region10: #{cifar_cnn1_forward.1} parent=5 // pred_check_branch
        %467 = sbr.rel (%p464) target = $region12
      $region11: #{cifar_cnn1_forward.1} parent=5 // pred_region
        %s468 = ssub.s32 %s35, 1
        // Predicated region
        $region13: #{cifar_cnn1_forward.1} parent=11 // pred_check
          %p469 = pneg %p108
        $region14: #{cifar_cnn1_forward.1} parent=11 // pred_check_branch
          %471 = sbr.rel (%p469) target = $region16
        $region15: #{cifar_cnn1_forward.1} parent=11 // pred_region
          %s473 = ssub.s32 7680, 7680
          %474 = vsyncadd [#allocation4], %s473
          %s475 = sshll.u32 [#allocation3], 4
          %s476 = int_to_ptr.vmem [resolvable:$true] %s475
          %481 = dma.hbm_to_vmem [thread:$0]  %s2, 7680, %s476, [#allocation4], 128, 128, 8
        $region16: #{cifar_cnn1_forward.1} parent=11 // pred_fallthru
          _
        // Predicated region
        $region17: #{cifar_cnn1_forward.1} parent=11 // pred_check
          %p482 = pneg %p129
        $region18: #{cifar_cnn1_forward.1} parent=11 // pred_check_branch
          %484 = sbr.rel (%p482) target = $region20
        $region19: #{cifar_cnn1_forward.1} parent=11 // pred_region
          %s486 = ssub.s32 7680, 7680
          %487 = vsyncadd [#allocation7], %s486
          %s488 = sshll.u32 [#allocation6], 4
          %s489 = int_to_ptr.vmem [resolvable:$true] %s488
          %494 = dma.hbm_to_vmem [thread:$0]  %s3, 7680, %s489, [#allocation7], 128, 128, 8
        $region20: #{cifar_cnn1_forward.1} parent=11 // pred_fallthru
          _
        // Predicated region
        $region21: #{cifar_cnn1_forward.1} parent=11 // pred_check
          %p495 = pneg %p150
        $region22: #{cifar_cnn1_forward.1} parent=11 // pred_check_branch
          %497 = sbr.rel (%p495) target = $region24
        $region23: #{cifar_cnn1_forward.1} parent=11 // pred_region
          _
        $region24: #{cifar_cnn1_forward.1} parent=11 // pred_fallthru
          _
        // Predicated region
        $region25: #{cifar_cnn1_forward.1} parent=11 // pred_check
          %p498 = pneg %p171
        $region26: #{cifar_cnn1_forward.1} parent=11 // pred_check_branch
          %500 = sbr.rel (%p498) target = $region28
        $region27: #{cifar_cnn1_forward.1} parent=11 // pred_region
          %s502 = ssub.s32 20480, 20480
          %503 = vsyncadd [#allocation7], %s502
          %s504 = sshll.u32 [#allocation8], 4
          %s505 = int_to_ptr.vmem [resolvable:$true] %s504
          %510 = dma.hbm_to_vmem [thread:$0]  %s5, 20480, %s505, [#allocation7], 128, 128, 8
        $region28: #{cifar_cnn1_forward.1} parent=11 // pred_fallthru
          _
        // Predicated region
        $region29: #{cifar_cnn1_forward.1} parent=11 // pred_check
          %p511 = pneg %p192
        $region30: #{cifar_cnn1_forward.1} parent=11 // pred_check_branch
          %513 = sbr.rel (%p511) target = $region32
        $region31: #{cifar_cnn1_forward.1} parent=11 // pred_region
          %s515 = ssub.s32 20480, 20480
          %516 = vsyncadd [#allocation10], %s515
          %s517 = sshll.u32 [#allocation9], 4
          %s518 = int_to_ptr.vmem [resolvable:$true] %s517
          %523 = dma.hbm_to_vmem [thread:$0]  %s6, 20480, %s518, [#allocation10], 128, 128, 8
        $region32: #{cifar_cnn1_forward.1} parent=11 // pred_fallthru
          _
        // Predicated region
        $region33: #{cifar_cnn1_forward.1} parent=11 // pred_check
          %p524 = pneg %p213
        $region34: #{cifar_cnn1_forward.1} parent=11 // pred_check_branch
          %526 = sbr.rel (%p524) target = $region36
        $region35: #{cifar_cnn1_forward.1} parent=11 // pred_region
          _
        $region36: #{cifar_cnn1_forward.1} parent=11 // pred_fallthru
          _
        // Predicated region
        $region37: #{cifar_cnn1_forward.1} parent=11 // pred_check
          %p527 = pneg %p234
        $region38: #{cifar_cnn1_forward.1} parent=11 // pred_check_branch
          %529 = sbr.rel (%p527) target = $region40
        $region39: #{cifar_cnn1_forward.1} parent=11 // pred_region
          _
        $region40: #{cifar_cnn1_forward.1} parent=11 // pred_fallthru
          _
        // Predicated region
        $region41: #{cifar_cnn1_forward.1} parent=11 // pred_check
          %p530 = pneg %p255
        $region42: #{cifar_cnn1_forward.1} parent=11 // pred_check_branch
          %532 = sbr.rel (%p530) target = $region44
        $region43: #{cifar_cnn1_forward.1} parent=11 // pred_region
          %s534 = ssub.s32 12288, 12288
          %535 = vsyncadd [#allocation10], %s534
          %s536 = sshll.u32 [#allocation11], 4
          %s537 = int_to_ptr.vmem [resolvable:$true] %s536
          %542 = dma.hbm_to_vmem [thread:$0]  %s9, 12288, %s537, [#allocation10], 128, 128, 8
        $region44: #{cifar_cnn1_forward.1} parent=11 // pred_fallthru
          _
        // Predicated region
        $region45: #{cifar_cnn1_forward.1} parent=11 // pred_check
          %p543 = pneg %p276
        $region46: #{cifar_cnn1_forward.1} parent=11 // pred_check_branch
          %545 = sbr.rel (%p543) target = $region48
        $region47: #{cifar_cnn1_forward.1} parent=11 // pred_region
          _
        $region48: #{cifar_cnn1_forward.1} parent=11 // pred_fallthru
          _
        // Predicated region
        $region49: #{cifar_cnn1_forward.1} parent=11 // pred_check
          %p546 = pneg %p297
        $region50: #{cifar_cnn1_forward.1} parent=11 // pred_check_branch
          %548 = sbr.rel (%p546) target = $region52
        $region51: #{cifar_cnn1_forward.1} parent=11 // pred_region
          _
        $region52: #{cifar_cnn1_forward.1} parent=11 // pred_fallthru
          _
        // Predicated region
        $region53: #{cifar_cnn1_forward.1} parent=11 // pred_check
          %p549 = pneg %p318
        $region54: #{cifar_cnn1_forward.1} parent=11 // pred_check_branch
          %551 = sbr.rel (%p549) target = $region56
        $region55: #{cifar_cnn1_forward.1} parent=11 // pred_region
          _
        $region56: #{cifar_cnn1_forward.1} parent=11 // pred_fallthru
          _
        // Predicated region
        $region57: #{cifar_cnn1_forward.1} parent=11 // pred_check
          %p552 = pneg %p339
        $region58: #{cifar_cnn1_forward.1} parent=11 // pred_check_branch
          %554 = sbr.rel (%p552) target = $region60
        $region59: #{cifar_cnn1_forward.1} parent=11 // pred_region
          _
        $region60: #{cifar_cnn1_forward.1} parent=11 // pred_fallthru
          _
        // Predicated region
        $region61: #{cifar_cnn1_forward.1} parent=11 // pred_check
          %p555 = pneg %p360
        $region62: #{cifar_cnn1_forward.1} parent=11 // pred_check_branch
          %557 = sbr.rel (%p555) target = $region64
        $region63: #{cifar_cnn1_forward.1} parent=11 // pred_region
          _
        $region64: #{cifar_cnn1_forward.1} parent=11 // pred_fallthru
          _
        // Predicated region
        $region65: #{cifar_cnn1_forward.1} parent=11 // pred_check
          %p558 = pneg %p381
        $region66: #{cifar_cnn1_forward.1} parent=11 // pred_check_branch
          %560 = sbr.rel (%p558) target = $region68
        $region67: #{cifar_cnn1_forward.1} parent=11 // pred_region
          _
        $region68: #{cifar_cnn1_forward.1} parent=11 // pred_fallthru
          _
        // Predicated region
        $region69: #{cifar_cnn1_forward.1} parent=11 // pred_check
          %p561 = pneg %p402
        $region70: #{cifar_cnn1_forward.1} parent=11 // pred_check_branch
          %563 = sbr.rel (%p561) target = $region72
        $region71: #{cifar_cnn1_forward.1} parent=11 // pred_region
          _
        $region72: #{cifar_cnn1_forward.1} parent=11 // pred_fallthru
          _
      $region12: #{cifar_cnn1_forward.1} parent=5 // pred_fallthru
        _
      %p564 = scmp.lt.s32.totalorder %s35, 2
      // Predicated region
      $region73: #{cifar_cnn1_forward.1} parent=5 // pred_check
        %p565 = pneg %p564
      $region74: #{cifar_cnn1_forward.1} parent=5 // pred_check_branch
        %567 = sbr.rel (%p565) target = $region76
      $region75: #{cifar_cnn1_forward.1} parent=5 // pred_region
        // Predicated region
        $region77: #{cifar_cnn1_forward.1} parent=75 // pred_check
          %p568 = pneg %p55
        $region78: #{cifar_cnn1_forward.1} parent=75 // pred_check_branch
          %570 = sbr.rel (%p568) target = $region80
        $region79: #{cifar_cnn1_forward.1} parent=75 // pred_region
          %p571 = scmp.lt.s32.totalorder %s35, 1
          %s572 = scalar_select %p571, %s35, 1
          %s573 = smul.addr %s572, 16
          %s574 = scalar_lea.vmem %s0, %s573
        $region80: #{cifar_cnn1_forward.1} parent=75 // pred_fallthru
          _
        // Predicated region
        $region81: #{cifar_cnn1_forward.1} parent=75 // pred_check
          %p575 = pneg %p81
        $region82: #{cifar_cnn1_forward.1} parent=75 // pred_check_branch
          %577 = sbr.rel (%p575) target = $region84
        $region83: #{cifar_cnn1_forward.1} parent=75 // pred_region
          %p578 = scmp.lt.s32.totalorder %s35, 1
          %s579 = scalar_select %p578, %s35, 1
          %s580 = smul.addr %s579, 16
          %s581 = scalar_lea.vmem %s1, %s580
        $region84: #{cifar_cnn1_forward.1} parent=75 // pred_fallthru
          _
      $region76: #{cifar_cnn1_forward.1} parent=5 // pred_fallthru
        _
      %p582 = scmp.le.s32.totalorder 1, %s35
      %p583 = scmp.lt.s32.totalorder %s35, 3
      %p584 = pnand %p582, %p583
      %p585 = pneg %p584
      // Predicated region
      $region85: #{cifar_cnn1_forward.1} parent=5 // pred_check
        _
      $region86: #{cifar_cnn1_forward.1} parent=5 // pred_check_branch
        %587 = sbr.rel (%p584) target = $region88
      $region87: #{cifar_cnn1_forward.1} parent=5 // pred_region
        %s588 = ssub.s32 %s35, 1
        // Predicated region
        $region89: #{cifar_cnn1_forward.1} parent=87 // pred_check
          %p589 = pneg %p108
        $region90: #{cifar_cnn1_forward.1} parent=87 // pred_check_branch
          %591 = sbr.rel (%p589) target = $region92
        $region91: #{cifar_cnn1_forward.1} parent=87 // pred_region
          %592 = dma.done [#allocation4], 7680
        $region92: #{cifar_cnn1_forward.1} parent=87 // pred_fallthru
          _
        // Predicated region
        $region93: #{cifar_cnn1_forward.1} parent=87 // pred_check
          %p593 = pneg %p129
        $region94: #{cifar_cnn1_forward.1} parent=87 // pred_check_branch
          %595 = sbr.rel (%p593) target = $region96
        $region95: #{cifar_cnn1_forward.1} parent=87 // pred_region
          %596 = dma.done [#allocation7], 7680
        $region96: #{cifar_cnn1_forward.1} parent=87 // pred_fallthru
          _
        // Predicated region
        $region97: #{cifar_cnn1_forward.1} parent=87 // pred_check
          %p597 = pneg %p171
        $region98: #{cifar_cnn1_forward.1} parent=87 // pred_check_branch
          %599 = sbr.rel (%p597) target = $region100
        $region99: #{cifar_cnn1_forward.1} parent=87 // pred_region
          %600 = dma.done [#allocation7], 20480
        $region100: #{cifar_cnn1_forward.1} parent=87 // pred_fallthru
          _
        // Predicated region
        $region101: #{cifar_cnn1_forward.1} parent=87 // pred_check
          %p601 = pneg %p192
        $region102: #{cifar_cnn1_forward.1} parent=87 // pred_check_branch
          %603 = sbr.rel (%p601) target = $region104
        $region103: #{cifar_cnn1_forward.1} parent=87 // pred_region
          %604 = dma.done [#allocation10], 20480
        $region104: #{cifar_cnn1_forward.1} parent=87 // pred_fallthru
          _
        // Predicated region
        $region105: #{cifar_cnn1_forward.1} parent=87 // pred_check
          %p605 = pneg %p255
        $region106: #{cifar_cnn1_forward.1} parent=87 // pred_check_branch
          %607 = sbr.rel (%p605) target = $region108
        $region107: #{cifar_cnn1_forward.1} parent=87 // pred_region
          %608 = dma.done [#allocation10], 12288
        $region108: #{cifar_cnn1_forward.1} parent=87 // pred_fallthru
          _
        %p609 = scmp.lt.s32.totalorder %s40, 1
        %s610 = scalar_select %p609, %s40, 1
        %s611 = smul.addr %s610, 16
        %s612 = scalar_lea.vmem %s0, %s611
        %p613 = pneg %p61
        %p614 = pneg %p58
        %p615 = scmp.lt.s32.totalorder %s40, 1
        %s616 = scalar_select %p615, %s40, 1
        %s617 = smul.addr %s616, 16
        %s618 = scalar_lea.vmem %s1, %s617
        %p619 = pneg %p87
        %p620 = pneg %p84
        %p621 = pneg %p108
        %p622 = pneg %p105
        %p623 = pneg %p129
        %p624 = pneg %p126
        %p625 = pneg %p150
        %p626 = pneg %p147
        %p627 = pneg %p171
        %p628 = pneg %p168
        %p629 = pneg %p192
        %p630 = pneg %p189
        %p631 = pneg %p213
        %p632 = pneg %p210
        %p633 = pneg %p234
        %p634 = pneg %p231
        %p635 = pneg %p255
        %p636 = pneg %p252
        %p637 = pneg %p276
        %p638 = pneg %p273
        %p639 = pneg %p297
        %p640 = pneg %p294
        %p641 = pneg %p318
        %p642 = pneg %p315
        %p643 = pneg %p339
        %p644 = pneg %p336
        %p645 = pneg %p360
        %p646 = pneg %p357
        %p647 = pneg %p381
        %p648 = pneg %p378
        %p649 = pneg %p402
        %p650 = pneg %p399
        %p651 = pneg %p428
        %p652 = pneg %p425
        %s653 = sand.u32 %s415, 1
        %s654 = scalar_lea.sflag [#allocation5], %s653
        %s655 = sand.u32 %s415, 1
        %s656 = scalar_lea.vmem [#allocation12], %s655
        %p657 = pneg %p454
        %p658 = pneg %p451
        %s659 = sand.u32 %s441, 1
        %s660 = scalar_lea.sflag [#allocation14], %s659
        %s661 = sand.u32 %s441, 1
        %s662 = scalar_lea.vmem [#allocation13], %s661
        %p663 = scmp.lt.s32.totalorder %s40, 1
        %s664 = scalar_select %p663, %s40, 1
        %s665 = smul.addr %s664, 16
        %s666 = scalar_lea.vmem %s0, %s665
        %p667 = scmp.lt.s32.totalorder %s40, 1
        %s668 = scalar_select %p667, %s40, 1
        %s669 = smul.addr %s668, 16
        %s670 = scalar_lea.vmem %s1, %s669
        %v672 = vld [vmem:[%s666] sm:$0x1]
        %v673 = vld [vmem:[%s666 + $0x1] sm:$0x1]
        %v674 = vld [vmem:[%s666 + $0x2] sm:$0x1]
        %v675 = vld [vmem:[%s666 + $0x3] sm:$0x1]
        %v676 = vld [vmem:[%s666 + $0x4] sm:$0x1]
        %v677 = vld [vmem:[%s666 + $0x5] sm:$0x1]
        %v678 = vld [vmem:[%s666 + $0x6] sm:$0x1]
        %v679 = vld [vmem:[%s666 + $0x7] sm:$0x1]
        %v680 = vld [vmem:[%s666 + $0x8] sm:$0x1]
        %v681 = vld [vmem:[%s666 + $0x9] sm:$0x1]
        %v682 = vld [vmem:[%s666 + $0xa] sm:$0x1]
        %v683 = vld [vmem:[%s666 + $0xb] sm:$0x1]
        %v684 = vld [vmem:[%s666 + $0xc] sm:$0x1]
        %v685 = vld [vmem:[%s666 + $0xd] sm:$0x1]
        %v686 = vld [vmem:[%s666 + $0xe] sm:$0x1]
        %v687 = vld [vmem:[%s666 + $0xf] sm:$0x1]
        %v688 = vld [vmem:[%s670] sm:$0x1]
        %v689 = vld [vmem:[%s670 + $0x1] sm:$0x1]
        %v690 = vld [vmem:[%s670 + $0x2] sm:$0x1]
        %v691 = vld [vmem:[%s670 + $0x3] sm:$0x1]
        %v692 = vld [vmem:[%s670 + $0x4] sm:$0x1]
        %v693 = vld [vmem:[%s670 + $0x5] sm:$0x1]
        %v694 = vld [vmem:[%s670 + $0x6] sm:$0x1]
        %v695 = vld [vmem:[%s670 + $0x7] sm:$0x1]
        %v696 = vld [vmem:[%s670 + $0x8] sm:$0x1]
        %v697 = vld [vmem:[%s670 + $0x9] sm:$0x1]
        %v698 = vld [vmem:[%s670 + $0xa] sm:$0x1]
        %v699 = vld [vmem:[%s670 + $0xb] sm:$0x1]
        %v700 = vld [vmem:[%s670 + $0xc] sm:$0x1]
        %v701 = vld [vmem:[%s670 + $0xd] sm:$0x1]
        %v702 = vld [vmem:[%s670 + $0xe] sm:$0x1]
        %v703 = vld [vmem:[%s670 + $0xf] sm:$0x1]
        %v704 = vld [vmem:[#allocation3] sm:$0xff]
        %v705 = vld [vmem:[#allocation3 + $0x8] sm:$0xff]
        %v706 = vld [vmem:[#allocation3 + $0x10] sm:$0xff]
        %v707 = vld [vmem:[#allocation3 + $0x18] sm:$0xff]
        %v708 = vld [vmem:[#allocation3 + $0x20] sm:$0xff]
        %v709 = vld [vmem:[#allocation3 + $0x28] sm:$0xff]
        %v710 = vld [vmem:[#allocation3 + $0x30] sm:$0xff]
        %v711 = vld [vmem:[#allocation3 + $0x38] sm:$0xff]
        %v712 = vld [vmem:[#allocation3 + $0x40] sm:$0xff]
        %v713 = vld [vmem:[#allocation3 + $0x48] sm:$0xff]
        %v714 = vld [vmem:[#allocation3 + $0x50] sm:$0xff]
        %v715 = vld [vmem:[#allocation3 + $0x58] sm:$0xff]
        %v716 = vld [vmem:[#allocation6] sm:$0xff]
        %v717 = vld [vmem:[#allocation6 + $0x8] sm:$0xff]
        %v718 = vld [vmem:[#allocation6 + $0x10] sm:$0xff]
        %v719 = vld [vmem:[#allocation6 + $0x18] sm:$0xff]
        %v720 = vld [vmem:[#allocation6 + $0x20] sm:$0xff]
        %v721 = vld [vmem:[#allocation6 + $0x28] sm:$0xff]
        %v722 = vld [vmem:[#allocation6 + $0x30] sm:$0xff]
        %v723 = vld [vmem:[#allocation6 + $0x38] sm:$0xff]
        %v724 = vld [vmem:[#allocation6 + $0x40] sm:$0xff]
        %v725 = vld [vmem:[#allocation6 + $0x48] sm:$0xff]
        %v726 = vld [vmem:[#allocation6 + $0x50] sm:$0xff]
        %v727 = vld [vmem:[#allocation6 + $0x58] sm:$0xff]
        %s728 = scalar_lea.vmem [#allocation3], 96
        %v729 = vld [vmem:[%s728] sm:$0xff]
        %v730 = vld [vmem:[%s728 + $0x8] sm:$0xff]
        %v731 = vld [vmem:[%s728 + $0x10] sm:$0xff]
        %v732 = vld [vmem:[%s728 + $0x18] sm:$0xff]
        %v733 = vld [vmem:[%s728 + $0x20] sm:$0xff]
        %v734 = vld [vmem:[%s728 + $0x28] sm:$0xff]
        %v735 = vld [vmem:[%s728 + $0x30] sm:$0xff]
        %v736 = vld [vmem:[%s728 + $0x38] sm:$0xff]
        %v737 = vld [vmem:[%s728 + $0x40] sm:$0xff]
        %v738 = vld [vmem:[%s728 + $0x48] sm:$0xff]
        %v739 = vld [vmem:[%s728 + $0x50] sm:$0xff]
        %v740 = vld [vmem:[%s728 + $0x58] sm:$0xff]
        %v756 = vunpack.c.l.s4 1966171168
        %v757 = vunpack.c.0.s8 %v756
        %v758 = vlaneseq
        %v759 = vshrl.u32 %v758, 7
        %v760 = vsub.s32 %v757, %v759
        %v761 = vrot.slane %v688, %v760
        %v763 = vunpack.c.l.s4 1966171168
        %v764 = vunpack.c.0.s8 %v763
        %v765 = vlaneseq
        %v766 = vshrl.u32 %v765, 7
        %v767 = vsub.s32 %v764, %v766
        %v768 = vrot.slane %v761, %v767
        %v770 = vunpack.c.l.s4 1966171168
        %v771 = vunpack.c.0.s8 %v770
        %v772 = vlaneseq
        %v773 = vshrl.u32 %v772, 7
        %v774 = vsub.s32 %v771, %v773
        %v775 = vrot.slane %v689, %v774
        %v777 = vunpack.c.l.s4 1966171168
        %v778 = vunpack.c.0.s8 %v777
        %v779 = vlaneseq
        %v780 = vshrl.u32 %v779, 7
        %v781 = vsub.s32 %v778, %v780
        %v782 = vrot.slane %v775, %v781
        %v784 = vunpack.c.l.s4 1966171168
        %v785 = vunpack.c.0.s8 %v784
        %v786 = vlaneseq
        %v787 = vshrl.u32 %v786, 7
        %v788 = vsub.s32 %v785, %v787
        %v789 = vrot.slane %v690, %v788
        %v791 = vunpack.c.l.s4 1966171168
        %v792 = vunpack.c.0.s8 %v791
        %v793 = vlaneseq
        %v794 = vshrl.u32 %v793, 7
        %v795 = vsub.s32 %v792, %v794
        %v796 = vrot.slane %v789, %v795
        %v798 = vunpack.c.l.s4 1966171168
        %v799 = vunpack.c.0.s8 %v798
        %v800 = vlaneseq
        %v801 = vshrl.u32 %v800, 7
        %v802 = vsub.s32 %v799, %v801
        %v803 = vrot.slane %v691, %v802
        %v805 = vunpack.c.l.s4 1966171168
        %v806 = vunpack.c.0.s8 %v805
        %v807 = vlaneseq
        %v808 = vshrl.u32 %v807, 7
        %v809 = vsub.s32 %v806, %v808
        %v810 = vrot.slane %v803, %v809
        %v812 = vunpack.c.l.s4 1966171168
        %v813 = vunpack.c.0.s8 %v812
        %v814 = vlaneseq
        %v815 = vshrl.u32 %v814, 7
        %v816 = vsub.s32 %v813, %v815
        %v817 = vrot.slane %v692, %v816
        %v819 = vunpack.c.l.s4 1966171168
        %v820 = vunpack.c.0.s8 %v819
        %v821 = vlaneseq
        %v822 = vshrl.u32 %v821, 7
        %v823 = vsub.s32 %v820, %v822
        %v824 = vrot.slane %v817, %v823
        %v826 = vunpack.c.l.s4 1966171168
        %v827 = vunpack.c.0.s8 %v826
        %v828 = vlaneseq
        %v829 = vshrl.u32 %v828, 7
        %v830 = vsub.s32 %v827, %v829
        %v831 = vrot.slane %v693, %v830
        %v833 = vunpack.c.l.s4 1966171168
        %v834 = vunpack.c.0.s8 %v833
        %v835 = vlaneseq
        %v836 = vshrl.u32 %v835, 7
        %v837 = vsub.s32 %v834, %v836
        %v838 = vrot.slane %v831, %v837
        %v840 = vunpack.c.l.s4 1966171168
        %v841 = vunpack.c.0.s8 %v840
        %v842 = vlaneseq
        %v843 = vshrl.u32 %v842, 7
        %v844 = vsub.s32 %v841, %v843
        %v845 = vrot.slane %v694, %v844
        %v847 = vunpack.c.l.s4 1966171168
        %v848 = vunpack.c.0.s8 %v847
        %v849 = vlaneseq
        %v850 = vshrl.u32 %v849, 7
        %v851 = vsub.s32 %v848, %v850
        %v852 = vrot.slane %v845, %v851
        %v854 = vunpack.c.l.s4 1966171168
        %v855 = vunpack.c.0.s8 %v854
        %v856 = vlaneseq
        %v857 = vshrl.u32 %v856, 7
        %v858 = vsub.s32 %v855, %v857
        %v859 = vrot.slane %v695, %v858
        %v861 = vunpack.c.l.s4 1966171168
        %v862 = vunpack.c.0.s8 %v861
        %v863 = vlaneseq
        %v864 = vshrl.u32 %v863, 7
        %v865 = vsub.s32 %v862, %v864
        %v866 = vrot.slane %v859, %v865
        %v868 = vunpack.c.l.s4 1966171168
        %v869 = vunpack.c.0.s8 %v868
        %v870 = vlaneseq
        %v871 = vshrl.u32 %v870, 7
        %v872 = vsub.s32 %v869, %v871
        %v873 = vrot.slane %v696, %v872
        %v875 = vunpack.c.l.s4 1966171168
        %v876 = vunpack.c.0.s8 %v875
        %v877 = vlaneseq
        %v878 = vshrl.u32 %v877, 7
        %v879 = vsub.s32 %v876, %v878
        %v880 = vrot.slane %v873, %v879
        %v882 = vunpack.c.l.s4 1966171168
        %v883 = vunpack.c.0.s8 %v882
        %v884 = vlaneseq
        %v885 = vshrl.u32 %v884, 7
        %v886 = vsub.s32 %v883, %v885
        %v887 = vrot.slane %v697, %v886
        %v889 = vunpack.c.l.s4 1966171168
        %v890 = vunpack.c.0.s8 %v889
        %v891 = vlaneseq
        %v892 = vshrl.u32 %v891, 7
        %v893 = vsub.s32 %v890, %v892
        %v894 = vrot.slane %v887, %v893
        %v896 = vunpack.c.l.s4 1966171168
        %v897 = vunpack.c.0.s8 %v896
        %v898 = vlaneseq
        %v899 = vshrl.u32 %v898, 7
        %v900 = vsub.s32 %v897, %v899
        %v901 = vrot.slane %v698, %v900
        %v903 = vunpack.c.l.s4 1966171168
        %v904 = vunpack.c.0.s8 %v903
        %v905 = vlaneseq
        %v906 = vshrl.u32 %v905, 7
        %v907 = vsub.s32 %v904, %v906
        %v908 = vrot.slane %v901, %v907
        %v910 = vunpack.c.l.s4 1966171168
        %v911 = vunpack.c.0.s8 %v910
        %v912 = vlaneseq
        %v913 = vshrl.u32 %v912, 7
        %v914 = vsub.s32 %v911, %v913
        %v915 = vrot.slane %v699, %v914
        %v917 = vunpack.c.l.s4 1966171168
        %v918 = vunpack.c.0.s8 %v917
        %v919 = vlaneseq
        %v920 = vshrl.u32 %v919, 7
        %v921 = vsub.s32 %v918, %v920
        %v922 = vrot.slane %v915, %v921
        %v924 = vunpack.c.l.s4 1966171168
        %v925 = vunpack.c.0.s8 %v924
        %v926 = vlaneseq
        %v927 = vshrl.u32 %v926, 7
        %v928 = vsub.s32 %v925, %v927
        %v929 = vrot.slane %v700, %v928
        %v931 = vunpack.c.l.s4 1966171168
        %v932 = vunpack.c.0.s8 %v931
        %v933 = vlaneseq
        %v934 = vshrl.u32 %v933, 7
        %v935 = vsub.s32 %v932, %v934
        %v936 = vrot.slane %v929, %v935
        %v938 = vunpack.c.l.s4 1966171168
        %v939 = vunpack.c.0.s8 %v938
        %v940 = vlaneseq
        %v941 = vshrl.u32 %v940, 7
        %v942 = vsub.s32 %v939, %v941
        %v943 = vrot.slane %v701, %v942
        %v945 = vunpack.c.l.s4 1966171168
        %v946 = vunpack.c.0.s8 %v945
        %v947 = vlaneseq
        %v948 = vshrl.u32 %v947, 7
        %v949 = vsub.s32 %v946, %v948
        %v950 = vrot.slane %v943, %v949
        %v951 = vunpack.c.l.b16 %v768
        %v952 = vunpack.c.l.b16 %v782
        %v953 = vunpack.c.l.b16 %v796
        %v954 = vunpack.c.l.b16 %v810
        %v955 = vunpack.c.l.b16 %v824
        %v956 = vunpack.c.l.b16 %v838
        %v957 = vunpack.c.l.b16 %v852
        %v958 = vunpack.c.l.b16 %v866
        %v959 = vunpack.c.l.b16 %v880
        %v960 = vunpack.c.l.b16 %v894
        %v961 = vunpack.c.l.b16 %v908
        %v962 = vunpack.c.l.b16 %v922
        %v963 = vunpack.c.l.b16 %v936
        %v964 = vunpack.c.l.b16 %v950
        %v965 = vrot.slane %v952, 7
        %vm966 = vcmask 1041409
        %v967 = vsel %vm966, %v965, %v951
        %v968 = vrot.slane %v953, 6
        %vm969 = vcmask 1042434
        %v970 = vsel %vm969, %v968, %v967
        %v971 = vrot.slane %v954, 5
        %vm972 = vcmask 1043459
        %v973 = vsel %vm972, %v971, %v970
        %v974 = vrot.slane %v955, 4
        %vm975 = vcmask 1044484
        %v976 = vsel %vm975, %v974, %v973
        %v977 = vrot.slane %v956, 3
        %vm978 = vcmask 1045509
        %v979 = vsel %vm978, %v977, %v976
        %v980 = vrot.slane %v957, 2
        %vm981 = vcmask 1046534
        %v982 = vsel %vm981, %v980, %v979
        %v983 = vrot.slane %v958, 1
        %vm984 = vcmask 1047559
        %v985 = vsel %vm984, %v983, %v982
        %v986 = vrot.slane %v960, 7
        %v987 = vsel %vm966, %v986, %v959
        %v988 = vrot.slane %v961, 6
        %v989 = vsel %vm969, %v988, %v987
        %v990 = vrot.slane %v962, 5
        %v991 = vsel %vm972, %v990, %v989
        %v992 = vrot.slane %v963, 4
        %v993 = vsel %vm975, %v992, %v991
        %v994 = vrot.slane %v964, 3
        %v995 = vsel %vm978, %v994, %v993
        %v996 = vpack.c.b16 %v995, %v985
        %v1009 = vunpack.c.l.b16 %v729
        %v1010 = vunpack.c.h.b16 %v729
        %v1011 = vunpack.c.l.b16 %v730
        %v1012 = vunpack.c.h.b16 %v730
        %v1013 = vunpack.c.l.b16 %v731
        %v1014 = vunpack.c.h.b16 %v731
        %v1015 = vunpack.c.l.b16 %v732
        %v1016 = vunpack.c.h.b16 %v732
        %v1017 = vunpack.c.l.b16 %v733
        %v1018 = vunpack.c.h.b16 %v733
        %v1019 = vunpack.c.l.b16 %v734
        %v1020 = vunpack.c.h.b16 %v734
        %v1021 = vunpack.c.l.b16 %v735
        %v1022 = vunpack.c.h.b16 %v735
        %v1023 = vunpack.c.l.b16 %v736
        %v1024 = vunpack.c.h.b16 %v736
        %v1025 = vunpack.c.l.b16 %v737
        %v1026 = vunpack.c.h.b16 %v737
        %v1027 = vunpack.c.l.b16 %v738
        %v1028 = vunpack.c.h.b16 %v738
        %v1029 = vunpack.c.l.b16 %v739
        %v1030 = vunpack.c.h.b16 %v739
        %v1031 = vunpack.c.l.b16 %v740
        %v1032 = vunpack.c.h.b16 %v740
        %v1033 = vpack.c.b16 %v1011, %v1009
        %v1034 = vpack.c.b16 %v1012, %v1010
        %v1035 = vpack.c.b16 %v1015, %v1013
        %v1036 = vpack.c.b16 %v1016, %v1014
        %v1037 = vpack.c.b16 %v1019, %v1017
        %v1038 = vpack.c.b16 %v1020, %v1018
        %v1039 = vpack.c.b16 %v1023, %v1021
        %v1040 = vpack.c.b16 %v1024, %v1022
        %v1041 = vpack.c.b16 %v1027, %v1025
        %v1042 = vpack.c.b16 %v1028, %v1026
        %v1043 = vpack.c.b16 %v1031, %v1029
        %v1044 = vpack.c.b16 %v1032, %v1030
        %vm1057 = vcmask 785408
        %v1059 = vsel %vm1057, %v996, 0
        %1061 = vmatprep.subr.bf16.mxu0 %v1034
        %1062 = vmatpush1.bf16.msra.mxu0 %v1033
        %1063 = vmatprep.subr.bf16.mxu0 %v1036
        %1064 = vmatpush1.bf16.msra.mxu0 %v1035
        %1065 = vmatprep.subr.bf16.mxu0 %v1038
        %1066 = vmatpush1.bf16.msra.mxu0 %v1037
        %1067 = vmatprep.subr.bf16.mxu0 %v1040
        %1068 = vmatpush1.bf16.msra.mxu0 %v1039
        %1069 = vmatprep.subr.bf16.mxu0 %v1042
        %1070 = vmatpush1.bf16.msra.mxu0 %v1041
        %1071 = vmatprep.subr.bf16.mxu0 %v1044
        %1072 = vmatpush1.bf16.msra.mxu0 %v1043
        %1073 = vmatprep.subr.bf16.mxu0 0
        %1074 = vmatpush1.bf16.msra.mxu0 0
        %1075 = vmatprep.subr.bf16.mxu0 0
        %1076 = vmatpush1.bf16.msra.mxu0 0
        %1077 = vmatprep.subr.bf16.mxu0 0
        %1078 = vmatpush1.bf16.msra.mxu0 0
        %1079 = vmatprep.subr.bf16.mxu0 0
        %1080 = vmatpush1.bf16.msra.mxu0 0
        %1081 = vmatprep.subr.bf16.mxu0 0
        %1082 = vmatpush1.bf16.msra.mxu0 0
        %1083 = vmatprep.subr.bf16.mxu0 0
        %1084 = vmatpush1.bf16.msra.mxu0 0
        %1085 = vmatprep.subr.bf16.mxu0 0
        %1086 = vmatpush1.bf16.msra.mxu0 0
        %1087 = vmatprep.subr.bf16.mxu0 0
        %1088 = vmatpush1.bf16.msra.mxu0 0
        %1089 = vmatprep.subr.bf16.mxu0 0
        %1090 = vmatpush1.bf16.msra.mxu0 0
        %1091 = vmatprep.subr.bf16.mxu0 0
        %1092 = vmatpush1.bf16.msra.mxu0 0
        %1093 = vmatprep.mubr.bf16.mxu0 0
        %1094 = vmatmul.mubr.bf16.gmra.mrb[0].mxu0 %v1059
        %v1095 = vpop.f32.mrb[0].mxu0
        %v1096 = vadd.f32 0.0, %v1095
        %v1097 = vpop.f32.mrb[0].mxu0
        %v1098 = vadd.f32 0.0, %v1097
        %v1099 = vpop.f32.mrb[0].mxu0
        %v1100 = vadd.f32 0.0, %v1099
        %v1101 = vpop.f32.mrb[0].mxu0
        %v1102 = vadd.f32 0.0, %v1101
        %1103 = vdwg.mxu0
        %v1119 = vunpack.c.l.s4 1966171168
        %v1120 = vunpack.c.0.s8 %v1119
        %v1121 = vlaneseq
        %v1122 = vshrl.u32 %v1121, 7
        %v1123 = vsub.s32 %v1120, %v1122
        %v1124 = vrot.slane %v672, %v1123
        %v1126 = vunpack.c.l.s4 1966171168
        %v1127 = vunpack.c.0.s8 %v1126
        %v1128 = vlaneseq
        %v1129 = vshrl.u32 %v1128, 7
        %v1130 = vsub.s32 %v1127, %v1129
        %v1131 = vrot.slane %v1124, %v1130
        %v1133 = vunpack.c.l.s4 1966171168
        %v1134 = vunpack.c.0.s8 %v1133
        %v1135 = vlaneseq
        %v1136 = vshrl.u32 %v1135, 7
        %v1137 = vsub.s32 %v1134, %v1136
        %v1138 = vrot.slane %v673, %v1137
        %v1140 = vunpack.c.l.s4 1966171168
        %v1141 = vunpack.c.0.s8 %v1140
        %v1142 = vlaneseq
        %v1143 = vshrl.u32 %v1142, 7
        %v1144 = vsub.s32 %v1141, %v1143
        %v1145 = vrot.slane %v1138, %v1144
        %v1147 = vunpack.c.l.s4 1966171168
        %v1148 = vunpack.c.0.s8 %v1147
        %v1149 = vlaneseq
        %v1150 = vshrl.u32 %v1149, 7
        %v1151 = vsub.s32 %v1148, %v1150
        %v1152 = vrot.slane %v674, %v1151
        %v1154 = vunpack.c.l.s4 1966171168
        %v1155 = vunpack.c.0.s8 %v1154
        %v1156 = vlaneseq
        %v1157 = vshrl.u32 %v1156, 7
        %v1158 = vsub.s32 %v1155, %v1157
        %v1159 = vrot.slane %v1152, %v1158
        %v1161 = vunpack.c.l.s4 1966171168
        %v1162 = vunpack.c.0.s8 %v1161
        %v1163 = vlaneseq
        %v1164 = vshrl.u32 %v1163, 7
        %v1165 = vsub.s32 %v1162, %v1164
        %v1166 = vrot.slane %v675, %v1165
        %v1168 = vunpack.c.l.s4 1966171168
        %v1169 = vunpack.c.0.s8 %v1168
        %v1170 = vlaneseq
        %v1171 = vshrl.u32 %v1170, 7
        %v1172 = vsub.s32 %v1169, %v1171
        %v1173 = vrot.slane %v1166, %v1172
        %v1175 = vunpack.c.l.s4 1966171168
        %v1176 = vunpack.c.0.s8 %v1175
        %v1177 = vlaneseq
        %v1178 = vshrl.u32 %v1177, 7
        %v1179 = vsub.s32 %v1176, %v1178
        %v1180 = vrot.slane %v676, %v1179
        %v1182 = vunpack.c.l.s4 1966171168
        %v1183 = vunpack.c.0.s8 %v1182
        %v1184 = vlaneseq
        %v1185 = vshrl.u32 %v1184, 7
        %v1186 = vsub.s32 %v1183, %v1185
        %v1187 = vrot.slane %v1180, %v1186
        %v1189 = vunpack.c.l.s4 1966171168
        %v1190 = vunpack.c.0.s8 %v1189
        %v1191 = vlaneseq
        %v1192 = vshrl.u32 %v1191, 7
        %v1193 = vsub.s32 %v1190, %v1192
        %v1194 = vrot.slane %v677, %v1193
        %v1196 = vunpack.c.l.s4 1966171168
        %v1197 = vunpack.c.0.s8 %v1196
        %v1198 = vlaneseq
        %v1199 = vshrl.u32 %v1198, 7
        %v1200 = vsub.s32 %v1197, %v1199
        %v1201 = vrot.slane %v1194, %v1200
        %v1203 = vunpack.c.l.s4 1966171168
        %v1204 = vunpack.c.0.s8 %v1203
        %v1205 = vlaneseq
        %v1206 = vshrl.u32 %v1205, 7
        %v1207 = vsub.s32 %v1204, %v1206
        %v1208 = vrot.slane %v678, %v1207
        %v1210 = vunpack.c.l.s4 1966171168
        %v1211 = vunpack.c.0.s8 %v1210
        %v1212 = vlaneseq
        %v1213 = vshrl.u32 %v1212, 7
        %v1214 = vsub.s32 %v1211, %v1213
        %v1215 = vrot.slane %v1208, %v1214
        %v1217 = vunpack.c.l.s4 1966171168
        %v1218 = vunpack.c.0.s8 %v1217
        %v1219 = vlaneseq
        %v1220 = vshrl.u32 %v1219, 7
        %v1221 = vsub.s32 %v1218, %v1220
        %v1222 = vrot.slane %v679, %v1221
        %v1224 = vunpack.c.l.s4 1966171168
        %v1225 = vunpack.c.0.s8 %v1224
        %v1226 = vlaneseq
        %v1227 = vshrl.u32 %v1226, 7
        %v1228 = vsub.s32 %v1225, %v1227
        %v1229 = vrot.slane %v1222, %v1228
        %v1231 = vunpack.c.l.s4 1966171168
        %v1232 = vunpack.c.0.s8 %v1231
        %v1233 = vlaneseq
        %v1234 = vshrl.u32 %v1233, 7
        %v1235 = vsub.s32 %v1232, %v1234
        %v1236 = vrot.slane %v680, %v1235
        %v1238 = vunpack.c.l.s4 1966171168
        %v1239 = vunpack.c.0.s8 %v1238
        %v1240 = vlaneseq
        %v1241 = vshrl.u32 %v1240, 7
        %v1242 = vsub.s32 %v1239, %v1241
        %v1243 = vrot.slane %v1236, %v1242
        %v1245 = vunpack.c.l.s4 1966171168
        %v1246 = vunpack.c.0.s8 %v1245
        %v1247 = vlaneseq
        %v1248 = vshrl.u32 %v1247, 7
        %v1249 = vsub.s32 %v1246, %v1248
        %v1250 = vrot.slane %v681, %v1249
        %v1252 = vunpack.c.l.s4 1966171168
        %v1253 = vunpack.c.0.s8 %v1252
        %v1254 = vlaneseq
        %v1255 = vshrl.u32 %v1254, 7
        %v1256 = vsub.s32 %v1253, %v1255
        %v1257 = vrot.slane %v1250, %v1256
        %v1259 = vunpack.c.l.s4 1966171168
        %v1260 = vunpack.c.0.s8 %v1259
        %v1261 = vlaneseq
        %v1262 = vshrl.u32 %v1261, 7
        %v1263 = vsub.s32 %v1260, %v1262
        %v1264 = vrot.slane %v682, %v1263
        %v1266 = vunpack.c.l.s4 1966171168
        %v1267 = vunpack.c.0.s8 %v1266
        %v1268 = vlaneseq
        %v1269 = vshrl.u32 %v1268, 7
        %v1270 = vsub.s32 %v1267, %v1269
        %v1271 = vrot.slane %v1264, %v1270
        %v1273 = vunpack.c.l.s4 1966171168
        %v1274 = vunpack.c.0.s8 %v1273
        %v1275 = vlaneseq
        %v1276 = vshrl.u32 %v1275, 7
        %v1277 = vsub.s32 %v1274, %v1276
        %v1278 = vrot.slane %v683, %v1277
        %v1280 = vunpack.c.l.s4 1966171168
        %v1281 = vunpack.c.0.s8 %v1280
        %v1282 = vlaneseq
        %v1283 = vshrl.u32 %v1282, 7
        %v1284 = vsub.s32 %v1281, %v1283
        %v1285 = vrot.slane %v1278, %v1284
        %v1287 = vunpack.c.l.s4 1966171168
        %v1288 = vunpack.c.0.s8 %v1287
        %v1289 = vlaneseq
        %v1290 = vshrl.u32 %v1289, 7
        %v1291 = vsub.s32 %v1288, %v1290
        %v1292 = vrot.slane %v684, %v1291
        %v1294 = vunpack.c.l.s4 1966171168
        %v1295 = vunpack.c.0.s8 %v1294
        %v1296 = vlaneseq
        %v1297 = vshrl.u32 %v1296, 7
        %v1298 = vsub.s32 %v1295, %v1297
        %v1299 = vrot.slane %v1292, %v1298
        %v1301 = vunpack.c.l.s4 1966171168
        %v1302 = vunpack.c.0.s8 %v1301
        %v1303 = vlaneseq
        %v1304 = vshrl.u32 %v1303, 7
        %v1305 = vsub.s32 %v1302, %v1304
        %v1306 = vrot.slane %v685, %v1305
        %v1308 = vunpack.c.l.s4 1966171168
        %v1309 = vunpack.c.0.s8 %v1308
        %v1310 = vlaneseq
        %v1311 = vshrl.u32 %v1310, 7
        %v1312 = vsub.s32 %v1309, %v1311
        %v1313 = vrot.slane %v1306, %v1312
        %v1314 = vunpack.c.l.b16 %v1131
        %v1315 = vunpack.c.l.b16 %v1145
        %v1316 = vunpack.c.l.b16 %v1159
        %v1317 = vunpack.c.l.b16 %v1173
        %v1318 = vunpack.c.l.b16 %v1187
        %v1319 = vunpack.c.l.b16 %v1201
        %v1320 = vunpack.c.l.b16 %v1215
        %v1321 = vunpack.c.l.b16 %v1229
        %v1322 = vunpack.c.l.b16 %v1243
        %v1323 = vunpack.c.l.b16 %v1257
        %v1324 = vunpack.c.l.b16 %v1271
        %v1325 = vunpack.c.l.b16 %v1285
        %v1326 = vunpack.c.l.b16 %v1299
        %v1327 = vunpack.c.l.b16 %v1313
        %v1328 = vrot.slane %v1315, 7
        %v1329 = vsel %vm966, %v1328, %v1314
        %v1330 = vrot.slane %v1316, 6
        %v1331 = vsel %vm969, %v1330, %v1329
        %v1332 = vrot.slane %v1317, 5
        %v1333 = vsel %vm972, %v1332, %v1331
        %v1334 = vrot.slane %v1318, 4
        %v1335 = vsel %vm975, %v1334, %v1333
        %v1336 = vrot.slane %v1319, 3
        %v1337 = vsel %vm978, %v1336, %v1335
        %v1338 = vrot.slane %v1320, 2
        %v1339 = vsel %vm981, %v1338, %v1337
        %v1340 = vrot.slane %v1321, 1
        %v1341 = vsel %vm984, %v1340, %v1339
        %v1342 = vrot.slane %v1323, 7
        %v1343 = vsel %vm966, %v1342, %v1322
        %v1344 = vrot.slane %v1324, 6
        %v1345 = vsel %vm969, %v1344, %v1343
        %v1346 = vrot.slane %v1325, 5
        %v1347 = vsel %vm972, %v1346, %v1345
        %v1348 = vrot.slane %v1326, 4
        %v1349 = vsel %vm975, %v1348, %v1347
        %v1350 = vrot.slane %v1327, 3
        %v1351 = vsel %vm978, %v1350, %v1349
        %v1352 = vpack.c.b16 %v1351, %v1341
        %v1365 = vunpack.c.l.b16 %v704
        %v1366 = vunpack.c.h.b16 %v704
        %v1367 = vunpack.c.l.b16 %v705
        %v1368 = vunpack.c.h.b16 %v705
        %v1369 = vunpack.c.l.b16 %v706
        %v1370 = vunpack.c.h.b16 %v706
        %v1371 = vunpack.c.l.b16 %v707
        %v1372 = vunpack.c.h.b16 %v707
        %v1373 = vunpack.c.l.b16 %v708
        %v1374 = vunpack.c.h.b16 %v708
        %v1375 = vunpack.c.l.b16 %v709
        %v1376 = vunpack.c.h.b16 %v709
        %v1377 = vunpack.c.l.b16 %v710
        %v1378 = vunpack.c.h.b16 %v710
        %v1379 = vunpack.c.l.b16 %v711
        %v1380 = vunpack.c.h.b16 %v711
        %v1381 = vunpack.c.l.b16 %v712
        %v1382 = vunpack.c.h.b16 %v712
        %v1383 = vunpack.c.l.b16 %v713
        %v1384 = vunpack.c.h.b16 %v713
        %v1385 = vunpack.c.l.b16 %v714
        %v1386 = vunpack.c.h.b16 %v714
        %v1387 = vunpack.c.l.b16 %v715
        %v1388 = vunpack.c.h.b16 %v715
        %v1389 = vpack.c.b16 %v1367, %v1365
        %v1390 = vpack.c.b16 %v1368, %v1366
        %v1391 = vpack.c.b16 %v1371, %v1369
        %v1392 = vpack.c.b16 %v1372, %v1370
        %v1393 = vpack.c.b16 %v1375, %v1373
        %v1394 = vpack.c.b16 %v1376, %v1374
        %v1395 = vpack.c.b16 %v1379, %v1377
        %v1396 = vpack.c.b16 %v1380, %v1378
        %v1397 = vpack.c.b16 %v1383, %v1381
        %v1398 = vpack.c.b16 %v1384, %v1382
        %v1399 = vpack.c.b16 %v1387, %v1385
        %v1400 = vpack.c.b16 %v1388, %v1386
        %v1414 = vsel %vm1057, %v1352, 0
        %1416 = vmatprep.subr.bf16.mxu0 %v1390
        %1417 = vmatpush1.bf16.msra.mxu0 %v1389
        %1418 = vmatprep.subr.bf16.mxu0 %v1392
        %1419 = vmatpush1.bf16.msra.mxu0 %v1391
        %1420 = vmatprep.subr.bf16.mxu0 %v1394
        %1421 = vmatpush1.bf16.msra.mxu0 %v1393
        %1422 = vmatprep.subr.bf16.mxu0 %v1396
        %1423 = vmatpush1.bf16.msra.mxu0 %v1395
        %1424 = vmatprep.subr.bf16.mxu0 %v1398
        %1425 = vmatpush1.bf16.msra.mxu0 %v1397
        %1426 = vmatprep.subr.bf16.mxu0 %v1400
        %1427 = vmatpush1.bf16.msra.mxu0 %v1399
        %1428 = vmatprep.subr.bf16.mxu0 0
        %1429 = vmatpush1.bf16.msra.mxu0 0
        %1430 = vmatprep.subr.bf16.mxu0 0
        %1431 = vmatpush1.bf16.msra.mxu0 0
        %1432 = vmatprep.subr.bf16.mxu0 0
        %1433 = vmatpush1.bf16.msra.mxu0 0
        %1434 = vmatprep.subr.bf16.mxu0 0
        %1435 = vmatpush1.bf16.msra.mxu0 0
        %1436 = vmatprep.subr.bf16.mxu0 0
        %1437 = vmatpush1.bf16.msra.mxu0 0
        %1438 = vmatprep.subr.bf16.mxu0 0
        %1439 = vmatpush1.bf16.msra.mxu0 0
        %1440 = vmatprep.subr.bf16.mxu0 0
        %1441 = vmatpush1.bf16.msra.mxu0 0
        %1442 = vmatprep.subr.bf16.mxu0 0
        %1443 = vmatpush1.bf16.msra.mxu0 0
        %1444 = vmatprep.subr.bf16.mxu0 0
        %1445 = vmatpush1.bf16.msra.mxu0 0
        %1446 = vmatprep.subr.bf16.mxu0 0
        %1447 = vmatpush1.bf16.msra.mxu0 0
        %1448 = vmatprep.mubr.bf16.mxu0 0
        %1449 = vmatmul.mubr.bf16.gmra.mrb[0].mxu0 %v1414
        %v1450 = vpop.f32.mrb[0].mxu0
        %v1451 = vadd.f32 %v1096, %v1450
        %v1452 = vpop.f32.mrb[0].mxu0
        %v1453 = vadd.f32 %v1098, %v1452
        %v1454 = vpop.f32.mrb[0].mxu0
        %v1455 = vadd.f32 %v1100, %v1454
        %v1456 = vpop.f32.mrb[0].mxu0
        %v1457 = vadd.f32 %v1102, %v1456
        %1458 = vdwg.mxu0
        %s1459 = scalar_lea.vmem [#allocation6], 96
        %v1460 = vld [vmem:[%s1459] sm:$0xff]
        %v1461 = vld [vmem:[%s1459 + $0x8] sm:$0xff]
        %v1462 = vld [vmem:[%s1459 + $0x10] sm:$0xff]
        %v1463 = vld [vmem:[%s1459 + $0x18] sm:$0xff]
        %v1464 = vld [vmem:[%s1459 + $0x20] sm:$0xff]
        %v1465 = vld [vmem:[%s1459 + $0x28] sm:$0xff]
        %v1466 = vld [vmem:[%s1459 + $0x30] sm:$0xff]
        %v1467 = vld [vmem:[%s1459 + $0x38] sm:$0xff]
        %v1468 = vld [vmem:[%s1459 + $0x40] sm:$0xff]
        %v1469 = vld [vmem:[%s1459 + $0x48] sm:$0xff]
        %v1470 = vld [vmem:[%s1459 + $0x50] sm:$0xff]
        %v1471 = vld [vmem:[%s1459 + $0x58] sm:$0xff]
        %v1484 = vunpack.c.l.b16 %v1460
        %v1485 = vunpack.c.h.b16 %v1460
        %v1486 = vunpack.c.l.b16 %v1461
        %v1487 = vunpack.c.h.b16 %v1461
        %v1488 = vunpack.c.l.b16 %v1462
        %v1489 = vunpack.c.h.b16 %v1462
        %v1490 = vunpack.c.l.b16 %v1463
        %v1491 = vunpack.c.h.b16 %v1463
        %v1492 = vunpack.c.l.b16 %v1464
        %v1493 = vunpack.c.h.b16 %v1464
        %v1494 = vunpack.c.l.b16 %v1465
        %v1495 = vunpack.c.h.b16 %v1465
        %v1496 = vunpack.c.l.b16 %v1466
        %v1497 = vunpack.c.h.b16 %v1466
        %v1498 = vunpack.c.l.b16 %v1467
        %v1499 = vunpack.c.h.b16 %v1467
        %v1500 = vunpack.c.l.b16 %v1468
        %v1501 = vunpack.c.h.b16 %v1468
        %v1502 = vunpack.c.l.b16 %v1469
        %v1503 = vunpack.c.h.b16 %v1469
        %v1504 = vunpack.c.l.b16 %v1470
        %v1505 = vunpack.c.h.b16 %v1470
        %v1506 = vunpack.c.l.b16 %v1471
        %v1507 = vunpack.c.h.b16 %v1471
        %v1508 = vpack.c.b16 %v1486, %v1484
        %v1509 = vpack.c.b16 %v1487, %v1485
        %v1510 = vpack.c.b16 %v1490, %v1488
        %v1511 = vpack.c.b16 %v1491, %v1489
        %v1512 = vpack.c.b16 %v1494, %v1492
        %v1513 = vpack.c.b16 %v1495, %v1493
        %v1514 = vpack.c.b16 %v1498, %v1496
        %v1515 = vpack.c.b16 %v1499, %v1497
        %v1516 = vpack.c.b16 %v1502, %v1500
        %v1517 = vpack.c.b16 %v1503, %v1501
        %v1518 = vpack.c.b16 %v1506, %v1504
        %v1519 = vpack.c.b16 %v1507, %v1505
        %1532 = vmatprep.subr.bf16.mxu0 %v1509
        %1533 = vmatpush1.bf16.msra.mxu0 %v1508
        %1534 = vmatprep.subr.bf16.mxu0 %v1511
        %1535 = vmatpush1.bf16.msra.mxu0 %v1510
        %1536 = vmatprep.subr.bf16.mxu0 %v1513
        %1537 = vmatpush1.bf16.msra.mxu0 %v1512
        %1538 = vmatprep.subr.bf16.mxu0 %v1515
        %1539 = vmatpush1.bf16.msra.mxu0 %v1514
        %1540 = vmatprep.subr.bf16.mxu0 %v1517
        %1541 = vmatpush1.bf16.msra.mxu0 %v1516
        %1542 = vmatprep.subr.bf16.mxu0 %v1519
        %1543 = vmatpush1.bf16.msra.mxu0 %v1518
        %1544 = vmatprep.subr.bf16.mxu0 0
        %1545 = vmatpush1.bf16.msra.mxu0 0
        %1546 = vmatprep.subr.bf16.mxu0 0
        %1547 = vmatpush1.bf16.msra.mxu0 0
        %1548 = vmatprep.subr.bf16.mxu0 0
        %1549 = vmatpush1.bf16.msra.mxu0 0
        %1550 = vmatprep.subr.bf16.mxu0 0
        %1551 = vmatpush1.bf16.msra.mxu0 0
        %1552 = vmatprep.subr.bf16.mxu0 0
        %1553 = vmatpush1.bf16.msra.mxu0 0
        %1554 = vmatprep.subr.bf16.mxu0 0
        %1555 = vmatpush1.bf16.msra.mxu0 0
        %1556 = vmatprep.subr.bf16.mxu0 0
        %1557 = vmatpush1.bf16.msra.mxu0 0
        %1558 = vmatprep.subr.bf16.mxu0 0
        %1559 = vmatpush1.bf16.msra.mxu0 0
        %1560 = vmatprep.subr.bf16.mxu0 0
        %1561 = vmatpush1.bf16.msra.mxu0 0
        %1562 = vmatprep.subr.bf16.mxu0 0
        %1563 = vmatpush1.bf16.msra.mxu0 0
        %1564 = vmatprep.mubr.bf16.mxu0 0
        %1565 = vmatmul.mubr.bf16.gmra.mrb[0].mxu0 %v1059
        %v1566 = vpop.f32.mrb[0].mxu0
        %v1567 = vadd.f32 0.0, %v1566
        %v1568 = vpop.f32.mrb[0].mxu0
        %v1569 = vadd.f32 0.0, %v1568
        %v1570 = vpop.f32.mrb[0].mxu0
        %v1571 = vadd.f32 0.0, %v1570
        %v1572 = vpop.f32.mrb[0].mxu0
        %v1573 = vadd.f32 0.0, %v1572
        %1574 = vdwg.mxu0
        %v1587 = vunpack.c.l.b16 %v716
        %v1588 = vunpack.c.h.b16 %v716
        %v1589 = vunpack.c.l.b16 %v717
        %v1590 = vunpack.c.h.b16 %v717
        %v1591 = vunpack.c.l.b16 %v718
        %v1592 = vunpack.c.h.b16 %v718
        %v1593 = vunpack.c.l.b16 %v719
        %v1594 = vunpack.c.h.b16 %v719
        %v1595 = vunpack.c.l.b16 %v720
        %v1596 = vunpack.c.h.b16 %v720
        %v1597 = vunpack.c.l.b16 %v721
        %v1598 = vunpack.c.h.b16 %v721
        %v1599 = vunpack.c.l.b16 %v722
        %v1600 = vunpack.c.h.b16 %v722
        %v1601 = vunpack.c.l.b16 %v723
        %v1602 = vunpack.c.h.b16 %v723
        %v1603 = vunpack.c.l.b16 %v724
        %v1604 = vunpack.c.h.b16 %v724
        %v1605 = vunpack.c.l.b16 %v725
        %v1606 = vunpack.c.h.b16 %v725
        %v1607 = vunpack.c.l.b16 %v726
        %v1608 = vunpack.c.h.b16 %v726
        %v1609 = vunpack.c.l.b16 %v727
        %v1610 = vunpack.c.h.b16 %v727
        %v1611 = vpack.c.b16 %v1589, %v1587
        %v1612 = vpack.c.b16 %v1590, %v1588
        %v1613 = vpack.c.b16 %v1593, %v1591
        %v1614 = vpack.c.b16 %v1594, %v1592
        %v1615 = vpack.c.b16 %v1597, %v1595
        %v1616 = vpack.c.b16 %v1598, %v1596
        %v1617 = vpack.c.b16 %v1601, %v1599
        %v1618 = vpack.c.b16 %v1602, %v1600
        %v1619 = vpack.c.b16 %v1605, %v1603
        %v1620 = vpack.c.b16 %v1606, %v1604
        %v1621 = vpack.c.b16 %v1609, %v1607
        %v1622 = vpack.c.b16 %v1610, %v1608
        %1635 = vmatprep.subr.bf16.mxu0 %v1612
        %1636 = vmatpush1.bf16.msra.mxu0 %v1611
        %1637 = vmatprep.subr.bf16.mxu0 %v1614
        %1638 = vmatpush1.bf16.msra.mxu0 %v1613
        %1639 = vmatprep.subr.bf16.mxu0 %v1616
        %1640 = vmatpush1.bf16.msra.mxu0 %v1615
        %1641 = vmatprep.subr.bf16.mxu0 %v1618
        %1642 = vmatpush1.bf16.msra.mxu0 %v1617
        %1643 = vmatprep.subr.bf16.mxu0 %v1620
        %1644 = vmatpush1.bf16.msra.mxu0 %v1619
        %1645 = vmatprep.subr.bf16.mxu0 %v1622
        %1646 = vmatpush1.bf16.msra.mxu0 %v1621
        %1647 = vmatprep.subr.bf16.mxu0 0
        %1648 = vmatpush1.bf16.msra.mxu0 0
        %1649 = vmatprep.subr.bf16.mxu0 0
        %1650 = vmatpush1.bf16.msra.mxu0 0
        %1651 = vmatprep.subr.bf16.mxu0 0
        %1652 = vmatpush1.bf16.msra.mxu0 0
        %1653 = vmatprep.subr.bf16.mxu0 0
        %1654 = vmatpush1.bf16.msra.mxu0 0
        %1655 = vmatprep.subr.bf16.mxu0 0
        %1656 = vmatpush1.bf16.msra.mxu0 0
        %1657 = vmatprep.subr.bf16.mxu0 0
        %1658 = vmatpush1.bf16.msra.mxu0 0
        %1659 = vmatprep.subr.bf16.mxu0 0
        %1660 = vmatpush1.bf16.msra.mxu0 0
        %1661 = vmatprep.subr.bf16.mxu0 0
        %1662 = vmatpush1.bf16.msra.mxu0 0
        %1663 = vmatprep.subr.bf16.mxu0 0
        %1664 = vmatpush1.bf16.msra.mxu0 0
        %1665 = vmatprep.subr.bf16.mxu0 0
        %1666 = vmatpush1.bf16.msra.mxu0 0
        %1667 = vmatprep.mubr.bf16.mxu0 0
        %1668 = vmatmul.mubr.bf16.gmra.mrb[0].mxu0 %v1414
        %v1669 = vpop.f32.mrb[0].mxu0
        %v1670 = vadd.f32 %v1567, %v1669
        %v1671 = vpop.f32.mrb[0].mxu0
        %v1672 = vadd.f32 %v1569, %v1671
        %v1673 = vpop.f32.mrb[0].mxu0
        %v1674 = vadd.f32 %v1571, %v1673
        %v1675 = vpop.f32.mrb[0].mxu0
        %v1676 = vadd.f32 %v1573, %v1675
        %1677 = vdwg.mxu0
        %s1678 = scalar_lea.vmem [#allocation3], 192
        %v1679 = vld [vmem:[%s1678] sm:$0xff]
        %v1680 = vld [vmem:[%s1678 + $0x8] sm:$0xff]
        %v1681 = vld [vmem:[%s1678 + $0x10] sm:$0xff]
        %v1682 = vld [vmem:[%s1678 + $0x18] sm:$0xff]
        %v1683 = vld [vmem:[%s1678 + $0x20] sm:$0xff]
        %v1684 = vld [vmem:[%s1678 + $0x28] sm:$0xff]
        %v1685 = vld [vmem:[%s1678 + $0x30] sm:$0xff]
        %v1686 = vld [vmem:[%s1678 + $0x38] sm:$0xff]
        %v1687 = vld [vmem:[%s1678 + $0x40] sm:$0xff]
        %v1688 = vld [vmem:[%s1678 + $0x48] sm:$0xff]
        %v1689 = vld [vmem:[%s1678 + $0x50] sm:$0xff]
        %v1690 = vld [vmem:[%s1678 + $0x58] sm:$0xff]
        %v1693 = vunpack.c.l.s4 1966171168
        %v1694 = vunpack.c.0.s8 %v1693
        %v1695 = vlaneseq
        %v1696 = vshrl.u32 %v1695, 7
        %v1697 = vsub.s32 %v1694, %v1696
        %v1698 = vrot.slane %v686, %v1697
        %v1700 = vunpack.c.l.s4 1966171168
        %v1701 = vunpack.c.0.s8 %v1700
        %v1702 = vlaneseq
        %v1703 = vshrl.u32 %v1702, 7
        %v1704 = vsub.s32 %v1701, %v1703
        %v1705 = vrot.slane %v1698, %v1704
        %v1706 = vunpack.c.l.b16 %v1705
        %v1707 = vrot.slane %v1316, 7
        %v1708 = vsel %vm966, %v1707, %v1315
        %v1709 = vrot.slane %v1317, 6
        %v1710 = vsel %vm969, %v1709, %v1708
        %v1711 = vrot.slane %v1318, 5
        %v1712 = vsel %vm972, %v1711, %v1710
        %v1713 = vrot.slane %v1319, 4
        %v1714 = vsel %vm975, %v1713, %v1712
        %v1715 = vrot.slane %v1320, 3
        %v1716 = vsel %vm978, %v1715, %v1714
        %v1717 = vrot.slane %v1321, 2
        %v1718 = vsel %vm981, %v1717, %v1716
        %v1719 = vrot.slane %v1322, 1
        %v1720 = vsel %vm984, %v1719, %v1718
        %v1721 = vrot.slane %v1324, 7
        %v1722 = vsel %vm966, %v1721, %v1323
        %v1723 = vrot.slane %v1325, 6
        %v1724 = vsel %vm969, %v1723, %v1722
        %v1725 = vrot.slane %v1326, 5
        %v1726 = vsel %vm972, %v1725, %v1724
        %v1727 = vrot.slane %v1327, 4
        %v1728 = vsel %vm975, %v1727, %v1726
        %v1729 = vrot.slane %v1706, 3
        %v1730 = vsel %vm978, %v1729, %v1728
        %v1731 = vpack.c.b16 %v1730, %v1720
        %v1744 = vunpack.c.l.b16 %v1679
        %v1745 = vunpack.c.h.b16 %v1679
        %v1746 = vunpack.c.l.b16 %v1680
        %v1747 = vunpack.c.h.b16 %v1680
        %v1748 = vunpack.c.l.b16 %v1681
        %v1749 = vunpack.c.h.b16 %v1681
        %v1750 = vunpack.c.l.b16 %v1682
        %v1751 = vunpack.c.h.b16 %v1682
        %v1752 = vunpack.c.l.b16 %v1683
        %v1753 = vunpack.c.h.b16 %v1683
        %v1754 = vunpack.c.l.b16 %v1684
        %v1755 = vunpack.c.h.b16 %v1684
        %v1756 = vunpack.c.l.b16 %v1685
        %v1757 = vunpack.c.h.b16 %v1685
        %v1758 = vunpack.c.l.b16 %v1686
        %v1759 = vunpack.c.h.b16 %v1686
        %v1760 = vunpack.c.l.b16 %v1687
        %v1761 = vunpack.c.h.b16 %v1687
        %v1762 = vunpack.c.l.b16 %v1688
        %v1763 = vunpack.c.h.b16 %v1688
        %v1764 = vunpack.c.l.b16 %v1689
        %v1765 = vunpack.c.h.b16 %v1689
        %v1766 = vunpack.c.l.b16 %v1690
        %v1767 = vunpack.c.h.b16 %v1690
        %v1768 = vpack.c.b16 %v1746, %v1744
        %v1769 = vpack.c.b16 %v1747, %v1745
        %v1770 = vpack.c.b16 %v1750, %v1748
        %v1771 = vpack.c.b16 %v1751, %v1749
        %v1772 = vpack.c.b16 %v1754, %v1752
        %v1773 = vpack.c.b16 %v1755, %v1753
        %v1774 = vpack.c.b16 %v1758, %v1756
        %v1775 = vpack.c.b16 %v1759, %v1757
        %v1776 = vpack.c.b16 %v1762, %v1760
        %v1777 = vpack.c.b16 %v1763, %v1761
        %v1778 = vpack.c.b16 %v1766, %v1764
        %v1779 = vpack.c.b16 %v1767, %v1765
        %v1793 = vsel %vm1057, %v1731, 0
        %1795 = vmatprep.subr.bf16.mxu0 %v1769
        %1796 = vmatpush1.bf16.msra.mxu0 %v1768
        %1797 = vmatprep.subr.bf16.mxu0 %v1771
        %1798 = vmatpush1.bf16.msra.mxu0 %v1770
        %1799 = vmatprep.subr.bf16.mxu0 %v1773
        %1800 = vmatpush1.bf16.msra.mxu0 %v1772
        %1801 = vmatprep.subr.bf16.mxu0 %v1775
        %1802 = vmatpush1.bf16.msra.mxu0 %v1774
        %1803 = vmatprep.subr.bf16.mxu0 %v1777
        %1804 = vmatpush1.bf16.msra.mxu0 %v1776
        %1805 = vmatprep.subr.bf16.mxu0 %v1779
        %1806 = vmatpush1.bf16.msra.mxu0 %v1778
        %1807 = vmatprep.subr.bf16.mxu0 0
        %1808 = vmatpush1.bf16.msra.mxu0 0
        %1809 = vmatprep.subr.bf16.mxu0 0
        %1810 = vmatpush1.bf16.msra.mxu0 0
        %1811 = vmatprep.subr.bf16.mxu0 0
        %1812 = vmatpush1.bf16.msra.mxu0 0
        %1813 = vmatprep.subr.bf16.mxu0 0
        %1814 = vmatpush1.bf16.msra.mxu0 0
        %1815 = vmatprep.subr.bf16.mxu0 0
        %1816 = vmatpush1.bf16.msra.mxu0 0
        %1817 = vmatprep.subr.bf16.mxu0 0
        %1818 = vmatpush1.bf16.msra.mxu0 0
        %1819 = vmatprep.subr.bf16.mxu0 0
        %1820 = vmatpush1.bf16.msra.mxu0 0
        %1821 = vmatprep.subr.bf16.mxu0 0
        %1822 = vmatpush1.bf16.msra.mxu0 0
        %1823 = vmatprep.subr.bf16.mxu0 0
        %1824 = vmatpush1.bf16.msra.mxu0 0
        %1825 = vmatprep.subr.bf16.mxu0 0
        %1826 = vmatpush1.bf16.msra.mxu0 0
        %1827 = vmatprep.mubr.bf16.mxu0 0
        %1828 = vmatmul.mubr.bf16.gmra.mrb[0].mxu0 %v1793
        %v1829 = vpop.f32.mrb[0].mxu0
        %v1830 = vadd.f32 0.0, %v1829
        %v1831 = vpop.f32.mrb[0].mxu0
        %v1832 = vadd.f32 0.0, %v1831
        %v1833 = vpop.f32.mrb[0].mxu0
        %v1834 = vadd.f32 0.0, %v1833
        %v1835 = vpop.f32.mrb[0].mxu0
        %v1836 = vadd.f32 0.0, %v1835
        %1837 = vdwg.mxu0
        %v1838 = vadd.f32 %v1451, %v1830
        %v1839 = vadd.f32 %v1453, %v1832
        %v1840 = vadd.f32 %v1455, %v1834
        %v1841 = vadd.f32 %v1457, %v1836
        %s1842 = scalar_lea.vmem [#allocation6], 192
        %v1843 = vld [vmem:[%s1842] sm:$0xff]
        %v1844 = vld [vmem:[%s1842 + $0x8] sm:$0xff]
        %v1845 = vld [vmem:[%s1842 + $0x10] sm:$0xff]
        %v1846 = vld [vmem:[%s1842 + $0x18] sm:$0xff]
        %v1847 = vld [vmem:[%s1842 + $0x20] sm:$0xff]
        %v1848 = vld [vmem:[%s1842 + $0x28] sm:$0xff]
        %v1849 = vld [vmem:[%s1842 + $0x30] sm:$0xff]
        %v1850 = vld [vmem:[%s1842 + $0x38] sm:$0xff]
        %v1851 = vld [vmem:[%s1842 + $0x40] sm:$0xff]
        %v1852 = vld [vmem:[%s1842 + $0x48] sm:$0xff]
        %v1853 = vld [vmem:[%s1842 + $0x50] sm:$0xff]
        %v1854 = vld [vmem:[%s1842 + $0x58] sm:$0xff]
        %v1867 = vunpack.c.l.b16 %v1843
        %v1868 = vunpack.c.h.b16 %v1843
        %v1869 = vunpack.c.l.b16 %v1844
        %v1870 = vunpack.c.h.b16 %v1844
        %v1871 = vunpack.c.l.b16 %v1845
        %v1872 = vunpack.c.h.b16 %v1845
        %v1873 = vunpack.c.l.b16 %v1846
        %v1874 = vunpack.c.h.b16 %v1846
        %v1875 = vunpack.c.l.b16 %v1847
        %v1876 = vunpack.c.h.b16 %v1847
        %v1877 = vunpack.c.l.b16 %v1848
        %v1878 = vunpack.c.h.b16 %v1848
        %v1879 = vunpack.c.l.b16 %v1849
        %v1880 = vunpack.c.h.b16 %v1849
        %v1881 = vunpack.c.l.b16 %v1850
        %v1882 = vunpack.c.h.b16 %v1850
        %v1883 = vunpack.c.l.b16 %v1851
        %v1884 = vunpack.c.h.b16 %v1851
        %v1885 = vunpack.c.l.b16 %v1852
        %v1886 = vunpack.c.h.b16 %v1852
        %v1887 = vunpack.c.l.b16 %v1853
        %v1888 = vunpack.c.h.b16 %v1853
        %v1889 = vunpack.c.l.b16 %v1854
        %v1890 = vunpack.c.h.b16 %v1854
        %v1891 = vpack.c.b16 %v1869, %v1867
        %v1892 = vpack.c.b16 %v1870, %v1868
        %v1893 = vpack.c.b16 %v1873, %v1871
        %v1894 = vpack.c.b16 %v1874, %v1872
        %v1895 = vpack.c.b16 %v1877, %v1875
        %v1896 = vpack.c.b16 %v1878, %v1876
        %v1897 = vpack.c.b16 %v1881, %v1879
        %v1898 = vpack.c.b16 %v1882, %v1880
        %v1899 = vpack.c.b16 %v1885, %v1883
        %v1900 = vpack.c.b16 %v1886, %v1884
        %v1901 = vpack.c.b16 %v1889, %v1887
        %v1902 = vpack.c.b16 %v1890, %v1888
        %1915 = vmatprep.subr.bf16.mxu0 %v1892
        %1916 = vmatpush1.bf16.msra.mxu0 %v1891
        %1917 = vmatprep.subr.bf16.mxu0 %v1894
        %1918 = vmatpush1.bf16.msra.mxu0 %v1893
        %1919 = vmatprep.subr.bf16.mxu0 %v1896
        %1920 = vmatpush1.bf16.msra.mxu0 %v1895
        %1921 = vmatprep.subr.bf16.mxu0 %v1898
        %1922 = vmatpush1.bf16.msra.mxu0 %v1897
        %1923 = vmatprep.subr.bf16.mxu0 %v1900
        %1924 = vmatpush1.bf16.msra.mxu0 %v1899
        %1925 = vmatprep.subr.bf16.mxu0 %v1902
        %1926 = vmatpush1.bf16.msra.mxu0 %v1901
        %1927 = vmatprep.subr.bf16.mxu0 0
        %1928 = vmatpush1.bf16.msra.mxu0 0
        %1929 = vmatprep.subr.bf16.mxu0 0
        %1930 = vmatpush1.bf16.msra.mxu0 0
        %1931 = vmatprep.subr.bf16.mxu0 0
        %1932 = vmatpush1.bf16.msra.mxu0 0
        %1933 = vmatprep.subr.bf16.mxu0 0
        %1934 = vmatpush1.bf16.msra.mxu0 0
        %1935 = vmatprep.subr.bf16.mxu0 0
        %1936 = vmatpush1.bf16.msra.mxu0 0
        %1937 = vmatprep.subr.bf16.mxu0 0
        %1938 = vmatpush1.bf16.msra.mxu0 0
        %1939 = vmatprep.subr.bf16.mxu0 0
        %1940 = vmatpush1.bf16.msra.mxu0 0
        %1941 = vmatprep.subr.bf16.mxu0 0
        %1942 = vmatpush1.bf16.msra.mxu0 0
        %1943 = vmatprep.subr.bf16.mxu0 0
        %1944 = vmatpush1.bf16.msra.mxu0 0
        %1945 = vmatprep.subr.bf16.mxu0 0
        %1946 = vmatpush1.bf16.msra.mxu0 0
        %1947 = vmatprep.mubr.bf16.mxu0 0
        %1948 = vmatmul.mubr.bf16.gmra.mrb[0].mxu0 %v1793
        %v1949 = vpop.f32.mrb[0].mxu0
        %v1950 = vadd.f32 0.0, %v1949
        %v1951 = vpop.f32.mrb[0].mxu0
        %v1952 = vadd.f32 0.0, %v1951
        %v1953 = vpop.f32.mrb[0].mxu0
        %v1954 = vadd.f32 0.0, %v1953
        %v1955 = vpop.f32.mrb[0].mxu0
        %v1956 = vadd.f32 0.0, %v1955
        %1957 = vdwg.mxu0
        %v1958 = vadd.f32 %v1670, %v1950
        %v1959 = vadd.f32 %v1672, %v1952
        %v1960 = vadd.f32 %v1674, %v1954
        %v1961 = vadd.f32 %v1676, %v1956
        %1962 = vmatprep.subr.bf16.mxu0 %v1034
        %1963 = vmatpush1.bf16.msra.mxu0 %v1033
        %1964 = vmatprep.subr.bf16.mxu0 %v1036
        %1965 = vmatpush1.bf16.msra.mxu0 %v1035
        %1966 = vmatprep.subr.bf16.mxu0 %v1038
        %1967 = vmatpush1.bf16.msra.mxu0 %v1037
        %1968 = vmatprep.subr.bf16.mxu0 %v1040
        %1969 = vmatpush1.bf16.msra.mxu0 %v1039
        %1970 = vmatprep.subr.bf16.mxu0 %v1042
        %1971 = vmatpush1.bf16.msra.mxu0 %v1041
        %1972 = vmatprep.subr.bf16.mxu0 %v1044
        %1973 = vmatpush1.bf16.msra.mxu0 %v1043
        %1974 = vmatprep.subr.bf16.mxu0 0
        %1975 = vmatpush1.bf16.msra.mxu0 0
        %1976 = vmatprep.subr.bf16.mxu0 0
        %1977 = vmatpush1.bf16.msra.mxu0 0
        %1978 = vmatprep.subr.bf16.mxu0 0
        %1979 = vmatpush1.bf16.msra.mxu0 0
        %1980 = vmatprep.subr.bf16.mxu0 0
        %1981 = vmatpush1.bf16.msra.mxu0 0
        %1982 = vmatprep.subr.bf16.mxu0 0
        %1983 = vmatpush1.bf16.msra.mxu0 0
        %1984 = vmatprep.subr.bf16.mxu0 0
        %1985 = vmatpush1.bf16.msra.mxu0 0
        %1986 = vmatprep.subr.bf16.mxu0 0
        %1987 = vmatpush1.bf16.msra.mxu0 0
        %1988 = vmatprep.subr.bf16.mxu0 0
        %1989 = vmatpush1.bf16.msra.mxu0 0
        %1990 = vmatprep.subr.bf16.mxu0 0
        %1991 = vmatpush1.bf16.msra.mxu0 0
        %1992 = vmatprep.subr.bf16.mxu0 0
        %1993 = vmatpush1.bf16.msra.mxu0 0
        %1994 = vmatprep.mubr.bf16.mxu0 0
        %1995 = vmatmul.mubr.bf16.gmra.mrb[0].mxu0 %v1793
        %v1996 = vpop.f32.mrb[0].mxu0
        %v1997 = vadd.f32 0.0, %v1996
        %v1998 = vpop.f32.mrb[0].mxu0
        %v1999 = vadd.f32 0.0, %v1998
        %v2000 = vpop.f32.mrb[0].mxu0
        %v2001 = vadd.f32 0.0, %v2000
        %v2002 = vpop.f32.mrb[0].mxu0
        %v2003 = vadd.f32 0.0, %v2002
        %2004 = vdwg.mxu0
        %2005 = vmatprep.subr.bf16.mxu0 %v1390
        %2006 = vmatpush1.bf16.msra.mxu0 %v1389
        %2007 = vmatprep.subr.bf16.mxu0 %v1392
        %2008 = vmatpush1.bf16.msra.mxu0 %v1391
        %2009 = vmatprep.subr.bf16.mxu0 %v1394
        %2010 = vmatpush1.bf16.msra.mxu0 %v1393
        %2011 = vmatprep.subr.bf16.mxu0 %v1396
        %2012 = vmatpush1.bf16.msra.mxu0 %v1395
        %2013 = vmatprep.subr.bf16.mxu0 %v1398
        %2014 = vmatpush1.bf16.msra.mxu0 %v1397
        %2015 = vmatprep.subr.bf16.mxu0 %v1400
        %2016 = vmatpush1.bf16.msra.mxu0 %v1399
        %2017 = vmatprep.subr.bf16.mxu0 0
        %2018 = vmatpush1.bf16.msra.mxu0 0
        %2019 = vmatprep.subr.bf16.mxu0 0
        %2020 = vmatpush1.bf16.msra.mxu0 0
        %2021 = vmatprep.subr.bf16.mxu0 0
        %2022 = vmatpush1.bf16.msra.mxu0 0
        %2023 = vmatprep.subr.bf16.mxu0 0
        %2024 = vmatpush1.bf16.msra.mxu0 0
        %2025 = vmatprep.subr.bf16.mxu0 0
        %2026 = vmatpush1.bf16.msra.mxu0 0
        %2027 = vmatprep.subr.bf16.mxu0 0
        %2028 = vmatpush1.bf16.msra.mxu0 0
        %2029 = vmatprep.subr.bf16.mxu0 0
        %2030 = vmatpush1.bf16.msra.mxu0 0
        %2031 = vmatprep.subr.bf16.mxu0 0
        %2032 = vmatpush1.bf16.msra.mxu0 0
        %2033 = vmatprep.subr.bf16.mxu0 0
        %2034 = vmatpush1.bf16.msra.mxu0 0
        %2035 = vmatprep.subr.bf16.mxu0 0
        %2036 = vmatpush1.bf16.msra.mxu0 0
        %2037 = vmatprep.mubr.bf16.mxu0 0
        %2038 = vmatmul.mubr.bf16.gmra.mrb[0].mxu0 %v1059
        %v2039 = vpop.f32.mrb[0].mxu0
        %v2040 = vadd.f32 %v1997, %v2039
        %v2041 = vpop.f32.mrb[0].mxu0
        %v2042 = vadd.f32 %v1999, %v2041
        %v2043 = vpop.f32.mrb[0].mxu0
        %v2044 = vadd.f32 %v2001, %v2043
        %v2045 = vpop.f32.mrb[0].mxu0
        %v2046 = vadd.f32 %v2003, %v2045
        %2047 = vdwg.mxu0
        %2048 = vmatprep.subr.bf16.mxu0 %v1509
        %2049 = vmatpush1.bf16.msra.mxu0 %v1508
        %2050 = vmatprep.subr.bf16.mxu0 %v1511
        %2051 = vmatpush1.bf16.msra.mxu0 %v1510
        %2052 = vmatprep.subr.bf16.mxu0 %v1513
        %2053 = vmatpush1.bf16.msra.mxu0 %v1512
        %2054 = vmatprep.subr.bf16.mxu0 %v1515
        %2055 = vmatpush1.bf16.msra.mxu0 %v1514
        %2056 = vmatprep.subr.bf16.mxu0 %v1517
        %2057 = vmatpush1.bf16.msra.mxu0 %v1516
        %2058 = vmatprep.subr.bf16.mxu0 %v1519
        %2059 = vmatpush1.bf16.msra.mxu0 %v1518
        %2060 = vmatprep.subr.bf16.mxu0 0
        %2061 = vmatpush1.bf16.msra.mxu0 0
        %2062 = vmatprep.subr.bf16.mxu0 0
        %2063 = vmatpush1.bf16.msra.mxu0 0
        %2064 = vmatprep.subr.bf16.mxu0 0
        %2065 = vmatpush1.bf16.msra.mxu0 0
        %2066 = vmatprep.subr.bf16.mxu0 0
        %2067 = vmatpush1.bf16.msra.mxu0 0
        %2068 = vmatprep.subr.bf16.mxu0 0
        %2069 = vmatpush1.bf16.msra.mxu0 0
        %2070 = vmatprep.subr.bf16.mxu0 0
        %2071 = vmatpush1.bf16.msra.mxu0 0
        %2072 = vmatprep.subr.bf16.mxu0 0
        %2073 = vmatpush1.bf16.msra.mxu0 0
        %2074 = vmatprep.subr.bf16.mxu0 0
        %2075 = vmatpush1.bf16.msra.mxu0 0
        %2076 = vmatprep.subr.bf16.mxu0 0
        %2077 = vmatpush1.bf16.msra.mxu0 0
        %2078 = vmatprep.subr.bf16.mxu0 0
        %2079 = vmatpush1.bf16.msra.mxu0 0
        %2080 = vmatprep.mubr.bf16.mxu0 0
        %2081 = vmatmul.mubr.bf16.gmra.mrb[0].mxu0 %v1793
        %v2082 = vpop.f32.mrb[0].mxu0
        %v2083 = vadd.f32 0.0, %v2082
        %v2084 = vpop.f32.mrb[0].mxu0
        %v2085 = vadd.f32 0.0, %v2084
        %v2086 = vpop.f32.mrb[0].mxu0
        %v2087 = vadd.f32 0.0, %v2086
        %v2088 = vpop.f32.mrb[0].mxu0
        %v2089 = vadd.f32 0.0, %v2088
        %2090 = vdwg.mxu0
        %2091 = vmatprep.subr.bf16.mxu0 %v1612
        %2092 = vmatpush1.bf16.msra.mxu0 %v1611
        %2093 = vmatprep.subr.bf16.mxu0 %v1614
        %2094 = vmatpush1.bf16.msra.mxu0 %v1613
        %2095 = vmatprep.subr.bf16.mxu0 %v1616
        %2096 = vmatpush1.bf16.msra.mxu0 %v1615
        %2097 = vmatprep.subr.bf16.mxu0 %v1618
        %2098 = vmatpush1.bf16.msra.mxu0 %v1617
        %2099 = vmatprep.subr.bf16.mxu0 %v1620
        %2100 = vmatpush1.bf16.msra.mxu0 %v1619
        %2101 = vmatprep.subr.bf16.mxu0 %v1622
        %2102 = vmatpush1.bf16.msra.mxu0 %v1621
        %2103 = vmatprep.subr.bf16.mxu0 0
        %2104 = vmatpush1.bf16.msra.mxu0 0
        %2105 = vmatprep.subr.bf16.mxu0 0
        %2106 = vmatpush1.bf16.msra.mxu0 0
        %2107 = vmatprep.subr.bf16.mxu0 0
        %2108 = vmatpush1.bf16.msra.mxu0 0
        %2109 = vmatprep.subr.bf16.mxu0 0
        %2110 = vmatpush1.bf16.msra.mxu0 0
        %2111 = vmatprep.subr.bf16.mxu0 0
        %2112 = vmatpush1.bf16.msra.mxu0 0
        %2113 = vmatprep.subr.bf16.mxu0 0
        %2114 = vmatpush1.bf16.msra.mxu0 0
        %2115 = vmatprep.subr.bf16.mxu0 0
        %2116 = vmatpush1.bf16.msra.mxu0 0
        %2117 = vmatprep.subr.bf16.mxu0 0
        %2118 = vmatpush1.bf16.msra.mxu0 0
        %2119 = vmatprep.subr.bf16.mxu0 0
        %2120 = vmatpush1.bf16.msra.mxu0 0
        %2121 = vmatprep.subr.bf16.mxu0 0
        %2122 = vmatpush1.bf16.msra.mxu0 0
        %2123 = vmatprep.mubr.bf16.mxu0 0
        %2124 = vmatmul.mubr.bf16.gmra.mrb[0].mxu0 %v1059
        %v2125 = vpop.f32.mrb[0].mxu0
        %v2126 = vadd.f32 %v2083, %v2125
        %v2127 = vpop.f32.mrb[0].mxu0
        %v2128 = vadd.f32 %v2085, %v2127
        %v2129 = vpop.f32.mrb[0].mxu0
        %v2130 = vadd.f32 %v2087, %v2129
        %v2131 = vpop.f32.mrb[0].mxu0
        %v2132 = vadd.f32 %v2089, %v2131
        %2133 = vdwg.mxu0
        %s2134 = scalar_lea.vmem [#allocation3], 288
        %v2135 = vld [vmem:[%s2134] sm:$0xff]
        %v2136 = vld [vmem:[%s2134 + $0x8] sm:$0xff]
        %v2137 = vld [vmem:[%s2134 + $0x10] sm:$0xff]
        %v2138 = vld [vmem:[%s2134 + $0x18] sm:$0xff]
        %v2139 = vld [vmem:[%s2134 + $0x20] sm:$0xff]
        %v2140 = vld [vmem:[%s2134 + $0x28] sm:$0xff]
        %v2141 = vld [vmem:[%s2134 + $0x30] sm:$0xff]
        %v2142 = vld [vmem:[%s2134 + $0x38] sm:$0xff]
        %v2143 = vld [vmem:[%s2134 + $0x40] sm:$0xff]
        %v2144 = vld [vmem:[%s2134 + $0x48] sm:$0xff]
        %v2145 = vld [vmem:[%s2134 + $0x50] sm:$0xff]
        %v2146 = vld [vmem:[%s2134 + $0x58] sm:$0xff]
        %v2149 = vunpack.c.l.s4 1966171168
        %v2150 = vunpack.c.0.s8 %v2149
        %v2151 = vlaneseq
        %v2152 = vshrl.u32 %v2151, 7
        %v2153 = vsub.s32 %v2150, %v2152
        %v2154 = vrot.slane %v702, %v2153
        %v2156 = vunpack.c.l.s4 1966171168
        %v2157 = vunpack.c.0.s8 %v2156
        %v2158 = vlaneseq
        %v2159 = vshrl.u32 %v2158, 7
        %v2160 = vsub.s32 %v2157, %v2159
        %v2161 = vrot.slane %v2154, %v2160
        %v2162 = vunpack.c.l.b16 %v2161
        %v2163 = vrot.slane %v953, 7
        %v2164 = vsel %vm966, %v2163, %v952
        %v2165 = vrot.slane %v954, 6
        %v2166 = vsel %vm969, %v2165, %v2164
        %v2167 = vrot.slane %v955, 5
        %v2168 = vsel %vm972, %v2167, %v2166
        %v2169 = vrot.slane %v956, 4
        %v2170 = vsel %vm975, %v2169, %v2168
        %v2171 = vrot.slane %v957, 3
        %v2172 = vsel %vm978, %v2171, %v2170
        %v2173 = vrot.slane %v958, 2
        %v2174 = vsel %vm981, %v2173, %v2172
        %v2175 = vrot.slane %v959, 1
        %v2176 = vsel %vm984, %v2175, %v2174
        %v2177 = vrot.slane %v961, 7
        %v2178 = vsel %vm966, %v2177, %v960
        %v2179 = vrot.slane %v962, 6
        %v2180 = vsel %vm969, %v2179, %v2178
        %v2181 = vrot.slane %v963, 5
        %v2182 = vsel %vm972, %v2181, %v2180
        %v2183 = vrot.slane %v964, 4
        %v2184 = vsel %vm975, %v2183, %v2182
        %v2185 = vrot.slane %v2162, 3
        %v2186 = vsel %vm978, %v2185, %v2184
        %v2187 = vpack.c.b16 %v2186, %v2176
        %v2200 = vunpack.c.l.b16 %v2135
        %v2201 = vunpack.c.h.b16 %v2135
        %v2202 = vunpack.c.l.b16 %v2136
        %v2203 = vunpack.c.h.b16 %v2136
        %v2204 = vunpack.c.l.b16 %v2137
        %v2205 = vunpack.c.h.b16 %v2137
        %v2206 = vunpack.c.l.b16 %v2138
        %v2207 = vunpack.c.h.b16 %v2138
        %v2208 = vunpack.c.l.b16 %v2139
        %v2209 = vunpack.c.h.b16 %v2139
        %v2210 = vunpack.c.l.b16 %v2140
        %v2211 = vunpack.c.h.b16 %v2140
        %v2212 = vunpack.c.l.b16 %v2141
        %v2213 = vunpack.c.h.b16 %v2141
        %v2214 = vunpack.c.l.b16 %v2142
        %v2215 = vunpack.c.h.b16 %v2142
        %v2216 = vunpack.c.l.b16 %v2143
        %v2217 = vunpack.c.h.b16 %v2143
        %v2218 = vunpack.c.l.b16 %v2144
        %v2219 = vunpack.c.h.b16 %v2144
        %v2220 = vunpack.c.l.b16 %v2145
        %v2221 = vunpack.c.h.b16 %v2145
        %v2222 = vunpack.c.l.b16 %v2146
        %v2223 = vunpack.c.h.b16 %v2146
        %v2224 = vpack.c.b16 %v2202, %v2200
        %v2225 = vpack.c.b16 %v2203, %v2201
        %v2226 = vpack.c.b16 %v2206, %v2204
        %v2227 = vpack.c.b16 %v2207, %v2205
        %v2228 = vpack.c.b16 %v2210, %v2208
        %v2229 = vpack.c.b16 %v2211, %v2209
        %v2230 = vpack.c.b16 %v2214, %v2212
        %v2231 = vpack.c.b16 %v2215, %v2213
        %v2232 = vpack.c.b16 %v2218, %v2216
        %v2233 = vpack.c.b16 %v2219, %v2217
        %v2234 = vpack.c.b16 %v2222, %v2220
        %v2235 = vpack.c.b16 %v2223, %v2221
        %v2249 = vsel %vm1057, %v2187, 0
        %2251 = vmatprep.subr.bf16.mxu0 %v2225
        %2252 = vmatpush1.bf16.msra.mxu0 %v2224
        %2253 = vmatprep.subr.bf16.mxu0 %v2227
        %2254 = vmatpush1.bf16.msra.mxu0 %v2226
        %2255 = vmatprep.subr.bf16.mxu0 %v2229
        %2256 = vmatpush1.bf16.msra.mxu0 %v2228
        %2257 = vmatprep.subr.bf16.mxu0 %v2231
        %2258 = vmatpush1.bf16.msra.mxu0 %v2230
        %2259 = vmatprep.subr.bf16.mxu0 %v2233
        %2260 = vmatpush1.bf16.msra.mxu0 %v2232
        %2261 = vmatprep.subr.bf16.mxu0 %v2235
        %2262 = vmatpush1.bf16.msra.mxu0 %v2234
        %2263 = vmatprep.subr.bf16.mxu0 0
        %2264 = vmatpush1.bf16.msra.mxu0 0
        %2265 = vmatprep.subr.bf16.mxu0 0
        %2266 = vmatpush1.bf16.msra.mxu0 0
        %2267 = vmatprep.subr.bf16.mxu0 0
        %2268 = vmatpush1.bf16.msra.mxu0 0
        %2269 = vmatprep.subr.bf16.mxu0 0
        %2270 = vmatpush1.bf16.msra.mxu0 0
        %2271 = vmatprep.subr.bf16.mxu0 0
        %2272 = vmatpush1.bf16.msra.mxu0 0
        %2273 = vmatprep.subr.bf16.mxu0 0
        %2274 = vmatpush1.bf16.msra.mxu0 0
        %2275 = vmatprep.subr.bf16.mxu0 0
        %2276 = vmatpush1.bf16.msra.mxu0 0
        %2277 = vmatprep.subr.bf16.mxu0 0
        %2278 = vmatpush1.bf16.msra.mxu0 0
        %2279 = vmatprep.subr.bf16.mxu0 0
        %2280 = vmatpush1.bf16.msra.mxu0 0
        %2281 = vmatprep.subr.bf16.mxu0 0
        %2282 = vmatpush1.bf16.msra.mxu0 0
        %2283 = vmatprep.mubr.bf16.mxu0 0
        %2284 = vmatmul.mubr.bf16.gmra.mrb[0].mxu0 %v2249
        %v2285 = vpop.f32.mrb[0].mxu0
        %v2286 = vadd.f32 0.0, %v2285
        %v2287 = vpop.f32.mrb[0].mxu0
        %v2288 = vadd.f32 0.0, %v2287
        %v2289 = vpop.f32.mrb[0].mxu0
        %v2290 = vadd.f32 0.0, %v2289
        %v2291 = vpop.f32.mrb[0].mxu0
        %v2292 = vadd.f32 0.0, %v2291
        %2293 = vdwg.mxu0
        %v2294 = vadd.f32 %v1838, %v2286
        %v2295 = vadd.f32 %v1839, %v2288
        %v2296 = vadd.f32 %v1840, %v2290
        %v2297 = vadd.f32 %v1841, %v2292
        %s2298 = scalar_lea.vmem [#allocation6], 288
        %v2299 = vld [vmem:[%s2298] sm:$0xff]
        %v2300 = vld [vmem:[%s2298 + $0x8] sm:$0xff]
        %v2301 = vld [vmem:[%s2298 + $0x10] sm:$0xff]
        %v2302 = vld [vmem:[%s2298 + $0x18] sm:$0xff]
        %v2303 = vld [vmem:[%s2298 + $0x20] sm:$0xff]
        %v2304 = vld [vmem:[%s2298 + $0x28] sm:$0xff]
        %v2305 = vld [vmem:[%s2298 + $0x30] sm:$0xff]
        %v2306 = vld [vmem:[%s2298 + $0x38] sm:$0xff]
        %v2307 = vld [vmem:[%s2298 + $0x40] sm:$0xff]
        %v2308 = vld [vmem:[%s2298 + $0x48] sm:$0xff]
        %v2309 = vld [vmem:[%s2298 + $0x50] sm:$0xff]
        %v2310 = vld [vmem:[%s2298 + $0x58] sm:$0xff]
        %v2323 = vunpack.c.l.b16 %v2299
        %v2324 = vunpack.c.h.b16 %v2299
        %v2325 = vunpack.c.l.b16 %v2300
        %v2326 = vunpack.c.h.b16 %v2300
        %v2327 = vunpack.c.l.b16 %v2301
        %v2328 = vunpack.c.h.b16 %v2301
        %v2329 = vunpack.c.l.b16 %v2302
        %v2330 = vunpack.c.h.b16 %v2302
        %v2331 = vunpack.c.l.b16 %v2303
        %v2332 = vunpack.c.h.b16 %v2303
        %v2333 = vunpack.c.l.b16 %v2304
        %v2334 = vunpack.c.h.b16 %v2304
        %v2335 = vunpack.c.l.b16 %v2305
        %v2336 = vunpack.c.h.b16 %v2305
        %v2337 = vunpack.c.l.b16 %v2306
        %v2338 = vunpack.c.h.b16 %v2306
        %v2339 = vunpack.c.l.b16 %v2307
        %v2340 = vunpack.c.h.b16 %v2307
        %v2341 = vunpack.c.l.b16 %v2308
        %v2342 = vunpack.c.h.b16 %v2308
        %v2343 = vunpack.c.l.b16 %v2309
        %v2344 = vunpack.c.h.b16 %v2309
        %v2345 = vunpack.c.l.b16 %v2310
        %v2346 = vunpack.c.h.b16 %v2310
        %v2347 = vpack.c.b16 %v2325, %v2323
        %v2348 = vpack.c.b16 %v2326, %v2324
        %v2349 = vpack.c.b16 %v2329, %v2327
        %v2350 = vpack.c.b16 %v2330, %v2328
        %v2351 = vpack.c.b16 %v2333, %v2331
        %v2352 = vpack.c.b16 %v2334, %v2332
        %v2353 = vpack.c.b16 %v2337, %v2335
        %v2354 = vpack.c.b16 %v2338, %v2336
        %v2355 = vpack.c.b16 %v2341, %v2339
        %v2356 = vpack.c.b16 %v2342, %v2340
        %v2357 = vpack.c.b16 %v2345, %v2343
        %v2358 = vpack.c.b16 %v2346, %v2344
        %2371 = vmatprep.subr.bf16.mxu0 %v2348
        %2372 = vmatpush1.bf16.msra.mxu0 %v2347
        %2373 = vmatprep.subr.bf16.mxu0 %v2350
        %2374 = vmatpush1.bf16.msra.mxu0 %v2349
        %2375 = vmatprep.subr.bf16.mxu0 %v2352
        %2376 = vmatpush1.bf16.msra.mxu0 %v2351
        %2377 = vmatprep.subr.bf16.mxu0 %v2354
        %2378 = vmatpush1.bf16.msra.mxu0 %v2353
        %2379 = vmatprep.subr.bf16.mxu0 %v2356
        %2380 = vmatpush1.bf16.msra.mxu0 %v2355
        %2381 = vmatprep.subr.bf16.mxu0 %v2358
        %2382 = vmatpush1.bf16.msra.mxu0 %v2357
        %2383 = vmatprep.subr.bf16.mxu0 0
        %2384 = vmatpush1.bf16.msra.mxu0 0
        %2385 = vmatprep.subr.bf16.mxu0 0
        %2386 = vmatpush1.bf16.msra.mxu0 0
        %2387 = vmatprep.subr.bf16.mxu0 0
        %2388 = vmatpush1.bf16.msra.mxu0 0
        %2389 = vmatprep.subr.bf16.mxu0 0
        %2390 = vmatpush1.bf16.msra.mxu0 0
        %2391 = vmatprep.subr.bf16.mxu0 0
        %2392 = vmatpush1.bf16.msra.mxu0 0
        %2393 = vmatprep.subr.bf16.mxu0 0
        %2394 = vmatpush1.bf16.msra.mxu0 0
        %2395 = vmatprep.subr.bf16.mxu0 0
        %2396 = vmatpush1.bf16.msra.mxu0 0
        %2397 = vmatprep.subr.bf16.mxu0 0
        %2398 = vmatpush1.bf16.msra.mxu0 0
        %2399 = vmatprep.subr.bf16.mxu0 0
        %2400 = vmatpush1.bf16.msra.mxu0 0
        %2401 = vmatprep.subr.bf16.mxu0 0
        %2402 = vmatpush1.bf16.msra.mxu0 0
        %2403 = vmatprep.mubr.bf16.mxu0 0
        %2404 = vmatmul.mubr.bf16.gmra.mrb[0].mxu0 %v2249
        %v2405 = vpop.f32.mrb[0].mxu0
        %v2406 = vadd.f32 0.0, %v2405
        %v2407 = vpop.f32.mrb[0].mxu0
        %v2408 = vadd.f32 0.0, %v2407
        %v2409 = vpop.f32.mrb[0].mxu0
        %v2410 = vadd.f32 0.0, %v2409
        %v2411 = vpop.f32.mrb[0].mxu0
        %v2412 = vadd.f32 0.0, %v2411
        %2413 = vdwg.mxu0
        %v2414 = vadd.f32 %v1958, %v2406
        %v2415 = vadd.f32 %v1959, %v2408
        %v2416 = vadd.f32 %v1960, %v2410
        %v2417 = vadd.f32 %v1961, %v2412
        %2418 = vmatprep.subr.bf16.mxu0 %v1769
        %2419 = vmatpush1.bf16.msra.mxu0 %v1768
        %2420 = vmatprep.subr.bf16.mxu0 %v1771
        %2421 = vmatpush1.bf16.msra.mxu0 %v1770
        %2422 = vmatprep.subr.bf16.mxu0 %v1773
        %2423 = vmatpush1.bf16.msra.mxu0 %v1772
        %2424 = vmatprep.subr.bf16.mxu0 %v1775
        %2425 = vmatpush1.bf16.msra.mxu0 %v1774
        %2426 = vmatprep.subr.bf16.mxu0 %v1777
        %2427 = vmatpush1.bf16.msra.mxu0 %v1776
        %2428 = vmatprep.subr.bf16.mxu0 %v1779
        %2429 = vmatpush1.bf16.msra.mxu0 %v1778
        %2430 = vmatprep.subr.bf16.mxu0 0
        %2431 = vmatpush1.bf16.msra.mxu0 0
        %2432 = vmatprep.subr.bf16.mxu0 0
        %2433 = vmatpush1.bf16.msra.mxu0 0
        %2434 = vmatprep.subr.bf16.mxu0 0
        %2435 = vmatpush1.bf16.msra.mxu0 0
        %2436 = vmatprep.subr.bf16.mxu0 0
        %2437 = vmatpush1.bf16.msra.mxu0 0
        %2438 = vmatprep.subr.bf16.mxu0 0
        %2439 = vmatpush1.bf16.msra.mxu0 0
        %2440 = vmatprep.subr.bf16.mxu0 0
        %2441 = vmatpush1.bf16.msra.mxu0 0
        %2442 = vmatprep.subr.bf16.mxu0 0
        %2443 = vmatpush1.bf16.msra.mxu0 0
        %2444 = vmatprep.subr.bf16.mxu0 0
        %2445 = vmatpush1.bf16.msra.mxu0 0
        %2446 = vmatprep.subr.bf16.mxu0 0
        %2447 = vmatpush1.bf16.msra.mxu0 0
        %2448 = vmatprep.subr.bf16.mxu0 0
        %2449 = vmatpush1.bf16.msra.mxu0 0
        %2450 = vmatprep.mubr.bf16.mxu0 0
        %2451 = vmatmul.mubr.bf16.gmra.mrb[0].mxu0 %v2249
        %v2452 = vpop.f32.mrb[0].mxu0
        %v2453 = vadd.f32 0.0, %v2452
        %v2454 = vpop.f32.mrb[0].mxu0
        %v2455 = vadd.f32 0.0, %v2454
        %v2456 = vpop.f32.mrb[0].mxu0
        %v2457 = vadd.f32 0.0, %v2456
        %v2458 = vpop.f32.mrb[0].mxu0
        %v2459 = vadd.f32 0.0, %v2458
        %2460 = vdwg.mxu0
        %v2461 = vadd.f32 %v2040, %v2453
        %v2462 = vadd.f32 %v2042, %v2455
        %v2463 = vadd.f32 %v2044, %v2457
        %v2464 = vadd.f32 %v2046, %v2459
        %2465 = vmatprep.subr.bf16.mxu0 %v1892
        %2466 = vmatpush1.bf16.msra.mxu0 %v1891
        %2467 = vmatprep.subr.bf16.mxu0 %v1894
        %2468 = vmatpush1.bf16.msra.mxu0 %v1893
        %2469 = vmatprep.subr.bf16.mxu0 %v1896
        %2470 = vmatpush1.bf16.msra.mxu0 %v1895
        %2471 = vmatprep.subr.bf16.mxu0 %v1898
        %2472 = vmatpush1.bf16.msra.mxu0 %v1897
        %2473 = vmatprep.subr.bf16.mxu0 %v1900
        %2474 = vmatpush1.bf16.msra.mxu0 %v1899
        %2475 = vmatprep.subr.bf16.mxu0 %v1902
        %2476 = vmatpush1.bf16.msra.mxu0 %v1901
        %2477 = vmatprep.subr.bf16.mxu0 0
        %2478 = vmatpush1.bf16.msra.mxu0 0
        %2479 = vmatprep.subr.bf16.mxu0 0
        %2480 = vmatpush1.bf16.msra.mxu0 0
        %2481 = vmatprep.subr.bf16.mxu0 0
        %2482 = vmatpush1.bf16.msra.mxu0 0
        %2483 = vmatprep.subr.bf16.mxu0 0
        %2484 = vmatpush1.bf16.msra.mxu0 0
        %2485 = vmatprep.subr.bf16.mxu0 0
        %2486 = vmatpush1.bf16.msra.mxu0 0
        %2487 = vmatprep.subr.bf16.mxu0 0
        %2488 = vmatpush1.bf16.msra.mxu0 0
        %2489 = vmatprep.subr.bf16.mxu0 0
        %2490 = vmatpush1.bf16.msra.mxu0 0
        %2491 = vmatprep.subr.bf16.mxu0 0
        %2492 = vmatpush1.bf16.msra.mxu0 0
        %2493 = vmatprep.subr.bf16.mxu0 0
        %2494 = vmatpush1.bf16.msra.mxu0 0
        %2495 = vmatprep.subr.bf16.mxu0 0
        %2496 = vmatpush1.bf16.msra.mxu0 0
        %2497 = vmatprep.mubr.bf16.mxu0 0
        %2498 = vmatmul.mubr.bf16.gmra.mrb[0].mxu0 %v2249
        %v2499 = vpop.f32.mrb[0].mxu0
        %v2500 = vadd.f32 0.0, %v2499
        %v2501 = vpop.f32.mrb[0].mxu0
        %v2502 = vadd.f32 0.0, %v2501
        %v2503 = vpop.f32.mrb[0].mxu0
        %v2504 = vadd.f32 0.0, %v2503
        %v2505 = vpop.f32.mrb[0].mxu0
        %v2506 = vadd.f32 0.0, %v2505
        %2507 = vdwg.mxu0
        %v2508 = vadd.f32 %v2126, %v2500
        %v2509 = vadd.f32 %v2128, %v2502
        %v2510 = vadd.f32 %v2130, %v2504
        %v2511 = vadd.f32 %v2132, %v2506
        %s2512 = scalar_lea.vmem [#allocation3], 384
        %v2513 = vld [vmem:[%s2512] sm:$0xff]
        %v2514 = vld [vmem:[%s2512 + $0x8] sm:$0xff]
        %v2515 = vld [vmem:[%s2512 + $0x10] sm:$0xff]
        %v2516 = vld [vmem:[%s2512 + $0x18] sm:$0xff]
        %v2517 = vld [vmem:[%s2512 + $0x20] sm:$0xff]
        %v2518 = vld [vmem:[%s2512 + $0x28] sm:$0xff]
        %v2519 = vld [vmem:[%s2512 + $0x30] sm:$0xff]
        %v2520 = vld [vmem:[%s2512 + $0x38] sm:$0xff]
        %v2521 = vld [vmem:[%s2512 + $0x40] sm:$0xff]
        %v2522 = vld [vmem:[%s2512 + $0x48] sm:$0xff]
        %v2523 = vld [vmem:[%s2512 + $0x50] sm:$0xff]
        %v2524 = vld [vmem:[%s2512 + $0x58] sm:$0xff]
        %v2527 = vunpack.c.l.s4 1966171168
        %v2528 = vunpack.c.0.s8 %v2527
        %v2529 = vlaneseq
        %v2530 = vshrl.u32 %v2529, 7
        %v2531 = vsub.s32 %v2528, %v2530
        %v2532 = vrot.slane %v687, %v2531
        %v2534 = vunpack.c.l.s4 1966171168
        %v2535 = vunpack.c.0.s8 %v2534
        %v2536 = vlaneseq
        %v2537 = vshrl.u32 %v2536, 7
        %v2538 = vsub.s32 %v2535, %v2537
        %v2539 = vrot.slane %v2532, %v2538
        %v2540 = vunpack.c.l.b16 %v2539
        %v2541 = vrot.slane %v1317, 7
        %v2542 = vsel %vm966, %v2541, %v1316
        %v2543 = vrot.slane %v1318, 6
        %v2544 = vsel %vm969, %v2543, %v2542
        %v2545 = vrot.slane %v1319, 5
        %v2546 = vsel %vm972, %v2545, %v2544
        %v2547 = vrot.slane %v1320, 4
        %v2548 = vsel %vm975, %v2547, %v2546
        %v2549 = vrot.slane %v1321, 3
        %v2550 = vsel %vm978, %v2549, %v2548
        %v2551 = vrot.slane %v1322, 2
        %v2552 = vsel %vm981, %v2551, %v2550
        %v2553 = vrot.slane %v1323, 1
        %v2554 = vsel %vm984, %v2553, %v2552
        %v2555 = vrot.slane %v1325, 7
        %v2556 = vsel %vm966, %v2555, %v1324
        %v2557 = vrot.slane %v1326, 6
        %v2558 = vsel %vm969, %v2557, %v2556
        %v2559 = vrot.slane %v1327, 5
        %v2560 = vsel %vm972, %v2559, %v2558
        %v2561 = vrot.slane %v1706, 4
        %v2562 = vsel %vm975, %v2561, %v2560
        %v2563 = vrot.slane %v2540, 3
        %v2564 = vsel %vm978, %v2563, %v2562
        %v2565 = vpack.c.b16 %v2564, %v2554
        %v2578 = vunpack.c.l.b16 %v2513
        %v2579 = vunpack.c.h.b16 %v2513
        %v2580 = vunpack.c.l.b16 %v2514
        %v2581 = vunpack.c.h.b16 %v2514
        %v2582 = vunpack.c.l.b16 %v2515
        %v2583 = vunpack.c.h.b16 %v2515
        %v2584 = vunpack.c.l.b16 %v2516
        %v2585 = vunpack.c.h.b16 %v2516
        %v2586 = vunpack.c.l.b16 %v2517
        %v2587 = vunpack.c.h.b16 %v2517
        %v2588 = vunpack.c.l.b16 %v2518
        %v2589 = vunpack.c.h.b16 %v2518
        %v2590 = vunpack.c.l.b16 %v2519
        %v2591 = vunpack.c.h.b16 %v2519
        %v2592 = vunpack.c.l.b16 %v2520
        %v2593 = vunpack.c.h.b16 %v2520
        %v2594 = vunpack.c.l.b16 %v2521
        %v2595 = vunpack.c.h.b16 %v2521
        %v2596 = vunpack.c.l.b16 %v2522
        %v2597 = vunpack.c.h.b16 %v2522
        %v2598 = vunpack.c.l.b16 %v2523
        %v2599 = vunpack.c.h.b16 %v2523
        %v2600 = vunpack.c.l.b16 %v2524
        %v2601 = vunpack.c.h.b16 %v2524
        %v2602 = vpack.c.b16 %v2580, %v2578
        %v2603 = vpack.c.b16 %v2581, %v2579
        %v2604 = vpack.c.b16 %v2584, %v2582
        %v2605 = vpack.c.b16 %v2585, %v2583
        %v2606 = vpack.c.b16 %v2588, %v2586
        %v2607 = vpack.c.b16 %v2589, %v2587
        %v2608 = vpack.c.b16 %v2592, %v2590
        %v2609 = vpack.c.b16 %v2593, %v2591
        %v2610 = vpack.c.b16 %v2596, %v2594
        %v2611 = vpack.c.b16 %v2597, %v2595
        %v2612 = vpack.c.b16 %v2600, %v2598
        %v2613 = vpack.c.b16 %v2601, %v2599
        %v2627 = vsel %vm1057, %v2565, 0
        %2629 = vmatprep.subr.bf16.mxu0 %v2603
        %2630 = vmatpush1.bf16.msra.mxu0 %v2602
        %2631 = vmatprep.subr.bf16.mxu0 %v2605
        %2632 = vmatpush1.bf16.msra.mxu0 %v2604
        %2633 = vmatprep.subr.bf16.mxu0 %v2607
        %2634 = vmatpush1.bf16.msra.mxu0 %v2606
        %2635 = vmatprep.subr.bf16.mxu0 %v2609
        %2636 = vmatpush1.bf16.msra.mxu0 %v2608
        %2637 = vmatprep.subr.bf16.mxu0 %v2611
        %2638 = vmatpush1.bf16.msra.mxu0 %v2610
        %2639 = vmatprep.subr.bf16.mxu0 %v2613
        %2640 = vmatpush1.bf16.msra.mxu0 %v2612
        %2641 = vmatprep.subr.bf16.mxu0 0
        %2642 = vmatpush1.bf16.msra.mxu0 0
        %2643 = vmatprep.subr.bf16.mxu0 0
        %2644 = vmatpush1.bf16.msra.mxu0 0
        %2645 = vmatprep.subr.bf16.mxu0 0
        %2646 = vmatpush1.bf16.msra.mxu0 0
        %2647 = vmatprep.subr.bf16.mxu0 0
        %2648 = vmatpush1.bf16.msra.mxu0 0
        %2649 = vmatprep.subr.bf16.mxu0 0
        %2650 = vmatpush1.bf16.msra.mxu0 0
        %2651 = vmatprep.subr.bf16.mxu0 0
        %2652 = vmatpush1.bf16.msra.mxu0 0
        %2653 = vmatprep.subr.bf16.mxu0 0
        %2654 = vmatpush1.bf16.msra.mxu0 0
        %2655 = vmatprep.subr.bf16.mxu0 0
        %2656 = vmatpush1.bf16.msra.mxu0 0
        %2657 = vmatprep.subr.bf16.mxu0 0
        %2658 = vmatpush1.bf16.msra.mxu0 0
        %2659 = vmatprep.subr.bf16.mxu0 0
        %2660 = vmatpush1.bf16.msra.mxu0 0
        %2661 = vmatprep.mubr.bf16.mxu0 0
        %2662 = vmatmul.mubr.bf16.gmra.mrb[0].mxu0 %v2627
        %v2663 = vpop.f32.mrb[0].mxu0
        %v2664 = vadd.f32 0.0, %v2663
        %v2665 = vpop.f32.mrb[0].mxu0
        %v2666 = vadd.f32 0.0, %v2665
        %v2667 = vpop.f32.mrb[0].mxu0
        %v2668 = vadd.f32 0.0, %v2667
        %v2669 = vpop.f32.mrb[0].mxu0
        %v2670 = vadd.f32 0.0, %v2669
        %2671 = vdwg.mxu0
        %v2672 = vadd.f32 %v2294, %v2664
        %v2673 = vadd.f32 %v2295, %v2666
        %v2674 = vadd.f32 %v2296, %v2668
        %v2675 = vadd.f32 %v2297, %v2670
        %s2676 = scalar_lea.vmem [#allocation6], 384
        %v2677 = vld [vmem:[%s2676] sm:$0xff]
        %v2678 = vld [vmem:[%s2676 + $0x8] sm:$0xff]
        %v2679 = vld [vmem:[%s2676 + $0x10] sm:$0xff]
        %v2680 = vld [vmem:[%s2676 + $0x18] sm:$0xff]
        %v2681 = vld [vmem:[%s2676 + $0x20] sm:$0xff]
        %v2682 = vld [vmem:[%s2676 + $0x28] sm:$0xff]
        %v2683 = vld [vmem:[%s2676 + $0x30] sm:$0xff]
        %v2684 = vld [vmem:[%s2676 + $0x38] sm:$0xff]
        %v2685 = vld [vmem:[%s2676 + $0x40] sm:$0xff]
        %v2686 = vld [vmem:[%s2676 + $0x48] sm:$0xff]
        %v2687 = vld [vmem:[%s2676 + $0x50] sm:$0xff]
        %v2688 = vld [vmem:[%s2676 + $0x58] sm:$0xff]
        %v2701 = vunpack.c.l.b16 %v2677
        %v2702 = vunpack.c.h.b16 %v2677
        %v2703 = vunpack.c.l.b16 %v2678
        %v2704 = vunpack.c.h.b16 %v2678
        %v2705 = vunpack.c.l.b16 %v2679
        %v2706 = vunpack.c.h.b16 %v2679
        %v2707 = vunpack.c.l.b16 %v2680
        %v2708 = vunpack.c.h.b16 %v2680
        %v2709 = vunpack.c.l.b16 %v2681
        %v2710 = vunpack.c.h.b16 %v2681
        %v2711 = vunpack.c.l.b16 %v2682
        %v2712 = vunpack.c.h.b16 %v2682
        %v2713 = vunpack.c.l.b16 %v2683
        %v2714 = vunpack.c.h.b16 %v2683
        %v2715 = vunpack.c.l.b16 %v2684
        %v2716 = vunpack.c.h.b16 %v2684
        %v2717 = vunpack.c.l.b16 %v2685
        %v2718 = vunpack.c.h.b16 %v2685
        %v2719 = vunpack.c.l.b16 %v2686
        %v2720 = vunpack.c.h.b16 %v2686
        %v2721 = vunpack.c.l.b16 %v2687
        %v2722 = vunpack.c.h.b16 %v2687
        %v2723 = vunpack.c.l.b16 %v2688
        %v2724 = vunpack.c.h.b16 %v2688
        %v2725 = vpack.c.b16 %v2703, %v2701
        %v2726 = vpack.c.b16 %v2704, %v2702
        %v2727 = vpack.c.b16 %v2707, %v2705
        %v2728 = vpack.c.b16 %v2708, %v2706
        %v2729 = vpack.c.b16 %v2711, %v2709
        %v2730 = vpack.c.b16 %v2712, %v2710
        %v2731 = vpack.c.b16 %v2715, %v2713
        %v2732 = vpack.c.b16 %v2716, %v2714
        %v2733 = vpack.c.b16 %v2719, %v2717
        %v2734 = vpack.c.b16 %v2720, %v2718
        %v2735 = vpack.c.b16 %v2723, %v2721
        %v2736 = vpack.c.b16 %v2724, %v2722
        %2749 = vmatprep.subr.bf16.mxu0 %v2726
        %2750 = vmatpush1.bf16.msra.mxu0 %v2725
        %2751 = vmatprep.subr.bf16.mxu0 %v2728
        %2752 = vmatpush1.bf16.msra.mxu0 %v2727
        %2753 = vmatprep.subr.bf16.mxu0 %v2730
        %2754 = vmatpush1.bf16.msra.mxu0 %v2729
        %2755 = vmatprep.subr.bf16.mxu0 %v2732
        %2756 = vmatpush1.bf16.msra.mxu0 %v2731
        %2757 = vmatprep.subr.bf16.mxu0 %v2734
        %2758 = vmatpush1.bf16.msra.mxu0 %v2733
        %2759 = vmatprep.subr.bf16.mxu0 %v2736
        %2760 = vmatpush1.bf16.msra.mxu0 %v2735
        %2761 = vmatprep.subr.bf16.mxu0 0
        %2762 = vmatpush1.bf16.msra.mxu0 0
        %2763 = vmatprep.subr.bf16.mxu0 0
        %2764 = vmatpush1.bf16.msra.mxu0 0
        %2765 = vmatprep.subr.bf16.mxu0 0
        %2766 = vmatpush1.bf16.msra.mxu0 0
        %2767 = vmatprep.subr.bf16.mxu0 0
        %2768 = vmatpush1.bf16.msra.mxu0 0
        %2769 = vmatprep.subr.bf16.mxu0 0
        %2770 = vmatpush1.bf16.msra.mxu0 0
        %2771 = vmatprep.subr.bf16.mxu0 0
        %2772 = vmatpush1.bf16.msra.mxu0 0
        %2773 = vmatprep.subr.bf16.mxu0 0
        %2774 = vmatpush1.bf16.msra.mxu0 0
        %2775 = vmatprep.subr.bf16.mxu0 0
        %2776 = vmatpush1.bf16.msra.mxu0 0
        %2777 = vmatprep.subr.bf16.mxu0 0
        %2778 = vmatpush1.bf16.msra.mxu0 0
        %2779 = vmatprep.subr.bf16.mxu0 0
        %2780 = vmatpush1.bf16.msra.mxu0 0
        %2781 = vmatprep.mubr.bf16.mxu0 0
        %2782 = vmatmul.mubr.bf16.gmra.mrb[0].mxu0 %v2627
        %v2783 = vpop.f32.mrb[0].mxu0
        %v2784 = vadd.f32 0.0, %v2783
        %v2785 = vpop.f32.mrb[0].mxu0
        %v2786 = vadd.f32 0.0, %v2785
        %v2787 = vpop.f32.mrb[0].mxu0
        %v2788 = vadd.f32 0.0, %v2787
        %v2789 = vpop.f32.mrb[0].mxu0
        %v2790 = vadd.f32 0.0, %v2789
        %2791 = vdwg.mxu0
        %v2792 = vadd.f32 %v2414, %v2784
        %v2793 = vadd.f32 %v2415, %v2786
        %v2794 = vadd.f32 %v2416, %v2788
        %v2795 = vadd.f32 %v2417, %v2790
        %2796 = vmatprep.subr.bf16.mxu0 %v2225
        %2797 = vmatpush1.bf16.msra.mxu0 %v2224
        %2798 = vmatprep.subr.bf16.mxu0 %v2227
        %2799 = vmatpush1.bf16.msra.mxu0 %v2226
        %2800 = vmatprep.subr.bf16.mxu0 %v2229
        %2801 = vmatpush1.bf16.msra.mxu0 %v2228
        %2802 = vmatprep.subr.bf16.mxu0 %v2231
        %2803 = vmatpush1.bf16.msra.mxu0 %v2230
        %2804 = vmatprep.subr.bf16.mxu0 %v2233
        %2805 = vmatpush1.bf16.msra.mxu0 %v2232
        %2806 = vmatprep.subr.bf16.mxu0 %v2235
        %2807 = vmatpush1.bf16.msra.mxu0 %v2234
        %2808 = vmatprep.subr.bf16.mxu0 0
        %2809 = vmatpush1.bf16.msra.mxu0 0
        %2810 = vmatprep.subr.bf16.mxu0 0
        %2811 = vmatpush1.bf16.msra.mxu0 0
        %2812 = vmatprep.subr.bf16.mxu0 0
        %2813 = vmatpush1.bf16.msra.mxu0 0
        %2814 = vmatprep.subr.bf16.mxu0 0
        %2815 = vmatpush1.bf16.msra.mxu0 0
        %2816 = vmatprep.subr.bf16.mxu0 0
        %2817 = vmatpush1.bf16.msra.mxu0 0
        %2818 = vmatprep.subr.bf16.mxu0 0
        %2819 = vmatpush1.bf16.msra.mxu0 0
        %2820 = vmatprep.subr.bf16.mxu0 0
        %2821 = vmatpush1.bf16.msra.mxu0 0
        %2822 = vmatprep.subr.bf16.mxu0 0
        %2823 = vmatpush1.bf16.msra.mxu0 0
        %2824 = vmatprep.subr.bf16.mxu0 0
        %2825 = vmatpush1.bf16.msra.mxu0 0
        %2826 = vmatprep.subr.bf16.mxu0 0
        %2827 = vmatpush1.bf16.msra.mxu0 0
        %2828 = vmatprep.mubr.bf16.mxu0 0
        %2829 = vmatmul.mubr.bf16.gmra.mrb[0].mxu0 %v2627
        %v2830 = vpop.f32.mrb[0].mxu0
        %v2831 = vadd.f32 0.0, %v2830
        %v2832 = vpop.f32.mrb[0].mxu0
        %v2833 = vadd.f32 0.0, %v2832
        %v2834 = vpop.f32.mrb[0].mxu0
        %v2835 = vadd.f32 0.0, %v2834
        %v2836 = vpop.f32.mrb[0].mxu0
        %v2837 = vadd.f32 0.0, %v2836
        %2838 = vdwg.mxu0
        %v2839 = vadd.f32 %v2461, %v2831
        %v2840 = vadd.f32 %v2462, %v2833
        %v2841 = vadd.f32 %v2463, %v2835
        %v2842 = vadd.f32 %v2464, %v2837
        %2843 = vmatprep.subr.bf16.mxu0 %v2348
        %2844 = vmatpush1.bf16.msra.mxu0 %v2347
        %2845 = vmatprep.subr.bf16.mxu0 %v2350
        %2846 = vmatpush1.bf16.msra.mxu0 %v2349
        %2847 = vmatprep.subr.bf16.mxu0 %v2352
        %2848 = vmatpush1.bf16.msra.mxu0 %v2351
        %2849 = vmatprep.subr.bf16.mxu0 %v2354
        %2850 = vmatpush1.bf16.msra.mxu0 %v2353
        %2851 = vmatprep.subr.bf16.mxu0 %v2356
        %2852 = vmatpush1.bf16.msra.mxu0 %v2355
        %2853 = vmatprep.subr.bf16.mxu0 %v2358
        %2854 = vmatpush1.bf16.msra.mxu0 %v2357
        %2855 = vmatprep.subr.bf16.mxu0 0
        %2856 = vmatpush1.bf16.msra.mxu0 0
        %2857 = vmatprep.subr.bf16.mxu0 0
        %2858 = vmatpush1.bf16.msra.mxu0 0
        %2859 = vmatprep.subr.bf16.mxu0 0
        %2860 = vmatpush1.bf16.msra.mxu0 0
        %2861 = vmatprep.subr.bf16.mxu0 0
        %2862 = vmatpush1.bf16.msra.mxu0 0
        %2863 = vmatprep.subr.bf16.mxu0 0
        %2864 = vmatpush1.bf16.msra.mxu0 0
        %2865 = vmatprep.subr.bf16.mxu0 0
        %2866 = vmatpush1.bf16.msra.mxu0 0
        %2867 = vmatprep.subr.bf16.mxu0 0
        %2868 = vmatpush1.bf16.msra.mxu0 0
        %2869 = vmatprep.subr.bf16.mxu0 0
        %2870 = vmatpush1.bf16.msra.mxu0 0
        %2871 = vmatprep.subr.bf16.mxu0 0
        %2872 = vmatpush1.bf16.msra.mxu0 0
        %2873 = vmatprep.subr.bf16.mxu0 0
        %2874 = vmatpush1.bf16.msra.mxu0 0
        %2875 = vmatprep.mubr.bf16.mxu0 0
        %2876 = vmatmul.mubr.bf16.gmra.mrb[0].mxu0 %v2627
        %v2877 = vpop.f32.mrb[0].mxu0
        %v2878 = vadd.f32 0.0, %v2877
        %v2879 = vpop.f32.mrb[0].mxu0
        %v2880 = vadd.f32 0.0, %v2879
        %v2881 = vpop.f32.mrb[0].mxu0
        %v2882 = vadd.f32 0.0, %v2881
        %v2883 = vpop.f32.mrb[0].mxu0
        %v2884 = vadd.f32 0.0, %v2883
        %2885 = vdwg.mxu0
        %v2886 = vadd.f32 %v2508, %v2878
        %v2887 = vadd.f32 %v2509, %v2880
        %v2888 = vadd.f32 %v2510, %v2882
        %v2889 = vadd.f32 %v2511, %v2884
        %v2892 = vunpack.c.l.s4 1966171168
        %v2893 = vunpack.c.0.s8 %v2892
        %v2894 = vlaneseq
        %v2895 = vshrl.u32 %v2894, 7
        %v2896 = vsub.s32 %v2893, %v2895
        %v2897 = vrot.slane %v703, %v2896
        %v2899 = vunpack.c.l.s4 1966171168
        %v2900 = vunpack.c.0.s8 %v2899
        %v2901 = vlaneseq
        %v2902 = vshrl.u32 %v2901, 7
        %v2903 = vsub.s32 %v2900, %v2902
        %v2904 = vrot.slane %v2897, %v2903
        %v2905 = vunpack.c.l.b16 %v2904
        %v2906 = vrot.slane %v954, 7
        %v2907 = vsel %vm966, %v2906, %v953
        %v2908 = vrot.slane %v955, 6
        %v2909 = vsel %vm969, %v2908, %v2907
        %v2910 = vrot.slane %v956, 5
        %v2911 = vsel %vm972, %v2910, %v2909
        %v2912 = vrot.slane %v957, 4
        %v2913 = vsel %vm975, %v2912, %v2911
        %v2914 = vrot.slane %v958, 3
        %v2915 = vsel %vm978, %v2914, %v2913
        %v2916 = vrot.slane %v959, 2
        %v2917 = vsel %vm981, %v2916, %v2915
        %v2918 = vrot.slane %v960, 1
        %v2919 = vsel %vm984, %v2918, %v2917
        %v2920 = vrot.slane %v962, 7
        %v2921 = vsel %vm966, %v2920, %v961
        %v2922 = vrot.slane %v963, 6
        %v2923 = vsel %vm969, %v2922, %v2921
        %v2924 = vrot.slane %v964, 5
        %v2925 = vsel %vm972, %v2924, %v2923
        %v2926 = vrot.slane %v2162, 4
        %v2927 = vsel %vm975, %v2926, %v2925
        %v2928 = vrot.slane %v2905, 3
        %v2929 = vsel %vm978, %v2928, %v2927
        %v2930 = vpack.c.b16 %v2929, %v2919
        %v2932 = vsel %vm1057, %v2930, 0
        %2934 = vmatprep.subr.bf16.mxu0 %v2603
        %2935 = vmatpush1.bf16.msra.mxu0 %v2602
        %2936 = vmatprep.subr.bf16.mxu0 %v2605
        %2937 = vmatpush1.bf16.msra.mxu0 %v2604
        %2938 = vmatprep.subr.bf16.mxu0 %v2607
        %2939 = vmatpush1.bf16.msra.mxu0 %v2606
        %2940 = vmatprep.subr.bf16.mxu0 %v2609
        %2941 = vmatpush1.bf16.msra.mxu0 %v2608
        %2942 = vmatprep.subr.bf16.mxu0 %v2611
        %2943 = vmatpush1.bf16.msra.mxu0 %v2610
        %2944 = vmatprep.subr.bf16.mxu0 %v2613
        %2945 = vmatpush1.bf16.msra.mxu0 %v2612
        %2946 = vmatprep.subr.bf16.mxu0 0
        %2947 = vmatpush1.bf16.msra.mxu0 0
        %2948 = vmatprep.subr.bf16.mxu0 0
        %2949 = vmatpush1.bf16.msra.mxu0 0
        %2950 = vmatprep.subr.bf16.mxu0 0
        %2951 = vmatpush1.bf16.msra.mxu0 0
        %2952 = vmatprep.subr.bf16.mxu0 0
        %2953 = vmatpush1.bf16.msra.mxu0 0
        %2954 = vmatprep.subr.bf16.mxu0 0
        %2955 = vmatpush1.bf16.msra.mxu0 0
        %2956 = vmatprep.subr.bf16.mxu0 0
        %2957 = vmatpush1.bf16.msra.mxu0 0
        %2958 = vmatprep.subr.bf16.mxu0 0
        %2959 = vmatpush1.bf16.msra.mxu0 0
        %2960 = vmatprep.subr.bf16.mxu0 0
        %2961 = vmatpush1.bf16.msra.mxu0 0
        %2962 = vmatprep.subr.bf16.mxu0 0
        %2963 = vmatpush1.bf16.msra.mxu0 0
        %2964 = vmatprep.subr.bf16.mxu0 0
        %2965 = vmatpush1.bf16.msra.mxu0 0
        %2966 = vmatprep.mubr.bf16.mxu0 0
        %2967 = vmatmul.mubr.bf16.gmra.mrb[0].mxu0 %v2932
        %v2968 = vpop.f32.mrb[0].mxu0
        %v2969 = vadd.f32 0.0, %v2968
        %v2970 = vpop.f32.mrb[0].mxu0
        %v2971 = vadd.f32 0.0, %v2970
        %v2972 = vpop.f32.mrb[0].mxu0
        %v2973 = vadd.f32 0.0, %v2972
        %v2974 = vpop.f32.mrb[0].mxu0
        %v2975 = vadd.f32 0.0, %v2974
        %2976 = vdwg.mxu0
        %v2977 = vadd.f32 %v2839, %v2969
        %v2978 = vadd.f32 %v2840, %v2971
        %v2979 = vadd.f32 %v2841, %v2973
        %v2980 = vadd.f32 %v2842, %v2975
        %2981 = vmatprep.subr.bf16.mxu0 %v2726
        %2982 = vmatpush1.bf16.msra.mxu0 %v2725
        %2983 = vmatprep.subr.bf16.mxu0 %v2728
        %2984 = vmatpush1.bf16.msra.mxu0 %v2727
        %2985 = vmatprep.subr.bf16.mxu0 %v2730
        %2986 = vmatpush1.bf16.msra.mxu0 %v2729
        %2987 = vmatprep.subr.bf16.mxu0 %v2732
        %2988 = vmatpush1.bf16.msra.mxu0 %v2731
        %2989 = vmatprep.subr.bf16.mxu0 %v2734
        %2990 = vmatpush1.bf16.msra.mxu0 %v2733
        %2991 = vmatprep.subr.bf16.mxu0 %v2736
        %2992 = vmatpush1.bf16.msra.mxu0 %v2735
        %2993 = vmatprep.subr.bf16.mxu0 0
        %2994 = vmatpush1.bf16.msra.mxu0 0
        %2995 = vmatprep.subr.bf16.mxu0 0
        %2996 = vmatpush1.bf16.msra.mxu0 0
        %2997 = vmatprep.subr.bf16.mxu0 0
        %2998 = vmatpush1.bf16.msra.mxu0 0
        %2999 = vmatprep.subr.bf16.mxu0 0
        %3000 = vmatpush1.bf16.msra.mxu0 0
        %3001 = vmatprep.subr.bf16.mxu0 0
        %3002 = vmatpush1.bf16.msra.mxu0 0
        %3003 = vmatprep.subr.bf16.mxu0 0
        %3004 = vmatpush1.bf16.msra.mxu0 0
        %3005 = vmatprep.subr.bf16.mxu0 0
        %3006 = vmatpush1.bf16.msra.mxu0 0
        %3007 = vmatprep.subr.bf16.mxu0 0
        %3008 = vmatpush1.bf16.msra.mxu0 0
        %3009 = vmatprep.subr.bf16.mxu0 0
        %3010 = vmatpush1.bf16.msra.mxu0 0
        %3011 = vmatprep.subr.bf16.mxu0 0
        %3012 = vmatpush1.bf16.msra.mxu0 0
        %3013 = vmatprep.mubr.bf16.mxu0 0
        %3014 = vmatmul.mubr.bf16.gmra.mrb[0].mxu0 %v2932
        %v3015 = vpop.f32.mrb[0].mxu0
        %v3016 = vadd.f32 0.0, %v3015
        %v3017 = vpop.f32.mrb[0].mxu0
        %v3018 = vadd.f32 0.0, %v3017
        %v3019 = vpop.f32.mrb[0].mxu0
        %v3020 = vadd.f32 0.0, %v3019
        %v3021 = vpop.f32.mrb[0].mxu0
        %v3022 = vadd.f32 0.0, %v3021
        %3023 = vdwg.mxu0
        %v3024 = vadd.f32 %v2886, %v3016
        %v3025 = vadd.f32 %v2887, %v3018
        %v3026 = vadd.f32 %v2888, %v3020
        %v3027 = vadd.f32 %v2889, %v3022
        %v3028 = vmax.f32 %v2672, %v2792
        %v3029 = vmax.f32 %v2673, %v2793
        %v3030 = vmax.f32 %v2674, %v2794
        %v3031 = vmax.f32 %v2675, %v2795
        %v3032 = vmax.f32 %v2977, %v3024
        %v3033 = vmax.f32 %v2978, %v3025
        %v3034 = vmax.f32 %v2979, %v3026
        %v3035 = vmax.f32 %v2980, %v3027
        %v3036 = vmax.f32 %v3028, %v3032
        %v3037 = vmax.f32 %v3029, %v3033
        %v3038 = vmax.f32 %v3030, %v3034
        %v3039 = vmax.f32 %v3031, %v3035
        %v3040 = vld [vmem:[%s4] sm:$0x3]
        %v3042 = vlaneseq
        %v3043 = vshrl.u32 %v3042, 7
        %v3044 = vsub.s32 0, %v3043
        %v3045 = vrot.slane %v3040, %v3044
        %v3046 = vlaneseq
        %v3047 = vshrl.u32 %v3046, 7
        %v3048 = vsub.s32 1, %v3047
        %v3049 = vrot.slane %v3040, %v3048
        %v3052 = vadd.f32 %v3036, %v3045
        %v3053 = vadd.f32 %v3037, %v3049
        %v3054 = vadd.f32 %v3038, %v3045
        %v3055 = vadd.f32 %v3039, %v3049
        %vm3056 = vcmp.ge.f32.partialorder %v3052, 0.0
        %vm3057 = vcmp.ge.f32.partialorder %v3053, 0.0
        %vm3058 = vcmp.ge.f32.partialorder %v3054, 0.0
        %vm3059 = vcmp.ge.f32.partialorder %v3055, 0.0
        %v3060 = vmul.f32 %v3052, 0.01
        %v3061 = vmul.f32 %v3053, 0.01
        %v3062 = vmul.f32 %v3054, 0.01
        %v3063 = vmul.f32 %v3055, 0.01
        %v3064 = vsel %vm3056, %v3052, %v3060
        %v3065 = vsel %vm3057, %v3053, %v3061
        %v3066 = vsel %vm3058, %v3054, %v3062
        %v3067 = vsel %vm3059, %v3055, %v3063
        %v3072 = vcombine.low %v3064, %v3065
        %v3073 = vcombine.high %v3064, %v3065
        %v3075 = vunpack.c.l.s4 1966171168
        %v3076 = vunpack.c.0.s8 %v3075
        %v3077 = vlaneseq
        %v3078 = vshrl.u32 %v3077, 7
        %v3079 = vsub.s32 %v3076, %v3078
        %v3080 = vrot.slane %v3072, %v3079
        %v3082 = vunpack.c.l.s4 1966171168
        %v3083 = vunpack.c.0.s8 %v3082
        %v3084 = vlaneseq
        %v3085 = vshrl.u32 %v3084, 7
        %v3086 = vsub.s32 %v3083, %v3085
        %v3087 = vrot.slane %v3073, %v3086
        %v3088 = vcombine.high %v3080, %v3080
        %v3089 = vcombine.high %v3087, %v3087
        %v3091 = vunpack.c.l.s4 1966171168
        %v3092 = vunpack.c.0.s8 %v3091
        %v3093 = vlaneseq
        %v3094 = vshrl.u32 %v3093, 7
        %v3095 = vsub.s32 %v3092, %v3094
        %v3096 = vrot.slane %v3080, %v3095
        %v3098 = vunpack.c.l.s4 1966171168
        %v3099 = vunpack.c.0.s8 %v3098
        %v3100 = vlaneseq
        %v3101 = vshrl.u32 %v3100, 7
        %v3102 = vsub.s32 %v3099, %v3101
        %v3103 = vrot.slane %v3087, %v3102
        %v3105 = vunpack.c.l.s4 1966171168
        %v3106 = vunpack.c.0.s8 %v3105
        %v3107 = vlaneseq
        %v3108 = vshrl.u32 %v3107, 7
        %v3109 = vsub.s32 %v3106, %v3108
        %v3110 = vrot.slane %v3088, %v3109
        %v3112 = vunpack.c.l.s4 1966171168
        %v3113 = vunpack.c.0.s8 %v3112
        %v3114 = vlaneseq
        %v3115 = vshrl.u32 %v3114, 7
        %v3116 = vsub.s32 %v3113, %v3115
        %v3117 = vrot.slane %v3089, %v3116
        %v3118 = vcombine.high %v3096, %v3096
        %v3119 = vcombine.high %v3103, %v3103
        %v3120 = vcombine.high %v3110, %v3110
        %v3121 = vcombine.high %v3117, %v3117
        %v3122 = vcombine.low %v3066, %v3067
        %v3123 = vcombine.high %v3066, %v3067
        %v3125 = vunpack.c.l.s4 1966171168
        %v3126 = vunpack.c.0.s8 %v3125
        %v3127 = vlaneseq
        %v3128 = vshrl.u32 %v3127, 7
        %v3129 = vsub.s32 %v3126, %v3128
        %v3130 = vrot.slane %v3122, %v3129
        %v3132 = vunpack.c.l.s4 1966171168
        %v3133 = vunpack.c.0.s8 %v3132
        %v3134 = vlaneseq
        %v3135 = vshrl.u32 %v3134, 7
        %v3136 = vsub.s32 %v3133, %v3135
        %v3137 = vrot.slane %v3123, %v3136
        %v3138 = vcombine.high %v3130, %v3130
        %v3139 = vcombine.high %v3137, %v3137
        %v3141 = vunpack.c.l.s4 1966171168
        %v3142 = vunpack.c.0.s8 %v3141
        %v3143 = vlaneseq
        %v3144 = vshrl.u32 %v3143, 7
        %v3145 = vsub.s32 %v3142, %v3144
        %v3146 = vrot.slane %v3130, %v3145
        %v3148 = vunpack.c.l.s4 1966171168
        %v3149 = vunpack.c.0.s8 %v3148
        %v3150 = vlaneseq
        %v3151 = vshrl.u32 %v3150, 7
        %v3152 = vsub.s32 %v3149, %v3151
        %v3153 = vrot.slane %v3137, %v3152
        %v3155 = vunpack.c.l.s4 1966171168
        %v3156 = vunpack.c.0.s8 %v3155
        %v3157 = vlaneseq
        %v3158 = vshrl.u32 %v3157, 7
        %v3159 = vsub.s32 %v3156, %v3158
        %v3160 = vrot.slane %v3138, %v3159
        %v3162 = vunpack.c.l.s4 1966171168
        %v3163 = vunpack.c.0.s8 %v3162
        %v3164 = vlaneseq
        %v3165 = vshrl.u32 %v3164, 7
        %v3166 = vsub.s32 %v3163, %v3165
        %v3167 = vrot.slane %v3139, %v3166
        %v3168 = vcombine.high %v3146, %v3146
        %v3169 = vcombine.high %v3160, %v3160
        %v3170 = vlaneseq
        %v3171 = vshrl.u32 %v3170, 7
        %v3172 = vsub.s32 0, %v3171
        %v3173 = vrot.slane %v3096, %v3172
        %v3174 = vlaneseq
        %v3175 = vshrl.u32 %v3174, 7
        %v3176 = vsub.s32 1, %v3175
        %v3177 = vrot.slane %v3096, %v3176
        %v3178 = vlaneseq
        %v3179 = vshrl.u32 %v3178, 7
        %v3180 = vsub.s32 0, %v3179
        %v3181 = vrot.slane %v3110, %v3180
        %v3182 = vlaneseq
        %v3183 = vshrl.u32 %v3182, 7
        %v3184 = vsub.s32 1, %v3183
        %v3185 = vrot.slane %v3110, %v3184
        %v3186 = vlaneseq
        %v3187 = vshrl.u32 %v3186, 7
        %v3188 = vsub.s32 0, %v3187
        %v3189 = vrot.slane %v3118, %v3188
        %v3190 = vlaneseq
        %v3191 = vshrl.u32 %v3190, 7
        %v3192 = vsub.s32 1, %v3191
        %v3193 = vrot.slane %v3118, %v3192
        %v3194 = vlaneseq
        %v3195 = vshrl.u32 %v3194, 7
        %v3196 = vsub.s32 0, %v3195
        %v3197 = vrot.slane %v3120, %v3196
        %v3198 = vlaneseq
        %v3199 = vshrl.u32 %v3198, 7
        %v3200 = vsub.s32 1, %v3199
        %v3201 = vrot.slane %v3120, %v3200
        %v3202 = vlaneseq
        %v3203 = vshrl.u32 %v3202, 7
        %v3204 = vsub.s32 0, %v3203
        %v3205 = vrot.slane %v3103, %v3204
        %v3206 = vlaneseq
        %v3207 = vshrl.u32 %v3206, 7
        %v3208 = vsub.s32 1, %v3207
        %v3209 = vrot.slane %v3103, %v3208
        %v3210 = vlaneseq
        %v3211 = vshrl.u32 %v3210, 7
        %v3212 = vsub.s32 0, %v3211
        %v3213 = vrot.slane %v3117, %v3212
        %v3214 = vlaneseq
        %v3215 = vshrl.u32 %v3214, 7
        %v3216 = vsub.s32 1, %v3215
        %v3217 = vrot.slane %v3117, %v3216
        %v3218 = vlaneseq
        %v3219 = vshrl.u32 %v3218, 7
        %v3220 = vsub.s32 0, %v3219
        %v3221 = vrot.slane %v3119, %v3220
        %v3222 = vlaneseq
        %v3223 = vshrl.u32 %v3222, 7
        %v3224 = vsub.s32 1, %v3223
        %v3225 = vrot.slane %v3119, %v3224
        %v3226 = vlaneseq
        %v3227 = vshrl.u32 %v3226, 7
        %v3228 = vsub.s32 0, %v3227
        %v3229 = vrot.slane %v3121, %v3228
        %v3230 = vlaneseq
        %v3231 = vshrl.u32 %v3230, 7
        %v3232 = vsub.s32 1, %v3231
        %v3233 = vrot.slane %v3121, %v3232
        %v3234 = vlaneseq
        %v3235 = vshrl.u32 %v3234, 7
        %v3236 = vsub.s32 0, %v3235
        %v3237 = vrot.slane %v3146, %v3236
        %v3238 = vlaneseq
        %v3239 = vshrl.u32 %v3238, 7
        %v3240 = vsub.s32 1, %v3239
        %v3241 = vrot.slane %v3146, %v3240
        %v3242 = vlaneseq
        %v3243 = vshrl.u32 %v3242, 7
        %v3244 = vsub.s32 0, %v3243
        %v3245 = vrot.slane %v3160, %v3244
        %v3246 = vlaneseq
        %v3247 = vshrl.u32 %v3246, 7
        %v3248 = vsub.s32 1, %v3247
        %v3249 = vrot.slane %v3160, %v3248
        %v3250 = vlaneseq
        %v3251 = vshrl.u32 %v3250, 7
        %v3252 = vsub.s32 0, %v3251
        %v3253 = vrot.slane %v3168, %v3252
        %v3254 = vlaneseq
        %v3255 = vshrl.u32 %v3254, 7
        %v3256 = vsub.s32 1, %v3255
        %v3257 = vrot.slane %v3168, %v3256
        %v3258 = vlaneseq
        %v3259 = vshrl.u32 %v3258, 7
        %v3260 = vsub.s32 0, %v3259
        %v3261 = vrot.slane %v3169, %v3260
        %v3262 = vlaneseq
        %v3263 = vshrl.u32 %v3262, 7
        %v3264 = vsub.s32 1, %v3263
        %v3265 = vrot.slane %v3169, %v3264
        %v3266 = vlaneseq
        %v3267 = vshrl.u32 %v3266, 7
        %v3268 = vsub.s32 0, %v3267
        %v3269 = vrot.slane %v3153, %v3268
        %v3270 = vlaneseq
        %v3271 = vshrl.u32 %v3270, 7
        %v3272 = vsub.s32 1, %v3271
        %v3273 = vrot.slane %v3153, %v3272
        %v3274 = vlaneseq
        %v3275 = vshrl.u32 %v3274, 7
        %v3276 = vsub.s32 0, %v3275
        %v3277 = vrot.slane %v3167, %v3276
        %v3278 = vlaneseq
        %v3279 = vshrl.u32 %v3278, 7
        %v3280 = vsub.s32 1, %v3279
        %v3281 = vrot.slane %v3167, %v3280
        %v3310 = vpack.c.bf16 %v3173, %v3173
        %v3311 = vpack.c.bf16 %v3177, %v3177
        %v3312 = vpack.c.bf16 %v3181, %v3181
        %v3313 = vpack.c.bf16 %v3185, %v3185
        %v3314 = vpack.c.bf16 %v3189, %v3189
        %v3315 = vpack.c.bf16 %v3193, %v3193
        %v3316 = vpack.c.bf16 %v3197, %v3197
        %v3317 = vpack.c.bf16 %v3201, %v3201
        %v3318 = vpack.c.bf16 %v3205, %v3205
        %v3319 = vpack.c.bf16 %v3209, %v3209
        %v3320 = vpack.c.bf16 %v3213, %v3213
        %v3321 = vpack.c.bf16 %v3217, %v3217
        %v3322 = vpack.c.bf16 %v3221, %v3221
        %v3323 = vpack.c.bf16 %v3225, %v3225
        %v3324 = vpack.c.bf16 %v3229, %v3229
        %v3325 = vpack.c.bf16 %v3233, %v3233
        %v3326 = vpack.c.bf16 %v3237, %v3237
        %v3327 = vpack.c.bf16 %v3241, %v3241
        %v3328 = vpack.c.bf16 %v3245, %v3245
        %v3329 = vpack.c.bf16 %v3249, %v3249
        %v3330 = vpack.c.bf16 %v3253, %v3253
        %v3331 = vpack.c.bf16 %v3257, %v3257
        %v3332 = vpack.c.bf16 %v3261, %v3261
        %v3333 = vpack.c.bf16 %v3265, %v3265
        %v3334 = vpack.c.bf16 %v3269, %v3269
        %v3335 = vpack.c.bf16 %v3273, %v3273
        %v3336 = vpack.c.bf16 %v3277, %v3277
        %v3337 = vpack.c.bf16 %v3281, %v3281
        %v3338 = vld [vmem:[#allocation8] sm:$0xff]
        %v3339 = vld [vmem:[#allocation8 + $0x8] sm:$0xff]
        %v3340 = vld [vmem:[#allocation8 + $0x10] sm:$0xff]
        %v3341 = vld [vmem:[#allocation8 + $0x18] sm:$0xff]
        %v3342 = vld [vmem:[#allocation8 + $0x20] sm:$0xff]
        %v3343 = vld [vmem:[#allocation8 + $0x28] sm:$0xff]
        %v3344 = vld [vmem:[#allocation8 + $0x30] sm:$0xff]
        %v3345 = vld [vmem:[#allocation8 + $0x38] sm:$0xff]
        %v3346 = vld [vmem:[#allocation8 + $0x40] sm:$0xff]
        %v3347 = vld [vmem:[#allocation8 + $0x48] sm:$0xff]
        %v3348 = vld [vmem:[#allocation8 + $0x50] sm:$0xff]
        %v3349 = vld [vmem:[#allocation8 + $0x58] sm:$0xff]
        %v3350 = vld [vmem:[#allocation8 + $0x60] sm:$0xff]
        %v3351 = vld [vmem:[#allocation8 + $0x68] sm:$0xff]
        %v3352 = vld [vmem:[#allocation8 + $0x70] sm:$0xff]
        %v3353 = vld [vmem:[#allocation8 + $0x78] sm:$0xff]
        %v3354 = vld [vmem:[#allocation8 + $0x80] sm:$0xff]
        %v3355 = vld [vmem:[#allocation8 + $0x88] sm:$0xff]
        %v3356 = vld [vmem:[#allocation8 + $0x90] sm:$0xff]
        %v3357 = vld [vmem:[#allocation8 + $0x98] sm:$0xff]
        %v3358 = vld [vmem:[#allocation8 + $0xa0] sm:$0xff]
        %v3359 = vld [vmem:[#allocation8 + $0xa8] sm:$0xff]
        %v3360 = vld [vmem:[#allocation8 + $0xb0] sm:$0xff]
        %v3361 = vld [vmem:[#allocation8 + $0xb8] sm:$0xff]
        %v3362 = vld [vmem:[#allocation8 + $0xc0] sm:$0xff]
        %v3363 = vld [vmem:[#allocation8 + $0xc8] sm:$0xff]
        %v3364 = vld [vmem:[#allocation8 + $0xd0] sm:$0xff]
        %v3365 = vld [vmem:[#allocation8 + $0xd8] sm:$0xff]
        %v3366 = vld [vmem:[#allocation8 + $0xe0] sm:$0xff]
        %v3367 = vld [vmem:[#allocation8 + $0xe8] sm:$0xff]
        %v3368 = vld [vmem:[#allocation8 + $0xf0] sm:$0xff]
        %v3369 = vld [vmem:[#allocation8 + $0xf8] sm:$0xff]
        %v3370 = vld [vmem:[#allocation9] sm:$0xff]
        %v3371 = vld [vmem:[#allocation9 + $0x8] sm:$0xff]
        %v3372 = vld [vmem:[#allocation9 + $0x10] sm:$0xff]
        %v3373 = vld [vmem:[#allocation9 + $0x18] sm:$0xff]
        %v3374 = vld [vmem:[#allocation9 + $0x20] sm:$0xff]
        %v3375 = vld [vmem:[#allocation9 + $0x28] sm:$0xff]
        %v3376 = vld [vmem:[#allocation9 + $0x30] sm:$0xff]
        %v3377 = vld [vmem:[#allocation9 + $0x38] sm:$0xff]
        %v3378 = vld [vmem:[#allocation9 + $0x40] sm:$0xff]
        %v3379 = vld [vmem:[#allocation9 + $0x48] sm:$0xff]
        %v3380 = vld [vmem:[#allocation9 + $0x50] sm:$0xff]
        %v3381 = vld [vmem:[#allocation9 + $0x58] sm:$0xff]
        %v3382 = vld [vmem:[#allocation9 + $0x60] sm:$0xff]
        %v3383 = vld [vmem:[#allocation9 + $0x68] sm:$0xff]
        %v3384 = vld [vmem:[#allocation9 + $0x70] sm:$0xff]
        %v3385 = vld [vmem:[#allocation9 + $0x78] sm:$0xff]
        %v3386 = vld [vmem:[#allocation9 + $0x80] sm:$0xff]
        %v3387 = vld [vmem:[#allocation9 + $0x88] sm:$0xff]
        %v3388 = vld [vmem:[#allocation9 + $0x90] sm:$0xff]
        %v3389 = vld [vmem:[#allocation9 + $0x98] sm:$0xff]
        %v3390 = vld [vmem:[#allocation9 + $0xa0] sm:$0xff]
        %v3391 = vld [vmem:[#allocation9 + $0xa8] sm:$0xff]
        %v3392 = vld [vmem:[#allocation9 + $0xb0] sm:$0xff]
        %v3393 = vld [vmem:[#allocation9 + $0xb8] sm:$0xff]
        %v3394 = vld [vmem:[#allocation9 + $0xc0] sm:$0xff]
        %v3395 = vld [vmem:[#allocation9 + $0xc8] sm:$0xff]
        %v3396 = vld [vmem:[#allocation9 + $0xd0] sm:$0xff]
        %v3397 = vld [vmem:[#allocation9 + $0xd8] sm:$0xff]
        %v3398 = vld [vmem:[#allocation9 + $0xe0] sm:$0xff]
        %v3399 = vld [vmem:[#allocation9 + $0xe8] sm:$0xff]
        %v3400 = vld [vmem:[#allocation9 + $0xf0] sm:$0xff]
        %v3401 = vld [vmem:[#allocation9 + $0xf8] sm:$0xff]
        %s3402 = scalar_lea.vmem [#allocation8], 256
        %v3403 = vld [vmem:[%s3402] sm:$0xff]
        %v3404 = vld [vmem:[%s3402 + $0x8] sm:$0xff]
        %v3405 = vld [vmem:[%s3402 + $0x10] sm:$0xff]
        %v3406 = vld [vmem:[%s3402 + $0x18] sm:$0xff]
        %v3407 = vld [vmem:[%s3402 + $0x20] sm:$0xff]
        %v3408 = vld [vmem:[%s3402 + $0x28] sm:$0xff]
        %v3409 = vld [vmem:[%s3402 + $0x30] sm:$0xff]
        %v3410 = vld [vmem:[%s3402 + $0x38] sm:$0xff]
        %v3411 = vld [vmem:[%s3402 + $0x40] sm:$0xff]
        %v3412 = vld [vmem:[%s3402 + $0x48] sm:$0xff]
        %v3413 = vld [vmem:[%s3402 + $0x50] sm:$0xff]
        %v3414 = vld [vmem:[%s3402 + $0x58] sm:$0xff]
        %v3415 = vld [vmem:[%s3402 + $0x60] sm:$0xff]
        %v3416 = vld [vmem:[%s3402 + $0x68] sm:$0xff]
        %v3417 = vld [vmem:[%s3402 + $0x70] sm:$0xff]
        %v3418 = vld [vmem:[%s3402 + $0x78] sm:$0xff]
        %v3419 = vld [vmem:[%s3402 + $0x80] sm:$0xff]
        %v3420 = vld [vmem:[%s3402 + $0x88] sm:$0xff]
        %v3421 = vld [vmem:[%s3402 + $0x90] sm:$0xff]
        %v3422 = vld [vmem:[%s3402 + $0x98] sm:$0xff]
        %v3423 = vld [vmem:[%s3402 + $0xa0] sm:$0xff]
        %v3424 = vld [vmem:[%s3402 + $0xa8] sm:$0xff]
        %v3425 = vld [vmem:[%s3402 + $0xb0] sm:$0xff]
        %v3426 = vld [vmem:[%s3402 + $0xb8] sm:$0xff]
        %v3427 = vld [vmem:[%s3402 + $0xc0] sm:$0xff]
        %v3428 = vld [vmem:[%s3402 + $0xc8] sm:$0xff]
        %v3429 = vld [vmem:[%s3402 + $0xd0] sm:$0xff]
        %v3430 = vld [vmem:[%s3402 + $0xd8] sm:$0xff]
        %v3431 = vld [vmem:[%s3402 + $0xe0] sm:$0xff]
        %v3432 = vld [vmem:[%s3402 + $0xe8] sm:$0xff]
        %v3433 = vld [vmem:[%s3402 + $0xf0] sm:$0xff]
        %v3434 = vld [vmem:[%s3402 + $0xf8] sm:$0xff]
        %v3447 = vunpack.c.l.b16 %v3310
        %v3448 = vunpack.c.l.b16 %v3311
        %v3449 = vunpack.c.l.b16 %v3314
        %v3450 = vunpack.c.l.b16 %v3315
        %v3451 = vunpack.c.l.b16 %v3318
        %v3452 = vunpack.c.l.b16 %v3319
        %v3453 = vunpack.c.l.b16 %v3322
        %v3454 = vunpack.c.l.b16 %v3323
        %v3455 = vunpack.c.l.b16 %v3326
        %v3456 = vunpack.c.l.b16 %v3327
        %v3457 = vunpack.c.l.b16 %v3330
        %v3458 = vunpack.c.l.b16 %v3331
        %v3459 = vrot.slane %v3449, 7
        %v3460 = vsel %vm966, %v3459, %v3447
        %v3461 = vrot.slane %v3451, 6
        %v3462 = vsel %vm969, %v3461, %v3460
        %v3463 = vrot.slane %v3453, 5
        %v3464 = vsel %vm972, %v3463, %v3462
        %v3465 = vrot.slane %v3455, 4
        %v3466 = vsel %vm975, %v3465, %v3464
        %v3467 = vrot.slane %v3457, 3
        %v3468 = vsel %vm978, %v3467, %v3466
        %v3469 = vrot.slane %v3450, 7
        %v3470 = vsel %vm966, %v3469, %v3448
        %v3471 = vrot.slane %v3452, 6
        %v3472 = vsel %vm969, %v3471, %v3470
        %v3473 = vrot.slane %v3454, 5
        %v3474 = vsel %vm972, %v3473, %v3472
        %v3475 = vrot.slane %v3456, 4
        %v3476 = vsel %vm975, %v3475, %v3474
        %v3477 = vrot.slane %v3458, 3
        %v3478 = vsel %vm978, %v3477, %v3476
        %v3479 = vpack.c.b16 %v3468, %v3468
        %v3480 = vpack.c.b16 %v3478, %v3478
        %v3515 = vunpack.c.l.b16 %v3403
        %v3516 = vunpack.c.h.b16 %v3403
        %v3517 = vunpack.c.l.b16 %v3404
        %v3518 = vunpack.c.h.b16 %v3404
        %v3519 = vunpack.c.l.b16 %v3405
        %v3520 = vunpack.c.h.b16 %v3405
        %v3521 = vunpack.c.l.b16 %v3406
        %v3522 = vunpack.c.h.b16 %v3406
        %v3523 = vunpack.c.l.b16 %v3407
        %v3524 = vunpack.c.h.b16 %v3407
        %v3525 = vunpack.c.l.b16 %v3408
        %v3526 = vunpack.c.h.b16 %v3408
        %v3527 = vunpack.c.l.b16 %v3409
        %v3528 = vunpack.c.h.b16 %v3409
        %v3529 = vunpack.c.l.b16 %v3410
        %v3530 = vunpack.c.h.b16 %v3410
        %v3531 = vunpack.c.l.b16 %v3411
        %v3532 = vunpack.c.h.b16 %v3411
        %v3533 = vunpack.c.l.b16 %v3412
        %v3534 = vunpack.c.h.b16 %v3412
        %v3535 = vunpack.c.l.b16 %v3413
        %v3536 = vunpack.c.h.b16 %v3413
        %v3537 = vunpack.c.l.b16 %v3414
        %v3538 = vunpack.c.h.b16 %v3414
        %v3539 = vunpack.c.l.b16 %v3415
        %v3540 = vunpack.c.h.b16 %v3415
        %v3541 = vunpack.c.l.b16 %v3416
        %v3542 = vunpack.c.h.b16 %v3416
        %v3543 = vunpack.c.l.b16 %v3417
        %v3544 = vunpack.c.h.b16 %v3417
        %v3545 = vunpack.c.l.b16 %v3418
        %v3546 = vunpack.c.h.b16 %v3418
        %v3547 = vunpack.c.l.b16 %v3419
        %v3548 = vunpack.c.h.b16 %v3419
        %v3549 = vunpack.c.l.b16 %v3420
        %v3550 = vunpack.c.h.b16 %v3420
        %v3551 = vunpack.c.l.b16 %v3421
        %v3552 = vunpack.c.h.b16 %v3421
        %v3553 = vunpack.c.l.b16 %v3422
        %v3554 = vunpack.c.h.b16 %v3422
        %v3555 = vunpack.c.l.b16 %v3423
        %v3556 = vunpack.c.h.b16 %v3423
        %v3557 = vunpack.c.l.b16 %v3424
        %v3558 = vunpack.c.h.b16 %v3424
        %v3559 = vunpack.c.l.b16 %v3425
        %v3560 = vunpack.c.h.b16 %v3425
        %v3561 = vunpack.c.l.b16 %v3426
        %v3562 = vunpack.c.h.b16 %v3426
        %v3563 = vunpack.c.l.b16 %v3427
        %v3564 = vunpack.c.h.b16 %v3427
        %v3565 = vunpack.c.l.b16 %v3428
        %v3566 = vunpack.c.h.b16 %v3428
        %v3567 = vunpack.c.l.b16 %v3429
        %v3568 = vunpack.c.h.b16 %v3429
        %v3569 = vunpack.c.l.b16 %v3430
        %v3570 = vunpack.c.h.b16 %v3430
        %v3571 = vunpack.c.l.b16 %v3431
        %v3572 = vunpack.c.h.b16 %v3431
        %v3573 = vunpack.c.l.b16 %v3432
        %v3574 = vunpack.c.h.b16 %v3432
        %v3575 = vunpack.c.l.b16 %v3433
        %v3576 = vunpack.c.h.b16 %v3433
        %v3577 = vunpack.c.l.b16 %v3434
        %v3578 = vunpack.c.h.b16 %v3434
        %v3579 = vpack.c.b16 %v3517, %v3515
        %v3580 = vpack.c.b16 %v3518, %v3516
        %v3581 = vpack.c.b16 %v3521, %v3519
        %v3582 = vpack.c.b16 %v3522, %v3520
        %v3583 = vpack.c.b16 %v3525, %v3523
        %v3584 = vpack.c.b16 %v3526, %v3524
        %v3585 = vpack.c.b16 %v3529, %v3527
        %v3586 = vpack.c.b16 %v3530, %v3528
        %v3587 = vpack.c.b16 %v3533, %v3531
        %v3588 = vpack.c.b16 %v3534, %v3532
        %v3589 = vpack.c.b16 %v3537, %v3535
        %v3590 = vpack.c.b16 %v3538, %v3536
        %v3591 = vpack.c.b16 %v3541, %v3539
        %v3592 = vpack.c.b16 %v3542, %v3540
        %v3593 = vpack.c.b16 %v3545, %v3543
        %v3594 = vpack.c.b16 %v3546, %v3544
        %v3595 = vpack.c.b16 %v3549, %v3547
        %v3596 = vpack.c.b16 %v3550, %v3548
        %v3597 = vpack.c.b16 %v3553, %v3551
        %v3598 = vpack.c.b16 %v3554, %v3552
        %v3599 = vpack.c.b16 %v3557, %v3555
        %v3600 = vpack.c.b16 %v3558, %v3556
        %v3601 = vpack.c.b16 %v3561, %v3559
        %v3602 = vpack.c.b16 %v3562, %v3560
        %v3603 = vpack.c.b16 %v3565, %v3563
        %v3604 = vpack.c.b16 %v3566, %v3564
        %v3605 = vpack.c.b16 %v3569, %v3567
        %v3606 = vpack.c.b16 %v3570, %v3568
        %v3607 = vpack.c.b16 %v3573, %v3571
        %v3608 = vpack.c.b16 %v3574, %v3572
        %v3609 = vpack.c.b16 %v3577, %v3575
        %v3610 = vpack.c.b16 %v3578, %v3576
        %3643 = vmatprep.subr.bf16.mxu0 %v3580
        %3644 = vmatpush1.bf16.msra.mxu0 %v3579
        %3645 = vmatprep.subr.bf16.mxu0 %v3582
        %3646 = vmatpush1.bf16.msra.mxu0 %v3581
        %3647 = vmatprep.subr.bf16.mxu0 %v3584
        %3648 = vmatpush1.bf16.msra.mxu0 %v3583
        %3649 = vmatprep.subr.bf16.mxu0 %v3586
        %3650 = vmatpush1.bf16.msra.mxu0 %v3585
        %3651 = vmatprep.subr.bf16.mxu0 %v3588
        %3652 = vmatpush1.bf16.msra.mxu0 %v3587
        %3653 = vmatprep.subr.bf16.mxu0 %v3590
        %3654 = vmatpush1.bf16.msra.mxu0 %v3589
        %3655 = vmatprep.subr.bf16.mxu0 %v3592
        %3656 = vmatpush1.bf16.msra.mxu0 %v3591
        %3657 = vmatprep.subr.bf16.mxu0 %v3594
        %3658 = vmatpush1.bf16.msra.mxu0 %v3593
        %3659 = vmatprep.subr.bf16.mxu0 %v3596
        %3660 = vmatpush1.bf16.msra.mxu0 %v3595
        %3661 = vmatprep.subr.bf16.mxu0 %v3598
        %3662 = vmatpush1.bf16.msra.mxu0 %v3597
        %3663 = vmatprep.subr.bf16.mxu0 %v3600
        %3664 = vmatpush1.bf16.msra.mxu0 %v3599
        %3665 = vmatprep.subr.bf16.mxu0 %v3602
        %3666 = vmatpush1.bf16.msra.mxu0 %v3601
        %3667 = vmatprep.subr.bf16.mxu0 %v3604
        %3668 = vmatpush1.bf16.msra.mxu0 %v3603
        %3669 = vmatprep.subr.bf16.mxu0 %v3606
        %3670 = vmatpush1.bf16.msra.mxu0 %v3605
        %3671 = vmatprep.subr.bf16.mxu0 %v3608
        %3672 = vmatpush1.bf16.msra.mxu0 %v3607
        %3673 = vmatprep.subr.bf16.mxu0 %v3610
        %3674 = vmatpush1.bf16.msra.mxu0 %v3609
        %3675 = vmatprep.mubr.bf16.mxu0 %v3480
        %3676 = vmatmul.mubr.bf16.gmra.mrb[0].mxu0 %v3479
        %v3677 = vpop.f32.mrb[0].mxu0
        %v3678 = vadd.f32 0.0, %v3677
        %v3679 = vpop.f32.mrb[0].mxu0
        %v3680 = vadd.f32 0.0, %v3679
        %v3681 = vpop.f32.mrb[0].mxu0
        %v3682 = vpop.f32.mrb[0].mxu0
        %3683 = vdwg.mxu0
        %v3695 = vunpack.c.l.b16 0
        %v3696 = vunpack.c.l.b16 %v3312
        %v3697 = vunpack.c.l.b16 %v3313
        %v3698 = vunpack.c.l.b16 %v3316
        %v3699 = vunpack.c.l.b16 %v3317
        %v3700 = vunpack.c.l.b16 %v3320
        %v3701 = vunpack.c.l.b16 %v3321
        %v3702 = vunpack.c.l.b16 %v3324
        %v3703 = vunpack.c.l.b16 %v3325
        %v3704 = vunpack.c.l.b16 %v3328
        %v3705 = vunpack.c.l.b16 %v3329
        %v3706 = vrot.slane %v3696, 7
        %v3707 = vsel %vm966, %v3706, %v3695
        %v3708 = vrot.slane %v3698, 6
        %v3709 = vsel %vm969, %v3708, %v3707
        %v3710 = vrot.slane %v3700, 5
        %v3711 = vsel %vm972, %v3710, %v3709
        %v3712 = vrot.slane %v3702, 4
        %v3713 = vsel %vm975, %v3712, %v3711
        %v3714 = vrot.slane %v3704, 3
        %v3715 = vsel %vm978, %v3714, %v3713
        %v3716 = vrot.slane %v3697, 7
        %v3717 = vsel %vm966, %v3716, %v3695
        %v3718 = vrot.slane %v3699, 6
        %v3719 = vsel %vm969, %v3718, %v3717
        %v3720 = vrot.slane %v3701, 5
        %v3721 = vsel %vm972, %v3720, %v3719
        %v3722 = vrot.slane %v3703, 4
        %v3723 = vsel %vm975, %v3722, %v3721
        %v3724 = vrot.slane %v3705, 3
        %v3725 = vsel %vm978, %v3724, %v3723
        %v3726 = vpack.c.b16 %v3715, %v3715
        %v3727 = vpack.c.b16 %v3725, %v3725
        %v3762 = vunpack.c.l.b16 %v3338
        %v3763 = vunpack.c.h.b16 %v3338
        %v3764 = vunpack.c.l.b16 %v3339
        %v3765 = vunpack.c.h.b16 %v3339
        %v3766 = vunpack.c.l.b16 %v3340
        %v3767 = vunpack.c.h.b16 %v3340
        %v3768 = vunpack.c.l.b16 %v3341
        %v3769 = vunpack.c.h.b16 %v3341
        %v3770 = vunpack.c.l.b16 %v3342
        %v3771 = vunpack.c.h.b16 %v3342
        %v3772 = vunpack.c.l.b16 %v3343
        %v3773 = vunpack.c.h.b16 %v3343
        %v3774 = vunpack.c.l.b16 %v3344
        %v3775 = vunpack.c.h.b16 %v3344
        %v3776 = vunpack.c.l.b16 %v3345
        %v3777 = vunpack.c.h.b16 %v3345
        %v3778 = vunpack.c.l.b16 %v3346
        %v3779 = vunpack.c.h.b16 %v3346
        %v3780 = vunpack.c.l.b16 %v3347
        %v3781 = vunpack.c.h.b16 %v3347
        %v3782 = vunpack.c.l.b16 %v3348
        %v3783 = vunpack.c.h.b16 %v3348
        %v3784 = vunpack.c.l.b16 %v3349
        %v3785 = vunpack.c.h.b16 %v3349
        %v3786 = vunpack.c.l.b16 %v3350
        %v3787 = vunpack.c.h.b16 %v3350
        %v3788 = vunpack.c.l.b16 %v3351
        %v3789 = vunpack.c.h.b16 %v3351
        %v3790 = vunpack.c.l.b16 %v3352
        %v3791 = vunpack.c.h.b16 %v3352
        %v3792 = vunpack.c.l.b16 %v3353
        %v3793 = vunpack.c.h.b16 %v3353
        %v3794 = vunpack.c.l.b16 %v3354
        %v3795 = vunpack.c.h.b16 %v3354
        %v3796 = vunpack.c.l.b16 %v3355
        %v3797 = vunpack.c.h.b16 %v3355
        %v3798 = vunpack.c.l.b16 %v3356
        %v3799 = vunpack.c.h.b16 %v3356
        %v3800 = vunpack.c.l.b16 %v3357
        %v3801 = vunpack.c.h.b16 %v3357
        %v3802 = vunpack.c.l.b16 %v3358
        %v3803 = vunpack.c.h.b16 %v3358
        %v3804 = vunpack.c.l.b16 %v3359
        %v3805 = vunpack.c.h.b16 %v3359
        %v3806 = vunpack.c.l.b16 %v3360
        %v3807 = vunpack.c.h.b16 %v3360
        %v3808 = vunpack.c.l.b16 %v3361
        %v3809 = vunpack.c.h.b16 %v3361
        %v3810 = vunpack.c.l.b16 %v3362
        %v3811 = vunpack.c.h.b16 %v3362
        %v3812 = vunpack.c.l.b16 %v3363
        %v3813 = vunpack.c.h.b16 %v3363
        %v3814 = vunpack.c.l.b16 %v3364
        %v3815 = vunpack.c.h.b16 %v3364
        %v3816 = vunpack.c.l.b16 %v3365
        %v3817 = vunpack.c.h.b16 %v3365
        %v3818 = vunpack.c.l.b16 %v3366
        %v3819 = vunpack.c.h.b16 %v3366
        %v3820 = vunpack.c.l.b16 %v3367
        %v3821 = vunpack.c.h.b16 %v3367
        %v3822 = vunpack.c.l.b16 %v3368
        %v3823 = vunpack.c.h.b16 %v3368
        %v3824 = vunpack.c.l.b16 %v3369
        %v3825 = vunpack.c.h.b16 %v3369
        %v3826 = vpack.c.b16 %v3764, %v3762
        %v3827 = vpack.c.b16 %v3765, %v3763
        %v3828 = vpack.c.b16 %v3768, %v3766
        %v3829 = vpack.c.b16 %v3769, %v3767
        %v3830 = vpack.c.b16 %v3772, %v3770
        %v3831 = vpack.c.b16 %v3773, %v3771
        %v3832 = vpack.c.b16 %v3776, %v3774
        %v3833 = vpack.c.b16 %v3777, %v3775
        %v3834 = vpack.c.b16 %v3780, %v3778
        %v3835 = vpack.c.b16 %v3781, %v3779
        %v3836 = vpack.c.b16 %v3784, %v3782
        %v3837 = vpack.c.b16 %v3785, %v3783
        %v3838 = vpack.c.b16 %v3788, %v3786
        %v3839 = vpack.c.b16 %v3789, %v3787
        %v3840 = vpack.c.b16 %v3792, %v3790
        %v3841 = vpack.c.b16 %v3793, %v3791
        %v3842 = vpack.c.b16 %v3796, %v3794
        %v3843 = vpack.c.b16 %v3797, %v3795
        %v3844 = vpack.c.b16 %v3800, %v3798
        %v3845 = vpack.c.b16 %v3801, %v3799
        %v3846 = vpack.c.b16 %v3804, %v3802
        %v3847 = vpack.c.b16 %v3805, %v3803
        %v3848 = vpack.c.b16 %v3808, %v3806
        %v3849 = vpack.c.b16 %v3809, %v3807
        %v3850 = vpack.c.b16 %v3812, %v3810
        %v3851 = vpack.c.b16 %v3813, %v3811
        %v3852 = vpack.c.b16 %v3816, %v3814
        %v3853 = vpack.c.b16 %v3817, %v3815
        %v3854 = vpack.c.b16 %v3820, %v3818
        %v3855 = vpack.c.b16 %v3821, %v3819
        %v3856 = vpack.c.b16 %v3824, %v3822
        %v3857 = vpack.c.b16 %v3825, %v3823
        %3890 = vmatprep.subr.bf16.mxu0 %v3827
        %3891 = vmatpush1.bf16.msra.mxu0 %v3826
        %3892 = vmatprep.subr.bf16.mxu0 %v3829
        %3893 = vmatpush1.bf16.msra.mxu0 %v3828
        %3894 = vmatprep.subr.bf16.mxu0 %v3831
        %3895 = vmatpush1.bf16.msra.mxu0 %v3830
        %3896 = vmatprep.subr.bf16.mxu0 %v3833
        %3897 = vmatpush1.bf16.msra.mxu0 %v3832
        %3898 = vmatprep.subr.bf16.mxu0 %v3835
        %3899 = vmatpush1.bf16.msra.mxu0 %v3834
        %3900 = vmatprep.subr.bf16.mxu0 %v3837
        %3901 = vmatpush1.bf16.msra.mxu0 %v3836
        %3902 = vmatprep.subr.bf16.mxu0 %v3839
        %3903 = vmatpush1.bf16.msra.mxu0 %v3838
        %3904 = vmatprep.subr.bf16.mxu0 %v3841
        %3905 = vmatpush1.bf16.msra.mxu0 %v3840
        %3906 = vmatprep.subr.bf16.mxu0 %v3843
        %3907 = vmatpush1.bf16.msra.mxu0 %v3842
        %3908 = vmatprep.subr.bf16.mxu0 %v3845
        %3909 = vmatpush1.bf16.msra.mxu0 %v3844
        %3910 = vmatprep.subr.bf16.mxu0 %v3847
        %3911 = vmatpush1.bf16.msra.mxu0 %v3846
        %3912 = vmatprep.subr.bf16.mxu0 %v3849
        %3913 = vmatpush1.bf16.msra.mxu0 %v3848
        %3914 = vmatprep.subr.bf16.mxu0 %v3851
        %3915 = vmatpush1.bf16.msra.mxu0 %v3850
        %3916 = vmatprep.subr.bf16.mxu0 %v3853
        %3917 = vmatpush1.bf16.msra.mxu0 %v3852
        %3918 = vmatprep.subr.bf16.mxu0 %v3855
        %3919 = vmatpush1.bf16.msra.mxu0 %v3854
        %3920 = vmatprep.subr.bf16.mxu0 %v3857
        %3921 = vmatpush1.bf16.msra.mxu0 %v3856
        %3922 = vmatprep.mubr.bf16.mxu0 %v3727
        %3923 = vmatmul.mubr.bf16.gmra.mrb[0].mxu0 %v3726
        %v3924 = vpop.f32.mrb[0].mxu0
        %v3925 = vadd.f32 %v3678, %v3924
        %v3926 = vpop.f32.mrb[0].mxu0
        %v3927 = vadd.f32 %v3680, %v3926
        %v3928 = vpop.f32.mrb[0].mxu0
        %v3929 = vpop.f32.mrb[0].mxu0
        %3930 = vdwg.mxu0
        %s3931 = scalar_lea.vmem [#allocation9], 256
        %v3932 = vld [vmem:[%s3931] sm:$0xff]
        %v3933 = vld [vmem:[%s3931 + $0x8] sm:$0xff]
        %v3934 = vld [vmem:[%s3931 + $0x10] sm:$0xff]
        %v3935 = vld [vmem:[%s3931 + $0x18] sm:$0xff]
        %v3936 = vld [vmem:[%s3931 + $0x20] sm:$0xff]
        %v3937 = vld [vmem:[%s3931 + $0x28] sm:$0xff]
        %v3938 = vld [vmem:[%s3931 + $0x30] sm:$0xff]
        %v3939 = vld [vmem:[%s3931 + $0x38] sm:$0xff]
        %v3940 = vld [vmem:[%s3931 + $0x40] sm:$0xff]
        %v3941 = vld [vmem:[%s3931 + $0x48] sm:$0xff]
        %v3942 = vld [vmem:[%s3931 + $0x50] sm:$0xff]
        %v3943 = vld [vmem:[%s3931 + $0x58] sm:$0xff]
        %v3944 = vld [vmem:[%s3931 + $0x60] sm:$0xff]
        %v3945 = vld [vmem:[%s3931 + $0x68] sm:$0xff]
        %v3946 = vld [vmem:[%s3931 + $0x70] sm:$0xff]
        %v3947 = vld [vmem:[%s3931 + $0x78] sm:$0xff]
        %v3948 = vld [vmem:[%s3931 + $0x80] sm:$0xff]
        %v3949 = vld [vmem:[%s3931 + $0x88] sm:$0xff]
        %v3950 = vld [vmem:[%s3931 + $0x90] sm:$0xff]
        %v3951 = vld [vmem:[%s3931 + $0x98] sm:$0xff]
        %v3952 = vld [vmem:[%s3931 + $0xa0] sm:$0xff]
        %v3953 = vld [vmem:[%s3931 + $0xa8] sm:$0xff]
        %v3954 = vld [vmem:[%s3931 + $0xb0] sm:$0xff]
        %v3955 = vld [vmem:[%s3931 + $0xb8] sm:$0xff]
        %v3956 = vld [vmem:[%s3931 + $0xc0] sm:$0xff]
        %v3957 = vld [vmem:[%s3931 + $0xc8] sm:$0xff]
        %v3958 = vld [vmem:[%s3931 + $0xd0] sm:$0xff]
        %v3959 = vld [vmem:[%s3931 + $0xd8] sm:$0xff]
        %v3960 = vld [vmem:[%s3931 + $0xe0] sm:$0xff]
        %v3961 = vld [vmem:[%s3931 + $0xe8] sm:$0xff]
        %v3962 = vld [vmem:[%s3931 + $0xf0] sm:$0xff]
        %v3963 = vld [vmem:[%s3931 + $0xf8] sm:$0xff]
        %v3996 = vunpack.c.l.b16 %v3932
        %v3997 = vunpack.c.h.b16 %v3932
        %v3998 = vunpack.c.l.b16 %v3933
        %v3999 = vunpack.c.h.b16 %v3933
        %v4000 = vunpack.c.l.b16 %v3934
        %v4001 = vunpack.c.h.b16 %v3934
        %v4002 = vunpack.c.l.b16 %v3935
        %v4003 = vunpack.c.h.b16 %v3935
        %v4004 = vunpack.c.l.b16 %v3936
        %v4005 = vunpack.c.h.b16 %v3936
        %v4006 = vunpack.c.l.b16 %v3937
        %v4007 = vunpack.c.h.b16 %v3937
        %v4008 = vunpack.c.l.b16 %v3938
        %v4009 = vunpack.c.h.b16 %v3938
        %v4010 = vunpack.c.l.b16 %v3939
        %v4011 = vunpack.c.h.b16 %v3939
        %v4012 = vunpack.c.l.b16 %v3940
        %v4013 = vunpack.c.h.b16 %v3940
        %v4014 = vunpack.c.l.b16 %v3941
        %v4015 = vunpack.c.h.b16 %v3941
        %v4016 = vunpack.c.l.b16 %v3942
        %v4017 = vunpack.c.h.b16 %v3942
        %v4018 = vunpack.c.l.b16 %v3943
        %v4019 = vunpack.c.h.b16 %v3943
        %v4020 = vunpack.c.l.b16 %v3944
        %v4021 = vunpack.c.h.b16 %v3944
        %v4022 = vunpack.c.l.b16 %v3945
        %v4023 = vunpack.c.h.b16 %v3945
        %v4024 = vunpack.c.l.b16 %v3946
        %v4025 = vunpack.c.h.b16 %v3946
        %v4026 = vunpack.c.l.b16 %v3947
        %v4027 = vunpack.c.h.b16 %v3947
        %v4028 = vunpack.c.l.b16 %v3948
        %v4029 = vunpack.c.h.b16 %v3948
        %v4030 = vunpack.c.l.b16 %v3949
        %v4031 = vunpack.c.h.b16 %v3949
        %v4032 = vunpack.c.l.b16 %v3950
        %v4033 = vunpack.c.h.b16 %v3950
        %v4034 = vunpack.c.l.b16 %v3951
        %v4035 = vunpack.c.h.b16 %v3951
        %v4036 = vunpack.c.l.b16 %v3952
        %v4037 = vunpack.c.h.b16 %v3952
        %v4038 = vunpack.c.l.b16 %v3953
        %v4039 = vunpack.c.h.b16 %v3953
        %v4040 = vunpack.c.l.b16 %v3954
        %v4041 = vunpack.c.h.b16 %v3954
        %v4042 = vunpack.c.l.b16 %v3955
        %v4043 = vunpack.c.h.b16 %v3955
        %v4044 = vunpack.c.l.b16 %v3956
        %v4045 = vunpack.c.h.b16 %v3956
        %v4046 = vunpack.c.l.b16 %v3957
        %v4047 = vunpack.c.h.b16 %v3957
        %v4048 = vunpack.c.l.b16 %v3958
        %v4049 = vunpack.c.h.b16 %v3958
        %v4050 = vunpack.c.l.b16 %v3959
        %v4051 = vunpack.c.h.b16 %v3959
        %v4052 = vunpack.c.l.b16 %v3960
        %v4053 = vunpack.c.h.b16 %v3960
        %v4054 = vunpack.c.l.b16 %v3961
        %v4055 = vunpack.c.h.b16 %v3961
        %v4056 = vunpack.c.l.b16 %v3962
        %v4057 = vunpack.c.h.b16 %v3962
        %v4058 = vunpack.c.l.b16 %v3963
        %v4059 = vunpack.c.h.b16 %v3963
        %v4060 = vpack.c.b16 %v3998, %v3996
        %v4061 = vpack.c.b16 %v3999, %v3997
        %v4062 = vpack.c.b16 %v4002, %v4000
        %v4063 = vpack.c.b16 %v4003, %v4001
        %v4064 = vpack.c.b16 %v4006, %v4004
        %v4065 = vpack.c.b16 %v4007, %v4005
        %v4066 = vpack.c.b16 %v4010, %v4008
        %v4067 = vpack.c.b16 %v4011, %v4009
        %v4068 = vpack.c.b16 %v4014, %v4012
        %v4069 = vpack.c.b16 %v4015, %v4013
        %v4070 = vpack.c.b16 %v4018, %v4016
        %v4071 = vpack.c.b16 %v4019, %v4017
        %v4072 = vpack.c.b16 %v4022, %v4020
        %v4073 = vpack.c.b16 %v4023, %v4021
        %v4074 = vpack.c.b16 %v4026, %v4024
        %v4075 = vpack.c.b16 %v4027, %v4025
        %v4076 = vpack.c.b16 %v4030, %v4028
        %v4077 = vpack.c.b16 %v4031, %v4029
        %v4078 = vpack.c.b16 %v4034, %v4032
        %v4079 = vpack.c.b16 %v4035, %v4033
        %v4080 = vpack.c.b16 %v4038, %v4036
        %v4081 = vpack.c.b16 %v4039, %v4037
        %v4082 = vpack.c.b16 %v4042, %v4040
        %v4083 = vpack.c.b16 %v4043, %v4041
        %v4084 = vpack.c.b16 %v4046, %v4044
        %v4085 = vpack.c.b16 %v4047, %v4045
        %v4086 = vpack.c.b16 %v4050, %v4048
        %v4087 = vpack.c.b16 %v4051, %v4049
        %v4088 = vpack.c.b16 %v4054, %v4052
        %v4089 = vpack.c.b16 %v4055, %v4053
        %v4090 = vpack.c.b16 %v4058, %v4056
        %v4091 = vpack.c.b16 %v4059, %v4057
        %4124 = vmatprep.subr.bf16.mxu0 %v4061
        %4125 = vmatpush1.bf16.msra.mxu0 %v4060
        %4126 = vmatprep.subr.bf16.mxu0 %v4063
        %4127 = vmatpush1.bf16.msra.mxu0 %v4062
        %4128 = vmatprep.subr.bf16.mxu0 %v4065
        %4129 = vmatpush1.bf16.msra.mxu0 %v4064
        %4130 = vmatprep.subr.bf16.mxu0 %v4067
        %4131 = vmatpush1.bf16.msra.mxu0 %v4066
        %4132 = vmatprep.subr.bf16.mxu0 %v4069
        %4133 = vmatpush1.bf16.msra.mxu0 %v4068
        %4134 = vmatprep.subr.bf16.mxu0 %v4071
        %4135 = vmatpush1.bf16.msra.mxu0 %v4070
        %4136 = vmatprep.subr.bf16.mxu0 %v4073
        %4137 = vmatpush1.bf16.msra.mxu0 %v4072
        %4138 = vmatprep.subr.bf16.mxu0 %v4075
        %4139 = vmatpush1.bf16.msra.mxu0 %v4074
        %4140 = vmatprep.subr.bf16.mxu0 %v4077
        %4141 = vmatpush1.bf16.msra.mxu0 %v4076
        %4142 = vmatprep.subr.bf16.mxu0 %v4079
        %4143 = vmatpush1.bf16.msra.mxu0 %v4078
        %4144 = vmatprep.subr.bf16.mxu0 %v4081
        %4145 = vmatpush1.bf16.msra.mxu0 %v4080
        %4146 = vmatprep.subr.bf16.mxu0 %v4083
        %4147 = vmatpush1.bf16.msra.mxu0 %v4082
        %4148 = vmatprep.subr.bf16.mxu0 %v4085
        %4149 = vmatpush1.bf16.msra.mxu0 %v4084
        %4150 = vmatprep.subr.bf16.mxu0 %v4087
        %4151 = vmatpush1.bf16.msra.mxu0 %v4086
        %4152 = vmatprep.subr.bf16.mxu0 %v4089
        %4153 = vmatpush1.bf16.msra.mxu0 %v4088
        %4154 = vmatprep.subr.bf16.mxu0 %v4091
        %4155 = vmatpush1.bf16.msra.mxu0 %v4090
        %4156 = vmatprep.mubr.bf16.mxu0 %v3480
        %4157 = vmatmul.mubr.bf16.gmra.mrb[0].mxu0 %v3479
        %v4158 = vpop.f32.mrb[0].mxu0
        %v4159 = vadd.f32 0.0, %v4158
        %v4160 = vpop.f32.mrb[0].mxu0
        %v4161 = vadd.f32 0.0, %v4160
        %v4162 = vpop.f32.mrb[0].mxu0
        %v4163 = vpop.f32.mrb[0].mxu0
        %4164 = vdwg.mxu0
        %v4197 = vunpack.c.l.b16 %v3370
        %v4198 = vunpack.c.h.b16 %v3370
        %v4199 = vunpack.c.l.b16 %v3371
        %v4200 = vunpack.c.h.b16 %v3371
        %v4201 = vunpack.c.l.b16 %v3372
        %v4202 = vunpack.c.h.b16 %v3372
        %v4203 = vunpack.c.l.b16 %v3373
        %v4204 = vunpack.c.h.b16 %v3373
        %v4205 = vunpack.c.l.b16 %v3374
        %v4206 = vunpack.c.h.b16 %v3374
        %v4207 = vunpack.c.l.b16 %v3375
        %v4208 = vunpack.c.h.b16 %v3375
        %v4209 = vunpack.c.l.b16 %v3376
        %v4210 = vunpack.c.h.b16 %v3376
        %v4211 = vunpack.c.l.b16 %v3377
        %v4212 = vunpack.c.h.b16 %v3377
        %v4213 = vunpack.c.l.b16 %v3378
        %v4214 = vunpack.c.h.b16 %v3378
        %v4215 = vunpack.c.l.b16 %v3379
        %v4216 = vunpack.c.h.b16 %v3379
        %v4217 = vunpack.c.l.b16 %v3380
        %v4218 = vunpack.c.h.b16 %v3380
        %v4219 = vunpack.c.l.b16 %v3381
        %v4220 = vunpack.c.h.b16 %v3381
        %v4221 = vunpack.c.l.b16 %v3382
        %v4222 = vunpack.c.h.b16 %v3382
        %v4223 = vunpack.c.l.b16 %v3383
        %v4224 = vunpack.c.h.b16 %v3383
        %v4225 = vunpack.c.l.b16 %v3384
        %v4226 = vunpack.c.h.b16 %v3384
        %v4227 = vunpack.c.l.b16 %v3385
        %v4228 = vunpack.c.h.b16 %v3385
        %v4229 = vunpack.c.l.b16 %v3386
        %v4230 = vunpack.c.h.b16 %v3386
        %v4231 = vunpack.c.l.b16 %v3387
        %v4232 = vunpack.c.h.b16 %v3387
        %v4233 = vunpack.c.l.b16 %v3388
        %v4234 = vunpack.c.h.b16 %v3388
        %v4235 = vunpack.c.l.b16 %v3389
        %v4236 = vunpack.c.h.b16 %v3389
        %v4237 = vunpack.c.l.b16 %v3390
        %v4238 = vunpack.c.h.b16 %v3390
        %v4239 = vunpack.c.l.b16 %v3391
        %v4240 = vunpack.c.h.b16 %v3391
        %v4241 = vunpack.c.l.b16 %v3392
        %v4242 = vunpack.c.h.b16 %v3392
        %v4243 = vunpack.c.l.b16 %v3393
        %v4244 = vunpack.c.h.b16 %v3393
        %v4245 = vunpack.c.l.b16 %v3394
        %v4246 = vunpack.c.h.b16 %v3394
        %v4247 = vunpack.c.l.b16 %v3395
        %v4248 = vunpack.c.h.b16 %v3395
        %v4249 = vunpack.c.l.b16 %v3396
        %v4250 = vunpack.c.h.b16 %v3396
        %v4251 = vunpack.c.l.b16 %v3397
        %v4252 = vunpack.c.h.b16 %v3397
        %v4253 = vunpack.c.l.b16 %v3398
        %v4254 = vunpack.c.h.b16 %v3398
        %v4255 = vunpack.c.l.b16 %v3399
        %v4256 = vunpack.c.h.b16 %v3399
        %v4257 = vunpack.c.l.b16 %v3400
        %v4258 = vunpack.c.h.b16 %v3400
        %v4259 = vunpack.c.l.b16 %v3401
        %v4260 = vunpack.c.h.b16 %v3401
        %v4261 = vpack.c.b16 %v4199, %v4197
        %v4262 = vpack.c.b16 %v4200, %v4198
        %v4263 = vpack.c.b16 %v4203, %v4201
        %v4264 = vpack.c.b16 %v4204, %v4202
        %v4265 = vpack.c.b16 %v4207, %v4205
        %v4266 = vpack.c.b16 %v4208, %v4206
        %v4267 = vpack.c.b16 %v4211, %v4209
        %v4268 = vpack.c.b16 %v4212, %v4210
        %v4269 = vpack.c.b16 %v4215, %v4213
        %v4270 = vpack.c.b16 %v4216, %v4214
        %v4271 = vpack.c.b16 %v4219, %v4217
        %v4272 = vpack.c.b16 %v4220, %v4218
        %v4273 = vpack.c.b16 %v4223, %v4221
        %v4274 = vpack.c.b16 %v4224, %v4222
        %v4275 = vpack.c.b16 %v4227, %v4225
        %v4276 = vpack.c.b16 %v4228, %v4226
        %v4277 = vpack.c.b16 %v4231, %v4229
        %v4278 = vpack.c.b16 %v4232, %v4230
        %v4279 = vpack.c.b16 %v4235, %v4233
        %v4280 = vpack.c.b16 %v4236, %v4234
        %v4281 = vpack.c.b16 %v4239, %v4237
        %v4282 = vpack.c.b16 %v4240, %v4238
        %v4283 = vpack.c.b16 %v4243, %v4241
        %v4284 = vpack.c.b16 %v4244, %v4242
        %v4285 = vpack.c.b16 %v4247, %v4245
        %v4286 = vpack.c.b16 %v4248, %v4246
        %v4287 = vpack.c.b16 %v4251, %v4249
        %v4288 = vpack.c.b16 %v4252, %v4250
        %v4289 = vpack.c.b16 %v4255, %v4253
        %v4290 = vpack.c.b16 %v4256, %v4254
        %v4291 = vpack.c.b16 %v4259, %v4257
        %v4292 = vpack.c.b16 %v4260, %v4258
        %4325 = vmatprep.subr.bf16.mxu0 %v4262
        %4326 = vmatpush1.bf16.msra.mxu0 %v4261
        %4327 = vmatprep.subr.bf16.mxu0 %v4264
        %4328 = vmatpush1.bf16.msra.mxu0 %v4263
        %4329 = vmatprep.subr.bf16.mxu0 %v4266
        %4330 = vmatpush1.bf16.msra.mxu0 %v4265
        %4331 = vmatprep.subr.bf16.mxu0 %v4268
        %4332 = vmatpush1.bf16.msra.mxu0 %v4267
        %4333 = vmatprep.subr.bf16.mxu0 %v4270
        %4334 = vmatpush1.bf16.msra.mxu0 %v4269
        %4335 = vmatprep.subr.bf16.mxu0 %v4272
        %4336 = vmatpush1.bf16.msra.mxu0 %v4271
        %4337 = vmatprep.subr.bf16.mxu0 %v4274
        %4338 = vmatpush1.bf16.msra.mxu0 %v4273
        %4339 = vmatprep.subr.bf16.mxu0 %v4276
        %4340 = vmatpush1.bf16.msra.mxu0 %v4275
        %4341 = vmatprep.subr.bf16.mxu0 %v4278
        %4342 = vmatpush1.bf16.msra.mxu0 %v4277
        %4343 = vmatprep.subr.bf16.mxu0 %v4280
        %4344 = vmatpush1.bf16.msra.mxu0 %v4279
        %4345 = vmatprep.subr.bf16.mxu0 %v4282
        %4346 = vmatpush1.bf16.msra.mxu0 %v4281
        %4347 = vmatprep.subr.bf16.mxu0 %v4284
        %4348 = vmatpush1.bf16.msra.mxu0 %v4283
        %4349 = vmatprep.subr.bf16.mxu0 %v4286
        %4350 = vmatpush1.bf16.msra.mxu0 %v4285
        %4351 = vmatprep.subr.bf16.mxu0 %v4288
        %4352 = vmatpush1.bf16.msra.mxu0 %v4287
        %4353 = vmatprep.subr.bf16.mxu0 %v4290
        %4354 = vmatpush1.bf16.msra.mxu0 %v4289
        %4355 = vmatprep.subr.bf16.mxu0 %v4292
        %4356 = vmatpush1.bf16.msra.mxu0 %v4291
        %4357 = vmatprep.mubr.bf16.mxu0 %v3727
        %4358 = vmatmul.mubr.bf16.gmra.mrb[0].mxu0 %v3726
        %v4359 = vpop.f32.mrb[0].mxu0
        %v4360 = vadd.f32 %v4159, %v4359
        %v4361 = vpop.f32.mrb[0].mxu0
        %v4362 = vadd.f32 %v4161, %v4361
        %v4363 = vpop.f32.mrb[0].mxu0
        %v4364 = vpop.f32.mrb[0].mxu0
        %4365 = vdwg.mxu0
        %s4366 = scalar_lea.vmem [#allocation8], 512
        %v4367 = vld [vmem:[%s4366] sm:$0xff]
        %v4368 = vld [vmem:[%s4366 + $0x8] sm:$0xff]
        %v4369 = vld [vmem:[%s4366 + $0x10] sm:$0xff]
        %v4370 = vld [vmem:[%s4366 + $0x18] sm:$0xff]
        %v4371 = vld [vmem:[%s4366 + $0x20] sm:$0xff]
        %v4372 = vld [vmem:[%s4366 + $0x28] sm:$0xff]
        %v4373 = vld [vmem:[%s4366 + $0x30] sm:$0xff]
        %v4374 = vld [vmem:[%s4366 + $0x38] sm:$0xff]
        %v4375 = vld [vmem:[%s4366 + $0x40] sm:$0xff]
        %v4376 = vld [vmem:[%s4366 + $0x48] sm:$0xff]
        %v4377 = vld [vmem:[%s4366 + $0x50] sm:$0xff]
        %v4378 = vld [vmem:[%s4366 + $0x58] sm:$0xff]
        %v4379 = vld [vmem:[%s4366 + $0x60] sm:$0xff]
        %v4380 = vld [vmem:[%s4366 + $0x68] sm:$0xff]
        %v4381 = vld [vmem:[%s4366 + $0x70] sm:$0xff]
        %v4382 = vld [vmem:[%s4366 + $0x78] sm:$0xff]
        %v4383 = vld [vmem:[%s4366 + $0x80] sm:$0xff]
        %v4384 = vld [vmem:[%s4366 + $0x88] sm:$0xff]
        %v4385 = vld [vmem:[%s4366 + $0x90] sm:$0xff]
        %v4386 = vld [vmem:[%s4366 + $0x98] sm:$0xff]
        %v4387 = vld [vmem:[%s4366 + $0xa0] sm:$0xff]
        %v4388 = vld [vmem:[%s4366 + $0xa8] sm:$0xff]
        %v4389 = vld [vmem:[%s4366 + $0xb0] sm:$0xff]
        %v4390 = vld [vmem:[%s4366 + $0xb8] sm:$0xff]
        %v4391 = vld [vmem:[%s4366 + $0xc0] sm:$0xff]
        %v4392 = vld [vmem:[%s4366 + $0xc8] sm:$0xff]
        %v4393 = vld [vmem:[%s4366 + $0xd0] sm:$0xff]
        %v4394 = vld [vmem:[%s4366 + $0xd8] sm:$0xff]
        %v4395 = vld [vmem:[%s4366 + $0xe0] sm:$0xff]
        %v4396 = vld [vmem:[%s4366 + $0xe8] sm:$0xff]
        %v4397 = vld [vmem:[%s4366 + $0xf0] sm:$0xff]
        %v4398 = vld [vmem:[%s4366 + $0xf8] sm:$0xff]
        %v4401 = vunpack.c.l.b16 %v3332
        %v4402 = vunpack.c.l.b16 %v3333
        %v4403 = vrot.slane %v3698, 7
        %v4404 = vsel %vm966, %v4403, %v3696
        %v4405 = vrot.slane %v3700, 6
        %v4406 = vsel %vm969, %v4405, %v4404
        %v4407 = vrot.slane %v3702, 5
        %v4408 = vsel %vm972, %v4407, %v4406
        %v4409 = vrot.slane %v3704, 4
        %v4410 = vsel %vm975, %v4409, %v4408
        %v4411 = vrot.slane %v4401, 3
        %v4412 = vsel %vm978, %v4411, %v4410
        %v4413 = vrot.slane %v3699, 7
        %v4414 = vsel %vm966, %v4413, %v3697
        %v4415 = vrot.slane %v3701, 6
        %v4416 = vsel %vm969, %v4415, %v4414
        %v4417 = vrot.slane %v3703, 5
        %v4418 = vsel %vm972, %v4417, %v4416
        %v4419 = vrot.slane %v3705, 4
        %v4420 = vsel %vm975, %v4419, %v4418
        %v4421 = vrot.slane %v4402, 3
        %v4422 = vsel %vm978, %v4421, %v4420
        %v4423 = vpack.c.b16 %v4412, %v4412
        %v4424 = vpack.c.b16 %v4422, %v4422
        %v4459 = vunpack.c.l.b16 %v4367
        %v4460 = vunpack.c.h.b16 %v4367
        %v4461 = vunpack.c.l.b16 %v4368
        %v4462 = vunpack.c.h.b16 %v4368
        %v4463 = vunpack.c.l.b16 %v4369
        %v4464 = vunpack.c.h.b16 %v4369
        %v4465 = vunpack.c.l.b16 %v4370
        %v4466 = vunpack.c.h.b16 %v4370
        %v4467 = vunpack.c.l.b16 %v4371
        %v4468 = vunpack.c.h.b16 %v4371
        %v4469 = vunpack.c.l.b16 %v4372
        %v4470 = vunpack.c.h.b16 %v4372
        %v4471 = vunpack.c.l.b16 %v4373
        %v4472 = vunpack.c.h.b16 %v4373
        %v4473 = vunpack.c.l.b16 %v4374
        %v4474 = vunpack.c.h.b16 %v4374
        %v4475 = vunpack.c.l.b16 %v4375
        %v4476 = vunpack.c.h.b16 %v4375
        %v4477 = vunpack.c.l.b16 %v4376
        %v4478 = vunpack.c.h.b16 %v4376
        %v4479 = vunpack.c.l.b16 %v4377
        %v4480 = vunpack.c.h.b16 %v4377
        %v4481 = vunpack.c.l.b16 %v4378
        %v4482 = vunpack.c.h.b16 %v4378
        %v4483 = vunpack.c.l.b16 %v4379
        %v4484 = vunpack.c.h.b16 %v4379
        %v4485 = vunpack.c.l.b16 %v4380
        %v4486 = vunpack.c.h.b16 %v4380
        %v4487 = vunpack.c.l.b16 %v4381
        %v4488 = vunpack.c.h.b16 %v4381
        %v4489 = vunpack.c.l.b16 %v4382
        %v4490 = vunpack.c.h.b16 %v4382
        %v4491 = vunpack.c.l.b16 %v4383
        %v4492 = vunpack.c.h.b16 %v4383
        %v4493 = vunpack.c.l.b16 %v4384
        %v4494 = vunpack.c.h.b16 %v4384
        %v4495 = vunpack.c.l.b16 %v4385
        %v4496 = vunpack.c.h.b16 %v4385
        %v4497 = vunpack.c.l.b16 %v4386
        %v4498 = vunpack.c.h.b16 %v4386
        %v4499 = vunpack.c.l.b16 %v4387
        %v4500 = vunpack.c.h.b16 %v4387
        %v4501 = vunpack.c.l.b16 %v4388
        %v4502 = vunpack.c.h.b16 %v4388
        %v4503 = vunpack.c.l.b16 %v4389
        %v4504 = vunpack.c.h.b16 %v4389
        %v4505 = vunpack.c.l.b16 %v4390
        %v4506 = vunpack.c.h.b16 %v4390
        %v4507 = vunpack.c.l.b16 %v4391
        %v4508 = vunpack.c.h.b16 %v4391
        %v4509 = vunpack.c.l.b16 %v4392
        %v4510 = vunpack.c.h.b16 %v4392
        %v4511 = vunpack.c.l.b16 %v4393
        %v4512 = vunpack.c.h.b16 %v4393
        %v4513 = vunpack.c.l.b16 %v4394
        %v4514 = vunpack.c.h.b16 %v4394
        %v4515 = vunpack.c.l.b16 %v4395
        %v4516 = vunpack.c.h.b16 %v4395
        %v4517 = vunpack.c.l.b16 %v4396
        %v4518 = vunpack.c.h.b16 %v4396
        %v4519 = vunpack.c.l.b16 %v4397
        %v4520 = vunpack.c.h.b16 %v4397
        %v4521 = vunpack.c.l.b16 %v4398
        %v4522 = vunpack.c.h.b16 %v4398
        %v4523 = vpack.c.b16 %v4461, %v4459
        %v4524 = vpack.c.b16 %v4462, %v4460
        %v4525 = vpack.c.b16 %v4465, %v4463
        %v4526 = vpack.c.b16 %v4466, %v4464
        %v4527 = vpack.c.b16 %v4469, %v4467
        %v4528 = vpack.c.b16 %v4470, %v4468
        %v4529 = vpack.c.b16 %v4473, %v4471
        %v4530 = vpack.c.b16 %v4474, %v4472
        %v4531 = vpack.c.b16 %v4477, %v4475
        %v4532 = vpack.c.b16 %v4478, %v4476
        %v4533 = vpack.c.b16 %v4481, %v4479
        %v4534 = vpack.c.b16 %v4482, %v4480
        %v4535 = vpack.c.b16 %v4485, %v4483
        %v4536 = vpack.c.b16 %v4486, %v4484
        %v4537 = vpack.c.b16 %v4489, %v4487
        %v4538 = vpack.c.b16 %v4490, %v4488
        %v4539 = vpack.c.b16 %v4493, %v4491
        %v4540 = vpack.c.b16 %v4494, %v4492
        %v4541 = vpack.c.b16 %v4497, %v4495
        %v4542 = vpack.c.b16 %v4498, %v4496
        %v4543 = vpack.c.b16 %v4501, %v4499
        %v4544 = vpack.c.b16 %v4502, %v4500
        %v4545 = vpack.c.b16 %v4505, %v4503
        %v4546 = vpack.c.b16 %v4506, %v4504
        %v4547 = vpack.c.b16 %v4509, %v4507
        %v4548 = vpack.c.b16 %v4510, %v4508
        %v4549 = vpack.c.b16 %v4513, %v4511
        %v4550 = vpack.c.b16 %v4514, %v4512
        %v4551 = vpack.c.b16 %v4517, %v4515
        %v4552 = vpack.c.b16 %v4518, %v4516
        %v4553 = vpack.c.b16 %v4521, %v4519
        %v4554 = vpack.c.b16 %v4522, %v4520
        %4587 = vmatprep.subr.bf16.mxu0 %v4524
        %4588 = vmatpush1.bf16.msra.mxu0 %v4523
        %4589 = vmatprep.subr.bf16.mxu0 %v4526
        %4590 = vmatpush1.bf16.msra.mxu0 %v4525
        %4591 = vmatprep.subr.bf16.mxu0 %v4528
        %4592 = vmatpush1.bf16.msra.mxu0 %v4527
        %4593 = vmatprep.subr.bf16.mxu0 %v4530
        %4594 = vmatpush1.bf16.msra.mxu0 %v4529
        %4595 = vmatprep.subr.bf16.mxu0 %v4532
        %4596 = vmatpush1.bf16.msra.mxu0 %v4531
        %4597 = vmatprep.subr.bf16.mxu0 %v4534
        %4598 = vmatpush1.bf16.msra.mxu0 %v4533
        %4599 = vmatprep.subr.bf16.mxu0 %v4536
        %4600 = vmatpush1.bf16.msra.mxu0 %v4535
        %4601 = vmatprep.subr.bf16.mxu0 %v4538
        %4602 = vmatpush1.bf16.msra.mxu0 %v4537
        %4603 = vmatprep.subr.bf16.mxu0 %v4540
        %4604 = vmatpush1.bf16.msra.mxu0 %v4539
        %4605 = vmatprep.subr.bf16.mxu0 %v4542
        %4606 = vmatpush1.bf16.msra.mxu0 %v4541
        %4607 = vmatprep.subr.bf16.mxu0 %v4544
        %4608 = vmatpush1.bf16.msra.mxu0 %v4543
        %4609 = vmatprep.subr.bf16.mxu0 %v4546
        %4610 = vmatpush1.bf16.msra.mxu0 %v4545
        %4611 = vmatprep.subr.bf16.mxu0 %v4548
        %4612 = vmatpush1.bf16.msra.mxu0 %v4547
        %4613 = vmatprep.subr.bf16.mxu0 %v4550
        %4614 = vmatpush1.bf16.msra.mxu0 %v4549
        %4615 = vmatprep.subr.bf16.mxu0 %v4552
        %4616 = vmatpush1.bf16.msra.mxu0 %v4551
        %4617 = vmatprep.subr.bf16.mxu0 %v4554
        %4618 = vmatpush1.bf16.msra.mxu0 %v4553
        %4619 = vmatprep.mubr.bf16.mxu0 %v4424
        %4620 = vmatmul.mubr.bf16.gmra.mrb[0].mxu0 %v4423
        %v4621 = vpop.f32.mrb[0].mxu0
        %v4622 = vadd.f32 0.0, %v4621
        %v4623 = vpop.f32.mrb[0].mxu0
        %v4624 = vadd.f32 0.0, %v4623
        %v4625 = vpop.f32.mrb[0].mxu0
        %v4626 = vpop.f32.mrb[0].mxu0
        %4627 = vdwg.mxu0
        %v4628 = vadd.f32 %v3925, %v4622
        %v4629 = vadd.f32 %v3927, %v4624
        %s4630 = scalar_lea.vmem [#allocation9], 512
        %v4631 = vld [vmem:[%s4630] sm:$0xff]
        %v4632 = vld [vmem:[%s4630 + $0x8] sm:$0xff]
        %v4633 = vld [vmem:[%s4630 + $0x10] sm:$0xff]
        %v4634 = vld [vmem:[%s4630 + $0x18] sm:$0xff]
        %v4635 = vld [vmem:[%s4630 + $0x20] sm:$0xff]
        %v4636 = vld [vmem:[%s4630 + $0x28] sm:$0xff]
        %v4637 = vld [vmem:[%s4630 + $0x30] sm:$0xff]
        %v4638 = vld [vmem:[%s4630 + $0x38] sm:$0xff]
        %v4639 = vld [vmem:[%s4630 + $0x40] sm:$0xff]
        %v4640 = vld [vmem:[%s4630 + $0x48] sm:$0xff]
        %v4641 = vld [vmem:[%s4630 + $0x50] sm:$0xff]
        %v4642 = vld [vmem:[%s4630 + $0x58] sm:$0xff]
        %v4643 = vld [vmem:[%s4630 + $0x60] sm:$0xff]
        %v4644 = vld [vmem:[%s4630 + $0x68] sm:$0xff]
        %v4645 = vld [vmem:[%s4630 + $0x70] sm:$0xff]
        %v4646 = vld [vmem:[%s4630 + $0x78] sm:$0xff]
        %v4647 = vld [vmem:[%s4630 + $0x80] sm:$0xff]
        %v4648 = vld [vmem:[%s4630 + $0x88] sm:$0xff]
        %v4649 = vld [vmem:[%s4630 + $0x90] sm:$0xff]
        %v4650 = vld [vmem:[%s4630 + $0x98] sm:$0xff]
        %v4651 = vld [vmem:[%s4630 + $0xa0] sm:$0xff]
        %v4652 = vld [vmem:[%s4630 + $0xa8] sm:$0xff]
        %v4653 = vld [vmem:[%s4630 + $0xb0] sm:$0xff]
        %v4654 = vld [vmem:[%s4630 + $0xb8] sm:$0xff]
        %v4655 = vld [vmem:[%s4630 + $0xc0] sm:$0xff]
        %v4656 = vld [vmem:[%s4630 + $0xc8] sm:$0xff]
        %v4657 = vld [vmem:[%s4630 + $0xd0] sm:$0xff]
        %v4658 = vld [vmem:[%s4630 + $0xd8] sm:$0xff]
        %v4659 = vld [vmem:[%s4630 + $0xe0] sm:$0xff]
        %v4660 = vld [vmem:[%s4630 + $0xe8] sm:$0xff]
        %v4661 = vld [vmem:[%s4630 + $0xf0] sm:$0xff]
        %v4662 = vld [vmem:[%s4630 + $0xf8] sm:$0xff]
        %v4695 = vunpack.c.l.b16 %v4631
        %v4696 = vunpack.c.h.b16 %v4631
        %v4697 = vunpack.c.l.b16 %v4632
        %v4698 = vunpack.c.h.b16 %v4632
        %v4699 = vunpack.c.l.b16 %v4633
        %v4700 = vunpack.c.h.b16 %v4633
        %v4701 = vunpack.c.l.b16 %v4634
        %v4702 = vunpack.c.h.b16 %v4634
        %v4703 = vunpack.c.l.b16 %v4635
        %v4704 = vunpack.c.h.b16 %v4635
        %v4705 = vunpack.c.l.b16 %v4636
        %v4706 = vunpack.c.h.b16 %v4636
        %v4707 = vunpack.c.l.b16 %v4637
        %v4708 = vunpack.c.h.b16 %v4637
        %v4709 = vunpack.c.l.b16 %v4638
        %v4710 = vunpack.c.h.b16 %v4638
        %v4711 = vunpack.c.l.b16 %v4639
        %v4712 = vunpack.c.h.b16 %v4639
        %v4713 = vunpack.c.l.b16 %v4640
        %v4714 = vunpack.c.h.b16 %v4640
        %v4715 = vunpack.c.l.b16 %v4641
        %v4716 = vunpack.c.h.b16 %v4641
        %v4717 = vunpack.c.l.b16 %v4642
        %v4718 = vunpack.c.h.b16 %v4642
        %v4719 = vunpack.c.l.b16 %v4643
        %v4720 = vunpack.c.h.b16 %v4643
        %v4721 = vunpack.c.l.b16 %v4644
        %v4722 = vunpack.c.h.b16 %v4644
        %v4723 = vunpack.c.l.b16 %v4645
        %v4724 = vunpack.c.h.b16 %v4645
        %v4725 = vunpack.c.l.b16 %v4646
        %v4726 = vunpack.c.h.b16 %v4646
        %v4727 = vunpack.c.l.b16 %v4647
        %v4728 = vunpack.c.h.b16 %v4647
        %v4729 = vunpack.c.l.b16 %v4648
        %v4730 = vunpack.c.h.b16 %v4648
        %v4731 = vunpack.c.l.b16 %v4649
        %v4732 = vunpack.c.h.b16 %v4649
        %v4733 = vunpack.c.l.b16 %v4650
        %v4734 = vunpack.c.h.b16 %v4650
        %v4735 = vunpack.c.l.b16 %v4651
        %v4736 = vunpack.c.h.b16 %v4651
        %v4737 = vunpack.c.l.b16 %v4652
        %v4738 = vunpack.c.h.b16 %v4652
        %v4739 = vunpack.c.l.b16 %v4653
        %v4740 = vunpack.c.h.b16 %v4653
        %v4741 = vunpack.c.l.b16 %v4654
        %v4742 = vunpack.c.h.b16 %v4654
        %v4743 = vunpack.c.l.b16 %v4655
        %v4744 = vunpack.c.h.b16 %v4655
        %v4745 = vunpack.c.l.b16 %v4656
        %v4746 = vunpack.c.h.b16 %v4656
        %v4747 = vunpack.c.l.b16 %v4657
        %v4748 = vunpack.c.h.b16 %v4657
        %v4749 = vunpack.c.l.b16 %v4658
        %v4750 = vunpack.c.h.b16 %v4658
        %v4751 = vunpack.c.l.b16 %v4659
        %v4752 = vunpack.c.h.b16 %v4659
        %v4753 = vunpack.c.l.b16 %v4660
        %v4754 = vunpack.c.h.b16 %v4660
        %v4755 = vunpack.c.l.b16 %v4661
        %v4756 = vunpack.c.h.b16 %v4661
        %v4757 = vunpack.c.l.b16 %v4662
        %v4758 = vunpack.c.h.b16 %v4662
        %v4759 = vpack.c.b16 %v4697, %v4695
        %v4760 = vpack.c.b16 %v4698, %v4696
        %v4761 = vpack.c.b16 %v4701, %v4699
        %v4762 = vpack.c.b16 %v4702, %v4700
        %v4763 = vpack.c.b16 %v4705, %v4703
        %v4764 = vpack.c.b16 %v4706, %v4704
        %v4765 = vpack.c.b16 %v4709, %v4707
        %v4766 = vpack.c.b16 %v4710, %v4708
        %v4767 = vpack.c.b16 %v4713, %v4711
        %v4768 = vpack.c.b16 %v4714, %v4712
        %v4769 = vpack.c.b16 %v4717, %v4715
        %v4770 = vpack.c.b16 %v4718, %v4716
        %v4771 = vpack.c.b16 %v4721, %v4719
        %v4772 = vpack.c.b16 %v4722, %v4720
        %v4773 = vpack.c.b16 %v4725, %v4723
        %v4774 = vpack.c.b16 %v4726, %v4724
        %v4775 = vpack.c.b16 %v4729, %v4727
        %v4776 = vpack.c.b16 %v4730, %v4728
        %v4777 = vpack.c.b16 %v4733, %v4731
        %v4778 = vpack.c.b16 %v4734, %v4732
        %v4779 = vpack.c.b16 %v4737, %v4735
        %v4780 = vpack.c.b16 %v4738, %v4736
        %v4781 = vpack.c.b16 %v4741, %v4739
        %v4782 = vpack.c.b16 %v4742, %v4740
        %v4783 = vpack.c.b16 %v4745, %v4743
        %v4784 = vpack.c.b16 %v4746, %v4744
        %v4785 = vpack.c.b16 %v4749, %v4747
        %v4786 = vpack.c.b16 %v4750, %v4748
        %v4787 = vpack.c.b16 %v4753, %v4751
        %v4788 = vpack.c.b16 %v4754, %v4752
        %v4789 = vpack.c.b16 %v4757, %v4755
        %v4790 = vpack.c.b16 %v4758, %v4756
        %4823 = vmatprep.subr.bf16.mxu0 %v4760
        %4824 = vmatpush1.bf16.msra.mxu0 %v4759
        %4825 = vmatprep.subr.bf16.mxu0 %v4762
        %4826 = vmatpush1.bf16.msra.mxu0 %v4761
        %4827 = vmatprep.subr.bf16.mxu0 %v4764
        %4828 = vmatpush1.bf16.msra.mxu0 %v4763
        %4829 = vmatprep.subr.bf16.mxu0 %v4766
        %4830 = vmatpush1.bf16.msra.mxu0 %v4765
        %4831 = vmatprep.subr.bf16.mxu0 %v4768
        %4832 = vmatpush1.bf16.msra.mxu0 %v4767
        %4833 = vmatprep.subr.bf16.mxu0 %v4770
        %4834 = vmatpush1.bf16.msra.mxu0 %v4769
        %4835 = vmatprep.subr.bf16.mxu0 %v4772
        %4836 = vmatpush1.bf16.msra.mxu0 %v4771
        %4837 = vmatprep.subr.bf16.mxu0 %v4774
        %4838 = vmatpush1.bf16.msra.mxu0 %v4773
        %4839 = vmatprep.subr.bf16.mxu0 %v4776
        %4840 = vmatpush1.bf16.msra.mxu0 %v4775
        %4841 = vmatprep.subr.bf16.mxu0 %v4778
        %4842 = vmatpush1.bf16.msra.mxu0 %v4777
        %4843 = vmatprep.subr.bf16.mxu0 %v4780
        %4844 = vmatpush1.bf16.msra.mxu0 %v4779
        %4845 = vmatprep.subr.bf16.mxu0 %v4782
        %4846 = vmatpush1.bf16.msra.mxu0 %v4781
        %4847 = vmatprep.subr.bf16.mxu0 %v4784
        %4848 = vmatpush1.bf16.msra.mxu0 %v4783
        %4849 = vmatprep.subr.bf16.mxu0 %v4786
        %4850 = vmatpush1.bf16.msra.mxu0 %v4785
        %4851 = vmatprep.subr.bf16.mxu0 %v4788
        %4852 = vmatpush1.bf16.msra.mxu0 %v4787
        %4853 = vmatprep.subr.bf16.mxu0 %v4790
        %4854 = vmatpush1.bf16.msra.mxu0 %v4789
        %4855 = vmatprep.mubr.bf16.mxu0 %v4424
        %4856 = vmatmul.mubr.bf16.gmra.mrb[0].mxu0 %v4423
        %v4857 = vpop.f32.mrb[0].mxu0
        %v4858 = vadd.f32 0.0, %v4857
        %v4859 = vpop.f32.mrb[0].mxu0
        %v4860 = vadd.f32 0.0, %v4859
        %v4861 = vpop.f32.mrb[0].mxu0
        %v4862 = vpop.f32.mrb[0].mxu0
        %4863 = vdwg.mxu0
        %v4864 = vadd.f32 %v4360, %v4858
        %v4865 = vadd.f32 %v4362, %v4860
        %4866 = vmatprep.subr.bf16.mxu0 %v3580
        %4867 = vmatpush1.bf16.msra.mxu0 %v3579
        %4868 = vmatprep.subr.bf16.mxu0 %v3582
        %4869 = vmatpush1.bf16.msra.mxu0 %v3581
        %4870 = vmatprep.subr.bf16.mxu0 %v3584
        %4871 = vmatpush1.bf16.msra.mxu0 %v3583
        %4872 = vmatprep.subr.bf16.mxu0 %v3586
        %4873 = vmatpush1.bf16.msra.mxu0 %v3585
        %4874 = vmatprep.subr.bf16.mxu0 %v3588
        %4875 = vmatpush1.bf16.msra.mxu0 %v3587
        %4876 = vmatprep.subr.bf16.mxu0 %v3590
        %4877 = vmatpush1.bf16.msra.mxu0 %v3589
        %4878 = vmatprep.subr.bf16.mxu0 %v3592
        %4879 = vmatpush1.bf16.msra.mxu0 %v3591
        %4880 = vmatprep.subr.bf16.mxu0 %v3594
        %4881 = vmatpush1.bf16.msra.mxu0 %v3593
        %4882 = vmatprep.subr.bf16.mxu0 %v3596
        %4883 = vmatpush1.bf16.msra.mxu0 %v3595
        %4884 = vmatprep.subr.bf16.mxu0 %v3598
        %4885 = vmatpush1.bf16.msra.mxu0 %v3597
        %4886 = vmatprep.subr.bf16.mxu0 %v3600
        %4887 = vmatpush1.bf16.msra.mxu0 %v3599
        %4888 = vmatprep.subr.bf16.mxu0 %v3602
        %4889 = vmatpush1.bf16.msra.mxu0 %v3601
        %4890 = vmatprep.subr.bf16.mxu0 %v3604
        %4891 = vmatpush1.bf16.msra.mxu0 %v3603
        %4892 = vmatprep.subr.bf16.mxu0 %v3606
        %4893 = vmatpush1.bf16.msra.mxu0 %v3605
        %4894 = vmatprep.subr.bf16.mxu0 %v3608
        %4895 = vmatpush1.bf16.msra.mxu0 %v3607
        %4896 = vmatprep.subr.bf16.mxu0 %v3610
        %4897 = vmatpush1.bf16.msra.mxu0 %v3609
        %4898 = vmatprep.mubr.bf16.mxu0 %v4424
        %4899 = vmatmul.mubr.bf16.gmra.mrb[0].mxu0 %v4423
        %v4900 = vpop.f32.mrb[0].mxu0
        %v4901 = vadd.f32 0.0, %v4900
        %v4902 = vpop.f32.mrb[0].mxu0
        %v4903 = vadd.f32 0.0, %v4902
        %v4904 = vpop.f32.mrb[0].mxu0
        %v4905 = vpop.f32.mrb[0].mxu0
        %4906 = vdwg.mxu0
        %4907 = vmatprep.subr.bf16.mxu0 %v3827
        %4908 = vmatpush1.bf16.msra.mxu0 %v3826
        %4909 = vmatprep.subr.bf16.mxu0 %v3829
        %4910 = vmatpush1.bf16.msra.mxu0 %v3828
        %4911 = vmatprep.subr.bf16.mxu0 %v3831
        %4912 = vmatpush1.bf16.msra.mxu0 %v3830
        %4913 = vmatprep.subr.bf16.mxu0 %v3833
        %4914 = vmatpush1.bf16.msra.mxu0 %v3832
        %4915 = vmatprep.subr.bf16.mxu0 %v3835
        %4916 = vmatpush1.bf16.msra.mxu0 %v3834
        %4917 = vmatprep.subr.bf16.mxu0 %v3837
        %4918 = vmatpush1.bf16.msra.mxu0 %v3836
        %4919 = vmatprep.subr.bf16.mxu0 %v3839
        %4920 = vmatpush1.bf16.msra.mxu0 %v3838
        %4921 = vmatprep.subr.bf16.mxu0 %v3841
        %4922 = vmatpush1.bf16.msra.mxu0 %v3840
        %4923 = vmatprep.subr.bf16.mxu0 %v3843
        %4924 = vmatpush1.bf16.msra.mxu0 %v3842
        %4925 = vmatprep.subr.bf16.mxu0 %v3845
        %4926 = vmatpush1.bf16.msra.mxu0 %v3844
        %4927 = vmatprep.subr.bf16.mxu0 %v3847
        %4928 = vmatpush1.bf16.msra.mxu0 %v3846
        %4929 = vmatprep.subr.bf16.mxu0 %v3849
        %4930 = vmatpush1.bf16.msra.mxu0 %v3848
        %4931 = vmatprep.subr.bf16.mxu0 %v3851
        %4932 = vmatpush1.bf16.msra.mxu0 %v3850
        %4933 = vmatprep.subr.bf16.mxu0 %v3853
        %4934 = vmatpush1.bf16.msra.mxu0 %v3852
        %4935 = vmatprep.subr.bf16.mxu0 %v3855
        %4936 = vmatpush1.bf16.msra.mxu0 %v3854
        %4937 = vmatprep.subr.bf16.mxu0 %v3857
        %4938 = vmatpush1.bf16.msra.mxu0 %v3856
        %4939 = vmatprep.mubr.bf16.mxu0 %v3480
        %4940 = vmatmul.mubr.bf16.gmra.mrb[0].mxu0 %v3479
        %v4941 = vpop.f32.mrb[0].mxu0
        %v4942 = vadd.f32 %v4901, %v4941
        %v4943 = vpop.f32.mrb[0].mxu0
        %v4944 = vadd.f32 %v4903, %v4943
        %v4945 = vpop.f32.mrb[0].mxu0
        %v4946 = vpop.f32.mrb[0].mxu0
        %4947 = vdwg.mxu0
        %4948 = vmatprep.subr.bf16.mxu0 %v4061
        %4949 = vmatpush1.bf16.msra.mxu0 %v4060
        %4950 = vmatprep.subr.bf16.mxu0 %v4063
        %4951 = vmatpush1.bf16.msra.mxu0 %v4062
        %4952 = vmatprep.subr.bf16.mxu0 %v4065
        %4953 = vmatpush1.bf16.msra.mxu0 %v4064
        %4954 = vmatprep.subr.bf16.mxu0 %v4067
        %4955 = vmatpush1.bf16.msra.mxu0 %v4066
        %4956 = vmatprep.subr.bf16.mxu0 %v4069
        %4957 = vmatpush1.bf16.msra.mxu0 %v4068
        %4958 = vmatprep.subr.bf16.mxu0 %v4071
        %4959 = vmatpush1.bf16.msra.mxu0 %v4070
        %4960 = vmatprep.subr.bf16.mxu0 %v4073
        %4961 = vmatpush1.bf16.msra.mxu0 %v4072
        %4962 = vmatprep.subr.bf16.mxu0 %v4075
        %4963 = vmatpush1.bf16.msra.mxu0 %v4074
        %4964 = vmatprep.subr.bf16.mxu0 %v4077
        %4965 = vmatpush1.bf16.msra.mxu0 %v4076
        %4966 = vmatprep.subr.bf16.mxu0 %v4079
        %4967 = vmatpush1.bf16.msra.mxu0 %v4078
        %4968 = vmatprep.subr.bf16.mxu0 %v4081
        %4969 = vmatpush1.bf16.msra.mxu0 %v4080
        %4970 = vmatprep.subr.bf16.mxu0 %v4083
        %4971 = vmatpush1.bf16.msra.mxu0 %v4082
        %4972 = vmatprep.subr.bf16.mxu0 %v4085
        %4973 = vmatpush1.bf16.msra.mxu0 %v4084
        %4974 = vmatprep.subr.bf16.mxu0 %v4087
        %4975 = vmatpush1.bf16.msra.mxu0 %v4086
        %4976 = vmatprep.subr.bf16.mxu0 %v4089
        %4977 = vmatpush1.bf16.msra.mxu0 %v4088
        %4978 = vmatprep.subr.bf16.mxu0 %v4091
        %4979 = vmatpush1.bf16.msra.mxu0 %v4090
        %4980 = vmatprep.mubr.bf16.mxu0 %v4424
        %4981 = vmatmul.mubr.bf16.gmra.mrb[0].mxu0 %v4423
        %v4982 = vpop.f32.mrb[0].mxu0
        %v4983 = vadd.f32 0.0, %v4982
        %v4984 = vpop.f32.mrb[0].mxu0
        %v4985 = vadd.f32 0.0, %v4984
        %v4986 = vpop.f32.mrb[0].mxu0
        %v4987 = vpop.f32.mrb[0].mxu0
        %4988 = vdwg.mxu0
        %4989 = vmatprep.subr.bf16.mxu0 %v4262
        %4990 = vmatpush1.bf16.msra.mxu0 %v4261
        %4991 = vmatprep.subr.bf16.mxu0 %v4264
        %4992 = vmatpush1.bf16.msra.mxu0 %v4263
        %4993 = vmatprep.subr.bf16.mxu0 %v4266
        %4994 = vmatpush1.bf16.msra.mxu0 %v4265
        %4995 = vmatprep.subr.bf16.mxu0 %v4268
        %4996 = vmatpush1.bf16.msra.mxu0 %v4267
        %4997 = vmatprep.subr.bf16.mxu0 %v4270
        %4998 = vmatpush1.bf16.msra.mxu0 %v4269
        %4999 = vmatprep.subr.bf16.mxu0 %v4272
        %5000 = vmatpush1.bf16.msra.mxu0 %v4271
        %5001 = vmatprep.subr.bf16.mxu0 %v4274
        %5002 = vmatpush1.bf16.msra.mxu0 %v4273
        %5003 = vmatprep.subr.bf16.mxu0 %v4276
        %5004 = vmatpush1.bf16.msra.mxu0 %v4275
        %5005 = vmatprep.subr.bf16.mxu0 %v4278
        %5006 = vmatpush1.bf16.msra.mxu0 %v4277
        %5007 = vmatprep.subr.bf16.mxu0 %v4280
        %5008 = vmatpush1.bf16.msra.mxu0 %v4279
        %5009 = vmatprep.subr.bf16.mxu0 %v4282
        %5010 = vmatpush1.bf16.msra.mxu0 %v4281
        %5011 = vmatprep.subr.bf16.mxu0 %v4284
        %5012 = vmatpush1.bf16.msra.mxu0 %v4283
        %5013 = vmatprep.subr.bf16.mxu0 %v4286
        %5014 = vmatpush1.bf16.msra.mxu0 %v4285
        %5015 = vmatprep.subr.bf16.mxu0 %v4288
        %5016 = vmatpush1.bf16.msra.mxu0 %v4287
        %5017 = vmatprep.subr.bf16.mxu0 %v4290
        %5018 = vmatpush1.bf16.msra.mxu0 %v4289
        %5019 = vmatprep.subr.bf16.mxu0 %v4292
        %5020 = vmatpush1.bf16.msra.mxu0 %v4291
        %5021 = vmatprep.mubr.bf16.mxu0 %v3480
        %5022 = vmatmul.mubr.bf16.gmra.mrb[0].mxu0 %v3479
        %v5023 = vpop.f32.mrb[0].mxu0
        %v5024 = vadd.f32 %v4983, %v5023
        %v5025 = vpop.f32.mrb[0].mxu0
        %v5026 = vadd.f32 %v4985, %v5025
        %v5027 = vpop.f32.mrb[0].mxu0
        %v5028 = vpop.f32.mrb[0].mxu0
        %5029 = vdwg.mxu0
        %s5030 = scalar_lea.vmem [#allocation8], 768
        %v5031 = vld [vmem:[%s5030] sm:$0xff]
        %v5032 = vld [vmem:[%s5030 + $0x8] sm:$0xff]
        %v5033 = vld [vmem:[%s5030 + $0x10] sm:$0xff]
        %v5034 = vld [vmem:[%s5030 + $0x18] sm:$0xff]
        %v5035 = vld [vmem:[%s5030 + $0x20] sm:$0xff]
        %v5036 = vld [vmem:[%s5030 + $0x28] sm:$0xff]
        %v5037 = vld [vmem:[%s5030 + $0x30] sm:$0xff]
        %v5038 = vld [vmem:[%s5030 + $0x38] sm:$0xff]
        %v5039 = vld [vmem:[%s5030 + $0x40] sm:$0xff]
        %v5040 = vld [vmem:[%s5030 + $0x48] sm:$0xff]
        %v5041 = vld [vmem:[%s5030 + $0x50] sm:$0xff]
        %v5042 = vld [vmem:[%s5030 + $0x58] sm:$0xff]
        %v5043 = vld [vmem:[%s5030 + $0x60] sm:$0xff]
        %v5044 = vld [vmem:[%s5030 + $0x68] sm:$0xff]
        %v5045 = vld [vmem:[%s5030 + $0x70] sm:$0xff]
        %v5046 = vld [vmem:[%s5030 + $0x78] sm:$0xff]
        %v5047 = vld [vmem:[%s5030 + $0x80] sm:$0xff]
        %v5048 = vld [vmem:[%s5030 + $0x88] sm:$0xff]
        %v5049 = vld [vmem:[%s5030 + $0x90] sm:$0xff]
        %v5050 = vld [vmem:[%s5030 + $0x98] sm:$0xff]
        %v5051 = vld [vmem:[%s5030 + $0xa0] sm:$0xff]
        %v5052 = vld [vmem:[%s5030 + $0xa8] sm:$0xff]
        %v5053 = vld [vmem:[%s5030 + $0xb0] sm:$0xff]
        %v5054 = vld [vmem:[%s5030 + $0xb8] sm:$0xff]
        %v5055 = vld [vmem:[%s5030 + $0xc0] sm:$0xff]
        %v5056 = vld [vmem:[%s5030 + $0xc8] sm:$0xff]
        %v5057 = vld [vmem:[%s5030 + $0xd0] sm:$0xff]
        %v5058 = vld [vmem:[%s5030 + $0xd8] sm:$0xff]
        %v5059 = vld [vmem:[%s5030 + $0xe0] sm:$0xff]
        %v5060 = vld [vmem:[%s5030 + $0xe8] sm:$0xff]
        %v5061 = vld [vmem:[%s5030 + $0xf0] sm:$0xff]
        %v5062 = vld [vmem:[%s5030 + $0xf8] sm:$0xff]
        %v5065 = vunpack.c.l.b16 %v3334
        %v5066 = vunpack.c.l.b16 %v3335
        %v5067 = vrot.slane %v3451, 7
        %v5068 = vsel %vm966, %v5067, %v3449
        %v5069 = vrot.slane %v3453, 6
        %v5070 = vsel %vm969, %v5069, %v5068
        %v5071 = vrot.slane %v3455, 5
        %v5072 = vsel %vm972, %v5071, %v5070
        %v5073 = vrot.slane %v3457, 4
        %v5074 = vsel %vm975, %v5073, %v5072
        %v5075 = vrot.slane %v5065, 3
        %v5076 = vsel %vm978, %v5075, %v5074
        %v5077 = vrot.slane %v3452, 7
        %v5078 = vsel %vm966, %v5077, %v3450
        %v5079 = vrot.slane %v3454, 6
        %v5080 = vsel %vm969, %v5079, %v5078
        %v5081 = vrot.slane %v3456, 5
        %v5082 = vsel %vm972, %v5081, %v5080
        %v5083 = vrot.slane %v3458, 4
        %v5084 = vsel %vm975, %v5083, %v5082
        %v5085 = vrot.slane %v5066, 3
        %v5086 = vsel %vm978, %v5085, %v5084
        %v5087 = vpack.c.b16 %v5076, %v5076
        %v5088 = vpack.c.b16 %v5086, %v5086
        %v5123 = vunpack.c.l.b16 %v5031
        %v5124 = vunpack.c.h.b16 %v5031
        %v5125 = vunpack.c.l.b16 %v5032
        %v5126 = vunpack.c.h.b16 %v5032
        %v5127 = vunpack.c.l.b16 %v5033
        %v5128 = vunpack.c.h.b16 %v5033
        %v5129 = vunpack.c.l.b16 %v5034
        %v5130 = vunpack.c.h.b16 %v5034
        %v5131 = vunpack.c.l.b16 %v5035
        %v5132 = vunpack.c.h.b16 %v5035
        %v5133 = vunpack.c.l.b16 %v5036
        %v5134 = vunpack.c.h.b16 %v5036
        %v5135 = vunpack.c.l.b16 %v5037
        %v5136 = vunpack.c.h.b16 %v5037
        %v5137 = vunpack.c.l.b16 %v5038
        %v5138 = vunpack.c.h.b16 %v5038
        %v5139 = vunpack.c.l.b16 %v5039
        %v5140 = vunpack.c.h.b16 %v5039
        %v5141 = vunpack.c.l.b16 %v5040
        %v5142 = vunpack.c.h.b16 %v5040
        %v5143 = vunpack.c.l.b16 %v5041
        %v5144 = vunpack.c.h.b16 %v5041
        %v5145 = vunpack.c.l.b16 %v5042
        %v5146 = vunpack.c.h.b16 %v5042
        %v5147 = vunpack.c.l.b16 %v5043
        %v5148 = vunpack.c.h.b16 %v5043
        %v5149 = vunpack.c.l.b16 %v5044
        %v5150 = vunpack.c.h.b16 %v5044
        %v5151 = vunpack.c.l.b16 %v5045
        %v5152 = vunpack.c.h.b16 %v5045
        %v5153 = vunpack.c.l.b16 %v5046
        %v5154 = vunpack.c.h.b16 %v5046
        %v5155 = vunpack.c.l.b16 %v5047
        %v5156 = vunpack.c.h.b16 %v5047
        %v5157 = vunpack.c.l.b16 %v5048
        %v5158 = vunpack.c.h.b16 %v5048
        %v5159 = vunpack.c.l.b16 %v5049
        %v5160 = vunpack.c.h.b16 %v5049
        %v5161 = vunpack.c.l.b16 %v5050
        %v5162 = vunpack.c.h.b16 %v5050
        %v5163 = vunpack.c.l.b16 %v5051
        %v5164 = vunpack.c.h.b16 %v5051
        %v5165 = vunpack.c.l.b16 %v5052
        %v5166 = vunpack.c.h.b16 %v5052
        %v5167 = vunpack.c.l.b16 %v5053
        %v5168 = vunpack.c.h.b16 %v5053
        %v5169 = vunpack.c.l.b16 %v5054
        %v5170 = vunpack.c.h.b16 %v5054
        %v5171 = vunpack.c.l.b16 %v5055
        %v5172 = vunpack.c.h.b16 %v5055
        %v5173 = vunpack.c.l.b16 %v5056
        %v5174 = vunpack.c.h.b16 %v5056
        %v5175 = vunpack.c.l.b16 %v5057
        %v5176 = vunpack.c.h.b16 %v5057
        %v5177 = vunpack.c.l.b16 %v5058
        %v5178 = vunpack.c.h.b16 %v5058
        %v5179 = vunpack.c.l.b16 %v5059
        %v5180 = vunpack.c.h.b16 %v5059
        %v5181 = vunpack.c.l.b16 %v5060
        %v5182 = vunpack.c.h.b16 %v5060
        %v5183 = vunpack.c.l.b16 %v5061
        %v5184 = vunpack.c.h.b16 %v5061
        %v5185 = vunpack.c.l.b16 %v5062
        %v5186 = vunpack.c.h.b16 %v5062
        %v5187 = vpack.c.b16 %v5125, %v5123
        %v5188 = vpack.c.b16 %v5126, %v5124
        %v5189 = vpack.c.b16 %v5129, %v5127
        %v5190 = vpack.c.b16 %v5130, %v5128
        %v5191 = vpack.c.b16 %v5133, %v5131
        %v5192 = vpack.c.b16 %v5134, %v5132
        %v5193 = vpack.c.b16 %v5137, %v5135
        %v5194 = vpack.c.b16 %v5138, %v5136
        %v5195 = vpack.c.b16 %v5141, %v5139
        %v5196 = vpack.c.b16 %v5142, %v5140
        %v5197 = vpack.c.b16 %v5145, %v5143
        %v5198 = vpack.c.b16 %v5146, %v5144
        %v5199 = vpack.c.b16 %v5149, %v5147
        %v5200 = vpack.c.b16 %v5150, %v5148
        %v5201 = vpack.c.b16 %v5153, %v5151
        %v5202 = vpack.c.b16 %v5154, %v5152
        %v5203 = vpack.c.b16 %v5157, %v5155
        %v5204 = vpack.c.b16 %v5158, %v5156
        %v5205 = vpack.c.b16 %v5161, %v5159
        %v5206 = vpack.c.b16 %v5162, %v5160
        %v5207 = vpack.c.b16 %v5165, %v5163
        %v5208 = vpack.c.b16 %v5166, %v5164
        %v5209 = vpack.c.b16 %v5169, %v5167
        %v5210 = vpack.c.b16 %v5170, %v5168
        %v5211 = vpack.c.b16 %v5173, %v5171
        %v5212 = vpack.c.b16 %v5174, %v5172
        %v5213 = vpack.c.b16 %v5177, %v5175
        %v5214 = vpack.c.b16 %v5178, %v5176
        %v5215 = vpack.c.b16 %v5181, %v5179
        %v5216 = vpack.c.b16 %v5182, %v5180
        %v5217 = vpack.c.b16 %v5185, %v5183
        %v5218 = vpack.c.b16 %v5186, %v5184
        %5251 = vmatprep.subr.bf16.mxu0 %v5188
        %5252 = vmatpush1.bf16.msra.mxu0 %v5187
        %5253 = vmatprep.subr.bf16.mxu0 %v5190
        %5254 = vmatpush1.bf16.msra.mxu0 %v5189
        %5255 = vmatprep.subr.bf16.mxu0 %v5192
        %5256 = vmatpush1.bf16.msra.mxu0 %v5191
        %5257 = vmatprep.subr.bf16.mxu0 %v5194
        %5258 = vmatpush1.bf16.msra.mxu0 %v5193
        %5259 = vmatprep.subr.bf16.mxu0 %v5196
        %5260 = vmatpush1.bf16.msra.mxu0 %v5195
        %5261 = vmatprep.subr.bf16.mxu0 %v5198
        %5262 = vmatpush1.bf16.msra.mxu0 %v5197
        %5263 = vmatprep.subr.bf16.mxu0 %v5200
        %5264 = vmatpush1.bf16.msra.mxu0 %v5199
        %5265 = vmatprep.subr.bf16.mxu0 %v5202
        %5266 = vmatpush1.bf16.msra.mxu0 %v5201
        %5267 = vmatprep.subr.bf16.mxu0 %v5204
        %5268 = vmatpush1.bf16.msra.mxu0 %v5203
        %5269 = vmatprep.subr.bf16.mxu0 %v5206
        %5270 = vmatpush1.bf16.msra.mxu0 %v5205
        %5271 = vmatprep.subr.bf16.mxu0 %v5208
        %5272 = vmatpush1.bf16.msra.mxu0 %v5207
        %5273 = vmatprep.subr.bf16.mxu0 %v5210
        %5274 = vmatpush1.bf16.msra.mxu0 %v5209
        %5275 = vmatprep.subr.bf16.mxu0 %v5212
        %5276 = vmatpush1.bf16.msra.mxu0 %v5211
        %5277 = vmatprep.subr.bf16.mxu0 %v5214
        %5278 = vmatpush1.bf16.msra.mxu0 %v5213
        %5279 = vmatprep.subr.bf16.mxu0 %v5216
        %5280 = vmatpush1.bf16.msra.mxu0 %v5215
        %5281 = vmatprep.subr.bf16.mxu0 %v5218
        %5282 = vmatpush1.bf16.msra.mxu0 %v5217
        %5283 = vmatprep.mubr.bf16.mxu0 %v5088
        %5284 = vmatmul.mubr.bf16.gmra.mrb[0].mxu0 %v5087
        %v5285 = vpop.f32.mrb[0].mxu0
        %v5286 = vadd.f32 0.0, %v5285
        %v5287 = vpop.f32.mrb[0].mxu0
        %v5288 = vadd.f32 0.0, %v5287
        %v5289 = vpop.f32.mrb[0].mxu0
        %v5290 = vpop.f32.mrb[0].mxu0
        %5291 = vdwg.mxu0
        %v5292 = vadd.f32 %v4628, %v5286
        %v5293 = vadd.f32 %v4629, %v5288
        %s5294 = scalar_lea.vmem [#allocation9], 768
        %v5295 = vld [vmem:[%s5294] sm:$0xff]
        %v5296 = vld [vmem:[%s5294 + $0x8] sm:$0xff]
        %v5297 = vld [vmem:[%s5294 + $0x10] sm:$0xff]
        %v5298 = vld [vmem:[%s5294 + $0x18] sm:$0xff]
        %v5299 = vld [vmem:[%s5294 + $0x20] sm:$0xff]
        %v5300 = vld [vmem:[%s5294 + $0x28] sm:$0xff]
        %v5301 = vld [vmem:[%s5294 + $0x30] sm:$0xff]
        %v5302 = vld [vmem:[%s5294 + $0x38] sm:$0xff]
        %v5303 = vld [vmem:[%s5294 + $0x40] sm:$0xff]
        %v5304 = vld [vmem:[%s5294 + $0x48] sm:$0xff]
        %v5305 = vld [vmem:[%s5294 + $0x50] sm:$0xff]
        %v5306 = vld [vmem:[%s5294 + $0x58] sm:$0xff]
        %v5307 = vld [vmem:[%s5294 + $0x60] sm:$0xff]
        %v5308 = vld [vmem:[%s5294 + $0x68] sm:$0xff]
        %v5309 = vld [vmem:[%s5294 + $0x70] sm:$0xff]
        %v5310 = vld [vmem:[%s5294 + $0x78] sm:$0xff]
        %v5311 = vld [vmem:[%s5294 + $0x80] sm:$0xff]
        %v5312 = vld [vmem:[%s5294 + $0x88] sm:$0xff]
        %v5313 = vld [vmem:[%s5294 + $0x90] sm:$0xff]
        %v5314 = vld [vmem:[%s5294 + $0x98] sm:$0xff]
        %v5315 = vld [vmem:[%s5294 + $0xa0] sm:$0xff]
        %v5316 = vld [vmem:[%s5294 + $0xa8] sm:$0xff]
        %v5317 = vld [vmem:[%s5294 + $0xb0] sm:$0xff]
        %v5318 = vld [vmem:[%s5294 + $0xb8] sm:$0xff]
        %v5319 = vld [vmem:[%s5294 + $0xc0] sm:$0xff]
        %v5320 = vld [vmem:[%s5294 + $0xc8] sm:$0xff]
        %v5321 = vld [vmem:[%s5294 + $0xd0] sm:$0xff]
        %v5322 = vld [vmem:[%s5294 + $0xd8] sm:$0xff]
        %v5323 = vld [vmem:[%s5294 + $0xe0] sm:$0xff]
        %v5324 = vld [vmem:[%s5294 + $0xe8] sm:$0xff]
        %v5325 = vld [vmem:[%s5294 + $0xf0] sm:$0xff]
        %v5326 = vld [vmem:[%s5294 + $0xf8] sm:$0xff]
        %v5359 = vunpack.c.l.b16 %v5295
        %v5360 = vunpack.c.h.b16 %v5295
        %v5361 = vunpack.c.l.b16 %v5296
        %v5362 = vunpack.c.h.b16 %v5296
        %v5363 = vunpack.c.l.b16 %v5297
        %v5364 = vunpack.c.h.b16 %v5297
        %v5365 = vunpack.c.l.b16 %v5298
        %v5366 = vunpack.c.h.b16 %v5298
        %v5367 = vunpack.c.l.b16 %v5299
        %v5368 = vunpack.c.h.b16 %v5299
        %v5369 = vunpack.c.l.b16 %v5300
        %v5370 = vunpack.c.h.b16 %v5300
        %v5371 = vunpack.c.l.b16 %v5301
        %v5372 = vunpack.c.h.b16 %v5301
        %v5373 = vunpack.c.l.b16 %v5302
        %v5374 = vunpack.c.h.b16 %v5302
        %v5375 = vunpack.c.l.b16 %v5303
        %v5376 = vunpack.c.h.b16 %v5303
        %v5377 = vunpack.c.l.b16 %v5304
        %v5378 = vunpack.c.h.b16 %v5304
        %v5379 = vunpack.c.l.b16 %v5305
        %v5380 = vunpack.c.h.b16 %v5305
        %v5381 = vunpack.c.l.b16 %v5306
        %v5382 = vunpack.c.h.b16 %v5306
        %v5383 = vunpack.c.l.b16 %v5307
        %v5384 = vunpack.c.h.b16 %v5307
        %v5385 = vunpack.c.l.b16 %v5308
        %v5386 = vunpack.c.h.b16 %v5308
        %v5387 = vunpack.c.l.b16 %v5309
        %v5388 = vunpack.c.h.b16 %v5309
        %v5389 = vunpack.c.l.b16 %v5310
        %v5390 = vunpack.c.h.b16 %v5310
        %v5391 = vunpack.c.l.b16 %v5311
        %v5392 = vunpack.c.h.b16 %v5311
        %v5393 = vunpack.c.l.b16 %v5312
        %v5394 = vunpack.c.h.b16 %v5312
        %v5395 = vunpack.c.l.b16 %v5313
        %v5396 = vunpack.c.h.b16 %v5313
        %v5397 = vunpack.c.l.b16 %v5314
        %v5398 = vunpack.c.h.b16 %v5314
        %v5399 = vunpack.c.l.b16 %v5315
        %v5400 = vunpack.c.h.b16 %v5315
        %v5401 = vunpack.c.l.b16 %v5316
        %v5402 = vunpack.c.h.b16 %v5316
        %v5403 = vunpack.c.l.b16 %v5317
        %v5404 = vunpack.c.h.b16 %v5317
        %v5405 = vunpack.c.l.b16 %v5318
        %v5406 = vunpack.c.h.b16 %v5318
        %v5407 = vunpack.c.l.b16 %v5319
        %v5408 = vunpack.c.h.b16 %v5319
        %v5409 = vunpack.c.l.b16 %v5320
        %v5410 = vunpack.c.h.b16 %v5320
        %v5411 = vunpack.c.l.b16 %v5321
        %v5412 = vunpack.c.h.b16 %v5321
        %v5413 = vunpack.c.l.b16 %v5322
        %v5414 = vunpack.c.h.b16 %v5322
        %v5415 = vunpack.c.l.b16 %v5323
        %v5416 = vunpack.c.h.b16 %v5323
        %v5417 = vunpack.c.l.b16 %v5324
        %v5418 = vunpack.c.h.b16 %v5324
        %v5419 = vunpack.c.l.b16 %v5325
        %v5420 = vunpack.c.h.b16 %v5325
        %v5421 = vunpack.c.l.b16 %v5326
        %v5422 = vunpack.c.h.b16 %v5326
        %v5423 = vpack.c.b16 %v5361, %v5359
        %v5424 = vpack.c.b16 %v5362, %v5360
        %v5425 = vpack.c.b16 %v5365, %v5363
        %v5426 = vpack.c.b16 %v5366, %v5364
        %v5427 = vpack.c.b16 %v5369, %v5367
        %v5428 = vpack.c.b16 %v5370, %v5368
        %v5429 = vpack.c.b16 %v5373, %v5371
        %v5430 = vpack.c.b16 %v5374, %v5372
        %v5431 = vpack.c.b16 %v5377, %v5375
        %v5432 = vpack.c.b16 %v5378, %v5376
        %v5433 = vpack.c.b16 %v5381, %v5379
        %v5434 = vpack.c.b16 %v5382, %v5380
        %v5435 = vpack.c.b16 %v5385, %v5383
        %v5436 = vpack.c.b16 %v5386, %v5384
        %v5437 = vpack.c.b16 %v5389, %v5387
        %v5438 = vpack.c.b16 %v5390, %v5388
        %v5439 = vpack.c.b16 %v5393, %v5391
        %v5440 = vpack.c.b16 %v5394, %v5392
        %v5441 = vpack.c.b16 %v5397, %v5395
        %v5442 = vpack.c.b16 %v5398, %v5396
        %v5443 = vpack.c.b16 %v5401, %v5399
        %v5444 = vpack.c.b16 %v5402, %v5400
        %v5445 = vpack.c.b16 %v5405, %v5403
        %v5446 = vpack.c.b16 %v5406, %v5404
        %v5447 = vpack.c.b16 %v5409, %v5407
        %v5448 = vpack.c.b16 %v5410, %v5408
        %v5449 = vpack.c.b16 %v5413, %v5411
        %v5450 = vpack.c.b16 %v5414, %v5412
        %v5451 = vpack.c.b16 %v5417, %v5415
        %v5452 = vpack.c.b16 %v5418, %v5416
        %v5453 = vpack.c.b16 %v5421, %v5419
        %v5454 = vpack.c.b16 %v5422, %v5420
        %5487 = vmatprep.subr.bf16.mxu0 %v5424
        %5488 = vmatpush1.bf16.msra.mxu0 %v5423
        %5489 = vmatprep.subr.bf16.mxu0 %v5426
        %5490 = vmatpush1.bf16.msra.mxu0 %v5425
        %5491 = vmatprep.subr.bf16.mxu0 %v5428
        %5492 = vmatpush1.bf16.msra.mxu0 %v5427
        %5493 = vmatprep.subr.bf16.mxu0 %v5430
        %5494 = vmatpush1.bf16.msra.mxu0 %v5429
        %5495 = vmatprep.subr.bf16.mxu0 %v5432
        %5496 = vmatpush1.bf16.msra.mxu0 %v5431
        %5497 = vmatprep.subr.bf16.mxu0 %v5434
        %5498 = vmatpush1.bf16.msra.mxu0 %v5433
        %5499 = vmatprep.subr.bf16.mxu0 %v5436
        %5500 = vmatpush1.bf16.msra.mxu0 %v5435
        %5501 = vmatprep.subr.bf16.mxu0 %v5438
        %5502 = vmatpush1.bf16.msra.mxu0 %v5437
        %5503 = vmatprep.subr.bf16.mxu0 %v5440
        %5504 = vmatpush1.bf16.msra.mxu0 %v5439
        %5505 = vmatprep.subr.bf16.mxu0 %v5442
        %5506 = vmatpush1.bf16.msra.mxu0 %v5441
        %5507 = vmatprep.subr.bf16.mxu0 %v5444
        %5508 = vmatpush1.bf16.msra.mxu0 %v5443
        %5509 = vmatprep.subr.bf16.mxu0 %v5446
        %5510 = vmatpush1.bf16.msra.mxu0 %v5445
        %5511 = vmatprep.subr.bf16.mxu0 %v5448
        %5512 = vmatpush1.bf16.msra.mxu0 %v5447
        %5513 = vmatprep.subr.bf16.mxu0 %v5450
        %5514 = vmatpush1.bf16.msra.mxu0 %v5449
        %5515 = vmatprep.subr.bf16.mxu0 %v5452
        %5516 = vmatpush1.bf16.msra.mxu0 %v5451
        %5517 = vmatprep.subr.bf16.mxu0 %v5454
        %5518 = vmatpush1.bf16.msra.mxu0 %v5453
        %5519 = vmatprep.mubr.bf16.mxu0 %v5088
        %5520 = vmatmul.mubr.bf16.gmra.mrb[0].mxu0 %v5087
        %v5521 = vpop.f32.mrb[0].mxu0
        %v5522 = vadd.f32 0.0, %v5521
        %v5523 = vpop.f32.mrb[0].mxu0
        %v5524 = vadd.f32 0.0, %v5523
        %v5525 = vpop.f32.mrb[0].mxu0
        %v5526 = vpop.f32.mrb[0].mxu0
        %5527 = vdwg.mxu0
        %v5528 = vadd.f32 %v4864, %v5522
        %v5529 = vadd.f32 %v4865, %v5524
        %5530 = vmatprep.subr.bf16.mxu0 %v4524
        %5531 = vmatpush1.bf16.msra.mxu0 %v4523
        %5532 = vmatprep.subr.bf16.mxu0 %v4526
        %5533 = vmatpush1.bf16.msra.mxu0 %v4525
        %5534 = vmatprep.subr.bf16.mxu0 %v4528
        %5535 = vmatpush1.bf16.msra.mxu0 %v4527
        %5536 = vmatprep.subr.bf16.mxu0 %v4530
        %5537 = vmatpush1.bf16.msra.mxu0 %v4529
        %5538 = vmatprep.subr.bf16.mxu0 %v4532
        %5539 = vmatpush1.bf16.msra.mxu0 %v4531
        %5540 = vmatprep.subr.bf16.mxu0 %v4534
        %5541 = vmatpush1.bf16.msra.mxu0 %v4533
        %5542 = vmatprep.subr.bf16.mxu0 %v4536
        %5543 = vmatpush1.bf16.msra.mxu0 %v4535
        %5544 = vmatprep.subr.bf16.mxu0 %v4538
        %5545 = vmatpush1.bf16.msra.mxu0 %v4537
        %5546 = vmatprep.subr.bf16.mxu0 %v4540
        %5547 = vmatpush1.bf16.msra.mxu0 %v4539
        %5548 = vmatprep.subr.bf16.mxu0 %v4542
        %5549 = vmatpush1.bf16.msra.mxu0 %v4541
        %5550 = vmatprep.subr.bf16.mxu0 %v4544
        %5551 = vmatpush1.bf16.msra.mxu0 %v4543
        %5552 = vmatprep.subr.bf16.mxu0 %v4546
        %5553 = vmatpush1.bf16.msra.mxu0 %v4545
        %5554 = vmatprep.subr.bf16.mxu0 %v4548
        %5555 = vmatpush1.bf16.msra.mxu0 %v4547
        %5556 = vmatprep.subr.bf16.mxu0 %v4550
        %5557 = vmatpush1.bf16.msra.mxu0 %v4549
        %5558 = vmatprep.subr.bf16.mxu0 %v4552
        %5559 = vmatpush1.bf16.msra.mxu0 %v4551
        %5560 = vmatprep.subr.bf16.mxu0 %v4554
        %5561 = vmatpush1.bf16.msra.mxu0 %v4553
        %5562 = vmatprep.mubr.bf16.mxu0 %v5088
        %5563 = vmatmul.mubr.bf16.gmra.mrb[0].mxu0 %v5087
        %v5564 = vpop.f32.mrb[0].mxu0
        %v5565 = vadd.f32 0.0, %v5564
        %v5566 = vpop.f32.mrb[0].mxu0
        %v5567 = vadd.f32 0.0, %v5566
        %v5568 = vpop.f32.mrb[0].mxu0
        %v5569 = vpop.f32.mrb[0].mxu0
        %5570 = vdwg.mxu0
        %v5571 = vadd.f32 %v4942, %v5565
        %v5572 = vadd.f32 %v4944, %v5567
        %5573 = vmatprep.subr.bf16.mxu0 %v4760
        %5574 = vmatpush1.bf16.msra.mxu0 %v4759
        %5575 = vmatprep.subr.bf16.mxu0 %v4762
        %5576 = vmatpush1.bf16.msra.mxu0 %v4761
        %5577 = vmatprep.subr.bf16.mxu0 %v4764
        %5578 = vmatpush1.bf16.msra.mxu0 %v4763
        %5579 = vmatprep.subr.bf16.mxu0 %v4766
        %5580 = vmatpush1.bf16.msra.mxu0 %v4765
        %5581 = vmatprep.subr.bf16.mxu0 %v4768
        %5582 = vmatpush1.bf16.msra.mxu0 %v4767
        %5583 = vmatprep.subr.bf16.mxu0 %v4770
        %5584 = vmatpush1.bf16.msra.mxu0 %v4769
        %5585 = vmatprep.subr.bf16.mxu0 %v4772
        %5586 = vmatpush1.bf16.msra.mxu0 %v4771
        %5587 = vmatprep.subr.bf16.mxu0 %v4774
        %5588 = vmatpush1.bf16.msra.mxu0 %v4773
        %5589 = vmatprep.subr.bf16.mxu0 %v4776
        %5590 = vmatpush1.bf16.msra.mxu0 %v4775
        %5591 = vmatprep.subr.bf16.mxu0 %v4778
        %5592 = vmatpush1.bf16.msra.mxu0 %v4777
        %5593 = vmatprep.subr.bf16.mxu0 %v4780
        %5594 = vmatpush1.bf16.msra.mxu0 %v4779
        %5595 = vmatprep.subr.bf16.mxu0 %v4782
        %5596 = vmatpush1.bf16.msra.mxu0 %v4781
        %5597 = vmatprep.subr.bf16.mxu0 %v4784
        %5598 = vmatpush1.bf16.msra.mxu0 %v4783
        %5599 = vmatprep.subr.bf16.mxu0 %v4786
        %5600 = vmatpush1.bf16.msra.mxu0 %v4785
        %5601 = vmatprep.subr.bf16.mxu0 %v4788
        %5602 = vmatpush1.bf16.msra.mxu0 %v4787
        %5603 = vmatprep.subr.bf16.mxu0 %v4790
        %5604 = vmatpush1.bf16.msra.mxu0 %v4789
        %5605 = vmatprep.mubr.bf16.mxu0 %v5088
        %5606 = vmatmul.mubr.bf16.gmra.mrb[0].mxu0 %v5087
        %v5607 = vpop.f32.mrb[0].mxu0
        %v5608 = vadd.f32 0.0, %v5607
        %v5609 = vpop.f32.mrb[0].mxu0
        %v5610 = vadd.f32 0.0, %v5609
        %v5611 = vpop.f32.mrb[0].mxu0
        %v5612 = vpop.f32.mrb[0].mxu0
        %5613 = vdwg.mxu0
        %v5614 = vadd.f32 %v5024, %v5608
        %v5615 = vadd.f32 %v5026, %v5610
        %s5616 = scalar_lea.vmem [#allocation8], 1024
        %v5617 = vld [vmem:[%s5616] sm:$0xff]
        %v5618 = vld [vmem:[%s5616 + $0x8] sm:$0xff]
        %v5619 = vld [vmem:[%s5616 + $0x10] sm:$0xff]
        %v5620 = vld [vmem:[%s5616 + $0x18] sm:$0xff]
        %v5621 = vld [vmem:[%s5616 + $0x20] sm:$0xff]
        %v5622 = vld [vmem:[%s5616 + $0x28] sm:$0xff]
        %v5623 = vld [vmem:[%s5616 + $0x30] sm:$0xff]
        %v5624 = vld [vmem:[%s5616 + $0x38] sm:$0xff]
        %v5625 = vld [vmem:[%s5616 + $0x40] sm:$0xff]
        %v5626 = vld [vmem:[%s5616 + $0x48] sm:$0xff]
        %v5627 = vld [vmem:[%s5616 + $0x50] sm:$0xff]
        %v5628 = vld [vmem:[%s5616 + $0x58] sm:$0xff]
        %v5629 = vld [vmem:[%s5616 + $0x60] sm:$0xff]
        %v5630 = vld [vmem:[%s5616 + $0x68] sm:$0xff]
        %v5631 = vld [vmem:[%s5616 + $0x70] sm:$0xff]
        %v5632 = vld [vmem:[%s5616 + $0x78] sm:$0xff]
        %v5633 = vld [vmem:[%s5616 + $0x80] sm:$0xff]
        %v5634 = vld [vmem:[%s5616 + $0x88] sm:$0xff]
        %v5635 = vld [vmem:[%s5616 + $0x90] sm:$0xff]
        %v5636 = vld [vmem:[%s5616 + $0x98] sm:$0xff]
        %v5637 = vld [vmem:[%s5616 + $0xa0] sm:$0xff]
        %v5638 = vld [vmem:[%s5616 + $0xa8] sm:$0xff]
        %v5639 = vld [vmem:[%s5616 + $0xb0] sm:$0xff]
        %v5640 = vld [vmem:[%s5616 + $0xb8] sm:$0xff]
        %v5641 = vld [vmem:[%s5616 + $0xc0] sm:$0xff]
        %v5642 = vld [vmem:[%s5616 + $0xc8] sm:$0xff]
        %v5643 = vld [vmem:[%s5616 + $0xd0] sm:$0xff]
        %v5644 = vld [vmem:[%s5616 + $0xd8] sm:$0xff]
        %v5645 = vld [vmem:[%s5616 + $0xe0] sm:$0xff]
        %v5646 = vld [vmem:[%s5616 + $0xe8] sm:$0xff]
        %v5647 = vld [vmem:[%s5616 + $0xf0] sm:$0xff]
        %v5648 = vld [vmem:[%s5616 + $0xf8] sm:$0xff]
        %v5651 = vunpack.c.l.b16 %v3336
        %v5652 = vunpack.c.l.b16 %v3337
        %v5653 = vrot.slane %v3700, 7
        %v5654 = vsel %vm966, %v5653, %v3698
        %v5655 = vrot.slane %v3702, 6
        %v5656 = vsel %vm969, %v5655, %v5654
        %v5657 = vrot.slane %v3704, 5
        %v5658 = vsel %vm972, %v5657, %v5656
        %v5659 = vrot.slane %v4401, 4
        %v5660 = vsel %vm975, %v5659, %v5658
        %v5661 = vrot.slane %v5651, 3
        %v5662 = vsel %vm978, %v5661, %v5660
        %v5663 = vrot.slane %v3701, 7
        %v5664 = vsel %vm966, %v5663, %v3699
        %v5665 = vrot.slane %v3703, 6
        %v5666 = vsel %vm969, %v5665, %v5664
        %v5667 = vrot.slane %v3705, 5
        %v5668 = vsel %vm972, %v5667, %v5666
        %v5669 = vrot.slane %v4402, 4
        %v5670 = vsel %vm975, %v5669, %v5668
        %v5671 = vrot.slane %v5652, 3
        %v5672 = vsel %vm978, %v5671, %v5670
        %v5673 = vpack.c.b16 %v5662, %v5662
        %v5674 = vpack.c.b16 %v5672, %v5672
        %v5709 = vunpack.c.l.b16 %v5617
        %v5710 = vunpack.c.h.b16 %v5617
        %v5711 = vunpack.c.l.b16 %v5618
        %v5712 = vunpack.c.h.b16 %v5618
        %v5713 = vunpack.c.l.b16 %v5619
        %v5714 = vunpack.c.h.b16 %v5619
        %v5715 = vunpack.c.l.b16 %v5620
        %v5716 = vunpack.c.h.b16 %v5620
        %v5717 = vunpack.c.l.b16 %v5621
        %v5718 = vunpack.c.h.b16 %v5621
        %v5719 = vunpack.c.l.b16 %v5622
        %v5720 = vunpack.c.h.b16 %v5622
        %v5721 = vunpack.c.l.b16 %v5623
        %v5722 = vunpack.c.h.b16 %v5623
        %v5723 = vunpack.c.l.b16 %v5624
        %v5724 = vunpack.c.h.b16 %v5624
        %v5725 = vunpack.c.l.b16 %v5625
        %v5726 = vunpack.c.h.b16 %v5625
        %v5727 = vunpack.c.l.b16 %v5626
        %v5728 = vunpack.c.h.b16 %v5626
        %v5729 = vunpack.c.l.b16 %v5627
        %v5730 = vunpack.c.h.b16 %v5627
        %v5731 = vunpack.c.l.b16 %v5628
        %v5732 = vunpack.c.h.b16 %v5628
        %v5733 = vunpack.c.l.b16 %v5629
        %v5734 = vunpack.c.h.b16 %v5629
        %v5735 = vunpack.c.l.b16 %v5630
        %v5736 = vunpack.c.h.b16 %v5630
        %v5737 = vunpack.c.l.b16 %v5631
        %v5738 = vunpack.c.h.b16 %v5631
        %v5739 = vunpack.c.l.b16 %v5632
        %v5740 = vunpack.c.h.b16 %v5632
        %v5741 = vunpack.c.l.b16 %v5633
        %v5742 = vunpack.c.h.b16 %v5633
        %v5743 = vunpack.c.l.b16 %v5634
        %v5744 = vunpack.c.h.b16 %v5634
        %v5745 = vunpack.c.l.b16 %v5635
        %v5746 = vunpack.c.h.b16 %v5635
        %v5747 = vunpack.c.l.b16 %v5636
        %v5748 = vunpack.c.h.b16 %v5636
        %v5749 = vunpack.c.l.b16 %v5637
        %v5750 = vunpack.c.h.b16 %v5637
        %v5751 = vunpack.c.l.b16 %v5638
        %v5752 = vunpack.c.h.b16 %v5638
        %v5753 = vunpack.c.l.b16 %v5639
        %v5754 = vunpack.c.h.b16 %v5639
        %v5755 = vunpack.c.l.b16 %v5640
        %v5756 = vunpack.c.h.b16 %v5640
        %v5757 = vunpack.c.l.b16 %v5641
        %v5758 = vunpack.c.h.b16 %v5641
        %v5759 = vunpack.c.l.b16 %v5642
        %v5760 = vunpack.c.h.b16 %v5642
        %v5761 = vunpack.c.l.b16 %v5643
        %v5762 = vunpack.c.h.b16 %v5643
        %v5763 = vunpack.c.l.b16 %v5644
        %v5764 = vunpack.c.h.b16 %v5644
        %v5765 = vunpack.c.l.b16 %v5645
        %v5766 = vunpack.c.h.b16 %v5645
        %v5767 = vunpack.c.l.b16 %v5646
        %v5768 = vunpack.c.h.b16 %v5646
        %v5769 = vunpack.c.l.b16 %v5647
        %v5770 = vunpack.c.h.b16 %v5647
        %v5771 = vunpack.c.l.b16 %v5648
        %v5772 = vunpack.c.h.b16 %v5648
        %v5773 = vpack.c.b16 %v5711, %v5709
        %v5774 = vpack.c.b16 %v5712, %v5710
        %v5775 = vpack.c.b16 %v5715, %v5713
        %v5776 = vpack.c.b16 %v5716, %v5714
        %v5777 = vpack.c.b16 %v5719, %v5717
        %v5778 = vpack.c.b16 %v5720, %v5718
        %v5779 = vpack.c.b16 %v5723, %v5721
        %v5780 = vpack.c.b16 %v5724, %v5722
        %v5781 = vpack.c.b16 %v5727, %v5725
        %v5782 = vpack.c.b16 %v5728, %v5726
        %v5783 = vpack.c.b16 %v5731, %v5729
        %v5784 = vpack.c.b16 %v5732, %v5730
        %v5785 = vpack.c.b16 %v5735, %v5733
        %v5786 = vpack.c.b16 %v5736, %v5734
        %v5787 = vpack.c.b16 %v5739, %v5737
        %v5788 = vpack.c.b16 %v5740, %v5738
        %v5789 = vpack.c.b16 %v5743, %v5741
        %v5790 = vpack.c.b16 %v5744, %v5742
        %v5791 = vpack.c.b16 %v5747, %v5745
        %v5792 = vpack.c.b16 %v5748, %v5746
        %v5793 = vpack.c.b16 %v5751, %v5749
        %v5794 = vpack.c.b16 %v5752, %v5750
        %v5795 = vpack.c.b16 %v5755, %v5753
        %v5796 = vpack.c.b16 %v5756, %v5754
        %v5797 = vpack.c.b16 %v5759, %v5757
        %v5798 = vpack.c.b16 %v5760, %v5758
        %v5799 = vpack.c.b16 %v5763, %v5761
        %v5800 = vpack.c.b16 %v5764, %v5762
        %v5801 = vpack.c.b16 %v5767, %v5765
        %v5802 = vpack.c.b16 %v5768, %v5766
        %v5803 = vpack.c.b16 %v5771, %v5769
        %v5804 = vpack.c.b16 %v5772, %v5770
        %5837 = vmatprep.subr.bf16.mxu0 %v5774
        %5838 = vmatpush1.bf16.msra.mxu0 %v5773
        %5839 = vmatprep.subr.bf16.mxu0 %v5776
        %5840 = vmatpush1.bf16.msra.mxu0 %v5775
        %5841 = vmatprep.subr.bf16.mxu0 %v5778
        %5842 = vmatpush1.bf16.msra.mxu0 %v5777
        %5843 = vmatprep.subr.bf16.mxu0 %v5780
        %5844 = vmatpush1.bf16.msra.mxu0 %v5779
        %5845 = vmatprep.subr.bf16.mxu0 %v5782
        %5846 = vmatpush1.bf16.msra.mxu0 %v5781
        %5847 = vmatprep.subr.bf16.mxu0 %v5784
        %5848 = vmatpush1.bf16.msra.mxu0 %v5783
        %5849 = vmatprep.subr.bf16.mxu0 %v5786
        %5850 = vmatpush1.bf16.msra.mxu0 %v5785
        %5851 = vmatprep.subr.bf16.mxu0 %v5788
        %5852 = vmatpush1.bf16.msra.mxu0 %v5787
        %5853 = vmatprep.subr.bf16.mxu0 %v5790
        %5854 = vmatpush1.bf16.msra.mxu0 %v5789
        %5855 = vmatprep.subr.bf16.mxu0 %v5792
        %5856 = vmatpush1.bf16.msra.mxu0 %v5791
        %5857 = vmatprep.subr.bf16.mxu0 %v5794
        %5858 = vmatpush1.bf16.msra.mxu0 %v5793
        %5859 = vmatprep.subr.bf16.mxu0 %v5796
        %5860 = vmatpush1.bf16.msra.mxu0 %v5795
        %5861 = vmatprep.subr.bf16.mxu0 %v5798
        %5862 = vmatpush1.bf16.msra.mxu0 %v5797
        %5863 = vmatprep.subr.bf16.mxu0 %v5800
        %5864 = vmatpush1.bf16.msra.mxu0 %v5799
        %5865 = vmatprep.subr.bf16.mxu0 %v5802
        %5866 = vmatpush1.bf16.msra.mxu0 %v5801
        %5867 = vmatprep.subr.bf16.mxu0 %v5804
        %5868 = vmatpush1.bf16.msra.mxu0 %v5803
        %5869 = vmatprep.mubr.bf16.mxu0 %v5674
        %5870 = vmatmul.mubr.bf16.gmra.mrb[0].mxu0 %v5673
        %v5871 = vpop.f32.mrb[0].mxu0
        %v5872 = vadd.f32 0.0, %v5871
        %v5873 = vpop.f32.mrb[0].mxu0
        %v5874 = vadd.f32 0.0, %v5873
        %v5875 = vpop.f32.mrb[0].mxu0
        %v5876 = vpop.f32.mrb[0].mxu0
        %5877 = vdwg.mxu0
        %v5878 = vadd.f32 %v5292, %v5872
        %v5879 = vadd.f32 %v5293, %v5874
        %s5880 = scalar_lea.vmem [#allocation9], 1024
        %v5881 = vld [vmem:[%s5880] sm:$0xff]
        %v5882 = vld [vmem:[%s5880 + $0x8] sm:$0xff]
        %v5883 = vld [vmem:[%s5880 + $0x10] sm:$0xff]
        %v5884 = vld [vmem:[%s5880 + $0x18] sm:$0xff]
        %v5885 = vld [vmem:[%s5880 + $0x20] sm:$0xff]
        %v5886 = vld [vmem:[%s5880 + $0x28] sm:$0xff]
        %v5887 = vld [vmem:[%s5880 + $0x30] sm:$0xff]
        %v5888 = vld [vmem:[%s5880 + $0x38] sm:$0xff]
        %v5889 = vld [vmem:[%s5880 + $0x40] sm:$0xff]
        %v5890 = vld [vmem:[%s5880 + $0x48] sm:$0xff]
        %v5891 = vld [vmem:[%s5880 + $0x50] sm:$0xff]
        %v5892 = vld [vmem:[%s5880 + $0x58] sm:$0xff]
        %v5893 = vld [vmem:[%s5880 + $0x60] sm:$0xff]
        %v5894 = vld [vmem:[%s5880 + $0x68] sm:$0xff]
        %v5895 = vld [vmem:[%s5880 + $0x70] sm:$0xff]
        %v5896 = vld [vmem:[%s5880 + $0x78] sm:$0xff]
        %v5897 = vld [vmem:[%s5880 + $0x80] sm:$0xff]
        %v5898 = vld [vmem:[%s5880 + $0x88] sm:$0xff]
        %v5899 = vld [vmem:[%s5880 + $0x90] sm:$0xff]
        %v5900 = vld [vmem:[%s5880 + $0x98] sm:$0xff]
        %v5901 = vld [vmem:[%s5880 + $0xa0] sm:$0xff]
        %v5902 = vld [vmem:[%s5880 + $0xa8] sm:$0xff]
        %v5903 = vld [vmem:[%s5880 + $0xb0] sm:$0xff]
        %v5904 = vld [vmem:[%s5880 + $0xb8] sm:$0xff]
        %v5905 = vld [vmem:[%s5880 + $0xc0] sm:$0xff]
        %v5906 = vld [vmem:[%s5880 + $0xc8] sm:$0xff]
        %v5907 = vld [vmem:[%s5880 + $0xd0] sm:$0xff]
        %v5908 = vld [vmem:[%s5880 + $0xd8] sm:$0xff]
        %v5909 = vld [vmem:[%s5880 + $0xe0] sm:$0xff]
        %v5910 = vld [vmem:[%s5880 + $0xe8] sm:$0xff]
        %v5911 = vld [vmem:[%s5880 + $0xf0] sm:$0xff]
        %v5912 = vld [vmem:[%s5880 + $0xf8] sm:$0xff]
        %v5945 = vunpack.c.l.b16 %v5881
        %v5946 = vunpack.c.h.b16 %v5881
        %v5947 = vunpack.c.l.b16 %v5882
        %v5948 = vunpack.c.h.b16 %v5882
        %v5949 = vunpack.c.l.b16 %v5883
        %v5950 = vunpack.c.h.b16 %v5883
        %v5951 = vunpack.c.l.b16 %v5884
        %v5952 = vunpack.c.h.b16 %v5884
        %v5953 = vunpack.c.l.b16 %v5885
        %v5954 = vunpack.c.h.b16 %v5885
        %v5955 = vunpack.c.l.b16 %v5886
        %v5956 = vunpack.c.h.b16 %v5886
        %v5957 = vunpack.c.l.b16 %v5887
        %v5958 = vunpack.c.h.b16 %v5887
        %v5959 = vunpack.c.l.b16 %v5888
        %v5960 = vunpack.c.h.b16 %v5888
        %v5961 = vunpack.c.l.b16 %v5889
        %v5962 = vunpack.c.h.b16 %v5889
        %v5963 = vunpack.c.l.b16 %v5890
        %v5964 = vunpack.c.h.b16 %v5890
        %v5965 = vunpack.c.l.b16 %v5891
        %v5966 = vunpack.c.h.b16 %v5891
        %v5967 = vunpack.c.l.b16 %v5892
        %v5968 = vunpack.c.h.b16 %v5892
        %v5969 = vunpack.c.l.b16 %v5893
        %v5970 = vunpack.c.h.b16 %v5893
        %v5971 = vunpack.c.l.b16 %v5894
        %v5972 = vunpack.c.h.b16 %v5894
        %v5973 = vunpack.c.l.b16 %v5895
        %v5974 = vunpack.c.h.b16 %v5895
        %v5975 = vunpack.c.l.b16 %v5896
        %v5976 = vunpack.c.h.b16 %v5896
        %v5977 = vunpack.c.l.b16 %v5897
        %v5978 = vunpack.c.h.b16 %v5897
        %v5979 = vunpack.c.l.b16 %v5898
        %v5980 = vunpack.c.h.b16 %v5898
        %v5981 = vunpack.c.l.b16 %v5899
        %v5982 = vunpack.c.h.b16 %v5899
        %v5983 = vunpack.c.l.b16 %v5900
        %v5984 = vunpack.c.h.b16 %v5900
        %v5985 = vunpack.c.l.b16 %v5901
        %v5986 = vunpack.c.h.b16 %v5901
        %v5987 = vunpack.c.l.b16 %v5902
        %v5988 = vunpack.c.h.b16 %v5902
        %v5989 = vunpack.c.l.b16 %v5903
        %v5990 = vunpack.c.h.b16 %v5903
        %v5991 = vunpack.c.l.b16 %v5904
        %v5992 = vunpack.c.h.b16 %v5904
        %v5993 = vunpack.c.l.b16 %v5905
        %v5994 = vunpack.c.h.b16 %v5905
        %v5995 = vunpack.c.l.b16 %v5906
        %v5996 = vunpack.c.h.b16 %v5906
        %v5997 = vunpack.c.l.b16 %v5907
        %v5998 = vunpack.c.h.b16 %v5907
        %v5999 = vunpack.c.l.b16 %v5908
        %v6000 = vunpack.c.h.b16 %v5908
        %v6001 = vunpack.c.l.b16 %v5909
        %v6002 = vunpack.c.h.b16 %v5909
        %v6003 = vunpack.c.l.b16 %v5910
        %v6004 = vunpack.c.h.b16 %v5910
        %v6005 = vunpack.c.l.b16 %v5911
        %v6006 = vunpack.c.h.b16 %v5911
        %v6007 = vunpack.c.l.b16 %v5912
        %v6008 = vunpack.c.h.b16 %v5912
        %v6009 = vpack.c.b16 %v5947, %v5945
        %v6010 = vpack.c.b16 %v5948, %v5946
        %v6011 = vpack.c.b16 %v5951, %v5949
        %v6012 = vpack.c.b16 %v5952, %v5950
        %v6013 = vpack.c.b16 %v5955, %v5953
        %v6014 = vpack.c.b16 %v5956, %v5954
        %v6015 = vpack.c.b16 %v5959, %v5957
        %v6016 = vpack.c.b16 %v5960, %v5958
        %v6017 = vpack.c.b16 %v5963, %v5961
        %v6018 = vpack.c.b16 %v5964, %v5962
        %v6019 = vpack.c.b16 %v5967, %v5965
        %v6020 = vpack.c.b16 %v5968, %v5966
        %v6021 = vpack.c.b16 %v5971, %v5969
        %v6022 = vpack.c.b16 %v5972, %v5970
        %v6023 = vpack.c.b16 %v5975, %v5973
        %v6024 = vpack.c.b16 %v5976, %v5974
        %v6025 = vpack.c.b16 %v5979, %v5977
        %v6026 = vpack.c.b16 %v5980, %v5978
        %v6027 = vpack.c.b16 %v5983, %v5981
        %v6028 = vpack.c.b16 %v5984, %v5982
        %v6029 = vpack.c.b16 %v5987, %v5985
        %v6030 = vpack.c.b16 %v5988, %v5986
        %v6031 = vpack.c.b16 %v5991, %v5989
        %v6032 = vpack.c.b16 %v5992, %v5990
        %v6033 = vpack.c.b16 %v5995, %v5993
        %v6034 = vpack.c.b16 %v5996, %v5994
        %v6035 = vpack.c.b16 %v5999, %v5997
        %v6036 = vpack.c.b16 %v6000, %v5998
        %v6037 = vpack.c.b16 %v6003, %v6001
        %v6038 = vpack.c.b16 %v6004, %v6002
        %v6039 = vpack.c.b16 %v6007, %v6005
        %v6040 = vpack.c.b16 %v6008, %v6006
        %6073 = vmatprep.subr.bf16.mxu0 %v6010
        %6074 = vmatpush1.bf16.msra.mxu0 %v6009
        %6075 = vmatprep.subr.bf16.mxu0 %v6012
        %6076 = vmatpush1.bf16.msra.mxu0 %v6011
        %6077 = vmatprep.subr.bf16.mxu0 %v6014
        %6078 = vmatpush1.bf16.msra.mxu0 %v6013
        %6079 = vmatprep.subr.bf16.mxu0 %v6016
        %6080 = vmatpush1.bf16.msra.mxu0 %v6015
        %6081 = vmatprep.subr.bf16.mxu0 %v6018
        %6082 = vmatpush1.bf16.msra.mxu0 %v6017
        %6083 = vmatprep.subr.bf16.mxu0 %v6020
        %6084 = vmatpush1.bf16.msra.mxu0 %v6019
        %6085 = vmatprep.subr.bf16.mxu0 %v6022
        %6086 = vmatpush1.bf16.msra.mxu0 %v6021
        %6087 = vmatprep.subr.bf16.mxu0 %v6024
        %6088 = vmatpush1.bf16.msra.mxu0 %v6023
        %6089 = vmatprep.subr.bf16.mxu0 %v6026
        %6090 = vmatpush1.bf16.msra.mxu0 %v6025
        %6091 = vmatprep.subr.bf16.mxu0 %v6028
        %6092 = vmatpush1.bf16.msra.mxu0 %v6027
        %6093 = vmatprep.subr.bf16.mxu0 %v6030
        %6094 = vmatpush1.bf16.msra.mxu0 %v6029
        %6095 = vmatprep.subr.bf16.mxu0 %v6032
        %6096 = vmatpush1.bf16.msra.mxu0 %v6031
        %6097 = vmatprep.subr.bf16.mxu0 %v6034
        %6098 = vmatpush1.bf16.msra.mxu0 %v6033
        %6099 = vmatprep.subr.bf16.mxu0 %v6036
        %6100 = vmatpush1.bf16.msra.mxu0 %v6035
        %6101 = vmatprep.subr.bf16.mxu0 %v6038
        %6102 = vmatpush1.bf16.msra.mxu0 %v6037
        %6103 = vmatprep.subr.bf16.mxu0 %v6040
        %6104 = vmatpush1.bf16.msra.mxu0 %v6039
        %6105 = vmatprep.mubr.bf16.mxu0 %v5674
        %6106 = vmatmul.mubr.bf16.gmra.mrb[0].mxu0 %v5673
        %v6107 = vpop.f32.mrb[0].mxu0
        %v6108 = vadd.f32 0.0, %v6107
        %v6109 = vpop.f32.mrb[0].mxu0
        %v6110 = vadd.f32 0.0, %v6109
        %v6111 = vpop.f32.mrb[0].mxu0
        %v6112 = vpop.f32.mrb[0].mxu0
        %6113 = vdwg.mxu0
        %v6114 = vadd.f32 %v5528, %v6108
        %v6115 = vadd.f32 %v5529, %v6110
        %6116 = vmatprep.subr.bf16.mxu0 %v5188
        %6117 = vmatpush1.bf16.msra.mxu0 %v5187
        %6118 = vmatprep.subr.bf16.mxu0 %v5190
        %6119 = vmatpush1.bf16.msra.mxu0 %v5189
        %6120 = vmatprep.subr.bf16.mxu0 %v5192
        %6121 = vmatpush1.bf16.msra.mxu0 %v5191
        %6122 = vmatprep.subr.bf16.mxu0 %v5194
        %6123 = vmatpush1.bf16.msra.mxu0 %v5193
        %6124 = vmatprep.subr.bf16.mxu0 %v5196
        %6125 = vmatpush1.bf16.msra.mxu0 %v5195
        %6126 = vmatprep.subr.bf16.mxu0 %v5198
        %6127 = vmatpush1.bf16.msra.mxu0 %v5197
        %6128 = vmatprep.subr.bf16.mxu0 %v5200
        %6129 = vmatpush1.bf16.msra.mxu0 %v5199
        %6130 = vmatprep.subr.bf16.mxu0 %v5202
        %6131 = vmatpush1.bf16.msra.mxu0 %v5201
        %6132 = vmatprep.subr.bf16.mxu0 %v5204
        %6133 = vmatpush1.bf16.msra.mxu0 %v5203
        %6134 = vmatprep.subr.bf16.mxu0 %v5206
        %6135 = vmatpush1.bf16.msra.mxu0 %v5205
        %6136 = vmatprep.subr.bf16.mxu0 %v5208
        %6137 = vmatpush1.bf16.msra.mxu0 %v5207
        %6138 = vmatprep.subr.bf16.mxu0 %v5210
        %6139 = vmatpush1.bf16.msra.mxu0 %v5209
        %6140 = vmatprep.subr.bf16.mxu0 %v5212
        %6141 = vmatpush1.bf16.msra.mxu0 %v5211
        %6142 = vmatprep.subr.bf16.mxu0 %v5214
        %6143 = vmatpush1.bf16.msra.mxu0 %v5213
        %6144 = vmatprep.subr.bf16.mxu0 %v5216
        %6145 = vmatpush1.bf16.msra.mxu0 %v5215
        %6146 = vmatprep.subr.bf16.mxu0 %v5218
        %6147 = vmatpush1.bf16.msra.mxu0 %v5217
        %6148 = vmatprep.mubr.bf16.mxu0 %v5674
        %6149 = vmatmul.mubr.bf16.gmra.mrb[0].mxu0 %v5673
        %v6150 = vpop.f32.mrb[0].mxu0
        %v6151 = vadd.f32 0.0, %v6150
        %v6152 = vpop.f32.mrb[0].mxu0
        %v6153 = vadd.f32 0.0, %v6152
        %v6154 = vpop.f32.mrb[0].mxu0
        %v6155 = vpop.f32.mrb[0].mxu0
        %6156 = vdwg.mxu0
        %v6157 = vadd.f32 %v5571, %v6151
        %v6158 = vadd.f32 %v5572, %v6153
        %6159 = vmatprep.subr.bf16.mxu0 %v5424
        %6160 = vmatpush1.bf16.msra.mxu0 %v5423
        %6161 = vmatprep.subr.bf16.mxu0 %v5426
        %6162 = vmatpush1.bf16.msra.mxu0 %v5425
        %6163 = vmatprep.subr.bf16.mxu0 %v5428
        %6164 = vmatpush1.bf16.msra.mxu0 %v5427
        %6165 = vmatprep.subr.bf16.mxu0 %v5430
        %6166 = vmatpush1.bf16.msra.mxu0 %v5429
        %6167 = vmatprep.subr.bf16.mxu0 %v5432
        %6168 = vmatpush1.bf16.msra.mxu0 %v5431
        %6169 = vmatprep.subr.bf16.mxu0 %v5434
        %6170 = vmatpush1.bf16.msra.mxu0 %v5433
        %6171 = vmatprep.subr.bf16.mxu0 %v5436
        %6172 = vmatpush1.bf16.msra.mxu0 %v5435
        %6173 = vmatprep.subr.bf16.mxu0 %v5438
        %6174 = vmatpush1.bf16.msra.mxu0 %v5437
        %6175 = vmatprep.subr.bf16.mxu0 %v5440
        %6176 = vmatpush1.bf16.msra.mxu0 %v5439
        %6177 = vmatprep.subr.bf16.mxu0 %v5442
        %6178 = vmatpush1.bf16.msra.mxu0 %v5441
        %6179 = vmatprep.subr.bf16.mxu0 %v5444
        %6180 = vmatpush1.bf16.msra.mxu0 %v5443
        %6181 = vmatprep.subr.bf16.mxu0 %v5446
        %6182 = vmatpush1.bf16.msra.mxu0 %v5445
        %6183 = vmatprep.subr.bf16.mxu0 %v5448
        %6184 = vmatpush1.bf16.msra.mxu0 %v5447
        %6185 = vmatprep.subr.bf16.mxu0 %v5450
        %6186 = vmatpush1.bf16.msra.mxu0 %v5449
        %6187 = vmatprep.subr.bf16.mxu0 %v5452
        %6188 = vmatpush1.bf16.msra.mxu0 %v5451
        %6189 = vmatprep.subr.bf16.mxu0 %v5454
        %6190 = vmatpush1.bf16.msra.mxu0 %v5453
        %6191 = vmatprep.mubr.bf16.mxu0 %v5674
        %6192 = vmatmul.mubr.bf16.gmra.mrb[0].mxu0 %v5673
        %v6193 = vpop.f32.mrb[0].mxu0
        %v6194 = vadd.f32 0.0, %v6193
        %v6195 = vpop.f32.mrb[0].mxu0
        %v6196 = vadd.f32 0.0, %v6195
        %v6197 = vpop.f32.mrb[0].mxu0
        %v6198 = vpop.f32.mrb[0].mxu0
        %6199 = vdwg.mxu0
        %v6200 = vadd.f32 %v5614, %v6194
        %v6201 = vadd.f32 %v5615, %v6196
        %v6202 = vrot.slane %v3453, 7
        %v6203 = vsel %vm966, %v6202, %v3451
        %v6204 = vrot.slane %v3455, 6
        %v6205 = vsel %vm969, %v6204, %v6203
        %v6206 = vrot.slane %v3457, 5
        %v6207 = vsel %vm972, %v6206, %v6205
        %v6208 = vrot.slane %v5065, 4
        %v6209 = vsel %vm975, %v6208, %v6207
        %v6210 = vrot.slane %v3695, 3
        %v6211 = vsel %vm978, %v6210, %v6209
        %v6212 = vrot.slane %v3454, 7
        %v6213 = vsel %vm966, %v6212, %v3452
        %v6214 = vrot.slane %v3456, 6
        %v6215 = vsel %vm969, %v6214, %v6213
        %v6216 = vrot.slane %v3458, 5
        %v6217 = vsel %vm972, %v6216, %v6215
        %v6218 = vrot.slane %v5066, 4
        %v6219 = vsel %vm975, %v6218, %v6217
        %v6220 = vsel %vm978, %v6210, %v6219
        %v6221 = vpack.c.b16 %v6211, %v6211
        %v6222 = vpack.c.b16 %v6220, %v6220
        %6225 = vmatprep.subr.bf16.mxu0 %v5774
        %6226 = vmatpush1.bf16.msra.mxu0 %v5773
        %6227 = vmatprep.subr.bf16.mxu0 %v5776
        %6228 = vmatpush1.bf16.msra.mxu0 %v5775
        %6229 = vmatprep.subr.bf16.mxu0 %v5778
        %6230 = vmatpush1.bf16.msra.mxu0 %v5777
        %6231 = vmatprep.subr.bf16.mxu0 %v5780
        %6232 = vmatpush1.bf16.msra.mxu0 %v5779
        %6233 = vmatprep.subr.bf16.mxu0 %v5782
        %6234 = vmatpush1.bf16.msra.mxu0 %v5781
        %6235 = vmatprep.subr.bf16.mxu0 %v5784
        %6236 = vmatpush1.bf16.msra.mxu0 %v5783
        %6237 = vmatprep.subr.bf16.mxu0 %v5786
        %6238 = vmatpush1.bf16.msra.mxu0 %v5785
        %6239 = vmatprep.subr.bf16.mxu0 %v5788
        %6240 = vmatpush1.bf16.msra.mxu0 %v5787
        %6241 = vmatprep.subr.bf16.mxu0 %v5790
        %6242 = vmatpush1.bf16.msra.mxu0 %v5789
        %6243 = vmatprep.subr.bf16.mxu0 %v5792
        %6244 = vmatpush1.bf16.msra.mxu0 %v5791
        %6245 = vmatprep.subr.bf16.mxu0 %v5794
        %6246 = vmatpush1.bf16.msra.mxu0 %v5793
        %6247 = vmatprep.subr.bf16.mxu0 %v5796
        %6248 = vmatpush1.bf16.msra.mxu0 %v5795
        %6249 = vmatprep.subr.bf16.mxu0 %v5798
        %6250 = vmatpush1.bf16.msra.mxu0 %v5797
        %6251 = vmatprep.subr.bf16.mxu0 %v5800
        %6252 = vmatpush1.bf16.msra.mxu0 %v5799
        %6253 = vmatprep.subr.bf16.mxu0 %v5802
        %6254 = vmatpush1.bf16.msra.mxu0 %v5801
        %6255 = vmatprep.subr.bf16.mxu0 %v5804
        %6256 = vmatpush1.bf16.msra.mxu0 %v5803
        %6257 = vmatprep.mubr.bf16.mxu0 %v6222
        %6258 = vmatmul.mubr.bf16.gmra.mrb[0].mxu0 %v6221
        %v6259 = vpop.f32.mrb[0].mxu0
        %v6260 = vadd.f32 0.0, %v6259
        %v6261 = vpop.f32.mrb[0].mxu0
        %v6262 = vadd.f32 0.0, %v6261
        %v6263 = vpop.f32.mrb[0].mxu0
        %v6264 = vpop.f32.mrb[0].mxu0
        %6265 = vdwg.mxu0
        %v6266 = vadd.f32 %v6157, %v6260
        %v6267 = vadd.f32 %v6158, %v6262
        %6268 = vmatprep.subr.bf16.mxu0 %v6010
        %6269 = vmatpush1.bf16.msra.mxu0 %v6009
        %6270 = vmatprep.subr.bf16.mxu0 %v6012
        %6271 = vmatpush1.bf16.msra.mxu0 %v6011
        %6272 = vmatprep.subr.bf16.mxu0 %v6014
        %6273 = vmatpush1.bf16.msra.mxu0 %v6013
        %6274 = vmatprep.subr.bf16.mxu0 %v6016
        %6275 = vmatpush1.bf16.msra.mxu0 %v6015
        %6276 = vmatprep.subr.bf16.mxu0 %v6018
        %6277 = vmatpush1.bf16.msra.mxu0 %v6017
        %6278 = vmatprep.subr.bf16.mxu0 %v6020
        %6279 = vmatpush1.bf16.msra.mxu0 %v6019
        %6280 = vmatprep.subr.bf16.mxu0 %v6022
        %6281 = vmatpush1.bf16.msra.mxu0 %v6021
        %6282 = vmatprep.subr.bf16.mxu0 %v6024
        %6283 = vmatpush1.bf16.msra.mxu0 %v6023
        %6284 = vmatprep.subr.bf16.mxu0 %v6026
        %6285 = vmatpush1.bf16.msra.mxu0 %v6025
        %6286 = vmatprep.subr.bf16.mxu0 %v6028
        %6287 = vmatpush1.bf16.msra.mxu0 %v6027
        %6288 = vmatprep.subr.bf16.mxu0 %v6030
        %6289 = vmatpush1.bf16.msra.mxu0 %v6029
        %6290 = vmatprep.subr.bf16.mxu0 %v6032
        %6291 = vmatpush1.bf16.msra.mxu0 %v6031
        %6292 = vmatprep.subr.bf16.mxu0 %v6034
        %6293 = vmatpush1.bf16.msra.mxu0 %v6033
        %6294 = vmatprep.subr.bf16.mxu0 %v6036
        %6295 = vmatpush1.bf16.msra.mxu0 %v6035
        %6296 = vmatprep.subr.bf16.mxu0 %v6038
        %6297 = vmatpush1.bf16.msra.mxu0 %v6037
        %6298 = vmatprep.subr.bf16.mxu0 %v6040
        %6299 = vmatpush1.bf16.msra.mxu0 %v6039
        %6300 = vmatprep.mubr.bf16.mxu0 %v6222
        %6301 = vmatmul.mubr.bf16.gmra.mrb[0].mxu0 %v6221
        %v6302 = vpop.f32.mrb[0].mxu0
        %v6303 = vadd.f32 0.0, %v6302
        %v6304 = vpop.f32.mrb[0].mxu0
        %v6305 = vadd.f32 0.0, %v6304
        %v6306 = vpop.f32.mrb[0].mxu0
        %v6307 = vpop.f32.mrb[0].mxu0
        %6308 = vdwg.mxu0
        %v6309 = vadd.f32 %v6200, %v6303
        %v6310 = vadd.f32 %v6201, %v6305
        %v6311 = vmax.f32 %v5878, %v6114
        %v6312 = vmax.f32 %v5879, %v6115
        %v6313 = vmax.f32 %v6266, %v6309
        %v6314 = vmax.f32 %v6267, %v6310
        %v6315 = vmax.f32 %v6311, %v6313
        %v6316 = vmax.f32 %v6312, %v6314
        %v6317 = vld [vmem:[%s7] sm:$0x3]
        %v6319 = vlaneseq
        %v6320 = vshrl.u32 %v6319, 7
        %v6321 = vsub.s32 0, %v6320
        %v6322 = vrot.slane %v6317, %v6321
        %v6323 = vlaneseq
        %v6324 = vshrl.u32 %v6323, 7
        %v6325 = vsub.s32 1, %v6324
        %v6326 = vrot.slane %v6317, %v6325
        %v6329 = vadd.f32 %v6315, %v6322
        %v6330 = vadd.f32 %v6316, %v6326
        %vm6331 = vcmp.ge.f32.partialorder %v6329, 0.0
        %vm6332 = vcmp.ge.f32.partialorder %v6330, 0.0
        %v6333 = vmul.f32 %v6329, 0.01
        %v6334 = vmul.f32 %v6330, 0.01
        %v6335 = vsel %vm6331, %v6329, %v6333
        %v6336 = vsel %vm6332, %v6330, %v6334
        %v6339 = vcombine.low %v6335, %v6336
        %v6340 = vcombine.high %v6335, %v6336
        %v6342 = vunpack.c.l.s4 1966171168
        %v6343 = vunpack.c.0.s8 %v6342
        %v6344 = vlaneseq
        %v6345 = vshrl.u32 %v6344, 7
        %v6346 = vsub.s32 %v6343, %v6345
        %v6347 = vrot.slane %v6339, %v6346
        %v6349 = vunpack.c.l.s4 1966171168
        %v6350 = vunpack.c.0.s8 %v6349
        %v6351 = vlaneseq
        %v6352 = vshrl.u32 %v6351, 7
        %v6353 = vsub.s32 %v6350, %v6352
        %v6354 = vrot.slane %v6340, %v6353
        %v6355 = vcombine.high %v6347, %v6347
        %v6356 = vcombine.high %v6354, %v6354
        %v6358 = vunpack.c.l.s4 1966171168
        %v6359 = vunpack.c.0.s8 %v6358
        %v6360 = vlaneseq
        %v6361 = vshrl.u32 %v6360, 7
        %v6362 = vsub.s32 %v6359, %v6361
        %v6363 = vrot.slane %v6347, %v6362
        %v6365 = vunpack.c.l.s4 1966171168
        %v6366 = vunpack.c.0.s8 %v6365
        %v6367 = vlaneseq
        %v6368 = vshrl.u32 %v6367, 7
        %v6369 = vsub.s32 %v6366, %v6368
        %v6370 = vrot.slane %v6354, %v6369
        %v6372 = vunpack.c.l.s4 1966171168
        %v6373 = vunpack.c.0.s8 %v6372
        %v6374 = vlaneseq
        %v6375 = vshrl.u32 %v6374, 7
        %v6376 = vsub.s32 %v6373, %v6375
        %v6377 = vrot.slane %v6355, %v6376
        %v6379 = vunpack.c.l.s4 1966171168
        %v6380 = vunpack.c.0.s8 %v6379
        %v6381 = vlaneseq
        %v6382 = vshrl.u32 %v6381, 7
        %v6383 = vsub.s32 %v6380, %v6382
        %v6384 = vrot.slane %v6356, %v6383
        %v6385 = vcombine.high %v6363, %v6363
        %v6386 = vcombine.high %v6377, %v6377
        %v6387 = vlaneseq
        %v6388 = vshrl.u32 %v6387, 7
        %v6389 = vsub.s32 0, %v6388
        %v6390 = vrot.slane %v6363, %v6389
        %v6391 = vlaneseq
        %v6392 = vshrl.u32 %v6391, 7
        %v6393 = vsub.s32 1, %v6392
        %v6394 = vrot.slane %v6363, %v6393
        %v6395 = vlaneseq
        %v6396 = vshrl.u32 %v6395, 7
        %v6397 = vsub.s32 0, %v6396
        %v6398 = vrot.slane %v6377, %v6397
        %v6399 = vlaneseq
        %v6400 = vshrl.u32 %v6399, 7
        %v6401 = vsub.s32 1, %v6400
        %v6402 = vrot.slane %v6377, %v6401
        %v6403 = vlaneseq
        %v6404 = vshrl.u32 %v6403, 7
        %v6405 = vsub.s32 0, %v6404
        %v6406 = vrot.slane %v6385, %v6405
        %v6407 = vlaneseq
        %v6408 = vshrl.u32 %v6407, 7
        %v6409 = vsub.s32 1, %v6408
        %v6410 = vrot.slane %v6385, %v6409
        %v6411 = vlaneseq
        %v6412 = vshrl.u32 %v6411, 7
        %v6413 = vsub.s32 0, %v6412
        %v6414 = vrot.slane %v6386, %v6413
        %v6415 = vlaneseq
        %v6416 = vshrl.u32 %v6415, 7
        %v6417 = vsub.s32 1, %v6416
        %v6418 = vrot.slane %v6386, %v6417
        %v6419 = vlaneseq
        %v6420 = vshrl.u32 %v6419, 7
        %v6421 = vsub.s32 0, %v6420
        %v6422 = vrot.slane %v6370, %v6421
        %v6423 = vlaneseq
        %v6424 = vshrl.u32 %v6423, 7
        %v6425 = vsub.s32 1, %v6424
        %v6426 = vrot.slane %v6370, %v6425
        %v6427 = vlaneseq
        %v6428 = vshrl.u32 %v6427, 7
        %v6429 = vsub.s32 0, %v6428
        %v6430 = vrot.slane %v6384, %v6429
        %v6431 = vlaneseq
        %v6432 = vshrl.u32 %v6431, 7
        %v6433 = vsub.s32 1, %v6432
        %v6434 = vrot.slane %v6384, %v6433
        %v6447 = vpack.c.bf16 %v6390, %v6390
        %v6448 = vpack.c.bf16 %v6394, %v6394
        %v6449 = vpack.c.bf16 %v6398, %v6398
        %v6450 = vpack.c.bf16 %v6402, %v6402
        %v6451 = vpack.c.bf16 %v6406, %v6406
        %v6452 = vpack.c.bf16 %v6410, %v6410
        %v6453 = vpack.c.bf16 %v6414, %v6414
        %v6454 = vpack.c.bf16 %v6418, %v6418
        %v6455 = vpack.c.bf16 %v6422, %v6422
        %v6456 = vpack.c.bf16 %v6426, %v6426
        %v6457 = vpack.c.bf16 %v6430, %v6430
        %v6458 = vpack.c.bf16 %v6434, %v6434
        %v6459 = vld [vmem:[%s8] sm:$0xff]
        %v6460 = vld [vmem:[%s8 + $0x8] sm:$0xff]
        %v6461 = vld [vmem:[%s8 + $0x10] sm:$0xff]
        %v6462 = vld [vmem:[%s8 + $0x18] sm:$0xff]
        %v6463 = vld [vmem:[%s8 + $0x20] sm:$0xff]
        %v6464 = vld [vmem:[%s8 + $0x28] sm:$0xff]
        %v6465 = vld [vmem:[%s8 + $0x30] sm:$0xff]
        %v6466 = vld [vmem:[%s8 + $0x38] sm:$0xff]
        %v6467 = vld [vmem:[%s8 + $0x40] sm:$0xff]
        %v6468 = vld [vmem:[%s8 + $0x48] sm:$0xff]
        %v6469 = vld [vmem:[%s8 + $0x50] sm:$0xff]
        %v6470 = vld [vmem:[%s8 + $0x58] sm:$0xff]
        %v6471 = vld [vmem:[%s8 + $0x60] sm:$0xff]
        %v6472 = vld [vmem:[%s8 + $0x68] sm:$0xff]
        %v6473 = vld [vmem:[%s8 + $0x70] sm:$0xff]
        %v6474 = vld [vmem:[%s8 + $0x78] sm:$0xff]
        %v6475 = vld [vmem:[%s8 + $0x80] sm:$0xff]
        %v6476 = vld [vmem:[%s8 + $0x88] sm:$0xff]
        %v6477 = vld [vmem:[%s8 + $0x90] sm:$0xff]
        %v6478 = vld [vmem:[%s8 + $0x98] sm:$0xff]
        %v6479 = vld [vmem:[%s8 + $0xa0] sm:$0xff]
        %v6480 = vld [vmem:[%s8 + $0xa8] sm:$0xff]
        %v6481 = vld [vmem:[%s8 + $0xb0] sm:$0xff]
        %v6482 = vld [vmem:[%s8 + $0xb8] sm:$0xff]
        %v6483 = vld [vmem:[%s8 + $0xc0] sm:$0xff]
        %v6484 = vld [vmem:[%s8 + $0xc8] sm:$0xff]
        %v6485 = vld [vmem:[%s8 + $0xd0] sm:$0xff]
        %v6486 = vld [vmem:[%s8 + $0xd8] sm:$0xff]
        %v6487 = vld [vmem:[%s8 + $0xe0] sm:$0xff]
        %v6488 = vld [vmem:[%s8 + $0xe8] sm:$0xff]
        %v6489 = vld [vmem:[%s8 + $0xf0] sm:$0xff]
        %v6490 = vld [vmem:[%s8 + $0xf8] sm:$0xff]
        %v6491 = vld [vmem:[#allocation11] sm:$0xff]
        %v6492 = vld [vmem:[#allocation11 + $0x8] sm:$0xff]
        %v6493 = vld [vmem:[#allocation11 + $0x10] sm:$0xff]
        %v6494 = vld [vmem:[#allocation11 + $0x18] sm:$0xff]
        %v6495 = vld [vmem:[#allocation11 + $0x20] sm:$0xff]
        %v6496 = vld [vmem:[#allocation11 + $0x28] sm:$0xff]
        %v6497 = vld [vmem:[#allocation11 + $0x30] sm:$0xff]
        %v6498 = vld [vmem:[#allocation11 + $0x38] sm:$0xff]
        %v6499 = vld [vmem:[#allocation11 + $0x40] sm:$0xff]
        %v6500 = vld [vmem:[#allocation11 + $0x48] sm:$0xff]
        %v6501 = vld [vmem:[#allocation11 + $0x50] sm:$0xff]
        %v6502 = vld [vmem:[#allocation11 + $0x58] sm:$0xff]
        %v6503 = vld [vmem:[#allocation11 + $0x60] sm:$0xff]
        %v6504 = vld [vmem:[#allocation11 + $0x68] sm:$0xff]
        %v6505 = vld [vmem:[#allocation11 + $0x70] sm:$0xff]
        %v6506 = vld [vmem:[#allocation11 + $0x78] sm:$0xff]
        %v6507 = vld [vmem:[#allocation11 + $0x80] sm:$0xff]
        %v6508 = vld [vmem:[#allocation11 + $0x88] sm:$0xff]
        %v6509 = vld [vmem:[#allocation11 + $0x90] sm:$0xff]
        %v6510 = vld [vmem:[#allocation11 + $0x98] sm:$0xff]
        %v6511 = vld [vmem:[#allocation11 + $0xa0] sm:$0xff]
        %v6512 = vld [vmem:[#allocation11 + $0xa8] sm:$0xff]
        %v6513 = vld [vmem:[#allocation11 + $0xb0] sm:$0xff]
        %v6514 = vld [vmem:[#allocation11 + $0xb8] sm:$0xff]
        %v6515 = vld [vmem:[#allocation11 + $0xc0] sm:$0xff]
        %v6516 = vld [vmem:[#allocation11 + $0xc8] sm:$0xff]
        %v6517 = vld [vmem:[#allocation11 + $0xd0] sm:$0xff]
        %v6518 = vld [vmem:[#allocation11 + $0xd8] sm:$0xff]
        %v6519 = vld [vmem:[#allocation11 + $0xe0] sm:$0xff]
        %v6520 = vld [vmem:[#allocation11 + $0xe8] sm:$0xff]
        %v6521 = vld [vmem:[#allocation11 + $0xf0] sm:$0xff]
        %v6522 = vld [vmem:[#allocation11 + $0xf8] sm:$0xff]
        %s6523 = scalar_lea.vmem %s8, 256
        %v6524 = vld [vmem:[%s6523] sm:$0xff]
        %v6525 = vld [vmem:[%s6523 + $0x8] sm:$0xff]
        %v6526 = vld [vmem:[%s6523 + $0x10] sm:$0xff]
        %v6527 = vld [vmem:[%s6523 + $0x18] sm:$0xff]
        %v6528 = vld [vmem:[%s6523 + $0x20] sm:$0xff]
        %v6529 = vld [vmem:[%s6523 + $0x28] sm:$0xff]
        %v6530 = vld [vmem:[%s6523 + $0x30] sm:$0xff]
        %v6531 = vld [vmem:[%s6523 + $0x38] sm:$0xff]
        %v6532 = vld [vmem:[%s6523 + $0x40] sm:$0xff]
        %v6533 = vld [vmem:[%s6523 + $0x48] sm:$0xff]
        %v6534 = vld [vmem:[%s6523 + $0x50] sm:$0xff]
        %v6535 = vld [vmem:[%s6523 + $0x58] sm:$0xff]
        %v6536 = vld [vmem:[%s6523 + $0x60] sm:$0xff]
        %v6537 = vld [vmem:[%s6523 + $0x68] sm:$0xff]
        %v6538 = vld [vmem:[%s6523 + $0x70] sm:$0xff]
        %v6539 = vld [vmem:[%s6523 + $0x78] sm:$0xff]
        %v6540 = vld [vmem:[%s6523 + $0x80] sm:$0xff]
        %v6541 = vld [vmem:[%s6523 + $0x88] sm:$0xff]
        %v6542 = vld [vmem:[%s6523 + $0x90] sm:$0xff]
        %v6543 = vld [vmem:[%s6523 + $0x98] sm:$0xff]
        %v6544 = vld [vmem:[%s6523 + $0xa0] sm:$0xff]
        %v6545 = vld [vmem:[%s6523 + $0xa8] sm:$0xff]
        %v6546 = vld [vmem:[%s6523 + $0xb0] sm:$0xff]
        %v6547 = vld [vmem:[%s6523 + $0xb8] sm:$0xff]
        %v6548 = vld [vmem:[%s6523 + $0xc0] sm:$0xff]
        %v6549 = vld [vmem:[%s6523 + $0xc8] sm:$0xff]
        %v6550 = vld [vmem:[%s6523 + $0xd0] sm:$0xff]
        %v6551 = vld [vmem:[%s6523 + $0xd8] sm:$0xff]
        %v6552 = vld [vmem:[%s6523 + $0xe0] sm:$0xff]
        %v6553 = vld [vmem:[%s6523 + $0xe8] sm:$0xff]
        %v6554 = vld [vmem:[%s6523 + $0xf0] sm:$0xff]
        %v6555 = vld [vmem:[%s6523 + $0xf8] sm:$0xff]
        %v6562 = vunpack.c.l.b16 %v6447
        %v6563 = vunpack.c.l.b16 %v6448
        %v6564 = vunpack.c.l.b16 %v6451
        %v6565 = vunpack.c.l.b16 %v6452
        %v6566 = vunpack.c.l.b16 %v6455
        %v6567 = vunpack.c.l.b16 %v6456
        %v6568 = vrot.slane %v6564, 7
        %v6569 = vsel %vm966, %v6568, %v6562
        %v6570 = vrot.slane %v6566, 6
        %v6571 = vsel %vm969, %v6570, %v6569
        %v6572 = vrot.slane %v6565, 7
        %v6573 = vsel %vm966, %v6572, %v6563
        %v6574 = vrot.slane %v6567, 6
        %v6575 = vsel %vm969, %v6574, %v6573
        %v6576 = vpack.c.b16 %v6571, %v6571
        %v6577 = vpack.c.b16 %v6575, %v6575
        %v6612 = vunpack.c.l.b16 %v6524
        %v6613 = vunpack.c.h.b16 %v6524
        %v6614 = vunpack.c.l.b16 %v6525
        %v6615 = vunpack.c.h.b16 %v6525
        %v6616 = vunpack.c.l.b16 %v6526
        %v6617 = vunpack.c.h.b16 %v6526
        %v6618 = vunpack.c.l.b16 %v6527
        %v6619 = vunpack.c.h.b16 %v6527
        %v6620 = vunpack.c.l.b16 %v6528
        %v6621 = vunpack.c.h.b16 %v6528
        %v6622 = vunpack.c.l.b16 %v6529
        %v6623 = vunpack.c.h.b16 %v6529
        %v6624 = vunpack.c.l.b16 %v6530
        %v6625 = vunpack.c.h.b16 %v6530
        %v6626 = vunpack.c.l.b16 %v6531
        %v6627 = vunpack.c.h.b16 %v6531
        %v6628 = vunpack.c.l.b16 %v6532
        %v6629 = vunpack.c.h.b16 %v6532
        %v6630 = vunpack.c.l.b16 %v6533
        %v6631 = vunpack.c.h.b16 %v6533
        %v6632 = vunpack.c.l.b16 %v6534
        %v6633 = vunpack.c.h.b16 %v6534
        %v6634 = vunpack.c.l.b16 %v6535
        %v6635 = vunpack.c.h.b16 %v6535
        %v6636 = vunpack.c.l.b16 %v6536
        %v6637 = vunpack.c.h.b16 %v6536
        %v6638 = vunpack.c.l.b16 %v6537
        %v6639 = vunpack.c.h.b16 %v6537
        %v6640 = vunpack.c.l.b16 %v6538
        %v6641 = vunpack.c.h.b16 %v6538
        %v6642 = vunpack.c.l.b16 %v6539
        %v6643 = vunpack.c.h.b16 %v6539
        %v6644 = vunpack.c.l.b16 %v6540
        %v6645 = vunpack.c.h.b16 %v6540
        %v6646 = vunpack.c.l.b16 %v6541
        %v6647 = vunpack.c.h.b16 %v6541
        %v6648 = vunpack.c.l.b16 %v6542
        %v6649 = vunpack.c.h.b16 %v6542
        %v6650 = vunpack.c.l.b16 %v6543
        %v6651 = vunpack.c.h.b16 %v6543
        %v6652 = vunpack.c.l.b16 %v6544
        %v6653 = vunpack.c.h.b16 %v6544
        %v6654 = vunpack.c.l.b16 %v6545
        %v6655 = vunpack.c.h.b16 %v6545
        %v6656 = vunpack.c.l.b16 %v6546
        %v6657 = vunpack.c.h.b16 %v6546
        %v6658 = vunpack.c.l.b16 %v6547
        %v6659 = vunpack.c.h.b16 %v6547
        %v6660 = vunpack.c.l.b16 %v6548
        %v6661 = vunpack.c.h.b16 %v6548
        %v6662 = vunpack.c.l.b16 %v6549
        %v6663 = vunpack.c.h.b16 %v6549
        %v6664 = vunpack.c.l.b16 %v6550
        %v6665 = vunpack.c.h.b16 %v6550
        %v6666 = vunpack.c.l.b16 %v6551
        %v6667 = vunpack.c.h.b16 %v6551
        %v6668 = vunpack.c.l.b16 %v6552
        %v6669 = vunpack.c.h.b16 %v6552
        %v6670 = vunpack.c.l.b16 %v6553
        %v6671 = vunpack.c.h.b16 %v6553
        %v6672 = vunpack.c.l.b16 %v6554
        %v6673 = vunpack.c.h.b16 %v6554
        %v6674 = vunpack.c.l.b16 %v6555
        %v6675 = vunpack.c.h.b16 %v6555
        %v6676 = vpack.c.b16 %v6614, %v6612
        %v6677 = vpack.c.b16 %v6615, %v6613
        %v6678 = vpack.c.b16 %v6618, %v6616
        %v6679 = vpack.c.b16 %v6619, %v6617
        %v6680 = vpack.c.b16 %v6622, %v6620
        %v6681 = vpack.c.b16 %v6623, %v6621
        %v6682 = vpack.c.b16 %v6626, %v6624
        %v6683 = vpack.c.b16 %v6627, %v6625
        %v6684 = vpack.c.b16 %v6630, %v6628
        %v6685 = vpack.c.b16 %v6631, %v6629
        %v6686 = vpack.c.b16 %v6634, %v6632
        %v6687 = vpack.c.b16 %v6635, %v6633
        %v6688 = vpack.c.b16 %v6638, %v6636
        %v6689 = vpack.c.b16 %v6639, %v6637
        %v6690 = vpack.c.b16 %v6642, %v6640
        %v6691 = vpack.c.b16 %v6643, %v6641
        %v6692 = vpack.c.b16 %v6646, %v6644
        %v6693 = vpack.c.b16 %v6647, %v6645
        %v6694 = vpack.c.b16 %v6650, %v6648
        %v6695 = vpack.c.b16 %v6651, %v6649
        %v6696 = vpack.c.b16 %v6654, %v6652
        %v6697 = vpack.c.b16 %v6655, %v6653
        %v6698 = vpack.c.b16 %v6658, %v6656
        %v6699 = vpack.c.b16 %v6659, %v6657
        %v6700 = vpack.c.b16 %v6662, %v6660
        %v6701 = vpack.c.b16 %v6663, %v6661
        %v6702 = vpack.c.b16 %v6666, %v6664
        %v6703 = vpack.c.b16 %v6667, %v6665
        %v6704 = vpack.c.b16 %v6670, %v6668
        %v6705 = vpack.c.b16 %v6671, %v6669
        %v6706 = vpack.c.b16 %v6674, %v6672
        %v6707 = vpack.c.b16 %v6675, %v6673
        %6740 = vmatprep.subr.bf16.mxu0 %v6677
        %6741 = vmatpush1.bf16.msra.mxu0 %v6676
        %6742 = vmatprep.subr.bf16.mxu0 %v6679
        %6743 = vmatpush1.bf16.msra.mxu0 %v6678
        %6744 = vmatprep.subr.bf16.mxu0 %v6681
        %6745 = vmatpush1.bf16.msra.mxu0 %v6680
        %6746 = vmatprep.subr.bf16.mxu0 %v6683
        %6747 = vmatpush1.bf16.msra.mxu0 %v6682
        %6748 = vmatprep.subr.bf16.mxu0 %v6685
        %6749 = vmatpush1.bf16.msra.mxu0 %v6684
        %6750 = vmatprep.subr.bf16.mxu0 %v6687
        %6751 = vmatpush1.bf16.msra.mxu0 %v6686
        %6752 = vmatprep.subr.bf16.mxu0 %v6689
        %6753 = vmatpush1.bf16.msra.mxu0 %v6688
        %6754 = vmatprep.subr.bf16.mxu0 %v6691
        %6755 = vmatpush1.bf16.msra.mxu0 %v6690
        %6756 = vmatprep.subr.bf16.mxu0 %v6693
        %6757 = vmatpush1.bf16.msra.mxu0 %v6692
        %6758 = vmatprep.subr.bf16.mxu0 %v6695
        %6759 = vmatpush1.bf16.msra.mxu0 %v6694
        %6760 = vmatprep.subr.bf16.mxu0 %v6697
        %6761 = vmatpush1.bf16.msra.mxu0 %v6696
        %6762 = vmatprep.subr.bf16.mxu0 %v6699
        %6763 = vmatpush1.bf16.msra.mxu0 %v6698
        %6764 = vmatprep.subr.bf16.mxu0 %v6701
        %6765 = vmatpush1.bf16.msra.mxu0 %v6700
        %6766 = vmatprep.subr.bf16.mxu0 %v6703
        %6767 = vmatpush1.bf16.msra.mxu0 %v6702
        %6768 = vmatprep.subr.bf16.mxu0 %v6705
        %6769 = vmatpush1.bf16.msra.mxu0 %v6704
        %6770 = vmatprep.subr.bf16.mxu0 %v6707
        %6771 = vmatpush1.bf16.msra.mxu0 %v6706
        %6772 = vmatprep.mubr.bf16.mxu0 %v6577
        %6773 = vmatmul.mubr.bf16.gmra.mrb[0].mxu0 %v6576
        %v6774 = vpop.f32.mrb[0].mxu0
        %v6775 = vadd.f32 0.0, %v6774
        %v6776 = vpop.f32.mrb[0].mxu0
        %v6777 = vadd.f32 0.0, %v6776
        %v6778 = vpop.f32.mrb[0].mxu0
        %v6779 = vpop.f32.mrb[0].mxu0
        %6780 = vdwg.mxu0
        %v6785 = vunpack.c.l.b16 %v6449
        %v6786 = vunpack.c.l.b16 %v6450
        %v6787 = vunpack.c.l.b16 %v6453
        %v6788 = vunpack.c.l.b16 %v6454
        %v6789 = vrot.slane %v6785, 7
        %v6790 = vsel %vm966, %v6789, %v3695
        %v6791 = vrot.slane %v6787, 6
        %v6792 = vsel %vm969, %v6791, %v6790
        %v6793 = vrot.slane %v6786, 7
        %v6794 = vsel %vm966, %v6793, %v3695
        %v6795 = vrot.slane %v6788, 6
        %v6796 = vsel %vm969, %v6795, %v6794
        %v6797 = vpack.c.b16 %v6792, %v6792
        %v6798 = vpack.c.b16 %v6796, %v6796
        %v6833 = vunpack.c.l.b16 %v6459
        %v6834 = vunpack.c.h.b16 %v6459
        %v6835 = vunpack.c.l.b16 %v6460
        %v6836 = vunpack.c.h.b16 %v6460
        %v6837 = vunpack.c.l.b16 %v6461
        %v6838 = vunpack.c.h.b16 %v6461
        %v6839 = vunpack.c.l.b16 %v6462
        %v6840 = vunpack.c.h.b16 %v6462
        %v6841 = vunpack.c.l.b16 %v6463
        %v6842 = vunpack.c.h.b16 %v6463
        %v6843 = vunpack.c.l.b16 %v6464
        %v6844 = vunpack.c.h.b16 %v6464
        %v6845 = vunpack.c.l.b16 %v6465
        %v6846 = vunpack.c.h.b16 %v6465
        %v6847 = vunpack.c.l.b16 %v6466
        %v6848 = vunpack.c.h.b16 %v6466
        %v6849 = vunpack.c.l.b16 %v6467
        %v6850 = vunpack.c.h.b16 %v6467
        %v6851 = vunpack.c.l.b16 %v6468
        %v6852 = vunpack.c.h.b16 %v6468
        %v6853 = vunpack.c.l.b16 %v6469
        %v6854 = vunpack.c.h.b16 %v6469
        %v6855 = vunpack.c.l.b16 %v6470
        %v6856 = vunpack.c.h.b16 %v6470
        %v6857 = vunpack.c.l.b16 %v6471
        %v6858 = vunpack.c.h.b16 %v6471
        %v6859 = vunpack.c.l.b16 %v6472
        %v6860 = vunpack.c.h.b16 %v6472
        %v6861 = vunpack.c.l.b16 %v6473
        %v6862 = vunpack.c.h.b16 %v6473
        %v6863 = vunpack.c.l.b16 %v6474
        %v6864 = vunpack.c.h.b16 %v6474
        %v6865 = vunpack.c.l.b16 %v6475
        %v6866 = vunpack.c.h.b16 %v6475
        %v6867 = vunpack.c.l.b16 %v6476
        %v6868 = vunpack.c.h.b16 %v6476
        %v6869 = vunpack.c.l.b16 %v6477
        %v6870 = vunpack.c.h.b16 %v6477
        %v6871 = vunpack.c.l.b16 %v6478
        %v6872 = vunpack.c.h.b16 %v6478
        %v6873 = vunpack.c.l.b16 %v6479
        %v6874 = vunpack.c.h.b16 %v6479
        %v6875 = vunpack.c.l.b16 %v6480
        %v6876 = vunpack.c.h.b16 %v6480
        %v6877 = vunpack.c.l.b16 %v6481
        %v6878 = vunpack.c.h.b16 %v6481
        %v6879 = vunpack.c.l.b16 %v6482
        %v6880 = vunpack.c.h.b16 %v6482
        %v6881 = vunpack.c.l.b16 %v6483
        %v6882 = vunpack.c.h.b16 %v6483
        %v6883 = vunpack.c.l.b16 %v6484
        %v6884 = vunpack.c.h.b16 %v6484
        %v6885 = vunpack.c.l.b16 %v6485
        %v6886 = vunpack.c.h.b16 %v6485
        %v6887 = vunpack.c.l.b16 %v6486
        %v6888 = vunpack.c.h.b16 %v6486
        %v6889 = vunpack.c.l.b16 %v6487
        %v6890 = vunpack.c.h.b16 %v6487
        %v6891 = vunpack.c.l.b16 %v6488
        %v6892 = vunpack.c.h.b16 %v6488
        %v6893 = vunpack.c.l.b16 %v6489
        %v6894 = vunpack.c.h.b16 %v6489
        %v6895 = vunpack.c.l.b16 %v6490
        %v6896 = vunpack.c.h.b16 %v6490
        %v6897 = vpack.c.b16 %v6835, %v6833
        %v6898 = vpack.c.b16 %v6836, %v6834
        %v6899 = vpack.c.b16 %v6839, %v6837
        %v6900 = vpack.c.b16 %v6840, %v6838
        %v6901 = vpack.c.b16 %v6843, %v6841
        %v6902 = vpack.c.b16 %v6844, %v6842
        %v6903 = vpack.c.b16 %v6847, %v6845
        %v6904 = vpack.c.b16 %v6848, %v6846
        %v6905 = vpack.c.b16 %v6851, %v6849
        %v6906 = vpack.c.b16 %v6852, %v6850
        %v6907 = vpack.c.b16 %v6855, %v6853
        %v6908 = vpack.c.b16 %v6856, %v6854
        %v6909 = vpack.c.b16 %v6859, %v6857
        %v6910 = vpack.c.b16 %v6860, %v6858
        %v6911 = vpack.c.b16 %v6863, %v6861
        %v6912 = vpack.c.b16 %v6864, %v6862
        %v6913 = vpack.c.b16 %v6867, %v6865
        %v6914 = vpack.c.b16 %v6868, %v6866
        %v6915 = vpack.c.b16 %v6871, %v6869
        %v6916 = vpack.c.b16 %v6872, %v6870
        %v6917 = vpack.c.b16 %v6875, %v6873
        %v6918 = vpack.c.b16 %v6876, %v6874
        %v6919 = vpack.c.b16 %v6879, %v6877
        %v6920 = vpack.c.b16 %v6880, %v6878
        %v6921 = vpack.c.b16 %v6883, %v6881
        %v6922 = vpack.c.b16 %v6884, %v6882
        %v6923 = vpack.c.b16 %v6887, %v6885
        %v6924 = vpack.c.b16 %v6888, %v6886
        %v6925 = vpack.c.b16 %v6891, %v6889
        %v6926 = vpack.c.b16 %v6892, %v6890
        %v6927 = vpack.c.b16 %v6895, %v6893
        %v6928 = vpack.c.b16 %v6896, %v6894
        %6961 = vmatprep.subr.bf16.mxu0 %v6898
        %6962 = vmatpush1.bf16.msra.mxu0 %v6897
        %6963 = vmatprep.subr.bf16.mxu0 %v6900
        %6964 = vmatpush1.bf16.msra.mxu0 %v6899
        %6965 = vmatprep.subr.bf16.mxu0 %v6902
        %6966 = vmatpush1.bf16.msra.mxu0 %v6901
        %6967 = vmatprep.subr.bf16.mxu0 %v6904
        %6968 = vmatpush1.bf16.msra.mxu0 %v6903
        %6969 = vmatprep.subr.bf16.mxu0 %v6906
        %6970 = vmatpush1.bf16.msra.mxu0 %v6905
        %6971 = vmatprep.subr.bf16.mxu0 %v6908
        %6972 = vmatpush1.bf16.msra.mxu0 %v6907
        %6973 = vmatprep.subr.bf16.mxu0 %v6910
        %6974 = vmatpush1.bf16.msra.mxu0 %v6909
        %6975 = vmatprep.subr.bf16.mxu0 %v6912
        %6976 = vmatpush1.bf16.msra.mxu0 %v6911
        %6977 = vmatprep.subr.bf16.mxu0 %v6914
        %6978 = vmatpush1.bf16.msra.mxu0 %v6913
        %6979 = vmatprep.subr.bf16.mxu0 %v6916
        %6980 = vmatpush1.bf16.msra.mxu0 %v6915
        %6981 = vmatprep.subr.bf16.mxu0 %v6918
        %6982 = vmatpush1.bf16.msra.mxu0 %v6917
        %6983 = vmatprep.subr.bf16.mxu0 %v6920
        %6984 = vmatpush1.bf16.msra.mxu0 %v6919
        %6985 = vmatprep.subr.bf16.mxu0 %v6922
        %6986 = vmatpush1.bf16.msra.mxu0 %v6921
        %6987 = vmatprep.subr.bf16.mxu0 %v6924
        %6988 = vmatpush1.bf16.msra.mxu0 %v6923
        %6989 = vmatprep.subr.bf16.mxu0 %v6926
        %6990 = vmatpush1.bf16.msra.mxu0 %v6925
        %6991 = vmatprep.subr.bf16.mxu0 %v6928
        %6992 = vmatpush1.bf16.msra.mxu0 %v6927
        %6993 = vmatprep.mubr.bf16.mxu0 %v6798
        %6994 = vmatmul.mubr.bf16.gmra.mrb[0].mxu0 %v6797
        %v6995 = vpop.f32.mrb[0].mxu0
        %v6996 = vadd.f32 %v6775, %v6995
        %v6997 = vpop.f32.mrb[0].mxu0
        %v6998 = vadd.f32 %v6777, %v6997
        %v6999 = vpop.f32.mrb[0].mxu0
        %v7000 = vpop.f32.mrb[0].mxu0
        %7001 = vdwg.mxu0
        %s7002 = scalar_lea.vmem [#allocation11], 256
        %v7003 = vld [vmem:[%s7002] sm:$0xff]
        %v7004 = vld [vmem:[%s7002 + $0x8] sm:$0xff]
        %v7005 = vld [vmem:[%s7002 + $0x10] sm:$0xff]
        %v7006 = vld [vmem:[%s7002 + $0x18] sm:$0xff]
        %v7007 = vld [vmem:[%s7002 + $0x20] sm:$0xff]
        %v7008 = vld [vmem:[%s7002 + $0x28] sm:$0xff]
        %v7009 = vld [vmem:[%s7002 + $0x30] sm:$0xff]
        %v7010 = vld [vmem:[%s7002 + $0x38] sm:$0xff]
        %v7011 = vld [vmem:[%s7002 + $0x40] sm:$0xff]
        %v7012 = vld [vmem:[%s7002 + $0x48] sm:$0xff]
        %v7013 = vld [vmem:[%s7002 + $0x50] sm:$0xff]
        %v7014 = vld [vmem:[%s7002 + $0x58] sm:$0xff]
        %v7015 = vld [vmem:[%s7002 + $0x60] sm:$0xff]
        %v7016 = vld [vmem:[%s7002 + $0x68] sm:$0xff]
        %v7017 = vld [vmem:[%s7002 + $0x70] sm:$0xff]
        %v7018 = vld [vmem:[%s7002 + $0x78] sm:$0xff]
        %v7019 = vld [vmem:[%s7002 + $0x80] sm:$0xff]
        %v7020 = vld [vmem:[%s7002 + $0x88] sm:$0xff]
        %v7021 = vld [vmem:[%s7002 + $0x90] sm:$0xff]
        %v7022 = vld [vmem:[%s7002 + $0x98] sm:$0xff]
        %v7023 = vld [vmem:[%s7002 + $0xa0] sm:$0xff]
        %v7024 = vld [vmem:[%s7002 + $0xa8] sm:$0xff]
        %v7025 = vld [vmem:[%s7002 + $0xb0] sm:$0xff]
        %v7026 = vld [vmem:[%s7002 + $0xb8] sm:$0xff]
        %v7027 = vld [vmem:[%s7002 + $0xc0] sm:$0xff]
        %v7028 = vld [vmem:[%s7002 + $0xc8] sm:$0xff]
        %v7029 = vld [vmem:[%s7002 + $0xd0] sm:$0xff]
        %v7030 = vld [vmem:[%s7002 + $0xd8] sm:$0xff]
        %v7031 = vld [vmem:[%s7002 + $0xe0] sm:$0xff]
        %v7032 = vld [vmem:[%s7002 + $0xe8] sm:$0xff]
        %v7033 = vld [vmem:[%s7002 + $0xf0] sm:$0xff]
        %v7034 = vld [vmem:[%s7002 + $0xf8] sm:$0xff]
        %v7067 = vunpack.c.l.b16 %v7003
        %v7068 = vunpack.c.h.b16 %v7003
        %v7069 = vunpack.c.l.b16 %v7004
        %v7070 = vunpack.c.h.b16 %v7004
        %v7071 = vunpack.c.l.b16 %v7005
        %v7072 = vunpack.c.h.b16 %v7005
        %v7073 = vunpack.c.l.b16 %v7006
        %v7074 = vunpack.c.h.b16 %v7006
        %v7075 = vunpack.c.l.b16 %v7007
        %v7076 = vunpack.c.h.b16 %v7007
        %v7077 = vunpack.c.l.b16 %v7008
        %v7078 = vunpack.c.h.b16 %v7008
        %v7079 = vunpack.c.l.b16 %v7009
        %v7080 = vunpack.c.h.b16 %v7009
        %v7081 = vunpack.c.l.b16 %v7010
        %v7082 = vunpack.c.h.b16 %v7010
        %v7083 = vunpack.c.l.b16 %v7011
        %v7084 = vunpack.c.h.b16 %v7011
        %v7085 = vunpack.c.l.b16 %v7012
        %v7086 = vunpack.c.h.b16 %v7012
        %v7087 = vunpack.c.l.b16 %v7013
        %v7088 = vunpack.c.h.b16 %v7013
        %v7089 = vunpack.c.l.b16 %v7014
        %v7090 = vunpack.c.h.b16 %v7014
        %v7091 = vunpack.c.l.b16 %v7015
        %v7092 = vunpack.c.h.b16 %v7015
        %v7093 = vunpack.c.l.b16 %v7016
        %v7094 = vunpack.c.h.b16 %v7016
        %v7095 = vunpack.c.l.b16 %v7017
        %v7096 = vunpack.c.h.b16 %v7017
        %v7097 = vunpack.c.l.b16 %v7018
        %v7098 = vunpack.c.h.b16 %v7018
        %v7099 = vunpack.c.l.b16 %v7019
        %v7100 = vunpack.c.h.b16 %v7019
        %v7101 = vunpack.c.l.b16 %v7020
        %v7102 = vunpack.c.h.b16 %v7020
        %v7103 = vunpack.c.l.b16 %v7021
        %v7104 = vunpack.c.h.b16 %v7021
        %v7105 = vunpack.c.l.b16 %v7022
        %v7106 = vunpack.c.h.b16 %v7022
        %v7107 = vunpack.c.l.b16 %v7023
        %v7108 = vunpack.c.h.b16 %v7023
        %v7109 = vunpack.c.l.b16 %v7024
        %v7110 = vunpack.c.h.b16 %v7024
        %v7111 = vunpack.c.l.b16 %v7025
        %v7112 = vunpack.c.h.b16 %v7025
        %v7113 = vunpack.c.l.b16 %v7026
        %v7114 = vunpack.c.h.b16 %v7026
        %v7115 = vunpack.c.l.b16 %v7027
        %v7116 = vunpack.c.h.b16 %v7027
        %v7117 = vunpack.c.l.b16 %v7028
        %v7118 = vunpack.c.h.b16 %v7028
        %v7119 = vunpack.c.l.b16 %v7029
        %v7120 = vunpack.c.h.b16 %v7029
        %v7121 = vunpack.c.l.b16 %v7030
        %v7122 = vunpack.c.h.b16 %v7030
        %v7123 = vunpack.c.l.b16 %v7031
        %v7124 = vunpack.c.h.b16 %v7031
        %v7125 = vunpack.c.l.b16 %v7032
        %v7126 = vunpack.c.h.b16 %v7032
        %v7127 = vunpack.c.l.b16 %v7033
        %v7128 = vunpack.c.h.b16 %v7033
        %v7129 = vunpack.c.l.b16 %v7034
        %v7130 = vunpack.c.h.b16 %v7034
        %v7131 = vpack.c.b16 %v7069, %v7067
        %v7132 = vpack.c.b16 %v7070, %v7068
        %v7133 = vpack.c.b16 %v7073, %v7071
        %v7134 = vpack.c.b16 %v7074, %v7072
        %v7135 = vpack.c.b16 %v7077, %v7075
        %v7136 = vpack.c.b16 %v7078, %v7076
        %v7137 = vpack.c.b16 %v7081, %v7079
        %v7138 = vpack.c.b16 %v7082, %v7080
        %v7139 = vpack.c.b16 %v7085, %v7083
        %v7140 = vpack.c.b16 %v7086, %v7084
        %v7141 = vpack.c.b16 %v7089, %v7087
        %v7142 = vpack.c.b16 %v7090, %v7088
        %v7143 = vpack.c.b16 %v7093, %v7091
        %v7144 = vpack.c.b16 %v7094, %v7092
        %v7145 = vpack.c.b16 %v7097, %v7095
        %v7146 = vpack.c.b16 %v7098, %v7096
        %v7147 = vpack.c.b16 %v7101, %v7099
        %v7148 = vpack.c.b16 %v7102, %v7100
        %v7149 = vpack.c.b16 %v7105, %v7103
        %v7150 = vpack.c.b16 %v7106, %v7104
        %v7151 = vpack.c.b16 %v7109, %v7107
        %v7152 = vpack.c.b16 %v7110, %v7108
        %v7153 = vpack.c.b16 %v7113, %v7111
        %v7154 = vpack.c.b16 %v7114, %v7112
        %v7155 = vpack.c.b16 %v7117, %v7115
        %v7156 = vpack.c.b16 %v7118, %v7116
        %v7157 = vpack.c.b16 %v7121, %v7119
        %v7158 = vpack.c.b16 %v7122, %v7120
        %v7159 = vpack.c.b16 %v7125, %v7123
        %v7160 = vpack.c.b16 %v7126, %v7124
        %v7161 = vpack.c.b16 %v7129, %v7127
        %v7162 = vpack.c.b16 %v7130, %v7128
        %7195 = vmatprep.subr.bf16.mxu0 %v7132
        %7196 = vmatpush1.bf16.msra.mxu0 %v7131
        %7197 = vmatprep.subr.bf16.mxu0 %v7134
        %7198 = vmatpush1.bf16.msra.mxu0 %v7133
        %7199 = vmatprep.subr.bf16.mxu0 %v7136
        %7200 = vmatpush1.bf16.msra.mxu0 %v7135
        %7201 = vmatprep.subr.bf16.mxu0 %v7138
        %7202 = vmatpush1.bf16.msra.mxu0 %v7137
        %7203 = vmatprep.subr.bf16.mxu0 %v7140
        %7204 = vmatpush1.bf16.msra.mxu0 %v7139
        %7205 = vmatprep.subr.bf16.mxu0 %v7142
        %7206 = vmatpush1.bf16.msra.mxu0 %v7141
        %7207 = vmatprep.subr.bf16.mxu0 %v7144
        %7208 = vmatpush1.bf16.msra.mxu0 %v7143
        %7209 = vmatprep.subr.bf16.mxu0 %v7146
        %7210 = vmatpush1.bf16.msra.mxu0 %v7145
        %7211 = vmatprep.subr.bf16.mxu0 %v7148
        %7212 = vmatpush1.bf16.msra.mxu0 %v7147
        %7213 = vmatprep.subr.bf16.mxu0 %v7150
        %7214 = vmatpush1.bf16.msra.mxu0 %v7149
        %7215 = vmatprep.subr.bf16.mxu0 %v7152
        %7216 = vmatpush1.bf16.msra.mxu0 %v7151
        %7217 = vmatprep.subr.bf16.mxu0 %v7154
        %7218 = vmatpush1.bf16.msra.mxu0 %v7153
        %7219 = vmatprep.subr.bf16.mxu0 %v7156
        %7220 = vmatpush1.bf16.msra.mxu0 %v7155
        %7221 = vmatprep.subr.bf16.mxu0 %v7158
        %7222 = vmatpush1.bf16.msra.mxu0 %v7157
        %7223 = vmatprep.subr.bf16.mxu0 %v7160
        %7224 = vmatpush1.bf16.msra.mxu0 %v7159
        %7225 = vmatprep.subr.bf16.mxu0 %v7162
        %7226 = vmatpush1.bf16.msra.mxu0 %v7161
        %7227 = vmatprep.mubr.bf16.mxu0 %v6577
        %7228 = vmatmul.mubr.bf16.gmra.mrb[0].mxu0 %v6576
        %v7229 = vpop.f32.mrb[0].mxu0
        %v7230 = vadd.f32 0.0, %v7229
        %v7231 = vpop.f32.mrb[0].mxu0
        %v7232 = vadd.f32 0.0, %v7231
        %v7233 = vpop.f32.mrb[0].mxu0
        %v7234 = vpop.f32.mrb[0].mxu0
        %7235 = vdwg.mxu0
        %v7268 = vunpack.c.l.b16 %v6491
        %v7269 = vunpack.c.h.b16 %v6491
        %v7270 = vunpack.c.l.b16 %v6492
        %v7271 = vunpack.c.h.b16 %v6492
        %v7272 = vunpack.c.l.b16 %v6493
        %v7273 = vunpack.c.h.b16 %v6493
        %v7274 = vunpack.c.l.b16 %v6494
        %v7275 = vunpack.c.h.b16 %v6494
        %v7276 = vunpack.c.l.b16 %v6495
        %v7277 = vunpack.c.h.b16 %v6495
        %v7278 = vunpack.c.l.b16 %v6496
        %v7279 = vunpack.c.h.b16 %v6496
        %v7280 = vunpack.c.l.b16 %v6497
        %v7281 = vunpack.c.h.b16 %v6497
        %v7282 = vunpack.c.l.b16 %v6498
        %v7283 = vunpack.c.h.b16 %v6498
        %v7284 = vunpack.c.l.b16 %v6499
        %v7285 = vunpack.c.h.b16 %v6499
        %v7286 = vunpack.c.l.b16 %v6500
        %v7287 = vunpack.c.h.b16 %v6500
        %v7288 = vunpack.c.l.b16 %v6501
        %v7289 = vunpack.c.h.b16 %v6501
        %v7290 = vunpack.c.l.b16 %v6502
        %v7291 = vunpack.c.h.b16 %v6502
        %v7292 = vunpack.c.l.b16 %v6503
        %v7293 = vunpack.c.h.b16 %v6503
        %v7294 = vunpack.c.l.b16 %v6504
        %v7295 = vunpack.c.h.b16 %v6504
        %v7296 = vunpack.c.l.b16 %v6505
        %v7297 = vunpack.c.h.b16 %v6505
        %v7298 = vunpack.c.l.b16 %v6506
        %v7299 = vunpack.c.h.b16 %v6506
        %v7300 = vunpack.c.l.b16 %v6507
        %v7301 = vunpack.c.h.b16 %v6507
        %v7302 = vunpack.c.l.b16 %v6508
        %v7303 = vunpack.c.h.b16 %v6508
        %v7304 = vunpack.c.l.b16 %v6509
        %v7305 = vunpack.c.h.b16 %v6509
        %v7306 = vunpack.c.l.b16 %v6510
        %v7307 = vunpack.c.h.b16 %v6510
        %v7308 = vunpack.c.l.b16 %v6511
        %v7309 = vunpack.c.h.b16 %v6511
        %v7310 = vunpack.c.l.b16 %v6512
        %v7311 = vunpack.c.h.b16 %v6512
        %v7312 = vunpack.c.l.b16 %v6513
        %v7313 = vunpack.c.h.b16 %v6513
        %v7314 = vunpack.c.l.b16 %v6514
        %v7315 = vunpack.c.h.b16 %v6514
        %v7316 = vunpack.c.l.b16 %v6515
        %v7317 = vunpack.c.h.b16 %v6515
        %v7318 = vunpack.c.l.b16 %v6516
        %v7319 = vunpack.c.h.b16 %v6516
        %v7320 = vunpack.c.l.b16 %v6517
        %v7321 = vunpack.c.h.b16 %v6517
        %v7322 = vunpack.c.l.b16 %v6518
        %v7323 = vunpack.c.h.b16 %v6518
        %v7324 = vunpack.c.l.b16 %v6519
        %v7325 = vunpack.c.h.b16 %v6519
        %v7326 = vunpack.c.l.b16 %v6520
        %v7327 = vunpack.c.h.b16 %v6520
        %v7328 = vunpack.c.l.b16 %v6521
        %v7329 = vunpack.c.h.b16 %v6521
        %v7330 = vunpack.c.l.b16 %v6522
        %v7331 = vunpack.c.h.b16 %v6522
        %v7332 = vpack.c.b16 %v7270, %v7268
        %v7333 = vpack.c.b16 %v7271, %v7269
        %v7334 = vpack.c.b16 %v7274, %v7272
        %v7335 = vpack.c.b16 %v7275, %v7273
        %v7336 = vpack.c.b16 %v7278, %v7276
        %v7337 = vpack.c.b16 %v7279, %v7277
        %v7338 = vpack.c.b16 %v7282, %v7280
        %v7339 = vpack.c.b16 %v7283, %v7281
        %v7340 = vpack.c.b16 %v7286, %v7284
        %v7341 = vpack.c.b16 %v7287, %v7285
        %v7342 = vpack.c.b16 %v7290, %v7288
        %v7343 = vpack.c.b16 %v7291, %v7289
        %v7344 = vpack.c.b16 %v7294, %v7292
        %v7345 = vpack.c.b16 %v7295, %v7293
        %v7346 = vpack.c.b16 %v7298, %v7296
        %v7347 = vpack.c.b16 %v7299, %v7297
        %v7348 = vpack.c.b16 %v7302, %v7300
        %v7349 = vpack.c.b16 %v7303, %v7301
        %v7350 = vpack.c.b16 %v7306, %v7304
        %v7351 = vpack.c.b16 %v7307, %v7305
        %v7352 = vpack.c.b16 %v7310, %v7308
        %v7353 = vpack.c.b16 %v7311, %v7309
        %v7354 = vpack.c.b16 %v7314, %v7312
        %v7355 = vpack.c.b16 %v7315, %v7313
        %v7356 = vpack.c.b16 %v7318, %v7316
        %v7357 = vpack.c.b16 %v7319, %v7317
        %v7358 = vpack.c.b16 %v7322, %v7320
        %v7359 = vpack.c.b16 %v7323, %v7321
        %v7360 = vpack.c.b16 %v7326, %v7324
        %v7361 = vpack.c.b16 %v7327, %v7325
        %v7362 = vpack.c.b16 %v7330, %v7328
        %v7363 = vpack.c.b16 %v7331, %v7329
        %7396 = vmatprep.subr.bf16.mxu0 %v7333
        %7397 = vmatpush1.bf16.msra.mxu0 %v7332
        %7398 = vmatprep.subr.bf16.mxu0 %v7335
        %7399 = vmatpush1.bf16.msra.mxu0 %v7334
        %7400 = vmatprep.subr.bf16.mxu0 %v7337
        %7401 = vmatpush1.bf16.msra.mxu0 %v7336
        %7402 = vmatprep.subr.bf16.mxu0 %v7339
        %7403 = vmatpush1.bf16.msra.mxu0 %v7338
        %7404 = vmatprep.subr.bf16.mxu0 %v7341
        %7405 = vmatpush1.bf16.msra.mxu0 %v7340
        %7406 = vmatprep.subr.bf16.mxu0 %v7343
        %7407 = vmatpush1.bf16.msra.mxu0 %v7342
        %7408 = vmatprep.subr.bf16.mxu0 %v7345
        %7409 = vmatpush1.bf16.msra.mxu0 %v7344
        %7410 = vmatprep.subr.bf16.mxu0 %v7347
        %7411 = vmatpush1.bf16.msra.mxu0 %v7346
        %7412 = vmatprep.subr.bf16.mxu0 %v7349
        %7413 = vmatpush1.bf16.msra.mxu0 %v7348
        %7414 = vmatprep.subr.bf16.mxu0 %v7351
        %7415 = vmatpush1.bf16.msra.mxu0 %v7350
        %7416 = vmatprep.subr.bf16.mxu0 %v7353
        %7417 = vmatpush1.bf16.msra.mxu0 %v7352
        %7418 = vmatprep.subr.bf16.mxu0 %v7355
        %7419 = vmatpush1.bf16.msra.mxu0 %v7354
        %7420 = vmatprep.subr.bf16.mxu0 %v7357
        %7421 = vmatpush1.bf16.msra.mxu0 %v7356
        %7422 = vmatprep.subr.bf16.mxu0 %v7359
        %7423 = vmatpush1.bf16.msra.mxu0 %v7358
        %7424 = vmatprep.subr.bf16.mxu0 %v7361
        %7425 = vmatpush1.bf16.msra.mxu0 %v7360
        %7426 = vmatprep.subr.bf16.mxu0 %v7363
        %7427 = vmatpush1.bf16.msra.mxu0 %v7362
        %7428 = vmatprep.mubr.bf16.mxu0 %v6798
        %7429 = vmatmul.mubr.bf16.gmra.mrb[0].mxu0 %v6797
        %v7430 = vpop.f32.mrb[0].mxu0
        %v7431 = vadd.f32 %v7230, %v7430
        %v7432 = vpop.f32.mrb[0].mxu0
        %v7433 = vadd.f32 %v7232, %v7432
        %v7434 = vpop.f32.mrb[0].mxu0
        %v7435 = vpop.f32.mrb[0].mxu0
        %7436 = vdwg.mxu0
        %s7437 = scalar_lea.vmem %s8, 512
        %v7438 = vld [vmem:[%s7437] sm:$0xff]
        %v7439 = vld [vmem:[%s7437 + $0x8] sm:$0xff]
        %v7440 = vld [vmem:[%s7437 + $0x10] sm:$0xff]
        %v7441 = vld [vmem:[%s7437 + $0x18] sm:$0xff]
        %v7442 = vld [vmem:[%s7437 + $0x20] sm:$0xff]
        %v7443 = vld [vmem:[%s7437 + $0x28] sm:$0xff]
        %v7444 = vld [vmem:[%s7437 + $0x30] sm:$0xff]
        %v7445 = vld [vmem:[%s7437 + $0x38] sm:$0xff]
        %v7446 = vld [vmem:[%s7437 + $0x40] sm:$0xff]
        %v7447 = vld [vmem:[%s7437 + $0x48] sm:$0xff]
        %v7448 = vld [vmem:[%s7437 + $0x50] sm:$0xff]
        %v7449 = vld [vmem:[%s7437 + $0x58] sm:$0xff]
        %v7450 = vld [vmem:[%s7437 + $0x60] sm:$0xff]
        %v7451 = vld [vmem:[%s7437 + $0x68] sm:$0xff]
        %v7452 = vld [vmem:[%s7437 + $0x70] sm:$0xff]
        %v7453 = vld [vmem:[%s7437 + $0x78] sm:$0xff]
        %v7454 = vld [vmem:[%s7437 + $0x80] sm:$0xff]
        %v7455 = vld [vmem:[%s7437 + $0x88] sm:$0xff]
        %v7456 = vld [vmem:[%s7437 + $0x90] sm:$0xff]
        %v7457 = vld [vmem:[%s7437 + $0x98] sm:$0xff]
        %v7458 = vld [vmem:[%s7437 + $0xa0] sm:$0xff]
        %v7459 = vld [vmem:[%s7437 + $0xa8] sm:$0xff]
        %v7460 = vld [vmem:[%s7437 + $0xb0] sm:$0xff]
        %v7461 = vld [vmem:[%s7437 + $0xb8] sm:$0xff]
        %v7462 = vld [vmem:[%s7437 + $0xc0] sm:$0xff]
        %v7463 = vld [vmem:[%s7437 + $0xc8] sm:$0xff]
        %v7464 = vld [vmem:[%s7437 + $0xd0] sm:$0xff]
        %v7465 = vld [vmem:[%s7437 + $0xd8] sm:$0xff]
        %v7466 = vld [vmem:[%s7437 + $0xe0] sm:$0xff]
        %v7467 = vld [vmem:[%s7437 + $0xe8] sm:$0xff]
        %v7468 = vld [vmem:[%s7437 + $0xf0] sm:$0xff]
        %v7469 = vld [vmem:[%s7437 + $0xf8] sm:$0xff]
        %v7472 = vunpack.c.l.b16 %v6457
        %v7473 = vunpack.c.l.b16 %v6458
        %v7474 = vrot.slane %v6787, 7
        %v7475 = vsel %vm966, %v7474, %v6785
        %v7476 = vrot.slane %v7472, 6
        %v7477 = vsel %vm969, %v7476, %v7475
        %v7478 = vrot.slane %v6788, 7
        %v7479 = vsel %vm966, %v7478, %v6786
        %v7480 = vrot.slane %v7473, 6
        %v7481 = vsel %vm969, %v7480, %v7479
        %v7482 = vpack.c.b16 %v7477, %v7477
        %v7483 = vpack.c.b16 %v7481, %v7481
        %v7518 = vunpack.c.l.b16 %v7438
        %v7519 = vunpack.c.h.b16 %v7438
        %v7520 = vunpack.c.l.b16 %v7439
        %v7521 = vunpack.c.h.b16 %v7439
        %v7522 = vunpack.c.l.b16 %v7440
        %v7523 = vunpack.c.h.b16 %v7440
        %v7524 = vunpack.c.l.b16 %v7441
        %v7525 = vunpack.c.h.b16 %v7441
        %v7526 = vunpack.c.l.b16 %v7442
        %v7527 = vunpack.c.h.b16 %v7442
        %v7528 = vunpack.c.l.b16 %v7443
        %v7529 = vunpack.c.h.b16 %v7443
        %v7530 = vunpack.c.l.b16 %v7444
        %v7531 = vunpack.c.h.b16 %v7444
        %v7532 = vunpack.c.l.b16 %v7445
        %v7533 = vunpack.c.h.b16 %v7445
        %v7534 = vunpack.c.l.b16 %v7446
        %v7535 = vunpack.c.h.b16 %v7446
        %v7536 = vunpack.c.l.b16 %v7447
        %v7537 = vunpack.c.h.b16 %v7447
        %v7538 = vunpack.c.l.b16 %v7448
        %v7539 = vunpack.c.h.b16 %v7448
        %v7540 = vunpack.c.l.b16 %v7449
        %v7541 = vunpack.c.h.b16 %v7449
        %v7542 = vunpack.c.l.b16 %v7450
        %v7543 = vunpack.c.h.b16 %v7450
        %v7544 = vunpack.c.l.b16 %v7451
        %v7545 = vunpack.c.h.b16 %v7451
        %v7546 = vunpack.c.l.b16 %v7452
        %v7547 = vunpack.c.h.b16 %v7452
        %v7548 = vunpack.c.l.b16 %v7453
        %v7549 = vunpack.c.h.b16 %v7453
        %v7550 = vunpack.c.l.b16 %v7454
        %v7551 = vunpack.c.h.b16 %v7454
        %v7552 = vunpack.c.l.b16 %v7455
        %v7553 = vunpack.c.h.b16 %v7455
        %v7554 = vunpack.c.l.b16 %v7456
        %v7555 = vunpack.c.h.b16 %v7456
        %v7556 = vunpack.c.l.b16 %v7457
        %v7557 = vunpack.c.h.b16 %v7457
        %v7558 = vunpack.c.l.b16 %v7458
        %v7559 = vunpack.c.h.b16 %v7458
        %v7560 = vunpack.c.l.b16 %v7459
        %v7561 = vunpack.c.h.b16 %v7459
        %v7562 = vunpack.c.l.b16 %v7460
        %v7563 = vunpack.c.h.b16 %v7460
        %v7564 = vunpack.c.l.b16 %v7461
        %v7565 = vunpack.c.h.b16 %v7461
        %v7566 = vunpack.c.l.b16 %v7462
        %v7567 = vunpack.c.h.b16 %v7462
        %v7568 = vunpack.c.l.b16 %v7463
        %v7569 = vunpack.c.h.b16 %v7463
        %v7570 = vunpack.c.l.b16 %v7464
        %v7571 = vunpack.c.h.b16 %v7464
        %v7572 = vunpack.c.l.b16 %v7465
        %v7573 = vunpack.c.h.b16 %v7465
        %v7574 = vunpack.c.l.b16 %v7466
        %v7575 = vunpack.c.h.b16 %v7466
        %v7576 = vunpack.c.l.b16 %v7467
        %v7577 = vunpack.c.h.b16 %v7467
        %v7578 = vunpack.c.l.b16 %v7468
        %v7579 = vunpack.c.h.b16 %v7468
        %v7580 = vunpack.c.l.b16 %v7469
        %v7581 = vunpack.c.h.b16 %v7469
        %v7582 = vpack.c.b16 %v7520, %v7518
        %v7583 = vpack.c.b16 %v7521, %v7519
        %v7584 = vpack.c.b16 %v7524, %v7522
        %v7585 = vpack.c.b16 %v7525, %v7523
        %v7586 = vpack.c.b16 %v7528, %v7526
        %v7587 = vpack.c.b16 %v7529, %v7527
        %v7588 = vpack.c.b16 %v7532, %v7530
        %v7589 = vpack.c.b16 %v7533, %v7531
        %v7590 = vpack.c.b16 %v7536, %v7534
        %v7591 = vpack.c.b16 %v7537, %v7535
        %v7592 = vpack.c.b16 %v7540, %v7538
        %v7593 = vpack.c.b16 %v7541, %v7539
        %v7594 = vpack.c.b16 %v7544, %v7542
        %v7595 = vpack.c.b16 %v7545, %v7543
        %v7596 = vpack.c.b16 %v7548, %v7546
        %v7597 = vpack.c.b16 %v7549, %v7547
        %v7598 = vpack.c.b16 %v7552, %v7550
        %v7599 = vpack.c.b16 %v7553, %v7551
        %v7600 = vpack.c.b16 %v7556, %v7554
        %v7601 = vpack.c.b16 %v7557, %v7555
        %v7602 = vpack.c.b16 %v7560, %v7558
        %v7603 = vpack.c.b16 %v7561, %v7559
        %v7604 = vpack.c.b16 %v7564, %v7562
        %v7605 = vpack.c.b16 %v7565, %v7563
        %v7606 = vpack.c.b16 %v7568, %v7566
        %v7607 = vpack.c.b16 %v7569, %v7567
        %v7608 = vpack.c.b16 %v7572, %v7570
        %v7609 = vpack.c.b16 %v7573, %v7571
        %v7610 = vpack.c.b16 %v7576, %v7574
        %v7611 = vpack.c.b16 %v7577, %v7575
        %v7612 = vpack.c.b16 %v7580, %v7578
        %v7613 = vpack.c.b16 %v7581, %v7579
        %7646 = vmatprep.subr.bf16.mxu0 %v7583
        %7647 = vmatpush1.bf16.msra.mxu0 %v7582
        %7648 = vmatprep.subr.bf16.mxu0 %v7585
        %7649 = vmatpush1.bf16.msra.mxu0 %v7584
        %7650 = vmatprep.subr.bf16.mxu0 %v7587
        %7651 = vmatpush1.bf16.msra.mxu0 %v7586
        %7652 = vmatprep.subr.bf16.mxu0 %v7589
        %7653 = vmatpush1.bf16.msra.mxu0 %v7588
        %7654 = vmatprep.subr.bf16.mxu0 %v7591
        %7655 = vmatpush1.bf16.msra.mxu0 %v7590
        %7656 = vmatprep.subr.bf16.mxu0 %v7593
        %7657 = vmatpush1.bf16.msra.mxu0 %v7592
        %7658 = vmatprep.subr.bf16.mxu0 %v7595
        %7659 = vmatpush1.bf16.msra.mxu0 %v7594
        %7660 = vmatprep.subr.bf16.mxu0 %v7597
        %7661 = vmatpush1.bf16.msra.mxu0 %v7596
        %7662 = vmatprep.subr.bf16.mxu0 %v7599
        %7663 = vmatpush1.bf16.msra.mxu0 %v7598
        %7664 = vmatprep.subr.bf16.mxu0 %v7601
        %7665 = vmatpush1.bf16.msra.mxu0 %v7600
        %7666 = vmatprep.subr.bf16.mxu0 %v7603
        %7667 = vmatpush1.bf16.msra.mxu0 %v7602
        %7668 = vmatprep.subr.bf16.mxu0 %v7605
        %7669 = vmatpush1.bf16.msra.mxu0 %v7604
        %7670 = vmatprep.subr.bf16.mxu0 %v7607
        %7671 = vmatpush1.bf16.msra.mxu0 %v7606
        %7672 = vmatprep.subr.bf16.mxu0 %v7609
        %7673 = vmatpush1.bf16.msra.mxu0 %v7608
        %7674 = vmatprep.subr.bf16.mxu0 %v7611
        %7675 = vmatpush1.bf16.msra.mxu0 %v7610
        %7676 = vmatprep.subr.bf16.mxu0 %v7613
        %7677 = vmatpush1.bf16.msra.mxu0 %v7612
        %7678 = vmatprep.mubr.bf16.mxu0 %v7483
        %7679 = vmatmul.mubr.bf16.gmra.mrb[0].mxu0 %v7482
        %v7680 = vpop.f32.mrb[0].mxu0
        %v7681 = vadd.f32 0.0, %v7680
        %v7682 = vpop.f32.mrb[0].mxu0
        %v7683 = vadd.f32 0.0, %v7682
        %v7684 = vpop.f32.mrb[0].mxu0
        %v7685 = vpop.f32.mrb[0].mxu0
        %7686 = vdwg.mxu0
        %v7687 = vadd.f32 %v6996, %v7681
        %v7688 = vadd.f32 %v6998, %v7683
        %s7689 = scalar_lea.vmem [#allocation11], 512
        %v7690 = vld [vmem:[%s7689] sm:$0xff]
        %v7691 = vld [vmem:[%s7689 + $0x8] sm:$0xff]
        %v7692 = vld [vmem:[%s7689 + $0x10] sm:$0xff]
        %v7693 = vld [vmem:[%s7689 + $0x18] sm:$0xff]
        %v7694 = vld [vmem:[%s7689 + $0x20] sm:$0xff]
        %v7695 = vld [vmem:[%s7689 + $0x28] sm:$0xff]
        %v7696 = vld [vmem:[%s7689 + $0x30] sm:$0xff]
        %v7697 = vld [vmem:[%s7689 + $0x38] sm:$0xff]
        %v7698 = vld [vmem:[%s7689 + $0x40] sm:$0xff]
        %v7699 = vld [vmem:[%s7689 + $0x48] sm:$0xff]
        %v7700 = vld [vmem:[%s7689 + $0x50] sm:$0xff]
        %v7701 = vld [vmem:[%s7689 + $0x58] sm:$0xff]
        %v7702 = vld [vmem:[%s7689 + $0x60] sm:$0xff]
        %v7703 = vld [vmem:[%s7689 + $0x68] sm:$0xff]
        %v7704 = vld [vmem:[%s7689 + $0x70] sm:$0xff]
        %v7705 = vld [vmem:[%s7689 + $0x78] sm:$0xff]
        %v7706 = vld [vmem:[%s7689 + $0x80] sm:$0xff]
        %v7707 = vld [vmem:[%s7689 + $0x88] sm:$0xff]
        %v7708 = vld [vmem:[%s7689 + $0x90] sm:$0xff]
        %v7709 = vld [vmem:[%s7689 + $0x98] sm:$0xff]
        %v7710 = vld [vmem:[%s7689 + $0xa0] sm:$0xff]
        %v7711 = vld [vmem:[%s7689 + $0xa8] sm:$0xff]
        %v7712 = vld [vmem:[%s7689 + $0xb0] sm:$0xff]
        %v7713 = vld [vmem:[%s7689 + $0xb8] sm:$0xff]
        %v7714 = vld [vmem:[%s7689 + $0xc0] sm:$0xff]
        %v7715 = vld [vmem:[%s7689 + $0xc8] sm:$0xff]
        %v7716 = vld [vmem:[%s7689 + $0xd0] sm:$0xff]
        %v7717 = vld [vmem:[%s7689 + $0xd8] sm:$0xff]
        %v7718 = vld [vmem:[%s7689 + $0xe0] sm:$0xff]
        %v7719 = vld [vmem:[%s7689 + $0xe8] sm:$0xff]
        %v7720 = vld [vmem:[%s7689 + $0xf0] sm:$0xff]
        %v7721 = vld [vmem:[%s7689 + $0xf8] sm:$0xff]
        %v7754 = vunpack.c.l.b16 %v7690
        %v7755 = vunpack.c.h.b16 %v7690
        %v7756 = vunpack.c.l.b16 %v7691
        %v7757 = vunpack.c.h.b16 %v7691
        %v7758 = vunpack.c.l.b16 %v7692
        %v7759 = vunpack.c.h.b16 %v7692
        %v7760 = vunpack.c.l.b16 %v7693
        %v7761 = vunpack.c.h.b16 %v7693
        %v7762 = vunpack.c.l.b16 %v7694
        %v7763 = vunpack.c.h.b16 %v7694
        %v7764 = vunpack.c.l.b16 %v7695
        %v7765 = vunpack.c.h.b16 %v7695
        %v7766 = vunpack.c.l.b16 %v7696
        %v7767 = vunpack.c.h.b16 %v7696
        %v7768 = vunpack.c.l.b16 %v7697
        %v7769 = vunpack.c.h.b16 %v7697
        %v7770 = vunpack.c.l.b16 %v7698
        %v7771 = vunpack.c.h.b16 %v7698
        %v7772 = vunpack.c.l.b16 %v7699
        %v7773 = vunpack.c.h.b16 %v7699
        %v7774 = vunpack.c.l.b16 %v7700
        %v7775 = vunpack.c.h.b16 %v7700
        %v7776 = vunpack.c.l.b16 %v7701
        %v7777 = vunpack.c.h.b16 %v7701
        %v7778 = vunpack.c.l.b16 %v7702
        %v7779 = vunpack.c.h.b16 %v7702
        %v7780 = vunpack.c.l.b16 %v7703
        %v7781 = vunpack.c.h.b16 %v7703
        %v7782 = vunpack.c.l.b16 %v7704
        %v7783 = vunpack.c.h.b16 %v7704
        %v7784 = vunpack.c.l.b16 %v7705
        %v7785 = vunpack.c.h.b16 %v7705
        %v7786 = vunpack.c.l.b16 %v7706
        %v7787 = vunpack.c.h.b16 %v7706
        %v7788 = vunpack.c.l.b16 %v7707
        %v7789 = vunpack.c.h.b16 %v7707
        %v7790 = vunpack.c.l.b16 %v7708
        %v7791 = vunpack.c.h.b16 %v7708
        %v7792 = vunpack.c.l.b16 %v7709
        %v7793 = vunpack.c.h.b16 %v7709
        %v7794 = vunpack.c.l.b16 %v7710
        %v7795 = vunpack.c.h.b16 %v7710
        %v7796 = vunpack.c.l.b16 %v7711
        %v7797 = vunpack.c.h.b16 %v7711
        %v7798 = vunpack.c.l.b16 %v7712
        %v7799 = vunpack.c.h.b16 %v7712
        %v7800 = vunpack.c.l.b16 %v7713
        %v7801 = vunpack.c.h.b16 %v7713
        %v7802 = vunpack.c.l.b16 %v7714
        %v7803 = vunpack.c.h.b16 %v7714
        %v7804 = vunpack.c.l.b16 %v7715
        %v7805 = vunpack.c.h.b16 %v7715
        %v7806 = vunpack.c.l.b16 %v7716
        %v7807 = vunpack.c.h.b16 %v7716
        %v7808 = vunpack.c.l.b16 %v7717
        %v7809 = vunpack.c.h.b16 %v7717
        %v7810 = vunpack.c.l.b16 %v7718
        %v7811 = vunpack.c.h.b16 %v7718
        %v7812 = vunpack.c.l.b16 %v7719
        %v7813 = vunpack.c.h.b16 %v7719
        %v7814 = vunpack.c.l.b16 %v7720
        %v7815 = vunpack.c.h.b16 %v7720
        %v7816 = vunpack.c.l.b16 %v7721
        %v7817 = vunpack.c.h.b16 %v7721
        %v7818 = vpack.c.b16 %v7756, %v7754
        %v7819 = vpack.c.b16 %v7757, %v7755
        %v7820 = vpack.c.b16 %v7760, %v7758
        %v7821 = vpack.c.b16 %v7761, %v7759
        %v7822 = vpack.c.b16 %v7764, %v7762
        %v7823 = vpack.c.b16 %v7765, %v7763
        %v7824 = vpack.c.b16 %v7768, %v7766
        %v7825 = vpack.c.b16 %v7769, %v7767
        %v7826 = vpack.c.b16 %v7772, %v7770
        %v7827 = vpack.c.b16 %v7773, %v7771
        %v7828 = vpack.c.b16 %v7776, %v7774
        %v7829 = vpack.c.b16 %v7777, %v7775
        %v7830 = vpack.c.b16 %v7780, %v7778
        %v7831 = vpack.c.b16 %v7781, %v7779
        %v7832 = vpack.c.b16 %v7784, %v7782
        %v7833 = vpack.c.b16 %v7785, %v7783
        %v7834 = vpack.c.b16 %v7788, %v7786
        %v7835 = vpack.c.b16 %v7789, %v7787
        %v7836 = vpack.c.b16 %v7792, %v7790
        %v7837 = vpack.c.b16 %v7793, %v7791
        %v7838 = vpack.c.b16 %v7796, %v7794
        %v7839 = vpack.c.b16 %v7797, %v7795
        %v7840 = vpack.c.b16 %v7800, %v7798
        %v7841 = vpack.c.b16 %v7801, %v7799
        %v7842 = vpack.c.b16 %v7804, %v7802
        %v7843 = vpack.c.b16 %v7805, %v7803
        %v7844 = vpack.c.b16 %v7808, %v7806
        %v7845 = vpack.c.b16 %v7809, %v7807
        %v7846 = vpack.c.b16 %v7812, %v7810
        %v7847 = vpack.c.b16 %v7813, %v7811
        %v7848 = vpack.c.b16 %v7816, %v7814
        %v7849 = vpack.c.b16 %v7817, %v7815
        %7882 = vmatprep.subr.bf16.mxu0 %v7819
        %7883 = vmatpush1.bf16.msra.mxu0 %v7818
        %7884 = vmatprep.subr.bf16.mxu0 %v7821
        %7885 = vmatpush1.bf16.msra.mxu0 %v7820
        %7886 = vmatprep.subr.bf16.mxu0 %v7823
        %7887 = vmatpush1.bf16.msra.mxu0 %v7822
        %7888 = vmatprep.subr.bf16.mxu0 %v7825
        %7889 = vmatpush1.bf16.msra.mxu0 %v7824
        %7890 = vmatprep.subr.bf16.mxu0 %v7827
        %7891 = vmatpush1.bf16.msra.mxu0 %v7826
        %7892 = vmatprep.subr.bf16.mxu0 %v7829
        %7893 = vmatpush1.bf16.msra.mxu0 %v7828
        %7894 = vmatprep.subr.bf16.mxu0 %v7831
        %7895 = vmatpush1.bf16.msra.mxu0 %v7830
        %7896 = vmatprep.subr.bf16.mxu0 %v7833
        %7897 = vmatpush1.bf16.msra.mxu0 %v7832
        %7898 = vmatprep.subr.bf16.mxu0 %v7835
        %7899 = vmatpush1.bf16.msra.mxu0 %v7834
        %7900 = vmatprep.subr.bf16.mxu0 %v7837
        %7901 = vmatpush1.bf16.msra.mxu0 %v7836
        %7902 = vmatprep.subr.bf16.mxu0 %v7839
        %7903 = vmatpush1.bf16.msra.mxu0 %v7838
        %7904 = vmatprep.subr.bf16.mxu0 %v7841
        %7905 = vmatpush1.bf16.msra.mxu0 %v7840
        %7906 = vmatprep.subr.bf16.mxu0 %v7843
        %7907 = vmatpush1.bf16.msra.mxu0 %v7842
        %7908 = vmatprep.subr.bf16.mxu0 %v7845
        %7909 = vmatpush1.bf16.msra.mxu0 %v7844
        %7910 = vmatprep.subr.bf16.mxu0 %v7847
        %7911 = vmatpush1.bf16.msra.mxu0 %v7846
        %7912 = vmatprep.subr.bf16.mxu0 %v7849
        %7913 = vmatpush1.bf16.msra.mxu0 %v7848
        %7914 = vmatprep.mubr.bf16.mxu0 %v7483
        %7915 = vmatmul.mubr.bf16.gmra.mrb[0].mxu0 %v7482
        %v7916 = vpop.f32.mrb[0].mxu0
        %v7917 = vadd.f32 0.0, %v7916
        %v7918 = vpop.f32.mrb[0].mxu0
        %v7919 = vadd.f32 0.0, %v7918
        %v7920 = vpop.f32.mrb[0].mxu0
        %v7921 = vpop.f32.mrb[0].mxu0
        %7922 = vdwg.mxu0
        %v7923 = vadd.f32 %v7431, %v7917
        %v7924 = vadd.f32 %v7433, %v7919
        %7925 = vmatprep.subr.bf16.mxu0 %v6677
        %7926 = vmatpush1.bf16.msra.mxu0 %v6676
        %7927 = vmatprep.subr.bf16.mxu0 %v6679
        %7928 = vmatpush1.bf16.msra.mxu0 %v6678
        %7929 = vmatprep.subr.bf16.mxu0 %v6681
        %7930 = vmatpush1.bf16.msra.mxu0 %v6680
        %7931 = vmatprep.subr.bf16.mxu0 %v6683
        %7932 = vmatpush1.bf16.msra.mxu0 %v6682
        %7933 = vmatprep.subr.bf16.mxu0 %v6685
        %7934 = vmatpush1.bf16.msra.mxu0 %v6684
        %7935 = vmatprep.subr.bf16.mxu0 %v6687
        %7936 = vmatpush1.bf16.msra.mxu0 %v6686
        %7937 = vmatprep.subr.bf16.mxu0 %v6689
        %7938 = vmatpush1.bf16.msra.mxu0 %v6688
        %7939 = vmatprep.subr.bf16.mxu0 %v6691
        %7940 = vmatpush1.bf16.msra.mxu0 %v6690
        %7941 = vmatprep.subr.bf16.mxu0 %v6693
        %7942 = vmatpush1.bf16.msra.mxu0 %v6692
        %7943 = vmatprep.subr.bf16.mxu0 %v6695
        %7944 = vmatpush1.bf16.msra.mxu0 %v6694
        %7945 = vmatprep.subr.bf16.mxu0 %v6697
        %7946 = vmatpush1.bf16.msra.mxu0 %v6696
        %7947 = vmatprep.subr.bf16.mxu0 %v6699
        %7948 = vmatpush1.bf16.msra.mxu0 %v6698
        %7949 = vmatprep.subr.bf16.mxu0 %v6701
        %7950 = vmatpush1.bf16.msra.mxu0 %v6700
        %7951 = vmatprep.subr.bf16.mxu0 %v6703
        %7952 = vmatpush1.bf16.msra.mxu0 %v6702
        %7953 = vmatprep.subr.bf16.mxu0 %v6705
        %7954 = vmatpush1.bf16.msra.mxu0 %v6704
        %7955 = vmatprep.subr.bf16.mxu0 %v6707
        %7956 = vmatpush1.bf16.msra.mxu0 %v6706
        %7957 = vmatprep.mubr.bf16.mxu0 %v7483
        %7958 = vmatmul.mubr.bf16.gmra.mrb[0].mxu0 %v7482
        %v7959 = vpop.f32.mrb[0].mxu0
        %v7960 = vadd.f32 0.0, %v7959
        %v7961 = vpop.f32.mrb[0].mxu0
        %v7962 = vadd.f32 0.0, %v7961
        %v7963 = vpop.f32.mrb[0].mxu0
        %v7964 = vpop.f32.mrb[0].mxu0
        %7965 = vdwg.mxu0
        %7966 = vmatprep.subr.bf16.mxu0 %v6898
        %7967 = vmatpush1.bf16.msra.mxu0 %v6897
        %7968 = vmatprep.subr.bf16.mxu0 %v6900
        %7969 = vmatpush1.bf16.msra.mxu0 %v6899
        %7970 = vmatprep.subr.bf16.mxu0 %v6902
        %7971 = vmatpush1.bf16.msra.mxu0 %v6901
        %7972 = vmatprep.subr.bf16.mxu0 %v6904
        %7973 = vmatpush1.bf16.msra.mxu0 %v6903
        %7974 = vmatprep.subr.bf16.mxu0 %v6906
        %7975 = vmatpush1.bf16.msra.mxu0 %v6905
        %7976 = vmatprep.subr.bf16.mxu0 %v6908
        %7977 = vmatpush1.bf16.msra.mxu0 %v6907
        %7978 = vmatprep.subr.bf16.mxu0 %v6910
        %7979 = vmatpush1.bf16.msra.mxu0 %v6909
        %7980 = vmatprep.subr.bf16.mxu0 %v6912
        %7981 = vmatpush1.bf16.msra.mxu0 %v6911
        %7982 = vmatprep.subr.bf16.mxu0 %v6914
        %7983 = vmatpush1.bf16.msra.mxu0 %v6913
        %7984 = vmatprep.subr.bf16.mxu0 %v6916
        %7985 = vmatpush1.bf16.msra.mxu0 %v6915
        %7986 = vmatprep.subr.bf16.mxu0 %v6918
        %7987 = vmatpush1.bf16.msra.mxu0 %v6917
        %7988 = vmatprep.subr.bf16.mxu0 %v6920
        %7989 = vmatpush1.bf16.msra.mxu0 %v6919
        %7990 = vmatprep.subr.bf16.mxu0 %v6922
        %7991 = vmatpush1.bf16.msra.mxu0 %v6921
        %7992 = vmatprep.subr.bf16.mxu0 %v6924
        %7993 = vmatpush1.bf16.msra.mxu0 %v6923
        %7994 = vmatprep.subr.bf16.mxu0 %v6926
        %7995 = vmatpush1.bf16.msra.mxu0 %v6925
        %7996 = vmatprep.subr.bf16.mxu0 %v6928
        %7997 = vmatpush1.bf16.msra.mxu0 %v6927
        %7998 = vmatprep.mubr.bf16.mxu0 %v6577
        %7999 = vmatmul.mubr.bf16.gmra.mrb[0].mxu0 %v6576
        %v8000 = vpop.f32.mrb[0].mxu0
        %v8001 = vadd.f32 %v7960, %v8000
        %v8002 = vpop.f32.mrb[0].mxu0
        %v8003 = vadd.f32 %v7962, %v8002
        %v8004 = vpop.f32.mrb[0].mxu0
        %v8005 = vpop.f32.mrb[0].mxu0
        %8006 = vdwg.mxu0
        %8007 = vmatprep.subr.bf16.mxu0 %v7132
        %8008 = vmatpush1.bf16.msra.mxu0 %v7131
        %8009 = vmatprep.subr.bf16.mxu0 %v7134
        %8010 = vmatpush1.bf16.msra.mxu0 %v7133
        %8011 = vmatprep.subr.bf16.mxu0 %v7136
        %8012 = vmatpush1.bf16.msra.mxu0 %v7135
        %8013 = vmatprep.subr.bf16.mxu0 %v7138
        %8014 = vmatpush1.bf16.msra.mxu0 %v7137
        %8015 = vmatprep.subr.bf16.mxu0 %v7140
        %8016 = vmatpush1.bf16.msra.mxu0 %v7139
        %8017 = vmatprep.subr.bf16.mxu0 %v7142
        %8018 = vmatpush1.bf16.msra.mxu0 %v7141
        %8019 = vmatprep.subr.bf16.mxu0 %v7144
        %8020 = vmatpush1.bf16.msra.mxu0 %v7143
        %8021 = vmatprep.subr.bf16.mxu0 %v7146
        %8022 = vmatpush1.bf16.msra.mxu0 %v7145
        %8023 = vmatprep.subr.bf16.mxu0 %v7148
        %8024 = vmatpush1.bf16.msra.mxu0 %v7147
        %8025 = vmatprep.subr.bf16.mxu0 %v7150
        %8026 = vmatpush1.bf16.msra.mxu0 %v7149
        %8027 = vmatprep.subr.bf16.mxu0 %v7152
        %8028 = vmatpush1.bf16.msra.mxu0 %v7151
        %8029 = vmatprep.subr.bf16.mxu0 %v7154
        %8030 = vmatpush1.bf16.msra.mxu0 %v7153
        %8031 = vmatprep.subr.bf16.mxu0 %v7156
        %8032 = vmatpush1.bf16.msra.mxu0 %v7155
        %8033 = vmatprep.subr.bf16.mxu0 %v7158
        %8034 = vmatpush1.bf16.msra.mxu0 %v7157
        %8035 = vmatprep.subr.bf16.mxu0 %v7160
        %8036 = vmatpush1.bf16.msra.mxu0 %v7159
        %8037 = vmatprep.subr.bf16.mxu0 %v7162
        %8038 = vmatpush1.bf16.msra.mxu0 %v7161
        %8039 = vmatprep.mubr.bf16.mxu0 %v7483
        %8040 = vmatmul.mubr.bf16.gmra.mrb[0].mxu0 %v7482
        %v8041 = vpop.f32.mrb[0].mxu0
        %v8042 = vadd.f32 0.0, %v8041
        %v8043 = vpop.f32.mrb[0].mxu0
        %v8044 = vadd.f32 0.0, %v8043
        %v8045 = vpop.f32.mrb[0].mxu0
        %v8046 = vpop.f32.mrb[0].mxu0
        %8047 = vdwg.mxu0
        %8048 = vmatprep.subr.bf16.mxu0 %v7333
        %8049 = vmatpush1.bf16.msra.mxu0 %v7332
        %8050 = vmatprep.subr.bf16.mxu0 %v7335
        %8051 = vmatpush1.bf16.msra.mxu0 %v7334
        %8052 = vmatprep.subr.bf16.mxu0 %v7337
        %8053 = vmatpush1.bf16.msra.mxu0 %v7336
        %8054 = vmatprep.subr.bf16.mxu0 %v7339
        %8055 = vmatpush1.bf16.msra.mxu0 %v7338
        %8056 = vmatprep.subr.bf16.mxu0 %v7341
        %8057 = vmatpush1.bf16.msra.mxu0 %v7340
        %8058 = vmatprep.subr.bf16.mxu0 %v7343
        %8059 = vmatpush1.bf16.msra.mxu0 %v7342
        %8060 = vmatprep.subr.bf16.mxu0 %v7345
        %8061 = vmatpush1.bf16.msra.mxu0 %v7344
        %8062 = vmatprep.subr.bf16.mxu0 %v7347
        %8063 = vmatpush1.bf16.msra.mxu0 %v7346
        %8064 = vmatprep.subr.bf16.mxu0 %v7349
        %8065 = vmatpush1.bf16.msra.mxu0 %v7348
        %8066 = vmatprep.subr.bf16.mxu0 %v7351
        %8067 = vmatpush1.bf16.msra.mxu0 %v7350
        %8068 = vmatprep.subr.bf16.mxu0 %v7353
        %8069 = vmatpush1.bf16.msra.mxu0 %v7352
        %8070 = vmatprep.subr.bf16.mxu0 %v7355
        %8071 = vmatpush1.bf16.msra.mxu0 %v7354
        %8072 = vmatprep.subr.bf16.mxu0 %v7357
        %8073 = vmatpush1.bf16.msra.mxu0 %v7356
        %8074 = vmatprep.subr.bf16.mxu0 %v7359
        %8075 = vmatpush1.bf16.msra.mxu0 %v7358
        %8076 = vmatprep.subr.bf16.mxu0 %v7361
        %8077 = vmatpush1.bf16.msra.mxu0 %v7360
        %8078 = vmatprep.subr.bf16.mxu0 %v7363
        %8079 = vmatpush1.bf16.msra.mxu0 %v7362
        %8080 = vmatprep.mubr.bf16.mxu0 %v6577
        %8081 = vmatmul.mubr.bf16.gmra.mrb[0].mxu0 %v6576
        %v8082 = vpop.f32.mrb[0].mxu0
        %v8083 = vadd.f32 %v8042, %v8082
        %v8084 = vpop.f32.mrb[0].mxu0
        %v8085 = vadd.f32 %v8044, %v8084
        %v8086 = vpop.f32.mrb[0].mxu0
        %v8087 = vpop.f32.mrb[0].mxu0
        %8088 = vdwg.mxu0
        %v8089 = vrot.slane %v6566, 7
        %v8090 = vsel %vm966, %v8089, %v6564
        %v8091 = vrot.slane %v3695, 6
        %v8092 = vsel %vm969, %v8091, %v8090
        %v8093 = vrot.slane %v6567, 7
        %v8094 = vsel %vm966, %v8093, %v6565
        %v8095 = vsel %vm969, %v8091, %v8094
        %v8096 = vpack.c.b16 %v8092, %v8092
        %v8097 = vpack.c.b16 %v8095, %v8095
        %8100 = vmatprep.subr.bf16.mxu0 %v7583
        %8101 = vmatpush1.bf16.msra.mxu0 %v7582
        %8102 = vmatprep.subr.bf16.mxu0 %v7585
        %8103 = vmatpush1.bf16.msra.mxu0 %v7584
        %8104 = vmatprep.subr.bf16.mxu0 %v7587
        %8105 = vmatpush1.bf16.msra.mxu0 %v7586
        %8106 = vmatprep.subr.bf16.mxu0 %v7589
        %8107 = vmatpush1.bf16.msra.mxu0 %v7588
        %8108 = vmatprep.subr.bf16.mxu0 %v7591
        %8109 = vmatpush1.bf16.msra.mxu0 %v7590
        %8110 = vmatprep.subr.bf16.mxu0 %v7593
        %8111 = vmatpush1.bf16.msra.mxu0 %v7592
        %8112 = vmatprep.subr.bf16.mxu0 %v7595
        %8113 = vmatpush1.bf16.msra.mxu0 %v7594
        %8114 = vmatprep.subr.bf16.mxu0 %v7597
        %8115 = vmatpush1.bf16.msra.mxu0 %v7596
        %8116 = vmatprep.subr.bf16.mxu0 %v7599
        %8117 = vmatpush1.bf16.msra.mxu0 %v7598
        %8118 = vmatprep.subr.bf16.mxu0 %v7601
        %8119 = vmatpush1.bf16.msra.mxu0 %v7600
        %8120 = vmatprep.subr.bf16.mxu0 %v7603
        %8121 = vmatpush1.bf16.msra.mxu0 %v7602
        %8122 = vmatprep.subr.bf16.mxu0 %v7605
        %8123 = vmatpush1.bf16.msra.mxu0 %v7604
        %8124 = vmatprep.subr.bf16.mxu0 %v7607
        %8125 = vmatpush1.bf16.msra.mxu0 %v7606
        %8126 = vmatprep.subr.bf16.mxu0 %v7609
        %8127 = vmatpush1.bf16.msra.mxu0 %v7608
        %8128 = vmatprep.subr.bf16.mxu0 %v7611
        %8129 = vmatpush1.bf16.msra.mxu0 %v7610
        %8130 = vmatprep.subr.bf16.mxu0 %v7613
        %8131 = vmatpush1.bf16.msra.mxu0 %v7612
        %8132 = vmatprep.mubr.bf16.mxu0 %v8097
        %8133 = vmatmul.mubr.bf16.gmra.mrb[0].mxu0 %v8096
        %v8134 = vpop.f32.mrb[0].mxu0
        %v8135 = vadd.f32 0.0, %v8134
        %v8136 = vpop.f32.mrb[0].mxu0
        %v8137 = vadd.f32 0.0, %v8136
        %v8138 = vpop.f32.mrb[0].mxu0
        %v8139 = vpop.f32.mrb[0].mxu0
        %8140 = vdwg.mxu0
        %v8141 = vadd.f32 %v8001, %v8135
        %v8142 = vadd.f32 %v8003, %v8137
        %8143 = vmatprep.subr.bf16.mxu0 %v7819
        %8144 = vmatpush1.bf16.msra.mxu0 %v7818
        %8145 = vmatprep.subr.bf16.mxu0 %v7821
        %8146 = vmatpush1.bf16.msra.mxu0 %v7820
        %8147 = vmatprep.subr.bf16.mxu0 %v7823
        %8148 = vmatpush1.bf16.msra.mxu0 %v7822
        %8149 = vmatprep.subr.bf16.mxu0 %v7825
        %8150 = vmatpush1.bf16.msra.mxu0 %v7824
        %8151 = vmatprep.subr.bf16.mxu0 %v7827
        %8152 = vmatpush1.bf16.msra.mxu0 %v7826
        %8153 = vmatprep.subr.bf16.mxu0 %v7829
        %8154 = vmatpush1.bf16.msra.mxu0 %v7828
        %8155 = vmatprep.subr.bf16.mxu0 %v7831
        %8156 = vmatpush1.bf16.msra.mxu0 %v7830
        %8157 = vmatprep.subr.bf16.mxu0 %v7833
        %8158 = vmatpush1.bf16.msra.mxu0 %v7832
        %8159 = vmatprep.subr.bf16.mxu0 %v7835
        %8160 = vmatpush1.bf16.msra.mxu0 %v7834
        %8161 = vmatprep.subr.bf16.mxu0 %v7837
        %8162 = vmatpush1.bf16.msra.mxu0 %v7836
        %8163 = vmatprep.subr.bf16.mxu0 %v7839
        %8164 = vmatpush1.bf16.msra.mxu0 %v7838
        %8165 = vmatprep.subr.bf16.mxu0 %v7841
        %8166 = vmatpush1.bf16.msra.mxu0 %v7840
        %8167 = vmatprep.subr.bf16.mxu0 %v7843
        %8168 = vmatpush1.bf16.msra.mxu0 %v7842
        %8169 = vmatprep.subr.bf16.mxu0 %v7845
        %8170 = vmatpush1.bf16.msra.mxu0 %v7844
        %8171 = vmatprep.subr.bf16.mxu0 %v7847
        %8172 = vmatpush1.bf16.msra.mxu0 %v7846
        %8173 = vmatprep.subr.bf16.mxu0 %v7849
        %8174 = vmatpush1.bf16.msra.mxu0 %v7848
        %8175 = vmatprep.mubr.bf16.mxu0 %v8097
        %8176 = vmatmul.mubr.bf16.gmra.mrb[0].mxu0 %v8096
        %v8177 = vpop.f32.mrb[0].mxu0
        %v8178 = vadd.f32 0.0, %v8177
        %v8179 = vpop.f32.mrb[0].mxu0
        %v8180 = vadd.f32 0.0, %v8179
        %v8181 = vpop.f32.mrb[0].mxu0
        %v8182 = vpop.f32.mrb[0].mxu0
        %8183 = vdwg.mxu0
        %v8184 = vadd.f32 %v8083, %v8178
        %v8185 = vadd.f32 %v8085, %v8180
        %v8186 = vmax.f32 %v7687, %v7923
        %v8187 = vmax.f32 %v7688, %v7924
        %v8188 = vmax.f32 %v8141, %v8184
        %v8189 = vmax.f32 %v8142, %v8185
        %v8190 = vmax.f32 %v8186, %v8188
        %v8191 = vmax.f32 %v8187, %v8189
        %v8192 = vld [vmem:[%s10] sm:$0x3]
        %v8194 = vlaneseq
        %v8195 = vshrl.u32 %v8194, 7
        %v8196 = vsub.s32 0, %v8195
        %v8197 = vrot.slane %v8192, %v8196
        %v8198 = vlaneseq
        %v8199 = vshrl.u32 %v8198, 7
        %v8200 = vsub.s32 1, %v8199
        %v8201 = vrot.slane %v8192, %v8200
        %v8204 = vadd.f32 %v8190, %v8197
        %v8205 = vadd.f32 %v8191, %v8201
        %vm8206 = vcmp.ge.f32.partialorder %v8204, 0.0
        %vm8207 = vcmp.ge.f32.partialorder %v8205, 0.0
        %v8208 = vmul.f32 %v8204, 0.01
        %v8209 = vmul.f32 %v8205, 0.01
        %v8210 = vsel %vm8206, %v8204, %v8208
        %v8211 = vsel %vm8207, %v8205, %v8209
        %v8214 = vcombine.low %v8210, %v8211
        %v8216 = vunpack.c.l.s4 1966171168
        %v8217 = vunpack.c.0.s8 %v8216
        %v8218 = vlaneseq
        %v8219 = vshrl.u32 %v8218, 7
        %v8220 = vsub.s32 %v8217, %v8219
        %v8221 = vrot.slane %v8214, %v8220
        %v8222 = vcombine.high %v8221, %v8221
        %v8224 = vunpack.c.l.s4 1966171168
        %v8225 = vunpack.c.0.s8 %v8224
        %v8226 = vlaneseq
        %v8227 = vshrl.u32 %v8226, 7
        %v8228 = vsub.s32 %v8225, %v8227
        %v8229 = vrot.slane %v8221, %v8228
        %v8231 = vunpack.c.l.s4 1966171168
        %v8232 = vunpack.c.0.s8 %v8231
        %v8233 = vlaneseq
        %v8234 = vshrl.u32 %v8233, 7
        %v8235 = vsub.s32 %v8232, %v8234
        %v8236 = vrot.slane %v8222, %v8235
        %v8237 = vcombine.high %v8229, %v8229
        %v8238 = vlaneseq
        %v8239 = vshrl.u32 %v8238, 7
        %v8240 = vsub.s32 0, %v8239
        %v8241 = vrot.slane %v8229, %v8240
        %v8242 = vlaneseq
        %v8243 = vshrl.u32 %v8242, 7
        %v8244 = vsub.s32 1, %v8243
        %v8245 = vrot.slane %v8229, %v8244
        %v8246 = vlaneseq
        %v8247 = vshrl.u32 %v8246, 7
        %v8248 = vsub.s32 0, %v8247
        %v8249 = vrot.slane %v8236, %v8248
        %v8250 = vlaneseq
        %v8251 = vshrl.u32 %v8250, 7
        %v8252 = vsub.s32 1, %v8251
        %v8253 = vrot.slane %v8236, %v8252
        %v8254 = vlaneseq
        %v8255 = vshrl.u32 %v8254, 7
        %v8256 = vsub.s32 0, %v8255
        %v8257 = vrot.slane %v8237, %v8256
        %v8258 = vlaneseq
        %v8259 = vshrl.u32 %v8258, 7
        %v8260 = vsub.s32 1, %v8259
        %v8261 = vrot.slane %v8237, %v8260
        %v8268 = vpack.c.bf16 %v8241, %v8241
        %v8269 = vpack.c.bf16 %v8245, %v8245
        %v8270 = vpack.c.bf16 %v8249, %v8249
        %v8271 = vpack.c.bf16 %v8253, %v8253
        %v8272 = vpack.c.bf16 %v8257, %v8257
        %v8273 = vpack.c.bf16 %v8261, %v8261
        %v8274 = vld [vmem:[%s11] sm:$0xf]
        %v8275 = vld [vmem:[%s11 + $0x4] sm:$0xf]
        %v8276 = vld [vmem:[%s11 + $0x8] sm:$0xf]
        %v8277 = vld [vmem:[%s11 + $0xc] sm:$0xf]
        %v8278 = vld [vmem:[%s11 + $0x10] sm:$0xf]
        %v8279 = vld [vmem:[%s11 + $0x14] sm:$0xf]
        %v8280 = vld [vmem:[%s11 + $0x18] sm:$0xf]
        %v8281 = vld [vmem:[%s11 + $0x1c] sm:$0xf]
        %v8282 = vld [vmem:[%s11 + $0x20] sm:$0xf]
        %v8283 = vld [vmem:[%s11 + $0x24] sm:$0xf]
        %v8284 = vld [vmem:[%s11 + $0x28] sm:$0xf]
        %v8285 = vld [vmem:[%s11 + $0x2c] sm:$0xf]
        %v8286 = vld [vmem:[%s11 + $0x30] sm:$0xf]
        %v8287 = vld [vmem:[%s11 + $0x34] sm:$0xf]
        %v8288 = vld [vmem:[%s11 + $0x38] sm:$0xf]
        %v8289 = vld [vmem:[%s11 + $0x3c] sm:$0xf]
        %v8290 = vld [vmem:[%s11 + $0x40] sm:$0xf]
        %v8291 = vld [vmem:[%s11 + $0x44] sm:$0xf]
        %v8292 = vld [vmem:[%s11 + $0x48] sm:$0xf]
        %v8293 = vld [vmem:[%s11 + $0x4c] sm:$0xf]
        %v8294 = vld [vmem:[%s11 + $0x50] sm:$0xf]
        %v8295 = vld [vmem:[%s11 + $0x54] sm:$0xf]
        %v8296 = vld [vmem:[%s11 + $0x58] sm:$0xf]
        %v8297 = vld [vmem:[%s11 + $0x5c] sm:$0xf]
        %v8298 = vld [vmem:[%s11 + $0x60] sm:$0xf]
        %v8299 = vld [vmem:[%s11 + $0x64] sm:$0xf]
        %v8300 = vld [vmem:[%s11 + $0x68] sm:$0xf]
        %v8301 = vld [vmem:[%s11 + $0x6c] sm:$0xf]
        %v8302 = vld [vmem:[%s11 + $0x70] sm:$0xf]
        %v8303 = vld [vmem:[%s11 + $0x74] sm:$0xf]
        %v8304 = vld [vmem:[%s11 + $0x78] sm:$0xf]
        %v8305 = vld [vmem:[%s11 + $0x7c] sm:$0xf]
        %s8306 = scalar_lea.vmem %s11, 128
        %v8307 = vld [vmem:[%s8306] sm:$0xf]
        %v8308 = vld [vmem:[%s8306 + $0x4] sm:$0xf]
        %v8309 = vld [vmem:[%s8306 + $0x8] sm:$0xf]
        %v8310 = vld [vmem:[%s8306 + $0xc] sm:$0xf]
        %v8311 = vld [vmem:[%s8306 + $0x10] sm:$0xf]
        %v8312 = vld [vmem:[%s8306 + $0x14] sm:$0xf]
        %v8313 = vld [vmem:[%s8306 + $0x18] sm:$0xf]
        %v8314 = vld [vmem:[%s8306 + $0x1c] sm:$0xf]
        %v8315 = vld [vmem:[%s8306 + $0x20] sm:$0xf]
        %v8316 = vld [vmem:[%s8306 + $0x24] sm:$0xf]
        %v8317 = vld [vmem:[%s8306 + $0x28] sm:$0xf]
        %v8318 = vld [vmem:[%s8306 + $0x2c] sm:$0xf]
        %v8319 = vld [vmem:[%s8306 + $0x30] sm:$0xf]
        %v8320 = vld [vmem:[%s8306 + $0x34] sm:$0xf]
        %v8321 = vld [vmem:[%s8306 + $0x38] sm:$0xf]
        %v8322 = vld [vmem:[%s8306 + $0x3c] sm:$0xf]
        %v8323 = vld [vmem:[%s8306 + $0x40] sm:$0xf]
        %v8324 = vld [vmem:[%s8306 + $0x44] sm:$0xf]
        %v8325 = vld [vmem:[%s8306 + $0x48] sm:$0xf]
        %v8326 = vld [vmem:[%s8306 + $0x4c] sm:$0xf]
        %v8327 = vld [vmem:[%s8306 + $0x50] sm:$0xf]
        %v8328 = vld [vmem:[%s8306 + $0x54] sm:$0xf]
        %v8329 = vld [vmem:[%s8306 + $0x58] sm:$0xf]
        %v8330 = vld [vmem:[%s8306 + $0x5c] sm:$0xf]
        %v8331 = vld [vmem:[%s8306 + $0x60] sm:$0xf]
        %v8332 = vld [vmem:[%s8306 + $0x64] sm:$0xf]
        %v8333 = vld [vmem:[%s8306 + $0x68] sm:$0xf]
        %v8334 = vld [vmem:[%s8306 + $0x6c] sm:$0xf]
        %v8335 = vld [vmem:[%s8306 + $0x70] sm:$0xf]
        %v8336 = vld [vmem:[%s8306 + $0x74] sm:$0xf]
        %v8337 = vld [vmem:[%s8306 + $0x78] sm:$0xf]
        %v8338 = vld [vmem:[%s8306 + $0x7c] sm:$0xf]
        %v8371 = vunpack.c.l.b16 %v8307
        %v8372 = vunpack.c.l.b16 %v8308
        %v8373 = vunpack.c.l.b16 %v8309
        %v8374 = vunpack.c.l.b16 %v8310
        %v8375 = vunpack.c.l.b16 %v8311
        %v8376 = vunpack.c.l.b16 %v8312
        %v8377 = vunpack.c.l.b16 %v8313
        %v8378 = vunpack.c.l.b16 %v8314
        %v8379 = vunpack.c.l.b16 %v8315
        %v8380 = vunpack.c.l.b16 %v8316
        %v8381 = vunpack.c.l.b16 %v8317
        %v8382 = vunpack.c.l.b16 %v8318
        %v8383 = vunpack.c.l.b16 %v8319
        %v8384 = vunpack.c.l.b16 %v8320
        %v8385 = vunpack.c.l.b16 %v8321
        %v8386 = vunpack.c.l.b16 %v8322
        %v8387 = vunpack.c.l.b16 %v8323
        %v8388 = vunpack.c.l.b16 %v8324
        %v8389 = vunpack.c.l.b16 %v8325
        %v8390 = vunpack.c.l.b16 %v8326
        %v8391 = vunpack.c.l.b16 %v8327
        %v8392 = vunpack.c.l.b16 %v8328
        %v8393 = vunpack.c.l.b16 %v8329
        %v8394 = vunpack.c.l.b16 %v8330
        %v8395 = vunpack.c.l.b16 %v8331
        %v8396 = vunpack.c.l.b16 %v8332
        %v8397 = vunpack.c.l.b16 %v8333
        %v8398 = vunpack.c.l.b16 %v8334
        %v8399 = vunpack.c.l.b16 %v8335
        %v8400 = vunpack.c.l.b16 %v8336
        %v8401 = vunpack.c.l.b16 %v8337
        %v8402 = vunpack.c.l.b16 %v8338
        %v8403 = vpack.c.b16 %v8372, %v8371
        %v8404 = vpack.c.b16 %v8374, %v8373
        %v8405 = vpack.c.b16 %v8376, %v8375
        %v8406 = vpack.c.b16 %v8378, %v8377
        %v8407 = vpack.c.b16 %v8380, %v8379
        %v8408 = vpack.c.b16 %v8382, %v8381
        %v8409 = vpack.c.b16 %v8384, %v8383
        %v8410 = vpack.c.b16 %v8386, %v8385
        %v8411 = vpack.c.b16 %v8388, %v8387
        %v8412 = vpack.c.b16 %v8390, %v8389
        %v8413 = vpack.c.b16 %v8392, %v8391
        %v8414 = vpack.c.b16 %v8394, %v8393
        %v8415 = vpack.c.b16 %v8396, %v8395
        %v8416 = vpack.c.b16 %v8398, %v8397
        %v8417 = vpack.c.b16 %v8400, %v8399
        %v8418 = vpack.c.b16 %v8402, %v8401
        %8435 = vmatprep.subr.bf16.mxu0 0
        %8436 = vmatpush1.bf16.msra.mxu0 %v8403
        %8437 = vmatprep.subr.bf16.mxu0 0
        %8438 = vmatpush1.bf16.msra.mxu0 %v8404
        %8439 = vmatprep.subr.bf16.mxu0 0
        %8440 = vmatpush1.bf16.msra.mxu0 %v8405
        %8441 = vmatprep.subr.bf16.mxu0 0
        %8442 = vmatpush1.bf16.msra.mxu0 %v8406
        %8443 = vmatprep.subr.bf16.mxu0 0
        %8444 = vmatpush1.bf16.msra.mxu0 %v8407
        %8445 = vmatprep.subr.bf16.mxu0 0
        %8446 = vmatpush1.bf16.msra.mxu0 %v8408
        %8447 = vmatprep.subr.bf16.mxu0 0
        %8448 = vmatpush1.bf16.msra.mxu0 %v8409
        %8449 = vmatprep.subr.bf16.mxu0 0
        %8450 = vmatpush1.bf16.msra.mxu0 %v8410
        %8451 = vmatprep.subr.bf16.mxu0 0
        %8452 = vmatpush1.bf16.msra.mxu0 %v8411
        %8453 = vmatprep.subr.bf16.mxu0 0
        %8454 = vmatpush1.bf16.msra.mxu0 %v8412
        %8455 = vmatprep.subr.bf16.mxu0 0
        %8456 = vmatpush1.bf16.msra.mxu0 %v8413
        %8457 = vmatprep.subr.bf16.mxu0 0
        %8458 = vmatpush1.bf16.msra.mxu0 %v8414
        %8459 = vmatprep.subr.bf16.mxu0 0
        %8460 = vmatpush1.bf16.msra.mxu0 %v8415
        %8461 = vmatprep.subr.bf16.mxu0 0
        %8462 = vmatpush1.bf16.msra.mxu0 %v8416
        %8463 = vmatprep.subr.bf16.mxu0 0
        %8464 = vmatpush1.bf16.msra.mxu0 %v8417
        %8465 = vmatprep.subr.bf16.mxu0 0
        %8466 = vmatpush1.bf16.msra.mxu0 %v8418
        %8467 = vmatprep.mubr.bf16.mxu0 %v8271
        %8468 = vmatmul.mubr.bf16.gmra.mrb[0].mxu0 %v8270
        %v8469 = vpop.f32.mrb[0].mxu0
        %v8470 = vadd.f32 0.0, %v8469
        %v8471 = vpop.f32.mrb[0].mxu0
        %v8472 = vpop.f32.mrb[0].mxu0
        %v8473 = vpop.f32.mrb[0].mxu0
        %8474 = vdwg.mxu0
        %v8507 = vunpack.c.l.b16 %v8274
        %v8508 = vunpack.c.l.b16 %v8275
        %v8509 = vunpack.c.l.b16 %v8276
        %v8510 = vunpack.c.l.b16 %v8277
        %v8511 = vunpack.c.l.b16 %v8278
        %v8512 = vunpack.c.l.b16 %v8279
        %v8513 = vunpack.c.l.b16 %v8280
        %v8514 = vunpack.c.l.b16 %v8281
        %v8515 = vunpack.c.l.b16 %v8282
        %v8516 = vunpack.c.l.b16 %v8283
        %v8517 = vunpack.c.l.b16 %v8284
        %v8518 = vunpack.c.l.b16 %v8285
        %v8519 = vunpack.c.l.b16 %v8286
        %v8520 = vunpack.c.l.b16 %v8287
        %v8521 = vunpack.c.l.b16 %v8288
        %v8522 = vunpack.c.l.b16 %v8289
        %v8523 = vunpack.c.l.b16 %v8290
        %v8524 = vunpack.c.l.b16 %v8291
        %v8525 = vunpack.c.l.b16 %v8292
        %v8526 = vunpack.c.l.b16 %v8293
        %v8527 = vunpack.c.l.b16 %v8294
        %v8528 = vunpack.c.l.b16 %v8295
        %v8529 = vunpack.c.l.b16 %v8296
        %v8530 = vunpack.c.l.b16 %v8297
        %v8531 = vunpack.c.l.b16 %v8298
        %v8532 = vunpack.c.l.b16 %v8299
        %v8533 = vunpack.c.l.b16 %v8300
        %v8534 = vunpack.c.l.b16 %v8301
        %v8535 = vunpack.c.l.b16 %v8302
        %v8536 = vunpack.c.l.b16 %v8303
        %v8537 = vunpack.c.l.b16 %v8304
        %v8538 = vunpack.c.l.b16 %v8305
        %v8539 = vpack.c.b16 %v8508, %v8507
        %v8540 = vpack.c.b16 %v8510, %v8509
        %v8541 = vpack.c.b16 %v8512, %v8511
        %v8542 = vpack.c.b16 %v8514, %v8513
        %v8543 = vpack.c.b16 %v8516, %v8515
        %v8544 = vpack.c.b16 %v8518, %v8517
        %v8545 = vpack.c.b16 %v8520, %v8519
        %v8546 = vpack.c.b16 %v8522, %v8521
        %v8547 = vpack.c.b16 %v8524, %v8523
        %v8548 = vpack.c.b16 %v8526, %v8525
        %v8549 = vpack.c.b16 %v8528, %v8527
        %v8550 = vpack.c.b16 %v8530, %v8529
        %v8551 = vpack.c.b16 %v8532, %v8531
        %v8552 = vpack.c.b16 %v8534, %v8533
        %v8553 = vpack.c.b16 %v8536, %v8535
        %v8554 = vpack.c.b16 %v8538, %v8537
        %8571 = vmatprep.subr.bf16.mxu0 0
        %8572 = vmatpush1.bf16.msra.mxu0 %v8539
        %8573 = vmatprep.subr.bf16.mxu0 0
        %8574 = vmatpush1.bf16.msra.mxu0 %v8540
        %8575 = vmatprep.subr.bf16.mxu0 0
        %8576 = vmatpush1.bf16.msra.mxu0 %v8541
        %8577 = vmatprep.subr.bf16.mxu0 0
        %8578 = vmatpush1.bf16.msra.mxu0 %v8542
        %8579 = vmatprep.subr.bf16.mxu0 0
        %8580 = vmatpush1.bf16.msra.mxu0 %v8543
        %8581 = vmatprep.subr.bf16.mxu0 0
        %8582 = vmatpush1.bf16.msra.mxu0 %v8544
        %8583 = vmatprep.subr.bf16.mxu0 0
        %8584 = vmatpush1.bf16.msra.mxu0 %v8545
        %8585 = vmatprep.subr.bf16.mxu0 0
        %8586 = vmatpush1.bf16.msra.mxu0 %v8546
        %8587 = vmatprep.subr.bf16.mxu0 0
        %8588 = vmatpush1.bf16.msra.mxu0 %v8547
        %8589 = vmatprep.subr.bf16.mxu0 0
        %8590 = vmatpush1.bf16.msra.mxu0 %v8548
        %8591 = vmatprep.subr.bf16.mxu0 0
        %8592 = vmatpush1.bf16.msra.mxu0 %v8549
        %8593 = vmatprep.subr.bf16.mxu0 0
        %8594 = vmatpush1.bf16.msra.mxu0 %v8550
        %8595 = vmatprep.subr.bf16.mxu0 0
        %8596 = vmatpush1.bf16.msra.mxu0 %v8551
        %8597 = vmatprep.subr.bf16.mxu0 0
        %8598 = vmatpush1.bf16.msra.mxu0 %v8552
        %8599 = vmatprep.subr.bf16.mxu0 0
        %8600 = vmatpush1.bf16.msra.mxu0 %v8553
        %8601 = vmatprep.subr.bf16.mxu0 0
        %8602 = vmatpush1.bf16.msra.mxu0 %v8554
        %8603 = vmatprep.mubr.bf16.mxu0 %v8269
        %8604 = vmatmul.mubr.bf16.gmra.mrb[0].mxu0 %v8268
        %v8605 = vpop.f32.mrb[0].mxu0
        %v8606 = vadd.f32 %v8470, %v8605
        %v8607 = vpop.f32.mrb[0].mxu0
        %v8608 = vpop.f32.mrb[0].mxu0
        %v8609 = vpop.f32.mrb[0].mxu0
        %8610 = vdwg.mxu0
        %s8611 = scalar_lea.vmem %s11, 256
        %v8612 = vld [vmem:[%s8611] sm:$0xf]
        %v8613 = vld [vmem:[%s8611 + $0x4] sm:$0xf]
        %v8614 = vld [vmem:[%s8611 + $0x8] sm:$0xf]
        %v8615 = vld [vmem:[%s8611 + $0xc] sm:$0xf]
        %v8616 = vld [vmem:[%s8611 + $0x10] sm:$0xf]
        %v8617 = vld [vmem:[%s8611 + $0x14] sm:$0xf]
        %v8618 = vld [vmem:[%s8611 + $0x18] sm:$0xf]
        %v8619 = vld [vmem:[%s8611 + $0x1c] sm:$0xf]
        %v8620 = vld [vmem:[%s8611 + $0x20] sm:$0xf]
        %v8621 = vld [vmem:[%s8611 + $0x24] sm:$0xf]
        %v8622 = vld [vmem:[%s8611 + $0x28] sm:$0xf]
        %v8623 = vld [vmem:[%s8611 + $0x2c] sm:$0xf]
        %v8624 = vld [vmem:[%s8611 + $0x30] sm:$0xf]
        %v8625 = vld [vmem:[%s8611 + $0x34] sm:$0xf]
        %v8626 = vld [vmem:[%s8611 + $0x38] sm:$0xf]
        %v8627 = vld [vmem:[%s8611 + $0x3c] sm:$0xf]
        %v8628 = vld [vmem:[%s8611 + $0x40] sm:$0xf]
        %v8629 = vld [vmem:[%s8611 + $0x44] sm:$0xf]
        %v8630 = vld [vmem:[%s8611 + $0x48] sm:$0xf]
        %v8631 = vld [vmem:[%s8611 + $0x4c] sm:$0xf]
        %v8632 = vld [vmem:[%s8611 + $0x50] sm:$0xf]
        %v8633 = vld [vmem:[%s8611 + $0x54] sm:$0xf]
        %v8634 = vld [vmem:[%s8611 + $0x58] sm:$0xf]
        %v8635 = vld [vmem:[%s8611 + $0x5c] sm:$0xf]
        %v8636 = vld [vmem:[%s8611 + $0x60] sm:$0xf]
        %v8637 = vld [vmem:[%s8611 + $0x64] sm:$0xf]
        %v8638 = vld [vmem:[%s8611 + $0x68] sm:$0xf]
        %v8639 = vld [vmem:[%s8611 + $0x6c] sm:$0xf]
        %v8640 = vld [vmem:[%s8611 + $0x70] sm:$0xf]
        %v8641 = vld [vmem:[%s8611 + $0x74] sm:$0xf]
        %v8642 = vld [vmem:[%s8611 + $0x78] sm:$0xf]
        %v8643 = vld [vmem:[%s8611 + $0x7c] sm:$0xf]
        %v8676 = vunpack.c.l.b16 %v8612
        %v8677 = vunpack.c.l.b16 %v8613
        %v8678 = vunpack.c.l.b16 %v8614
        %v8679 = vunpack.c.l.b16 %v8615
        %v8680 = vunpack.c.l.b16 %v8616
        %v8681 = vunpack.c.l.b16 %v8617
        %v8682 = vunpack.c.l.b16 %v8618
        %v8683 = vunpack.c.l.b16 %v8619
        %v8684 = vunpack.c.l.b16 %v8620
        %v8685 = vunpack.c.l.b16 %v8621
        %v8686 = vunpack.c.l.b16 %v8622
        %v8687 = vunpack.c.l.b16 %v8623
        %v8688 = vunpack.c.l.b16 %v8624
        %v8689 = vunpack.c.l.b16 %v8625
        %v8690 = vunpack.c.l.b16 %v8626
        %v8691 = vunpack.c.l.b16 %v8627
        %v8692 = vunpack.c.l.b16 %v8628
        %v8693 = vunpack.c.l.b16 %v8629
        %v8694 = vunpack.c.l.b16 %v8630
        %v8695 = vunpack.c.l.b16 %v8631
        %v8696 = vunpack.c.l.b16 %v8632
        %v8697 = vunpack.c.l.b16 %v8633
        %v8698 = vunpack.c.l.b16 %v8634
        %v8699 = vunpack.c.l.b16 %v8635
        %v8700 = vunpack.c.l.b16 %v8636
        %v8701 = vunpack.c.l.b16 %v8637
        %v8702 = vunpack.c.l.b16 %v8638
        %v8703 = vunpack.c.l.b16 %v8639
        %v8704 = vunpack.c.l.b16 %v8640
        %v8705 = vunpack.c.l.b16 %v8641
        %v8706 = vunpack.c.l.b16 %v8642
        %v8707 = vunpack.c.l.b16 %v8643
        %v8708 = vpack.c.b16 %v8677, %v8676
        %v8709 = vpack.c.b16 %v8679, %v8678
        %v8710 = vpack.c.b16 %v8681, %v8680
        %v8711 = vpack.c.b16 %v8683, %v8682
        %v8712 = vpack.c.b16 %v8685, %v8684
        %v8713 = vpack.c.b16 %v8687, %v8686
        %v8714 = vpack.c.b16 %v8689, %v8688
        %v8715 = vpack.c.b16 %v8691, %v8690
        %v8716 = vpack.c.b16 %v8693, %v8692
        %v8717 = vpack.c.b16 %v8695, %v8694
        %v8718 = vpack.c.b16 %v8697, %v8696
        %v8719 = vpack.c.b16 %v8699, %v8698
        %v8720 = vpack.c.b16 %v8701, %v8700
        %v8721 = vpack.c.b16 %v8703, %v8702
        %v8722 = vpack.c.b16 %v8705, %v8704
        %v8723 = vpack.c.b16 %v8707, %v8706
        %8740 = vmatprep.subr.bf16.mxu0 0
        %8741 = vmatpush1.bf16.msra.mxu0 %v8708
        %8742 = vmatprep.subr.bf16.mxu0 0
        %8743 = vmatpush1.bf16.msra.mxu0 %v8709
        %8744 = vmatprep.subr.bf16.mxu0 0
        %8745 = vmatpush1.bf16.msra.mxu0 %v8710
        %8746 = vmatprep.subr.bf16.mxu0 0
        %8747 = vmatpush1.bf16.msra.mxu0 %v8711
        %8748 = vmatprep.subr.bf16.mxu0 0
        %8749 = vmatpush1.bf16.msra.mxu0 %v8712
        %8750 = vmatprep.subr.bf16.mxu0 0
        %8751 = vmatpush1.bf16.msra.mxu0 %v8713
        %8752 = vmatprep.subr.bf16.mxu0 0
        %8753 = vmatpush1.bf16.msra.mxu0 %v8714
        %8754 = vmatprep.subr.bf16.mxu0 0
        %8755 = vmatpush1.bf16.msra.mxu0 %v8715
        %8756 = vmatprep.subr.bf16.mxu0 0
        %8757 = vmatpush1.bf16.msra.mxu0 %v8716
        %8758 = vmatprep.subr.bf16.mxu0 0
        %8759 = vmatpush1.bf16.msra.mxu0 %v8717
        %8760 = vmatprep.subr.bf16.mxu0 0
        %8761 = vmatpush1.bf16.msra.mxu0 %v8718
        %8762 = vmatprep.subr.bf16.mxu0 0
        %8763 = vmatpush1.bf16.msra.mxu0 %v8719
        %8764 = vmatprep.subr.bf16.mxu0 0
        %8765 = vmatpush1.bf16.msra.mxu0 %v8720
        %8766 = vmatprep.subr.bf16.mxu0 0
        %8767 = vmatpush1.bf16.msra.mxu0 %v8721
        %8768 = vmatprep.subr.bf16.mxu0 0
        %8769 = vmatpush1.bf16.msra.mxu0 %v8722
        %8770 = vmatprep.subr.bf16.mxu0 0
        %8771 = vmatpush1.bf16.msra.mxu0 %v8723
        %8772 = vmatprep.mubr.bf16.mxu0 %v8273
        %8773 = vmatmul.mubr.bf16.gmra.mrb[0].mxu0 %v8272
        %v8774 = vpop.f32.mrb[0].mxu0
        %v8775 = vadd.f32 0.0, %v8774
        %v8776 = vpop.f32.mrb[0].mxu0
        %v8777 = vpop.f32.mrb[0].mxu0
        %v8778 = vpop.f32.mrb[0].mxu0
        %8779 = vdwg.mxu0
        %v8780 = vadd.f32 %v8606, %v8775
        %v8781 = vld [vmem:[%s12] sm:$0x1]
        %v8782 = vadd.f32 %v8780, %v8781
        %vm8783 = vcmp.ge.f32.partialorder %v8782, 0.0
        %v8784 = vmul.f32 %v8782, 0.01
        %v8785 = vsel %vm8783, %v8782, %v8784
        %v8786 = vpack.c.bf16 %v8785, %v8785
        %v8787 = vld [vmem:[%s13] sm:$0xf]
        %v8788 = vld [vmem:[%s13 + $0x4] sm:$0xf]
        %v8789 = vld [vmem:[%s13 + $0x8] sm:$0xf]
        %v8790 = vld [vmem:[%s13 + $0xc] sm:$0xf]
        %v8791 = vld [vmem:[%s13 + $0x10] sm:$0xf]
        %v8792 = vld [vmem:[%s13 + $0x14] sm:$0xf]
        %v8793 = vld [vmem:[%s13 + $0x18] sm:$0xf]
        %v8794 = vld [vmem:[%s13 + $0x1c] sm:$0xf]
        %v8795 = vld [vmem:[%s13 + $0x20] sm:$0xf]
        %v8796 = vld [vmem:[%s13 + $0x24] sm:$0xf]
        %v8797 = vld [vmem:[%s13 + $0x28] sm:$0xf]
        %v8798 = vld [vmem:[%s13 + $0x2c] sm:$0xf]
        %v8799 = vld [vmem:[%s13 + $0x30] sm:$0xf]
        %v8800 = vld [vmem:[%s13 + $0x34] sm:$0xf]
        %v8801 = vld [vmem:[%s13 + $0x38] sm:$0xf]
        %v8802 = vld [vmem:[%s13 + $0x3c] sm:$0xf]
        %v8803 = vld [vmem:[%s14] sm:$0x1]
        %v8820 = vunpack.c.l.b16 %v8787
        %v8821 = vunpack.c.l.b16 %v8788
        %v8822 = vunpack.c.l.b16 %v8789
        %v8823 = vunpack.c.l.b16 %v8790
        %v8824 = vunpack.c.l.b16 %v8791
        %v8825 = vunpack.c.l.b16 %v8792
        %v8826 = vunpack.c.l.b16 %v8793
        %v8827 = vunpack.c.l.b16 %v8794
        %v8828 = vunpack.c.l.b16 %v8795
        %v8829 = vunpack.c.l.b16 %v8796
        %v8830 = vunpack.c.l.b16 %v8797
        %v8831 = vunpack.c.l.b16 %v8798
        %v8832 = vunpack.c.l.b16 %v8799
        %v8833 = vunpack.c.l.b16 %v8800
        %v8834 = vunpack.c.l.b16 %v8801
        %v8835 = vunpack.c.l.b16 %v8802
        %v8836 = vpack.c.b16 %v8821, %v8820
        %v8837 = vpack.c.b16 %v8823, %v8822
        %v8838 = vpack.c.b16 %v8825, %v8824
        %v8839 = vpack.c.b16 %v8827, %v8826
        %v8840 = vpack.c.b16 %v8829, %v8828
        %v8841 = vpack.c.b16 %v8831, %v8830
        %v8842 = vpack.c.b16 %v8833, %v8832
        %v8843 = vpack.c.b16 %v8835, %v8834
        %8852 = vmatprep.subr.bf16.mxu0 0
        %8853 = vmatpush1.bf16.msra.mxu0 %v8836
        %8854 = vmatprep.subr.bf16.mxu0 0
        %8855 = vmatpush1.bf16.msra.mxu0 %v8837
        %8856 = vmatprep.subr.bf16.mxu0 0
        %8857 = vmatpush1.bf16.msra.mxu0 %v8838
        %8858 = vmatprep.subr.bf16.mxu0 0
        %8859 = vmatpush1.bf16.msra.mxu0 %v8839
        %8860 = vmatprep.subr.bf16.mxu0 0
        %8861 = vmatpush1.bf16.msra.mxu0 %v8840
        %8862 = vmatprep.subr.bf16.mxu0 0
        %8863 = vmatpush1.bf16.msra.mxu0 %v8841
        %8864 = vmatprep.subr.bf16.mxu0 0
        %8865 = vmatpush1.bf16.msra.mxu0 %v8842
        %8866 = vmatprep.subr.bf16.mxu0 0
        %8867 = vmatpush1.bf16.msra.mxu0 %v8843
        %8868 = vmatprep.subr.bf16.mxu0 0
        %8869 = vmatpush1.bf16.msra.mxu0 0
        %8870 = vmatprep.subr.bf16.mxu0 0
        %8871 = vmatpush1.bf16.msra.mxu0 0
        %8872 = vmatprep.subr.bf16.mxu0 0
        %8873 = vmatpush1.bf16.msra.mxu0 0
        %8874 = vmatprep.subr.bf16.mxu0 0
        %8875 = vmatpush1.bf16.msra.mxu0 0
        %8876 = vmatprep.subr.bf16.mxu0 0
        %8877 = vmatpush1.bf16.msra.mxu0 0
        %8878 = vmatprep.subr.bf16.mxu0 0
        %8879 = vmatpush1.bf16.msra.mxu0 0
        %8880 = vmatprep.subr.bf16.mxu0 0
        %8881 = vmatpush1.bf16.msra.mxu0 0
        %8882 = vmatprep.subr.bf16.mxu0 0
        %8883 = vmatpush1.bf16.msra.mxu0 0
        %8884 = vmatprep.mubr.bf16.mxu0 0
        %8885 = vmatmul.mubr.bf16.gmra.mrb[0].mxu0 %v8786
        %v8886 = vpop.f32.mrb[0].mxu0
        %v8887 = vadd.f32 %v8803, %v8886
        %v8888 = vpop.f32.mrb[0].mxu0
        %v8889 = vpop.f32.mrb[0].mxu0
        %v8890 = vpop.f32.mrb[0].mxu0
        %8891 = vdwg.mxu0
        %v8892 = vmul.f32 %v8887, %v8887
        %vm8893 = vcmask 73728
        %v8894 = vsel %vm8893, %v8892, 0.0
        %8895 = vadd.xlane.f32.xlu0 %v8894
        %v8896 = vpop.xlane.xlu0 %8895
        %v8897 = vmax.f32 %v8896, 1e-24
        %v8898 = vrsqrt.pop %v8897
        %v8899 = vmul.f32 %v8887, %v8898
        %8900 = vst.msk [vmem:[%s656] sm:$0x1] %vm8893, %v8899
        %v8901 = vpack.c.bf16 %v8899, %v8899
        %v8902 = vld [vmem:[%s15] sm:$0xf]
        %v8903 = vld [vmem:[%s15 + $0x4] sm:$0x1]
        %v8906 = vunpack.c.l.b16 %v8902
        %v8907 = vunpack.c.l.b16 %v8903
        %v8908 = vpack.c.b16 %v8907, %v8906
        %vm8909 = vcmask 80896
        %v8911 = vsel %vm8909, %v8901, 0
        %vm8913 = vcmask 1044480
        %v8915 = vsel %vm8913, %v8908, 0
        %8917 = vmatprep.subr.bf16.mxu0 0
        %8918 = vmatpush1.bf16.msra.mxu0 %v8915
        %8919 = vmatprep.subr.bf16.mxu0 0
        %8920 = vmatpush1.bf16.msra.mxu0 0
        %8921 = vmatprep.subr.bf16.mxu0 0
        %8922 = vmatpush1.bf16.msra.mxu0 0
        %8923 = vmatprep.subr.bf16.mxu0 0
        %8924 = vmatpush1.bf16.msra.mxu0 0
        %8925 = vmatprep.subr.bf16.mxu0 0
        %8926 = vmatpush1.bf16.msra.mxu0 0
        %8927 = vmatprep.subr.bf16.mxu0 0
        %8928 = vmatpush1.bf16.msra.mxu0 0
        %8929 = vmatprep.subr.bf16.mxu0 0
        %8930 = vmatpush1.bf16.msra.mxu0 0
        %8931 = vmatprep.subr.bf16.mxu0 0
        %8932 = vmatpush1.bf16.msra.mxu0 0
        %8933 = vmatprep.subr.bf16.mxu0 0
        %8934 = vmatpush1.bf16.msra.mxu0 0
        %8935 = vmatprep.subr.bf16.mxu0 0
        %8936 = vmatpush1.bf16.msra.mxu0 0
        %8937 = vmatprep.subr.bf16.mxu0 0
        %8938 = vmatpush1.bf16.msra.mxu0 0
        %8939 = vmatprep.subr.bf16.mxu0 0
        %8940 = vmatpush1.bf16.msra.mxu0 0
        %8941 = vmatprep.subr.bf16.mxu0 0
        %8942 = vmatpush1.bf16.msra.mxu0 0
        %8943 = vmatprep.subr.bf16.mxu0 0
        %8944 = vmatpush1.bf16.msra.mxu0 0
        %8945 = vmatprep.subr.bf16.mxu0 0
        %8946 = vmatpush1.bf16.msra.mxu0 0
        %8947 = vmatprep.subr.bf16.mxu0 0
        %8948 = vmatpush1.bf16.msra.mxu0 0
        %8949 = vmatprep.mubr.bf16.mxu0 0
        %8950 = vmatmul.mubr.bf16.gmra.mrb[0].mxu0 %v8911
        %v8951 = vpop.f32.mrb[0].mxu0
        %v8952 = vadd.f32 0.0, %v8951
        %v8953 = vpop.f32.mrb[0].mxu0
        %v8954 = vpop.f32.mrb[0].mxu0
        %v8955 = vpop.f32.mrb[0].mxu0
        %8956 = vdwg.mxu0
        %s8957 = sld [smem:[#allocation2]]
        %v8958 = vstv %s8957
        %v8959 = vmul.f32 %v8952, %v8958
        %8960 = vst.msk [vmem:[%s662] sm:$0x1] %vm8893, %v8959
        %s8961 = sand.u32 %s415, 1
        %s8962 = scalar_lea.sflag [#allocation5], %s8961
        %s8963 = sand.u32 %s415, 1
        %s8964 = scalar_lea.vmem [#allocation12], %s8963
        %s8965 = sand.u32 %s441, 1
        %s8966 = scalar_lea.sflag [#allocation14], %s8965
        %s8967 = sand.u32 %s441, 1
        %s8968 = scalar_lea.vmem [#allocation13], %s8967
        // Predicated region
        $region109: #{cifar_cnn1_forward.1} parent=87 // pred_check
          %p8969 = pneg %p425
        $region110: #{cifar_cnn1_forward.1} parent=87 // pred_check_branch
          %8971 = sbr.rel (%p8969) target = $region112
        $region111: #{cifar_cnn1_forward.1} parent=87 // pred_region
          %s8973 = ssub.s32 16, 16
          %8974 = vsyncadd %s8962, %s8973
          %s8975 = smul.addr %s40, 16
          %s8976 = scalar_lea.hbm %s17, %s8975
          %s8978 = sshll.u32 %s8964, 4
          %s8979 = int_to_ptr.vmem [resolvable:$true] %s8978
          %8981 = dma.vmem_to_hbm [thread:$0]  %s8979, 16, %s8976, %s8962
        $region112: #{cifar_cnn1_forward.1} parent=87 // pred_fallthru
          _
        // Predicated region
        $region113: #{cifar_cnn1_forward.1} parent=87 // pred_check
          %p8982 = pneg %p451
        $region114: #{cifar_cnn1_forward.1} parent=87 // pred_check_branch
          %8984 = sbr.rel (%p8982) target = $region116
        $region115: #{cifar_cnn1_forward.1} parent=87 // pred_region
          %s8986 = ssub.s32 16, 16
          %8987 = vsyncadd %s8966, %s8986
          %s8988 = smul.addr %s40, 16
          %s8989 = scalar_lea.hbm %s18, %s8988
          %s8991 = sshll.u32 %s8968, 4
          %s8992 = int_to_ptr.vmem [resolvable:$true] %s8991
          %8994 = dma.vmem_to_hbm [thread:$0]  %s8992, 16, %s8989, %s8966
        $region116: #{cifar_cnn1_forward.1} parent=87 // pred_fallthru
          _
      $region88: #{cifar_cnn1_forward.1} parent=5 // pred_fallthru
        _
      %p8995 = scmp.le.s32.totalorder 2, %s35
      // Predicated region
      $region117: #{cifar_cnn1_forward.1} parent=5 // pred_check
        %p8996 = pneg %p8995
      $region118: #{cifar_cnn1_forward.1} parent=5 // pred_check_branch
        %8998 = sbr.rel (%p8996) target = $region120
      $region119: #{cifar_cnn1_forward.1} parent=5 // pred_region
        %s8999 = ssub.s32 %s35, 2
        // Predicated region
        $region121: #{cifar_cnn1_forward.1} parent=119 // pred_check
          %p9000 = pneg %p431
        $region122: #{cifar_cnn1_forward.1} parent=119 // pred_check_branch
          %9002 = sbr.rel (%p9000) target = $region124
        $region123: #{cifar_cnn1_forward.1} parent=119 // pred_region
          %s9003 = sand.u32 %s416, 1
          %s9004 = scalar_lea.sflag [#allocation5], %s9003
          %s9005 = sand.u32 %s416, 1
          %s9006 = scalar_lea.vmem [#allocation12], %s9005
          %9007 = dma.done %s9004, 16
        $region124: #{cifar_cnn1_forward.1} parent=119 // pred_fallthru
          _
        // Predicated region
        $region125: #{cifar_cnn1_forward.1} parent=119 // pred_check
          %p9008 = pneg %p457
        $region126: #{cifar_cnn1_forward.1} parent=119 // pred_check_branch
          %9010 = sbr.rel (%p9008) target = $region128
        $region127: #{cifar_cnn1_forward.1} parent=119 // pred_region
          %s9011 = sand.u32 %s442, 1
          %s9012 = scalar_lea.sflag [#allocation14], %s9011
          %s9013 = sand.u32 %s442, 1
          %s9014 = scalar_lea.vmem [#allocation13], %s9013
          %9015 = dma.done %s9012, 16
        $region128: #{cifar_cnn1_forward.1} parent=119 // pred_fallthru
          _
      $region120: #{cifar_cnn1_forward.1} parent=5 // pred_fallthru
        _
    $region6: #{cifar_cnn1_forward.1} parent=1 // loop_footer
      %s39 = sadd.s32 1, %s35
    $region7: #{cifar_cnn1_forward.1} parent=1 // loop_footer_branch
      %34 = sbr.rel target = $region3
    $region8: #{cifar_cnn1_forward.1} parent=1 // loop_exit
      _
    %9016 = vsyncpa [#allocation4], 1
    %s9017 = scalar_lea.sflag [#allocation4], 1
    %9018 = vsyncpa %s9017, 1
    %9019 = vsyncpa [#allocation7], 1
    %9020 = vsyncpa [#allocation10], 1
    %9021 = vsyncpa [#allocation5], 1
    %s9022 = scalar_lea.sflag [#allocation5], 1
    %9023 = vsyncpa %s9022, 1
    %9024 = vsyncpa [#allocation14], 1
    %s9025 = scalar_lea.sflag [#allocation14], 1
    %9026 = vsyncpa %s9025, 1

</llo_original>
